<compile_context>
chip_gen: v7x
topology: tpu7x:2x2x1
jax: 0.10.0
libtpu: 0.0.40
codegen_flags: <defaults>
</compile_context>

<pallas_src>
import jax
import jax.numpy as jnp
import numpy as np
from jax import lax
from jax.experimental import pallas as pl
from jax.experimental.pallas import tpu as pltpu


def _halo_rows(pad, W):
    """Zero rows needed above/below a row-padded flat (.., rows*W) conv buffer."""
    rows = pad + -(-pad // W)                 # pad rows + ceil(pad/W) safety row(s)
    for extra in range(33):                   # round up so the halo is a whole
        if ((rows + extra) * W) % 128 == 0:   # number of 128-lane blocks -> all
            return rows + extra               # scratch stores stay lane-aligned
    return rows


def _make_lsk_kernel(C, H, W, aug_rows, tap_dtype):
    HW = H * W
    Ch = C // 2
    P0 = _halo_rows(2, W)     # conv0:        5x5, pad 2
    PS = _halo_rows(9, W)     # conv_spatial: 7x7, pad 9, dilation 3
    PQ = _halo_rows(3, W)     # conv_squeeze: 7x7, pad 3

    def depthwise(buf_ref, w_ref, K, dil, pad, ptop, col):
        """Depthwise KxK conv on a row-padded flat (C, rows*W) buffer -> (C, HW)."""
        acc = jnp.zeros((C, HW), jnp.float32)
        for kw in range(K):
            dw = dil * kw - pad
            part = jnp.zeros((C, HW), jnp.float32)
            for kh in range(K):
                dh = dil * kh - pad
                off = (ptop + dh) * W + dw                 # static lane offset
                tap = buf_ref[:, pl.ds(off, HW)]           # (C, HW) lane-dense read
                part = part + tap * w_ref[kh * K + kw]     # (C,1) lane-broadcast
            # zero lanes whose W index wrapped into a neighbouring row
            wmask = ((col + dw >= 0) & (col + dw < W)).astype(jnp.float32)
            acc = acc + part * wmask
        return acc

    def kernel(wsq_ref, bsq_ref, x_ref,
               w0_ref, b0_ref, wsp_ref, bsp_ref,
               wbd_ref, bcat_ref, wcaug_ref,
               out_ref,
               pad0, padsp, padq):
        x = x_ref[0]                                       # (C, HW) f32
        col = lax.broadcasted_iota(jnp.int32, (1, HW), 1) % W

        # Only the small halo rows need zeros; interiors are fully rewritten
        # every step.  Re-zeroing the halos per step (cheap, lane-aligned
        # stores) keeps the batch grid axis truly "parallel" (megacore-safe:
        # no cross-iteration scratch state).
        pad0[:, pl.ds(0, P0 * W)] = jnp.zeros((C, P0 * W), tap_dtype)
        pad0[:, pl.ds((P0 + H) * W, P0 * W)] = jnp.zeros((C, P0 * W), tap_dtype)
        padsp[:, pl.ds(0, PS * W)] = jnp.zeros((C, PS * W), tap_dtype)
        padsp[:, pl.ds((PS + H) * W, PS * W)] = jnp.zeros((C, PS * W), tap_dtype)
        padq[:, pl.ds(0, PQ * W)] = jnp.zeros((2, PQ * W), jnp.float32)
        padq[:, pl.ds((PQ + H) * W, PQ * W)] = jnp.zeros((2, PQ * W), jnp.float32)

        # ---- conv0: depthwise 5x5, padding 2 --------------------------------
        pad0[:, pl.ds(P0 * W, HW)] = x.astype(tap_dtype)
        attn1 = depthwise(pad0, w0_ref, 5, 1, 2, P0, col) + b0_ref[...]

        # ---- conv_spatial: depthwise 7x7, dilation 3, padding 9 -------------
        padsp[:, pl.ds(PS * W, HW)] = attn1.astype(tap_dtype)
        attn2 = depthwise(padsp, wsp_ref, 7, 3, 9, PS, col) + bsp_ref[...]

        # ---- conv1 & conv2 fused: single (2Ch,2C)x(2C,HW) MXU matmul --------
        a_stack = jnp.concatenate([attn1, attn2], axis=0)          # (2C, HW)
        acat = jnp.dot(wbd_ref[...], a_stack,
                       preferred_element_type=jnp.float32) + bcat_ref[...]
        a1 = acat[0:Ch]                                            # (Ch, HW)
        a2 = acat[Ch:C]

        # ---- channel mean / max of concat([a1, a2]) (sublane reductions) ----
        avg_attn = jnp.mean(acat, axis=0, keepdims=True)           # (1, HW)
        max_attn = jnp.max(acat, axis=0, keepdims=True)            # (1, HW)

        # ---- conv_squeeze: 2 -> 2, 7x7, padding 3, then sigmoid -------------
        padq[:, pl.ds(PQ * W, HW)] = jnp.concatenate([avg_attn, max_attn], axis=0)
        s0 = jnp.zeros((1, HW), jnp.float32)
        s1 = jnp.zeros((1, HW), jnp.float32)
        for kw in range(7):
            dw = kw - 3
            p0 = jnp.zeros((1, HW), jnp.float32)
            p1 = jnp.zeros((1, HW), jnp.float32)
            for kh in range(7):
                dh = kh - 3
                off = (PQ + dh) * W + dw
                t = padq[:, pl.ds(off, HW)]                        # (2, HW)
                t_avg = t[0:1]
                t_max = t[1:2]
                base = (kh * 7 + kw) * 4                           # [kh,kw,cin,cout]
                p0 = p0 + t_avg * wsq_ref[base + 0] + t_max * wsq_ref[base + 2]
                p1 = p1 + t_avg * wsq_ref[base + 1] + t_max * wsq_ref[base + 3]
            wmask = ((col + dw >= 0) & (col + dw < W)).astype(jnp.float32)
            s0 = s0 + p0 * wmask
            s1 = s1 + p1 * wmask
        sig0 = jax.nn.sigmoid(s0 + bsq_ref[0])                     # (1, HW)
        sig1 = jax.nn.sigmoid(s1 + bsq_ref[1])

        # ---- mix + algebraic tail -------------------------------------------
        # y[c] = mean_hw(x * (wc^T attn_mix + bc))[c]
        #      = (1/HW) * sum_d wcaug[d,c] * (sum_hw attn_aug[d,hw] * x[c,hw])
        attn_mix = a1 * sig0 + a2 * sig1                           # (Ch, HW)
        rows = [attn_mix, jnp.ones((1, HW), jnp.float32)]
        if aug_rows > Ch + 1:
            rows.append(jnp.zeros((aug_rows - Ch - 1, HW), jnp.float32))
        attn_aug = jnp.concatenate(rows, axis=0)                   # (aug_rows, HW)
        mt = lax.dot_general(attn_aug, x, (((1,), (1,)), ((), ())),
                             preferred_element_type=jnp.float32)   # (aug_rows, C)
        y = jnp.sum(mt * wcaug_ref[...], axis=0, keepdims=True) * (1.0 / HW)
        out_ref[...] = y.reshape(1, 1, C)

    return kernel, P0, PS, PQ


# ----------------------------------------------------------------------------
# Wrapper: NCHW in (like PyTorch), (N, C) out.
# ----------------------------------------------------------------------------
def lsk_layer_pallas(x_nchw, p, tap_dtype=jnp.float32):
    """LSKLayer forward.  x_nchw: (N, C, H, W) -> (N, C).

    tap_dtype=jnp.bfloat16 halves VALU/vld work of the depthwise tap loops on
    v6e/v7x (keep the default jnp.float32 on v5e, which has no bf16 VPU path).
    """
    N, C, H, W = x_nchw.shape
    Ch = C // 2
    HW = H * W
    f32 = jnp.float32
    aug_rows = -(-(Ch + 1) // 8) * 8

    # NCHW -> (N, C, H*W): free row-major reshape, no activation transpose.
    x = x_nchw.reshape(N, C, HW).astype(f32)

    kernel, P0, PS, PQ = _make_lsk_kernel(C, H, W, aug_rows, tap_dtype)

    # Depthwise weights as (K*K, C, 1): one per-channel sublane vector per tap.
    w0 = p['w0'].reshape(25, C)[:, :, None].astype(tap_dtype)
    wsp = p['wsp'].reshape(49, C)[:, :, None].astype(tap_dtype)
    b0 = p['b0'].reshape(C, 1).astype(f32)
    bsp = p['bsp'].reshape(C, 1).astype(f32)

    # conv1/conv2 fused into one block-diagonal (2Ch, 2C) weight: applied to
    # [attn1; attn2] it yields concat([conv1(attn1), conv2(attn2)]) directly.
    w1t = p['w1'].T.astype(f32)                       # (Ch, C)
    w2t = p['w2'].T.astype(f32)
    z = jnp.zeros((Ch, C), f32)
    wbd = jnp.concatenate([jnp.concatenate([w1t, z], axis=1),
                           jnp.concatenate([z, w2t], axis=1)], axis=0)  # (C, 2C)
    bcat = jnp.concatenate([p['b1'], p['b2']]).reshape(C, 1).astype(f32)

    # Final 1x1 conv folded into the spatial mean: rows = [wc; bc; zero pad].
    wcaug = jnp.concatenate(
        [p['wc'].astype(f32), p['bc'][None, :].astype(f32),
         jnp.zeros((aug_rows - Ch - 1, C), f32)], axis=0)           # (aug_rows, C)

    wsq_flat = p['wsq'].reshape(-1).astype(f32)       # (7*7*2*2,)
    bsq = p['bsq'].astype(f32)

    smem = pl.BlockSpec(memory_space=pltpu.MemorySpace.SMEM)

    def rep(shape):
        nd = len(shape)
        return pl.BlockSpec(shape, lambda n, _nd=nd: (0,) * _nd)

    out = pl.pallas_call(
        kernel,
        out_shape=jax.ShapeDtypeStruct((N, 1, C), f32),
        grid=(N,),
        in_specs=[
            smem, smem,
            pl.BlockSpec((1, C, HW), lambda n: (n, 0, 0)),
            rep((25, C, 1)), rep((C, 1)),
            rep((49, C, 1)), rep((C, 1)),
            rep((C, 2 * C)), rep((C, 1)),
            rep((aug_rows, C)),
        ],
        out_specs=pl.BlockSpec((1, 1, C), lambda n: (n, 0, 0)),
        scratch_shapes=[
            pltpu.VMEM((C, (2 * P0 + H) * W), tap_dtype),    # conv0 halo buffer
            pltpu.VMEM((C, (2 * PS + H) * W), tap_dtype),    # conv_spatial halo buf
            pltpu.VMEM((2, (2 * PQ + H) * W), jnp.float32),  # conv_squeeze halo buf
        ],
        compiler_params=pltpu.CompilerParams(
            dimension_semantics=("parallel",)),
        # TODO(synk): for production feature maps (H,W >= 128) add a second
        # spatially-tiled "parallel" grid axis (with conv halos) so both v7x
        # TensorCores get work at N=1, and set vmem_limit_bytes with headroom.
    )(wsq_flat, bsq, x, w0, b0, wsp, bsp, wbd, bcat, wcaug)
    return out[:, 0, :]                               # (N, C)


# ----------------------------------------------------------------------------
# Deterministic parameter init (shapes follow LSKLayer.__init__, kernel layout).
# ----------------------------------------------------------------------------
def init_params(key, C):
    ks = jax.random.split(key, 12)
    Ch = C // 2
    return {
        'w0':  jax.random.normal(ks[0],  (5, 5, C)) * 0.10,    # depthwise 5x5
        'b0':  jax.random.normal(ks[1],  (C,)) * 0.10,
        'wsp': jax.random.normal(ks[2],  (7, 7, C)) * 0.05,    # depthwise 7x7 dil 3
        'bsp': jax.random.normal(ks[3],  (C,)) * 0.10,
        'w1':  jax.random.normal(ks[4],  (C, Ch)) * 0.10,      # 1x1: [cin, cout]
        'b1':  jax.random.normal(ks[5],  (Ch,)) * 0.10,
        'w2':  jax.random.normal(ks[6],  (C, Ch)) * 0.10,
        'b2':  jax.random.normal(ks[7],  (Ch,)) * 0.10,
        'wsq': jax.random.normal(ks[8],  (7, 7, 2, 2)) * 0.10, # [kh, kw, cin, cout]
        'bsq': jax.random.normal(ks[9],  (2,)) * 0.10,
        'wc':  jax.random.normal(ks[10], (Ch, C)) * 0.10,      # 1x1: [cin, cout]
        'bc':  jax.random.normal(ks[11], (C,)) * 0.10,
    }


# ----------------------------------------------------------------------------
# Pure-JAX reference (NCHW, mirrors the PyTorch forward exactly).
# ----------------------------------------------------------------------------
def ref_lsk(x, p):
    N, C, H, W = x.shape
    dn = ('NCHW', 'OIHW', 'NCHW')
    w0 = jnp.transpose(p['w0'], (2, 0, 1))[:, None]            # (C,1,5,5)
    attn1 = lax.conv_general_dilated(x, w0, (1, 1), ((2, 2), (2, 2)),
                                     feature_group_count=C, dimension_numbers=dn)
    attn1 = attn1 + p['b0'].reshape(1, C, 1, 1)
    wsp = jnp.transpose(p['wsp'], (2, 0, 1))[:, None]          # (C,1,7,7)
    attn2 = lax.conv_general_dilated(attn1, wsp, (1, 1), ((9, 9), (9, 9)),
                                     rhs_dilation=(3, 3),
                                     feature_group_count=C, dimension_numbers=dn)
    attn2 = attn2 + p['bsp'].reshape(1, C, 1, 1)
    a1 = jnp.einsum('nchw,cd->ndhw', attn1, p['w1']) + p['b1'].reshape(1, -1, 1, 1)
    a2 = jnp.einsum('nchw,cd->ndhw', attn2, p['w2']) + p['b2'].reshape(1, -1, 1, 1)
    cat = jnp.concatenate([a1, a2], axis=1)
    agg = jnp.concatenate([cat.mean(axis=1, keepdims=True),
                           cat.max(axis=1, keepdims=True)], axis=1)
    wsq = jnp.transpose(p['wsq'], (3, 2, 0, 1))                # (out,in,7,7)
    sig = jax.nn.sigmoid(
        lax.conv_general_dilated(agg, wsq, (1, 1), ((3, 3), (3, 3)),
                                 dimension_numbers=dn) + p['bsq'].reshape(1, 2, 1, 1))
    attn = a1 * sig[:, 0:1] + a2 * sig[:, 1:2]
    attn = jnp.einsum('ndhw,dc->nchw', attn, p['wc']) + p['bc'].reshape(1, -1, 1, 1)
    return (x * attn).mean(axis=(2, 3))


if __name__ == "__main__":
    key = jax.random.PRNGKey(0)
    kx, kp = jax.random.split(key)
    N, C, H, W = 2, 8, 16, 16           # feat_channels=8 (must be even)
    x = jax.random.normal(kx, (N, C, H, W), jnp.float32)
    params = init_params(kp, C)

    y = lsk_layer_pallas(x, params)
    y = jax.block_until_ready(y)
    assert y.shape == (N, C)

    y_ref = ref_lsk(x, params)
    np.testing.assert_allclose(np.asarray(y), np.asarray(y_ref),
                               rtol=1e-4, atol=1e-4)
    print("KERNEL_OK")
</pallas_src>

<mosaic_0001>
module attributes {stable_mosaic.version = 11 : i64} {
  func.func @kernel(%arg0: i32, %arg1: memref<196xf32, #tpu.memory_space<smem>>, %arg2: memref<2xf32, #tpu.memory_space<smem>>, %arg3: memref<1x8x256xf32, #tpu.memory_space<vmem>>, %arg4: memref<25x8x1xf32, #tpu.memory_space<vmem>>, %arg5: memref<8x1xf32, #tpu.memory_space<vmem>>, %arg6: memref<49x8x1xf32, #tpu.memory_space<vmem>>, %arg7: memref<8x1xf32, #tpu.memory_space<vmem>>, %arg8: memref<8x16xf32, #tpu.memory_space<vmem>>, %arg9: memref<8x1xf32, #tpu.memory_space<vmem>>, %arg10: memref<8x8xf32, #tpu.memory_space<vmem>>, %arg11: memref<1x1x8xf32, #tpu.memory_space<vmem>>, %arg12: memref<8x512xf32, #tpu.memory_space<vmem>>, %arg13: memref<8x768xf32, #tpu.memory_space<vmem>>, %arg14: memref<2x512xf32, #tpu.memory_space<vmem>>) attributes {dimension_semantics = [#tpu.dimension_semantics<parallel>], iteration_bounds = array<i64: 2>, scalar_prefetch = 0 : i64, scratch_operands = 3 : i64, tpu.core_type = #tpu.core_type<tc>, window_params = [{transform_indices = @transform_0, window_bounds = array<i64: 196>}, {transform_indices = @transform_1, window_bounds = array<i64: 2>}, {transform_indices = @transform_2, window_bounds = array<i64: 1, 8, 256>}, {pipeline_mode = #tpu.pipeline_mode<synchronous>, transform_indices = @transform_3, window_bounds = array<i64: 25, 8, 1>}, {pipeline_mode = #tpu.pipeline_mode<synchronous>, transform_indices = @transform_4, window_bounds = array<i64: 8, 1>}, {pipeline_mode = #tpu.pipeline_mode<synchronous>, transform_indices = @transform_5, window_bounds = array<i64: 49, 8, 1>}, {pipeline_mode = #tpu.pipeline_mode<synchronous>, transform_indices = @transform_6, window_bounds = array<i64: 8, 1>}, {pipeline_mode = #tpu.pipeline_mode<synchronous>, transform_indices = @transform_7, window_bounds = array<i64: 8, 16>}, {pipeline_mode = #tpu.pipeline_mode<synchronous>, transform_indices = @transform_8, window_bounds = array<i64: 8, 1>}, {pipeline_mode = #tpu.pipeline_mode<synchronous>, transform_indices = @transform_9, window_bounds = array<i64: 8, 8>}, {transform_indices = @transform_10, window_bounds = array<i64: 1, 1, 8>}]} {
    %c0 = arith.constant 0 : index
    %c0_0 = arith.constant 0 : index
    %c0_1 = arith.constant 0 : index
    %0 = vector.load %arg3[%c0, %c0_0, %c0_1] : memref<1x8x256xf32, #tpu.memory_space<vmem>>, vector<1x8x256xf32>
    %1 = vector.shape_cast %0 : vector<1x8x256xf32> to vector<8x256xf32>
    %2 = tpu.iota {dimensions = array<i32: 1>} : vector<1x256xi32>
    %c16_i32 = arith.constant 16 : i32
    %c0_i32 = arith.constant 0 : i32
    %3 = arith.cmpi eq, %c16_i32, %c0_i32 : i32
    %c1_i32 = arith.constant 1 : i32
    %4 = arith.select %3, %c1_i32, %c16_i32 : i32
    %5 = vector.broadcast %4 : i32 to vector<1x256xi32>
    %6 = arith.remsi %2, %5 : vector<1x256xi32>
    %c0_i32_2 = arith.constant 0 : i32
    %7 = vector.broadcast %c0_i32_2 : i32 to vector<1x256xi32>
    %8 = arith.cmpi ne, %6, %7 : vector<1x256xi32>
    %c0_i32_3 = arith.constant 0 : i32
    %9 = vector.broadcast %c0_i32_3 : i32 to vector<1x256xi32>
    %10 = arith.cmpi slt, %6, %9 : vector<1x256xi32>
    %c0_i32_4 = arith.constant 0 : i32
    %11 = arith.cmpi slt, %4, %c0_i32_4 : i32
    %12 = vector.broadcast %11 : i1 to vector<1x256xi1>
    %13 = vector.broadcast %12 : vector<1x256xi1> to vector<1x256xi1>
    %14 = arith.xori %10, %13 : vector<1x256xi1>
    %15 = arith.andi %14, %8 : vector<1x256xi1>
    %16 = vector.broadcast %4 : i32 to vector<1x256xi32>
    %17 = arith.addi %6, %16 : vector<1x256xi32>
    %18 = arith.select %15, %17, %6 : vector<1x256xi1>, vector<1x256xi32>
    %cst = arith.constant 0.000000e+00 : f32
    %19 = vector.broadcast %cst : f32 to vector<8x128xf32>
    %c0_5 = arith.constant 0 : index
    %c0_6 = arith.constant 0 : index
    %20 = vector.load %arg12[%c0_5, %c0_6] : memref<8x512xf32, #tpu.memory_space<vmem>>, vector<8x128xf32>
    tpu.vector_store %arg12[%c0_5, %c0_6], %19 {strides = array<i32>} : memref<8x512xf32, #tpu.memory_space<vmem>>, vector<8x128xf32>,
    %cst_7 = arith.constant 0.000000e+00 : f32
    %21 = vector.broadcast %cst_7 : f32 to vector<8x128xf32>
    %c0_8 = arith.constant 0 : index
    %c384 = arith.constant 384 : index
    %22 = vector.load %arg12[%c0_8, %c384] : memref<8x512xf32, #tpu.memory_space<vmem>>, vector<8x128xf32>
    tpu.vector_store %arg12[%c0_8, %c384], %21 {strides = array<i32>} : memref<8x512xf32, #tpu.memory_space<vmem>>, vector<8x128xf32>,
    %cst_9 = arith.constant 0.000000e+00 : f32
    %23 = vector.broadcast %cst_9 : f32 to vector<8x256xf32>
    %c0_10 = arith.constant 0 : index
    %c0_11 = arith.constant 0 : index
    %24 = vector.load %arg13[%c0_10, %c0_11] : memref<8x768xf32, #tpu.memory_space<vmem>>, vector<8x256xf32>
    tpu.vector_store %arg13[%c0_10, %c0_11], %23 {strides = array<i32>} : memref<8x768xf32, #tpu.memory_space<vmem>>, vector<8x256xf32>,
    %cst_12 = arith.constant 0.000000e+00 : f32
    %25 = vector.broadcast %cst_12 : f32 to vector<8x256xf32>
    %c0_13 = arith.constant 0 : index
    %c512 = arith.constant 512 : index
    %26 = vector.load %arg13[%c0_13, %c512] : memref<8x768xf32, #tpu.memory_space<vmem>>, vector<8x256xf32>
    tpu.vector_store %arg13[%c0_13, %c512], %25 {strides = array<i32>} : memref<8x768xf32, #tpu.memory_space<vmem>>, vector<8x256xf32>,
    %cst_14 = arith.constant 0.000000e+00 : f32
    %27 = vector.broadcast %cst_14 : f32 to vector<2x128xf32>
    %c0_15 = arith.constant 0 : index
    %c0_16 = arith.constant 0 : index
    %28 = vector.load %arg14[%c0_15, %c0_16] : memref<2x512xf32, #tpu.memory_space<vmem>>, vector<2x128xf32>
    tpu.vector_store %arg14[%c0_15, %c0_16], %27 {strides = array<i32>} : memref<2x512xf32, #tpu.memory_space<vmem>>, vector<2x128xf32>,
    %cst_17 = arith.constant 0.000000e+00 : f32
    %29 = vector.broadcast %cst_17 : f32 to vector<2x128xf32>
    %c0_18 = arith.constant 0 : index
    %c384_19 = arith.constant 384 : index
    %30 = vector.load %arg14[%c0_18, %c384_19] : memref<2x512xf32, #tpu.memory_space<vmem>>, vector<2x128xf32>
    tpu.vector_store %arg14[%c0_18, %c384_19], %29 {strides = array<i32>} : memref<2x512xf32, #tpu.memory_space<vmem>>, vector<2x128xf32>,
    %c0_20 = arith.constant 0 : index
    %c128 = arith.constant 128 : index
    %31 = vector.load %arg12[%c0_20, %c128] : memref<8x512xf32, #tpu.memory_space<vmem>>, vector<8x256xf32>
    tpu.vector_store %arg12[%c0_20, %c128], %1 {strides = array<i32>} : memref<8x512xf32, #tpu.memory_space<vmem>>, vector<8x256xf32>,
    %cst_21 = arith.constant 0.000000e+00 : f32
    %32 = vector.broadcast %cst_21 : f32 to vector<8x256xf32>
    %cst_22 = arith.constant 0.000000e+00 : f32
    %33 = vector.broadcast %cst_22 : f32 to vector<8x256xf32>
    %c0_23 = arith.constant 0 : index
    %c94 = arith.constant 94 : index
    %34 = vector.load %arg12[%c0_23, %c94] : memref<8x512xf32, #tpu.memory_space<vmem>>, vector<8x256xf32>
    %c0_24 = arith.constant 0 : index
    %c0_25 = arith.constant 0 : index
    %c0_26 = arith.constant 0 : index
    %35 = vector.load %arg4[%c0_24, %c0_25, %c0_26] : memref<25x8x1xf32, #tpu.memory_space<vmem>>, vector<1x8x1xf32>
    %36 = vector.shape_cast %35 : vector<1x8x1xf32> to vector<8x1xf32>
    %37 = vector.broadcast %36 : vector<8x1xf32> to vector<8x256xf32>
    %38 = arith.mulf %34, %37 : vector<8x256xf32>
    %39 = arith.addf %33, %38 : vector<8x256xf32>
    %c0_27 = arith.constant 0 : index
    %c110 = arith.constant 110 : index
    %40 = vector.load %arg12[%c0_27, %c110] : memref<8x512xf32, #tpu.memory_space<vmem>>, vector<8x256xf32>
    %c5 = arith.constant 5 : index
    %c0_28 = arith.constant 0 : index
    %c0_29 = arith.constant 0 : index
    %41 = vector.load %arg4[%c5, %c0_28, %c0_29] : memref<25x8x1xf32, #tpu.memory_space<vmem>>, vector<1x8x1xf32>
    %42 = vector.shape_cast %41 : vector<1x8x1xf32> to vector<8x1xf32>
    %43 = vector.broadcast %42 : vector<8x1xf32> to vector<8x256xf32>
    %44 = arith.mulf %40, %43 : vector<8x256xf32>
    %45 = arith.addf %39, %44 : vector<8x256xf32>
    %c0_30 = arith.constant 0 : index
    %c126 = arith.constant 126 : index
    %46 = vector.load %arg12[%c0_30, %c126] : memref<8x512xf32, #tpu.memory_space<vmem>>, vector<8x256xf32>
    %c10 = arith.constant 10 : index
    %c0_31 = arith.constant 0 : index
    %c0_32 = arith.constant 0 : index
    %47 = vector.load %arg4[%c10, %c0_31, %c0_32] : memref<25x8x1xf32, #tpu.memory_space<vmem>>, vector<1x8x1xf32>
    %48 = vector.shape_cast %47 : vector<1x8x1xf32> to vector<8x1xf32>
    %49 = vector.broadcast %48 : vector<8x1xf32> to vector<8x256xf32>
    %50 = arith.mulf %46, %49 : vector<8x256xf32>
    %51 = arith.addf %45, %50 : vector<8x256xf32>
    %c0_33 = arith.constant 0 : index
    %c142 = arith.constant 142 : index
    %52 = vector.load %arg12[%c0_33, %c142] : memref<8x512xf32, #tpu.memory_space<vmem>>, vector<8x256xf32>
    %c15 = arith.constant 15 : index
    %c0_34 = arith.constant 0 : index
    %c0_35 = arith.constant 0 : index
    %53 = vector.load %arg4[%c15, %c0_34, %c0_35] : memref<25x8x1xf32, #tpu.memory_space<vmem>>, vector<1x8x1xf32>
    %54 = vector.shape_cast %53 : vector<1x8x1xf32> to vector<8x1xf32>
    %55 = vector.broadcast %54 : vector<8x1xf32> to vector<8x256xf32>
    %56 = arith.mulf %52, %55 : vector<8x256xf32>
    %57 = arith.addf %51, %56 : vector<8x256xf32>
    %c0_36 = arith.constant 0 : index
    %c158 = arith.constant 158 : index
    %58 = vector.load %arg12[%c0_36, %c158] : memref<8x512xf32, #tpu.memory_space<vmem>>, vector<8x256xf32>
    %c20 = arith.constant 20 : index
    %c0_37 = arith.constant 0 : index
    %c0_38 = arith.constant 0 : index
    %59 = vector.load %arg4[%c20, %c0_37, %c0_38] : memref<25x8x1xf32, #tpu.memory_space<vmem>>, vector<1x8x1xf32>
    %60 = vector.shape_cast %59 : vector<1x8x1xf32> to vector<8x1xf32>
    %61 = vector.broadcast %60 : vector<8x1xf32> to vector<8x256xf32>
    %62 = arith.mulf %58, %61 : vector<8x256xf32>
    %63 = arith.addf %57, %62 : vector<8x256xf32>
    %c-2_i32 = arith.constant -2 : i32
    %64 = vector.broadcast %c-2_i32 : i32 to vector<1x256xi32>
    %65 = arith.addi %18, %64 : vector<1x256xi32>
    %c0_i32_39 = arith.constant 0 : i32
    %66 = vector.broadcast %c0_i32_39 : i32 to vector<1x256xi32>
    %67 = arith.cmpi sge, %65, %66 : vector<1x256xi32>
    %c-2_i32_40 = arith.constant -2 : i32
    %68 = vector.broadcast %c-2_i32_40 : i32 to vector<1x256xi32>
    %69 = arith.addi %18, %68 : vector<1x256xi32>
    %c16_i32_41 = arith.constant 16 : i32
    %70 = vector.broadcast %c16_i32_41 : i32 to vector<1x256xi32>
    %71 = arith.cmpi slt, %69, %70 : vector<1x256xi32>
    %72 = arith.andi %67, %71 : vector<1x256xi1>
    %73 = arith.extui %72 : vector<1x256xi1> to vector<1x256xi32>
    %74 = arith.sitofp %73 : vector<1x256xi32> to vector<1x256xf32>
    %75 = vector.broadcast %74 : vector<1x256xf32> to vector<8x256xf32>
    %76 = arith.mulf %63, %75 : vector<8x256xf32>
    %77 = arith.addf %32, %76 : vector<8x256xf32>
    %cst_42 = arith.constant 0.000000e+00 : f32
    %78 = vector.broadcast %cst_42 : f32 to vector<8x256xf32>
    %c0_43 = arith.constant 0 : index
    %c95 = arith.constant 95 : index
    %79 = vector.load %arg12[%c0_43, %c95] : memref<8x512xf32, #tpu.memory_space<vmem>>, vector<8x256xf32>
    %c1 = arith.constant 1 : index
    %c0_44 = arith.constant 0 : index
    %c0_45 = arith.constant 0 : index
    %80 = vector.load %arg4[%c1, %c0_44, %c0_45] : memref<25x8x1xf32, #tpu.memory_space<vmem>>, vector<1x8x1xf32>
    %81 = vector.shape_cast %80 : vector<1x8x1xf32> to vector<8x1xf32>
    %82 = vector.broadcast %81 : vector<8x1xf32> to vector<8x256xf32>
    %83 = arith.mulf %79, %82 : vector<8x256xf32>
    %84 = arith.addf %78, %83 : vector<8x256xf32>
    %c0_46 = arith.constant 0 : index
    %c111 = arith.constant 111 : index
    %85 = vector.load %arg12[%c0_46, %c111] : memref<8x512xf32, #tpu.memory_space<vmem>>, vector<8x256xf32>
    %c6 = arith.constant 6 : index
    %c0_47 = arith.constant 0 : index
    %c0_48 = arith.constant 0 : index
    %86 = vector.load %arg4[%c6, %c0_47, %c0_48] : memref<25x8x1xf32, #tpu.memory_space<vmem>>, vector<1x8x1xf32>
    %87 = vector.shape_cast %86 : vector<1x8x1xf32> to vector<8x1xf32>
    %88 = vector.broadcast %87 : vector<8x1xf32> to vector<8x256xf32>
    %89 = arith.mulf %85, %88 : vector<8x256xf32>
    %90 = arith.addf %84, %89 : vector<8x256xf32>
    %c0_49 = arith.constant 0 : index
    %c127 = arith.constant 127 : index
    %91 = vector.load %arg12[%c0_49, %c127] : memref<8x512xf32, #tpu.memory_space<vmem>>, vector<8x256xf32>
    %c11 = arith.constant 11 : index
    %c0_50 = arith.constant 0 : index
    %c0_51 = arith.constant 0 : index
    %92 = vector.load %arg4[%c11, %c0_50, %c0_51] : memref<25x8x1xf32, #tpu.memory_space<vmem>>, vector<1x8x1xf32>
    %93 = vector.shape_cast %92 : vector<1x8x1xf32> to vector<8x1xf32>
    %94 = vector.broadcast %93 : vector<8x1xf32> to vector<8x256xf32>
    %95 = arith.mulf %91, %94 : vector<8x256xf32>
    %96 = arith.addf %90, %95 : vector<8x256xf32>
    %c0_52 = arith.constant 0 : index
    %c143 = arith.constant 143 : index
    %97 = vector.load %arg12[%c0_52, %c143] : memref<8x512xf32, #tpu.memory_space<vmem>>, vector<8x256xf32>
    %c16 = arith.constant 16 : index
    %c0_53 = arith.constant 0 : index
    %c0_54 = arith.constant 0 : index
    %98 = vector.load %arg4[%c16, %c0_53, %c0_54] : memref<25x8x1xf32, #tpu.memory_space<vmem>>, vector<1x8x1xf32>
    %99 = vector.shape_cast %98 : vector<1x8x1xf32> to vector<8x1xf32>
    %100 = vector.broadcast %99 : vector<8x1xf32> to vector<8x256xf32>
    %101 = arith.mulf %97, %100 : vector<8x256xf32>
    %102 = arith.addf %96, %101 : vector<8x256xf32>
    %c0_55 = arith.constant 0 : index
    %c159 = arith.constant 159 : index
    %103 = vector.load %arg12[%c0_55, %c159] : memref<8x512xf32, #tpu.memory_space<vmem>>, vector<8x256xf32>
    %c21 = arith.constant 21 : index
    %c0_56 = arith.constant 0 : index
    %c0_57 = arith.constant 0 : index
    %104 = vector.load %arg4[%c21, %c0_56, %c0_57] : memref<25x8x1xf32, #tpu.memory_space<vmem>>, vector<1x8x1xf32>
    %105 = vector.shape_cast %104 : vector<1x8x1xf32> to vector<8x1xf32>
    %106 = vector.broadcast %105 : vector<8x1xf32> to vector<8x256xf32>
    %107 = arith.mulf %103, %106 : vector<8x256xf32>
    %108 = arith.addf %102, %107 : vector<8x256xf32>
    %c-1_i32 = arith.constant -1 : i32
    %109 = vector.broadcast %c-1_i32 : i32 to vector<1x256xi32>
    %110 = arith.addi %18, %109 : vector<1x256xi32>
    %c0_i32_58 = arith.constant 0 : i32
    %111 = vector.broadcast %c0_i32_58 : i32 to vector<1x256xi32>
    %112 = arith.cmpi sge, %110, %111 : vector<1x256xi32>
    %c-1_i32_59 = arith.constant -1 : i32
    %113 = vector.broadcast %c-1_i32_59 : i32 to vector<1x256xi32>
    %114 = arith.addi %18, %113 : vector<1x256xi32>
    %c16_i32_60 = arith.constant 16 : i32
    %115 = vector.broadcast %c16_i32_60 : i32 to vector<1x256xi32>
    %116 = arith.cmpi slt, %114, %115 : vector<1x256xi32>
    %117 = arith.andi %112, %116 : vector<1x256xi1>
    %118 = arith.extui %117 : vector<1x256xi1> to vector<1x256xi32>
    %119 = arith.sitofp %118 : vector<1x256xi32> to vector<1x256xf32>
    %120 = vector.broadcast %119 : vector<1x256xf32> to vector<8x256xf32>
    %121 = arith.mulf %108, %120 : vector<8x256xf32>
    %122 = arith.addf %77, %121 : vector<8x256xf32>
    %cst_61 = arith.constant 0.000000e+00 : f32
    %123 = vector.broadcast %cst_61 : f32 to vector<8x256xf32>
    %c0_62 = arith.constant 0 : index
    %c96 = arith.constant 96 : index
    %124 = vector.load %arg12[%c0_62, %c96] : memref<8x512xf32, #tpu.memory_space<vmem>>, vector<8x256xf32>
    %c2 = arith.constant 2 : index
    %c0_63 = arith.constant 0 : index
    %c0_64 = arith.constant 0 : index
    %125 = vector.load %arg4[%c2, %c0_63, %c0_64] : memref<25x8x1xf32, #tpu.memory_space<vmem>>, vector<1x8x1xf32>
    %126 = vector.shape_cast %125 : vector<1x8x1xf32> to vector<8x1xf32>
    %127 = vector.broadcast %126 : vector<8x1xf32> to vector<8x256xf32>
    %128 = arith.mulf %124, %127 : vector<8x256xf32>
    %129 = arith.addf %123, %128 : vector<8x256xf32>
    %c0_65 = arith.constant 0 : index
    %c112 = arith.constant 112 : index
    %130 = vector.load %arg12[%c0_65, %c112] : memref<8x512xf32, #tpu.memory_space<vmem>>, vector<8x256xf32>
    %c7 = arith.constant 7 : index
    %c0_66 = arith.constant 0 : index
    %c0_67 = arith.constant 0 : index
    %131 = vector.load %arg4[%c7, %c0_66, %c0_67] : memref<25x8x1xf32, #tpu.memory_space<vmem>>, vector<1x8x1xf32>
    %132 = vector.shape_cast %131 : vector<1x8x1xf32> to vector<8x1xf32>
    %133 = vector.broadcast %132 : vector<8x1xf32> to vector<8x256xf32>
    %134 = arith.mulf %130, %133 : vector<8x256xf32>
    %135 = arith.addf %129, %134 : vector<8x256xf32>
    %c0_68 = arith.constant 0 : index
    %c128_69 = arith.constant 128 : index
    %136 = vector.load %arg12[%c0_68, %c128_69] : memref<8x512xf32, #tpu.memory_space<vmem>>, vector<8x256xf32>
    %c12 = arith.constant 12 : index
    %c0_70 = arith.constant 0 : index
    %c0_71 = arith.constant 0 : index
    %137 = vector.load %arg4[%c12, %c0_70, %c0_71] : memref<25x8x1xf32, #tpu.memory_space<vmem>>, vector<1x8x1xf32>
    %138 = vector.shape_cast %137 : vector<1x8x1xf32> to vector<8x1xf32>
    %139 = vector.broadcast %138 : vector<8x1xf32> to vector<8x256xf32>
    %140 = arith.mulf %136, %139 : vector<8x256xf32>
    %141 = arith.addf %135, %140 : vector<8x256xf32>
    %c0_72 = arith.constant 0 : index
    %c144 = arith.constant 144 : index
    %142 = vector.load %arg12[%c0_72, %c144] : memref<8x512xf32, #tpu.memory_space<vmem>>, vector<8x256xf32>
    %c17 = arith.constant 17 : index
    %c0_73 = arith.constant 0 : index
    %c0_74 = arith.constant 0 : index
    %143 = vector.load %arg4[%c17, %c0_73, %c0_74] : memref<25x8x1xf32, #tpu.memory_space<vmem>>, vector<1x8x1xf32>
    %144 = vector.shape_cast %143 : vector<1x8x1xf32> to vector<8x1xf32>
    %145 = vector.broadcast %144 : vector<8x1xf32> to vector<8x256xf32>
    %146 = arith.mulf %142, %145 : vector<8x256xf32>
    %147 = arith.addf %141, %146 : vector<8x256xf32>
    %c0_75 = arith.constant 0 : index
    %c160 = arith.constant 160 : index
    %148 = vector.load %arg12[%c0_75, %c160] : memref<8x512xf32, #tpu.memory_space<vmem>>, vector<8x256xf32>
    %c22 = arith.constant 22 : index
    %c0_76 = arith.constant 0 : index
    %c0_77 = arith.constant 0 : index
    %149 = vector.load %arg4[%c22, %c0_76, %c0_77] : memref<25x8x1xf32, #tpu.memory_space<vmem>>, vector<1x8x1xf32>
    %150 = vector.shape_cast %149 : vector<1x8x1xf32> to vector<8x1xf32>
    %151 = vector.broadcast %150 : vector<8x1xf32> to vector<8x256xf32>
    %152 = arith.mulf %148, %151 : vector<8x256xf32>
    %153 = arith.addf %147, %152 : vector<8x256xf32>
    %c0_i32_78 = arith.constant 0 : i32
    %154 = vector.broadcast %c0_i32_78 : i32 to vector<1x256xi32>
    %155 = arith.addi %18, %154 : vector<1x256xi32>
    %c0_i32_79 = arith.constant 0 : i32
    %156 = vector.broadcast %c0_i32_79 : i32 to vector<1x256xi32>
    %157 = arith.cmpi sge, %155, %156 : vector<1x256xi32>
    %c0_i32_80 = arith.constant 0 : i32
    %158 = vector.broadcast %c0_i32_80 : i32 to vector<1x256xi32>
    %159 = arith.addi %18, %158 : vector<1x256xi32>
    %c16_i32_81 = arith.constant 16 : i32
    %160 = vector.broadcast %c16_i32_81 : i32 to vector<1x256xi32>
    %161 = arith.cmpi slt, %159, %160 : vector<1x256xi32>
    %162 = arith.andi %157, %161 : vector<1x256xi1>
    %163 = arith.extui %162 : vector<1x256xi1> to vector<1x256xi32>
    %164 = arith.sitofp %163 : vector<1x256xi32> to vector<1x256xf32>
    %165 = vector.broadcast %164 : vector<1x256xf32> to vector<8x256xf32>
    %166 = arith.mulf %153, %165 : vector<8x256xf32>
    %167 = arith.addf %122, %166 : vector<8x256xf32>
    %cst_82 = arith.constant 0.000000e+00 : f32
    %168 = vector.broadcast %cst_82 : f32 to vector<8x256xf32>
    %c0_83 = arith.constant 0 : index
    %c97 = arith.constant 97 : index
    %169 = vector.load %arg12[%c0_83, %c97] : memref<8x512xf32, #tpu.memory_space<vmem>>, vector<8x256xf32>
    %c3 = arith.constant 3 : index
    %c0_84 = arith.constant 0 : index
    %c0_85 = arith.constant 0 : index
    %170 = vector.load %arg4[%c3, %c0_84, %c0_85] : memref<25x8x1xf32, #tpu.memory_space<vmem>>, vector<1x8x1xf32>
    %171 = vector.shape_cast %170 : vector<1x8x1xf32> to vector<8x1xf32>
    %172 = vector.broadcast %171 : vector<8x1xf32> to vector<8x256xf32>
    %173 = arith.mulf %169, %172 : vector<8x256xf32>
    %174 = arith.addf %168, %173 : vector<8x256xf32>
    %c0_86 = arith.constant 0 : index
    %c113 = arith.constant 113 : index
    %175 = vector.load %arg12[%c0_86, %c113] : memref<8x512xf32, #tpu.memory_space<vmem>>, vector<8x256xf32>
    %c8 = arith.constant 8 : index
    %c0_87 = arith.constant 0 : index
    %c0_88 = arith.constant 0 : index
    %176 = vector.load %arg4[%c8, %c0_87, %c0_88] : memref<25x8x1xf32, #tpu.memory_space<vmem>>, vector<1x8x1xf32>
    %177 = vector.shape_cast %176 : vector<1x8x1xf32> to vector<8x1xf32>
    %178 = vector.broadcast %177 : vector<8x1xf32> to vector<8x256xf32>
    %179 = arith.mulf %175, %178 : vector<8x256xf32>
    %180 = arith.addf %174, %179 : vector<8x256xf32>
    %c0_89 = arith.constant 0 : index
    %c129 = arith.constant 129 : index
    %181 = vector.load %arg12[%c0_89, %c129] : memref<8x512xf32, #tpu.memory_space<vmem>>, vector<8x256xf32>
    %c13 = arith.constant 13 : index
    %c0_90 = arith.constant 0 : index
    %c0_91 = arith.constant 0 : index
    %182 = vector.load %arg4[%c13, %c0_90, %c0_91] : memref<25x8x1xf32, #tpu.memory_space<vmem>>, vector<1x8x1xf32>
    %183 = vector.shape_cast %182 : vector<1x8x1xf32> to vector<8x1xf32>
    %184 = vector.broadcast %183 : vector<8x1xf32> to vector<8x256xf32>
    %185 = arith.mulf %181, %184 : vector<8x256xf32>
    %186 = arith.addf %180, %185 : vector<8x256xf32>
    %c0_92 = arith.constant 0 : index
    %c145 = arith.constant 145 : index
    %187 = vector.load %arg12[%c0_92, %c145] : memref<8x512xf32, #tpu.memory_space<vmem>>, vector<8x256xf32>
    %c18 = arith.constant 18 : index
    %c0_93 = arith.constant 0 : index
    %c0_94 = arith.constant 0 : index
    %188 = vector.load %arg4[%c18, %c0_93, %c0_94] : memref<25x8x1xf32, #tpu.memory_space<vmem>>, vector<1x8x1xf32>
    %189 = vector.shape_cast %188 : vector<1x8x1xf32> to vector<8x1xf32>
    %190 = vector.broadcast %189 : vector<8x1xf32> to vector<8x256xf32>
    %191 = arith.mulf %187, %190 : vector<8x256xf32>
    %192 = arith.addf %186, %191 : vector<8x256xf32>
    %c0_95 = arith.constant 0 : index
    %c161 = arith.constant 161 : index
    %193 = vector.load %arg12[%c0_95, %c161] : memref<8x512xf32, #tpu.memory_space<vmem>>, vector<8x256xf32>
    %c23 = arith.constant 23 : index
    %c0_96 = arith.constant 0 : index
    %c0_97 = arith.constant 0 : index
    %194 = vector.load %arg4[%c23, %c0_96, %c0_97] : memref<25x8x1xf32, #tpu.memory_space<vmem>>, vector<1x8x1xf32>
    %195 = vector.shape_cast %194 : vector<1x8x1xf32> to vector<8x1xf32>
    %196 = vector.broadcast %195 : vector<8x1xf32> to vector<8x256xf32>
    %197 = arith.mulf %193, %196 : vector<8x256xf32>
    %198 = arith.addf %192, %197 : vector<8x256xf32>
    %c1_i32_98 = arith.constant 1 : i32
    %199 = vector.broadcast %c1_i32_98 : i32 to vector<1x256xi32>
    %200 = arith.addi %18, %199 : vector<1x256xi32>
    %c0_i32_99 = arith.constant 0 : i32
    %201 = vector.broadcast %c0_i32_99 : i32 to vector<1x256xi32>
    %202 = arith.cmpi sge, %200, %201 : vector<1x256xi32>
    %c1_i32_100 = arith.constant 1 : i32
    %203 = vector.broadcast %c1_i32_100 : i32 to vector<1x256xi32>
    %204 = arith.addi %18, %203 : vector<1x256xi32>
    %c16_i32_101 = arith.constant 16 : i32
    %205 = vector.broadcast %c16_i32_101 : i32 to vector<1x256xi32>
    %206 = arith.cmpi slt, %204, %205 : vector<1x256xi32>
    %207 = arith.andi %202, %206 : vector<1x256xi1>
    %208 = arith.extui %207 : vector<1x256xi1> to vector<1x256xi32>
    %209 = arith.sitofp %208 : vector<1x256xi32> to vector<1x256xf32>
    %210 = vector.broadcast %209 : vector<1x256xf32> to vector<8x256xf32>
    %211 = arith.mulf %198, %210 : vector<8x256xf32>
    %212 = arith.addf %167, %211 : vector<8x256xf32>
    %cst_102 = arith.constant 0.000000e+00 : f32
    %213 = vector.broadcast %cst_102 : f32 to vector<8x256xf32>
    %c0_103 = arith.constant 0 : index
    %c98 = arith.constant 98 : index
    %214 = vector.load %arg12[%c0_103, %c98] : memref<8x512xf32, #tpu.memory_space<vmem>>, vector<8x256xf32>
    %c4 = arith.constant 4 : index
    %c0_104 = arith.constant 0 : index
    %c0_105 = arith.constant 0 : index
    %215 = vector.load %arg4[%c4, %c0_104, %c0_105] : memref<25x8x1xf32, #tpu.memory_space<vmem>>, vector<1x8x1xf32>
    %216 = vector.shape_cast %215 : vector<1x8x1xf32> to vector<8x1xf32>
    %217 = vector.broadcast %216 : vector<8x1xf32> to vector<8x256xf32>
    %218 = arith.mulf %214, %217 : vector<8x256xf32>
    %219 = arith.addf %213, %218 : vector<8x256xf32>
    %c0_106 = arith.constant 0 : index
    %c114 = arith.constant 114 : index
    %220 = vector.load %arg12[%c0_106, %c114] : memref<8x512xf32, #tpu.memory_space<vmem>>, vector<8x256xf32>
    %c9 = arith.constant 9 : index
    %c0_107 = arith.constant 0 : index
    %c0_108 = arith.constant 0 : index
    %221 = vector.load %arg4[%c9, %c0_107, %c0_108] : memref<25x8x1xf32, #tpu.memory_space<vmem>>, vector<1x8x1xf32>
    %222 = vector.shape_cast %221 : vector<1x8x1xf32> to vector<8x1xf32>
    %223 = vector.broadcast %222 : vector<8x1xf32> to vector<8x256xf32>
    %224 = arith.mulf %220, %223 : vector<8x256xf32>
    %225 = arith.addf %219, %224 : vector<8x256xf32>
    %c0_109 = arith.constant 0 : index
    %c130 = arith.constant 130 : index
    %226 = vector.load %arg12[%c0_109, %c130] : memref<8x512xf32, #tpu.memory_space<vmem>>, vector<8x256xf32>
    %c14 = arith.constant 14 : index
    %c0_110 = arith.constant 0 : index
    %c0_111 = arith.constant 0 : index
    %227 = vector.load %arg4[%c14, %c0_110, %c0_111] : memref<25x8x1xf32, #tpu.memory_space<vmem>>, vector<1x8x1xf32>
    %228 = vector.shape_cast %227 : vector<1x8x1xf32> to vector<8x1xf32>
    %229 = vector.broadcast %228 : vector<8x1xf32> to vector<8x256xf32>
    %230 = arith.mulf %226, %229 : vector<8x256xf32>
    %231 = arith.addf %225, %230 : vector<8x256xf32>
    %c0_112 = arith.constant 0 : index
    %c146 = arith.constant 146 : index
    %232 = vector.load %arg12[%c0_112, %c146] : memref<8x512xf32, #tpu.memory_space<vmem>>, vector<8x256xf32>
    %c19 = arith.constant 19 : index
    %c0_113 = arith.constant 0 : index
    %c0_114 = arith.constant 0 : index
    %233 = vector.load %arg4[%c19, %c0_113, %c0_114] : memref<25x8x1xf32, #tpu.memory_space<vmem>>, vector<1x8x1xf32>
    %234 = vector.shape_cast %233 : vector<1x8x1xf32> to vector<8x1xf32>
    %235 = vector.broadcast %234 : vector<8x1xf32> to vector<8x256xf32>
    %236 = arith.mulf %232, %235 : vector<8x256xf32>
    %237 = arith.addf %231, %236 : vector<8x256xf32>
    %c0_115 = arith.constant 0 : index
    %c162 = arith.constant 162 : index
    %238 = vector.load %arg12[%c0_115, %c162] : memref<8x512xf32, #tpu.memory_space<vmem>>, vector<8x256xf32>
    %c24 = arith.constant 24 : index
    %c0_116 = arith.constant 0 : index
    %c0_117 = arith.constant 0 : index
    %239 = vector.load %arg4[%c24, %c0_116, %c0_117] : memref<25x8x1xf32, #tpu.memory_space<vmem>>, vector<1x8x1xf32>
    %240 = vector.shape_cast %239 : vector<1x8x1xf32> to vector<8x1xf32>
    %241 = vector.broadcast %240 : vector<8x1xf32> to vector<8x256xf32>
    %242 = arith.mulf %238, %241 : vector<8x256xf32>
    %243 = arith.addf %237, %242 : vector<8x256xf32>
    %c2_i32 = arith.constant 2 : i32
    %244 = vector.broadcast %c2_i32 : i32 to vector<1x256xi32>
    %245 = arith.addi %18, %244 : vector<1x256xi32>
    %c0_i32_118 = arith.constant 0 : i32
    %246 = vector.broadcast %c0_i32_118 : i32 to vector<1x256xi32>
    %247 = arith.cmpi sge, %245, %246 : vector<1x256xi32>
    %c2_i32_119 = arith.constant 2 : i32
    %248 = vector.broadcast %c2_i32_119 : i32 to vector<1x256xi32>
    %249 = arith.addi %18, %248 : vector<1x256xi32>
    %c16_i32_120 = arith.constant 16 : i32
    %250 = vector.broadcast %c16_i32_120 : i32 to vector<1x256xi32>
    %251 = arith.cmpi slt, %249, %250 : vector<1x256xi32>
    %252 = arith.andi %247, %251 : vector<1x256xi1>
    %253 = arith.extui %252 : vector<1x256xi1> to vector<1x256xi32>
    %254 = arith.sitofp %253 : vector<1x256xi32> to vector<1x256xf32>
    %255 = vector.broadcast %254 : vector<1x256xf32> to vector<8x256xf32>
    %256 = arith.mulf %243, %255 : vector<8x256xf32>
    %257 = arith.addf %212, %256 : vector<8x256xf32>
    %c0_121 = arith.constant 0 : index
    %c0_122 = arith.constant 0 : index
    %258 = vector.load %arg5[%c0_121, %c0_122] : memref<8x1xf32, #tpu.memory_space<vmem>>, vector<8x1xf32>
    %259 = vector.broadcast %258 : vector<8x1xf32> to vector<8x256xf32>
    %260 = arith.addf %257, %259 : vector<8x256xf32>
    %c0_123 = arith.constant 0 : index
    %c256 = arith.constant 256 : index
    %261 = vector.load %arg13[%c0_123, %c256] : memref<8x768xf32, #tpu.memory_space<vmem>>, vector<8x256xf32>
    tpu.vector_store %arg13[%c0_123, %c256], %260 {strides = array<i32>} : memref<8x768xf32, #tpu.memory_space<vmem>>, vector<8x256xf32>,
    %cst_124 = arith.constant 0.000000e+00 : f32
    %262 = vector.broadcast %cst_124 : f32 to vector<8x256xf32>
    %cst_125 = arith.constant 0.000000e+00 : f32
    %263 = vector.broadcast %cst_125 : f32 to vector<8x256xf32>
    %c0_126 = arith.constant 0 : index
    %c103 = arith.constant 103 : index
    %264 = vector.load %arg13[%c0_126, %c103] : memref<8x768xf32, #tpu.memory_space<vmem>>, vector<8x256xf32>
    %c0_127 = arith.constant 0 : index
    %c0_128 = arith.constant 0 : index
    %c0_129 = arith.constant 0 : index
    %265 = vector.load %arg6[%c0_127, %c0_128, %c0_129] : memref<49x8x1xf32, #tpu.memory_space<vmem>>, vector<1x8x1xf32>
    %266 = vector.shape_cast %265 : vector<1x8x1xf32> to vector<8x1xf32>
    %267 = vector.broadcast %266 : vector<8x1xf32> to vector<8x256xf32>
    %268 = arith.mulf %264, %267 : vector<8x256xf32>
    %269 = arith.addf %263, %268 : vector<8x256xf32>
    %c0_130 = arith.constant 0 : index
    %c151 = arith.constant 151 : index
    %270 = vector.load %arg13[%c0_130, %c151] : memref<8x768xf32, #tpu.memory_space<vmem>>, vector<8x256xf32>
    %c7_131 = arith.constant 7 : index
    %c0_132 = arith.constant 0 : index
    %c0_133 = arith.constant 0 : index
    %271 = vector.load %arg6[%c7_131, %c0_132, %c0_133] : memref<49x8x1xf32, #tpu.memory_space<vmem>>, vector<1x8x1xf32>
    %272 = vector.shape_cast %271 : vector<1x8x1xf32> to vector<8x1xf32>
    %273 = vector.broadcast %272 : vector<8x1xf32> to vector<8x256xf32>
    %274 = arith.mulf %270, %273 : vector<8x256xf32>
    %275 = arith.addf %269, %274 : vector<8x256xf32>
    %c0_134 = arith.constant 0 : index
    %c199 = arith.constant 199 : index
    %276 = vector.load %arg13[%c0_134, %c199] : memref<8x768xf32, #tpu.memory_space<vmem>>, vector<8x256xf32>
    %c14_135 = arith.constant 14 : index
    %c0_136 = arith.constant 0 : index
    %c0_137 = arith.constant 0 : index
    %277 = vector.load %arg6[%c14_135, %c0_136, %c0_137] : memref<49x8x1xf32, #tpu.memory_space<vmem>>, vector<1x8x1xf32>
    %278 = vector.shape_cast %277 : vector<1x8x1xf32> to vector<8x1xf32>
    %279 = vector.broadcast %278 : vector<8x1xf32> to vector<8x256xf32>
    %280 = arith.mulf %276, %279 : vector<8x256xf32>
    %281 = arith.addf %275, %280 : vector<8x256xf32>
    %c0_138 = arith.constant 0 : index
    %c247 = arith.constant 247 : index
    %282 = vector.load %arg13[%c0_138, %c247] : memref<8x768xf32, #tpu.memory_space<vmem>>, vector<8x256xf32>
    %c21_139 = arith.constant 21 : index
    %c0_140 = arith.constant 0 : index
    %c0_141 = arith.constant 0 : index
    %283 = vector.load %arg6[%c21_139, %c0_140, %c0_141] : memref<49x8x1xf32, #tpu.memory_space<vmem>>, vector<1x8x1xf32>
    %284 = vector.shape_cast %283 : vector<1x8x1xf32> to vector<8x1xf32>
    %285 = vector.broadcast %284 : vector<8x1xf32> to vector<8x256xf32>
    %286 = arith.mulf %282, %285 : vector<8x256xf32>
    %287 = arith.addf %281, %286 : vector<8x256xf32>
    %c0_142 = arith.constant 0 : index
    %c295 = arith.constant 295 : index
    %288 = vector.load %arg13[%c0_142, %c295] : memref<8x768xf32, #tpu.memory_space<vmem>>, vector<8x256xf32>
    %c28 = arith.constant 28 : index
    %c0_143 = arith.constant 0 : index
    %c0_144 = arith.constant 0 : index
    %289 = vector.load %arg6[%c28, %c0_143, %c0_144] : memref<49x8x1xf32, #tpu.memory_space<vmem>>, vector<1x8x1xf32>
    %290 = vector.shape_cast %289 : vector<1x8x1xf32> to vector<8x1xf32>
    %291 = vector.broadcast %290 : vector<8x1xf32> to vector<8x256xf32>
    %292 = arith.mulf %288, %291 : vector<8x256xf32>
    %293 = arith.addf %287, %292 : vector<8x256xf32>
    %c0_145 = arith.constant 0 : index
    %c343 = arith.constant 343 : index
    %294 = vector.load %arg13[%c0_145, %c343] : memref<8x768xf32, #tpu.memory_space<vmem>>, vector<8x256xf32>
    %c35 = arith.constant 35 : index
    %c0_146 = arith.constant 0 : index
    %c0_147 = arith.constant 0 : index
    %295 = vector.load %arg6[%c35, %c0_146, %c0_147] : memref<49x8x1xf32, #tpu.memory_space<vmem>>, vector<1x8x1xf32>
    %296 = vector.shape_cast %295 : vector<1x8x1xf32> to vector<8x1xf32>
    %297 = vector.broadcast %296 : vector<8x1xf32> to vector<8x256xf32>
    %298 = arith.mulf %294, %297 : vector<8x256xf32>
    %299 = arith.addf %293, %298 : vector<8x256xf32>
    %c0_148 = arith.constant 0 : index
    %c391 = arith.constant 391 : index
    %300 = vector.load %arg13[%c0_148, %c391] : memref<8x768xf32, #tpu.memory_space<vmem>>, vector<8x256xf32>
    %c42 = arith.constant 42 : index
    %c0_149 = arith.constant 0 : index
    %c0_150 = arith.constant 0 : index
    %301 = vector.load %arg6[%c42, %c0_149, %c0_150] : memref<49x8x1xf32, #tpu.memory_space<vmem>>, vector<1x8x1xf32>
    %302 = vector.shape_cast %301 : vector<1x8x1xf32> to vector<8x1xf32>
    %303 = vector.broadcast %302 : vector<8x1xf32> to vector<8x256xf32>
    %304 = arith.mulf %300, %303 : vector<8x256xf32>
    %305 = arith.addf %299, %304 : vector<8x256xf32>
    %c-9_i32 = arith.constant -9 : i32
    %306 = vector.broadcast %c-9_i32 : i32 to vector<1x256xi32>
    %307 = arith.addi %18, %306 : vector<1x256xi32>
    %c0_i32_151 = arith.constant 0 : i32
    %308 = vector.broadcast %c0_i32_151 : i32 to vector<1x256xi32>
    %309 = arith.cmpi sge, %307, %308 : vector<1x256xi32>
    %c-9_i32_152 = arith.constant -9 : i32
    %310 = vector.broadcast %c-9_i32_152 : i32 to vector<1x256xi32>
    %311 = arith.addi %18, %310 : vector<1x256xi32>
    %c16_i32_153 = arith.constant 16 : i32
    %312 = vector.broadcast %c16_i32_153 : i32 to vector<1x256xi32>
    %313 = arith.cmpi slt, %311, %312 : vector<1x256xi32>
    %314 = arith.andi %309, %313 : vector<1x256xi1>
    %315 = arith.extui %314 : vector<1x256xi1> to vector<1x256xi32>
    %316 = arith.sitofp %315 : vector<1x256xi32> to vector<1x256xf32>
    %317 = vector.broadcast %316 : vector<1x256xf32> to vector<8x256xf32>
    %318 = arith.mulf %305, %317 : vector<8x256xf32>
    %319 = arith.addf %262, %318 : vector<8x256xf32>
    %cst_154 = arith.constant 0.000000e+00 : f32
    %320 = vector.broadcast %cst_154 : f32 to vector<8x256xf32>
    %c0_155 = arith.constant 0 : index
    %c106 = arith.constant 106 : index
    %321 = vector.load %arg13[%c0_155, %c106] : memref<8x768xf32, #tpu.memory_space<vmem>>, vector<8x256xf32>
    %c1_156 = arith.constant 1 : index
    %c0_157 = arith.constant 0 : index
    %c0_158 = arith.constant 0 : index
    %322 = vector.load %arg6[%c1_156, %c0_157, %c0_158] : memref<49x8x1xf32, #tpu.memory_space<vmem>>, vector<1x8x1xf32>
    %323 = vector.shape_cast %322 : vector<1x8x1xf32> to vector<8x1xf32>
    %324 = vector.broadcast %323 : vector<8x1xf32> to vector<8x256xf32>
    %325 = arith.mulf %321, %324 : vector<8x256xf32>
    %326 = arith.addf %320, %325 : vector<8x256xf32>
    %c0_159 = arith.constant 0 : index
    %c154 = arith.constant 154 : index
    %327 = vector.load %arg13[%c0_159, %c154] : memref<8x768xf32, #tpu.memory_space<vmem>>, vector<8x256xf32>
    %c8_160 = arith.constant 8 : index
    %c0_161 = arith.constant 0 : index
    %c0_162 = arith.constant 0 : index
    %328 = vector.load %arg6[%c8_160, %c0_161, %c0_162] : memref<49x8x1xf32, #tpu.memory_space<vmem>>, vector<1x8x1xf32>
    %329 = vector.shape_cast %328 : vector<1x8x1xf32> to vector<8x1xf32>
    %330 = vector.broadcast %329 : vector<8x1xf32> to vector<8x256xf32>
    %331 = arith.mulf %327, %330 : vector<8x256xf32>
    %332 = arith.addf %326, %331 : vector<8x256xf32>
    %c0_163 = arith.constant 0 : index
    %c202 = arith.constant 202 : index
    %333 = vector.load %arg13[%c0_163, %c202] : memref<8x768xf32, #tpu.memory_space<vmem>>, vector<8x256xf32>
    %c15_164 = arith.constant 15 : index
    %c0_165 = arith.constant 0 : index
    %c0_166 = arith.constant 0 : index
    %334 = vector.load %arg6[%c15_164, %c0_165, %c0_166] : memref<49x8x1xf32, #tpu.memory_space<vmem>>, vector<1x8x1xf32>
    %335 = vector.shape_cast %334 : vector<1x8x1xf32> to vector<8x1xf32>
    %336 = vector.broadcast %335 : vector<8x1xf32> to vector<8x256xf32>
    %337 = arith.mulf %333, %336 : vector<8x256xf32>
    %338 = arith.addf %332, %337 : vector<8x256xf32>
    %c0_167 = arith.constant 0 : index
    %c250 = arith.constant 250 : index
    %339 = vector.load %arg13[%c0_167, %c250] : memref<8x768xf32, #tpu.memory_space<vmem>>, vector<8x256xf32>
    %c22_168 = arith.constant 22 : index
    %c0_169 = arith.constant 0 : index
    %c0_170 = arith.constant 0 : index
    %340 = vector.load %arg6[%c22_168, %c0_169, %c0_170] : memref<49x8x1xf32, #tpu.memory_space<vmem>>, vector<1x8x1xf32>
    %341 = vector.shape_cast %340 : vector<1x8x1xf32> to vector<8x1xf32>
    %342 = vector.broadcast %341 : vector<8x1xf32> to vector<8x256xf32>
    %343 = arith.mulf %339, %342 : vector<8x256xf32>
    %344 = arith.addf %338, %343 : vector<8x256xf32>
    %c0_171 = arith.constant 0 : index
    %c298 = arith.constant 298 : index
    %345 = vector.load %arg13[%c0_171, %c298] : memref<8x768xf32, #tpu.memory_space<vmem>>, vector<8x256xf32>
    %c29 = arith.constant 29 : index
    %c0_172 = arith.constant 0 : index
    %c0_173 = arith.constant 0 : index
    %346 = vector.load %arg6[%c29, %c0_172, %c0_173] : memref<49x8x1xf32, #tpu.memory_space<vmem>>, vector<1x8x1xf32>
    %347 = vector.shape_cast %346 : vector<1x8x1xf32> to vector<8x1xf32>
    %348 = vector.broadcast %347 : vector<8x1xf32> to vector<8x256xf32>
    %349 = arith.mulf %345, %348 : vector<8x256xf32>
    %350 = arith.addf %344, %349 : vector<8x256xf32>
    %c0_174 = arith.constant 0 : index
    %c346 = arith.constant 346 : index
    %351 = vector.load %arg13[%c0_174, %c346] : memref<8x768xf32, #tpu.memory_space<vmem>>, vector<8x256xf32>
    %c36 = arith.constant 36 : index
    %c0_175 = arith.constant 0 : index
    %c0_176 = arith.constant 0 : index
    %352 = vector.load %arg6[%c36, %c0_175, %c0_176] : memref<49x8x1xf32, #tpu.memory_space<vmem>>, vector<1x8x1xf32>
    %353 = vector.shape_cast %352 : vector<1x8x1xf32> to vector<8x1xf32>
    %354 = vector.broadcast %353 : vector<8x1xf32> to vector<8x256xf32>
    %355 = arith.mulf %351, %354 : vector<8x256xf32>
    %356 = arith.addf %350, %355 : vector<8x256xf32>
    %c0_177 = arith.constant 0 : index
    %c394 = arith.constant 394 : index
    %357 = vector.load %arg13[%c0_177, %c394] : memref<8x768xf32, #tpu.memory_space<vmem>>, vector<8x256xf32>
    %c43 = arith.constant 43 : index
    %c0_178 = arith.constant 0 : index
    %c0_179 = arith.constant 0 : index
    %358 = vector.load %arg6[%c43, %c0_178, %c0_179] : memref<49x8x1xf32, #tpu.memory_space<vmem>>, vector<1x8x1xf32>
    %359 = vector.shape_cast %358 : vector<1x8x1xf32> to vector<8x1xf32>
    %360 = vector.broadcast %359 : vector<8x1xf32> to vector<8x256xf32>
    %361 = arith.mulf %357, %360 : vector<8x256xf32>
    %362 = arith.addf %356, %361 : vector<8x256xf32>
    %c-6_i32 = arith.constant -6 : i32
    %363 = vector.broadcast %c-6_i32 : i32 to vector<1x256xi32>
    %364 = arith.addi %18, %363 : vector<1x256xi32>
    %c0_i32_180 = arith.constant 0 : i32
    %365 = vector.broadcast %c0_i32_180 : i32 to vector<1x256xi32>
    %366 = arith.cmpi sge, %364, %365 : vector<1x256xi32>
    %c-6_i32_181 = arith.constant -6 : i32
    %367 = vector.broadcast %c-6_i32_181 : i32 to vector<1x256xi32>
    %368 = arith.addi %18, %367 : vector<1x256xi32>
    %c16_i32_182 = arith.constant 16 : i32
    %369 = vector.broadcast %c16_i32_182 : i32 to vector<1x256xi32>
    %370 = arith.cmpi slt, %368, %369 : vector<1x256xi32>
    %371 = arith.andi %366, %370 : vector<1x256xi1>
    %372 = arith.extui %371 : vector<1x256xi1> to vector<1x256xi32>
    %373 = arith.sitofp %372 : vector<1x256xi32> to vector<1x256xf32>
    %374 = vector.broadcast %373 : vector<1x256xf32> to vector<8x256xf32>
    %375 = arith.mulf %362, %374 : vector<8x256xf32>
    %376 = arith.addf %319, %375 : vector<8x256xf32>
    %cst_183 = arith.constant 0.000000e+00 : f32
    %377 = vector.broadcast %cst_183 : f32 to vector<8x256xf32>
    %c0_184 = arith.constant 0 : index
    %c109 = arith.constant 109 : index
    %378 = vector.load %arg13[%c0_184, %c109] : memref<8x768xf32, #tpu.memory_space<vmem>>, vector<8x256xf32>
    %c2_185 = arith.constant 2 : index
    %c0_186 = arith.constant 0 : index
    %c0_187 = arith.constant 0 : index
    %379 = vector.load %arg6[%c2_185, %c0_186, %c0_187] : memref<49x8x1xf32, #tpu.memory_space<vmem>>, vector<1x8x1xf32>
    %380 = vector.shape_cast %379 : vector<1x8x1xf32> to vector<8x1xf32>
    %381 = vector.broadcast %380 : vector<8x1xf32> to vector<8x256xf32>
    %382 = arith.mulf %378, %381 : vector<8x256xf32>
    %383 = arith.addf %377, %382 : vector<8x256xf32>
    %c0_188 = arith.constant 0 : index
    %c157 = arith.constant 157 : index
    %384 = vector.load %arg13[%c0_188, %c157] : memref<8x768xf32, #tpu.memory_space<vmem>>, vector<8x256xf32>
    %c9_189 = arith.constant 9 : index
    %c0_190 = arith.constant 0 : index
    %c0_191 = arith.constant 0 : index
    %385 = vector.load %arg6[%c9_189, %c0_190, %c0_191] : memref<49x8x1xf32, #tpu.memory_space<vmem>>, vector<1x8x1xf32>
    %386 = vector.shape_cast %385 : vector<1x8x1xf32> to vector<8x1xf32>
    %387 = vector.broadcast %386 : vector<8x1xf32> to vector<8x256xf32>
    %388 = arith.mulf %384, %387 : vector<8x256xf32>
    %389 = arith.addf %383, %388 : vector<8x256xf32>
    %c0_192 = arith.constant 0 : index
    %c205 = arith.constant 205 : index
    %390 = vector.load %arg13[%c0_192, %c205] : memref<8x768xf32, #tpu.memory_space<vmem>>, vector<8x256xf32>
    %c16_193 = arith.constant 16 : index
    %c0_194 = arith.constant 0 : index
    %c0_195 = arith.constant 0 : index
    %391 = vector.load %arg6[%c16_193, %c0_194, %c0_195] : memref<49x8x1xf32, #tpu.memory_space<vmem>>, vector<1x8x1xf32>
    %392 = vector.shape_cast %391 : vector<1x8x1xf32> to vector<8x1xf32>
    %393 = vector.broadcast %392 : vector<8x1xf32> to vector<8x256xf32>
    %394 = arith.mulf %390, %393 : vector<8x256xf32>
    %395 = arith.addf %389, %394 : vector<8x256xf32>
    %c0_196 = arith.constant 0 : index
    %c253 = arith.constant 253 : index
    %396 = vector.load %arg13[%c0_196, %c253] : memref<8x768xf32, #tpu.memory_space<vmem>>, vector<8x256xf32>
    %c23_197 = arith.constant 23 : index
    %c0_198 = arith.constant 0 : index
    %c0_199 = arith.constant 0 : index
    %397 = vector.load %arg6[%c23_197, %c0_198, %c0_199] : memref<49x8x1xf32, #tpu.memory_space<vmem>>, vector<1x8x1xf32>
    %398 = vector.shape_cast %397 : vector<1x8x1xf32> to vector<8x1xf32>
    %399 = vector.broadcast %398 : vector<8x1xf32> to vector<8x256xf32>
    %400 = arith.mulf %396, %399 : vector<8x256xf32>
    %401 = arith.addf %395, %400 : vector<8x256xf32>
    %c0_200 = arith.constant 0 : index
    %c301 = arith.constant 301 : index
    %402 = vector.load %arg13[%c0_200, %c301] : memref<8x768xf32, #tpu.memory_space<vmem>>, vector<8x256xf32>
    %c30 = arith.constant 30 : index
    %c0_201 = arith.constant 0 : index
    %c0_202 = arith.constant 0 : index
    %403 = vector.load %arg6[%c30, %c0_201, %c0_202] : memref<49x8x1xf32, #tpu.memory_space<vmem>>, vector<1x8x1xf32>
    %404 = vector.shape_cast %403 : vector<1x8x1xf32> to vector<8x1xf32>
    %405 = vector.broadcast %404 : vector<8x1xf32> to vector<8x256xf32>
    %406 = arith.mulf %402, %405 : vector<8x256xf32>
    %407 = arith.addf %401, %406 : vector<8x256xf32>
    %c0_203 = arith.constant 0 : index
    %c349 = arith.constant 349 : index
    %408 = vector.load %arg13[%c0_203, %c349] : memref<8x768xf32, #tpu.memory_space<vmem>>, vector<8x256xf32>
    %c37 = arith.constant 37 : index
    %c0_204 = arith.constant 0 : index
    %c0_205 = arith.constant 0 : index
    %409 = vector.load %arg6[%c37, %c0_204, %c0_205] : memref<49x8x1xf32, #tpu.memory_space<vmem>>, vector<1x8x1xf32>
    %410 = vector.shape_cast %409 : vector<1x8x1xf32> to vector<8x1xf32>
    %411 = vector.broadcast %410 : vector<8x1xf32> to vector<8x256xf32>
    %412 = arith.mulf %408, %411 : vector<8x256xf32>
    %413 = arith.addf %407, %412 : vector<8x256xf32>
    %c0_206 = arith.constant 0 : index
    %c397 = arith.constant 397 : index
    %414 = vector.load %arg13[%c0_206, %c397] : memref<8x768xf32, #tpu.memory_space<vmem>>, vector<8x256xf32>
    %c44 = arith.constant 44 : index
    %c0_207 = arith.constant 0 : index
    %c0_208 = arith.constant 0 : index
    %415 = vector.load %arg6[%c44, %c0_207, %c0_208] : memref<49x8x1xf32, #tpu.memory_space<vmem>>, vector<1x8x1xf32>
    %416 = vector.shape_cast %415 : vector<1x8x1xf32> to vector<8x1xf32>
    %417 = vector.broadcast %416 : vector<8x1xf32> to vector<8x256xf32>
    %418 = arith.mulf %414, %417 : vector<8x256xf32>
    %419 = arith.addf %413, %418 : vector<8x256xf32>
    %c-3_i32 = arith.constant -3 : i32
    %420 = vector.broadcast %c-3_i32 : i32 to vector<1x256xi32>
    %421 = arith.addi %18, %420 : vector<1x256xi32>
    %c0_i32_209 = arith.constant 0 : i32
    %422 = vector.broadcast %c0_i32_209 : i32 to vector<1x256xi32>
    %423 = arith.cmpi sge, %421, %422 : vector<1x256xi32>
    %c-3_i32_210 = arith.constant -3 : i32
    %424 = vector.broadcast %c-3_i32_210 : i32 to vector<1x256xi32>
    %425 = arith.addi %18, %424 : vector<1x256xi32>
    %c16_i32_211 = arith.constant 16 : i32
    %426 = vector.broadcast %c16_i32_211 : i32 to vector<1x256xi32>
    %427 = arith.cmpi slt, %425, %426 : vector<1x256xi32>
    %428 = arith.andi %423, %427 : vector<1x256xi1>
    %429 = arith.extui %428 : vector<1x256xi1> to vector<1x256xi32>
    %430 = arith.sitofp %429 : vector<1x256xi32> to vector<1x256xf32>
    %431 = vector.broadcast %430 : vector<1x256xf32> to vector<8x256xf32>
    %432 = arith.mulf %419, %431 : vector<8x256xf32>
    %433 = arith.addf %376, %432 : vector<8x256xf32>
    %cst_212 = arith.constant 0.000000e+00 : f32
    %434 = vector.broadcast %cst_212 : f32 to vector<8x256xf32>
    %c0_213 = arith.constant 0 : index
    %c112_214 = arith.constant 112 : index
    %435 = vector.load %arg13[%c0_213, %c112_214] : memref<8x768xf32, #tpu.memory_space<vmem>>, vector<8x256xf32>
    %c3_215 = arith.constant 3 : index
    %c0_216 = arith.constant 0 : index
    %c0_217 = arith.constant 0 : index
    %436 = vector.load %arg6[%c3_215, %c0_216, %c0_217] : memref<49x8x1xf32, #tpu.memory_space<vmem>>, vector<1x8x1xf32>
    %437 = vector.shape_cast %436 : vector<1x8x1xf32> to vector<8x1xf32>
    %438 = vector.broadcast %437 : vector<8x1xf32> to vector<8x256xf32>
    %439 = arith.mulf %435, %438 : vector<8x256xf32>
    %440 = arith.addf %434, %439 : vector<8x256xf32>
    %c0_218 = arith.constant 0 : index
    %c160_219 = arith.constant 160 : index
    %441 = vector.load %arg13[%c0_218, %c160_219] : memref<8x768xf32, #tpu.memory_space<vmem>>, vector<8x256xf32>
    %c10_220 = arith.constant 10 : index
    %c0_221 = arith.constant 0 : index
    %c0_222 = arith.constant 0 : index
    %442 = vector.load %arg6[%c10_220, %c0_221, %c0_222] : memref<49x8x1xf32, #tpu.memory_space<vmem>>, vector<1x8x1xf32>
    %443 = vector.shape_cast %442 : vector<1x8x1xf32> to vector<8x1xf32>
    %444 = vector.broadcast %443 : vector<8x1xf32> to vector<8x256xf32>
    %445 = arith.mulf %441, %444 : vector<8x256xf32>
    %446 = arith.addf %440, %445 : vector<8x256xf32>
    %c0_223 = arith.constant 0 : index
    %c208 = arith.constant 208 : index
    %447 = vector.load %arg13[%c0_223, %c208] : memref<8x768xf32, #tpu.memory_space<vmem>>, vector<8x256xf32>
    %c17_224 = arith.constant 17 : index
    %c0_225 = arith.constant 0 : index
    %c0_226 = arith.constant 0 : index
    %448 = vector.load %arg6[%c17_224, %c0_225, %c0_226] : memref<49x8x1xf32, #tpu.memory_space<vmem>>, vector<1x8x1xf32>
    %449 = vector.shape_cast %448 : vector<1x8x1xf32> to vector<8x1xf32>
    %450 = vector.broadcast %449 : vector<8x1xf32> to vector<8x256xf32>
    %451 = arith.mulf %447, %450 : vector<8x256xf32>
    %452 = arith.addf %446, %451 : vector<8x256xf32>
    %c0_227 = arith.constant 0 : index
    %c256_228 = arith.constant 256 : index
    %453 = vector.load %arg13[%c0_227, %c256_228] : memref<8x768xf32, #tpu.memory_space<vmem>>, vector<8x256xf32>
    %c24_229 = arith.constant 24 : index
    %c0_230 = arith.constant 0 : index
    %c0_231 = arith.constant 0 : index
    %454 = vector.load %arg6[%c24_229, %c0_230, %c0_231] : memref<49x8x1xf32, #tpu.memory_space<vmem>>, vector<1x8x1xf32>
    %455 = vector.shape_cast %454 : vector<1x8x1xf32> to vector<8x1xf32>
    %456 = vector.broadcast %455 : vector<8x1xf32> to vector<8x256xf32>
    %457 = arith.mulf %453, %456 : vector<8x256xf32>
    %458 = arith.addf %452, %457 : vector<8x256xf32>
    %c0_232 = arith.constant 0 : index
    %c304 = arith.constant 304 : index
    %459 = vector.load %arg13[%c0_232, %c304] : memref<8x768xf32, #tpu.memory_space<vmem>>, vector<8x256xf32>
    %c31 = arith.constant 31 : index
    %c0_233 = arith.constant 0 : index
    %c0_234 = arith.constant 0 : index
    %460 = vector.load %arg6[%c31, %c0_233, %c0_234] : memref<49x8x1xf32, #tpu.memory_space<vmem>>, vector<1x8x1xf32>
    %461 = vector.shape_cast %460 : vector<1x8x1xf32> to vector<8x1xf32>
    %462 = vector.broadcast %461 : vector<8x1xf32> to vector<8x256xf32>
    %463 = arith.mulf %459, %462 : vector<8x256xf32>
    %464 = arith.addf %458, %463 : vector<8x256xf32>
    %c0_235 = arith.constant 0 : index
    %c352 = arith.constant 352 : index
    %465 = vector.load %arg13[%c0_235, %c352] : memref<8x768xf32, #tpu.memory_space<vmem>>, vector<8x256xf32>
    %c38 = arith.constant 38 : index
    %c0_236 = arith.constant 0 : index
    %c0_237 = arith.constant 0 : index
    %466 = vector.load %arg6[%c38, %c0_236, %c0_237] : memref<49x8x1xf32, #tpu.memory_space<vmem>>, vector<1x8x1xf32>
    %467 = vector.shape_cast %466 : vector<1x8x1xf32> to vector<8x1xf32>
    %468 = vector.broadcast %467 : vector<8x1xf32> to vector<8x256xf32>
    %469 = arith.mulf %465, %468 : vector<8x256xf32>
    %470 = arith.addf %464, %469 : vector<8x256xf32>
    %c0_238 = arith.constant 0 : index
    %c400 = arith.constant 400 : index
    %471 = vector.load %arg13[%c0_238, %c400] : memref<8x768xf32, #tpu.memory_space<vmem>>, vector<8x256xf32>
    %c45 = arith.constant 45 : index
    %c0_239 = arith.constant 0 : index
    %c0_240 = arith.constant 0 : index
    %472 = vector.load %arg6[%c45, %c0_239, %c0_240] : memref<49x8x1xf32, #tpu.memory_space<vmem>>, vector<1x8x1xf32>
    %473 = vector.shape_cast %472 : vector<1x8x1xf32> to vector<8x1xf32>
    %474 = vector.broadcast %473 : vector<8x1xf32> to vector<8x256xf32>
    %475 = arith.mulf %471, %474 : vector<8x256xf32>
    %476 = arith.addf %470, %475 : vector<8x256xf32>
    %c0_i32_241 = arith.constant 0 : i32
    %477 = vector.broadcast %c0_i32_241 : i32 to vector<1x256xi32>
    %478 = arith.addi %18, %477 : vector<1x256xi32>
    %c0_i32_242 = arith.constant 0 : i32
    %479 = vector.broadcast %c0_i32_242 : i32 to vector<1x256xi32>
    %480 = arith.cmpi sge, %478, %479 : vector<1x256xi32>
    %c0_i32_243 = arith.constant 0 : i32
    %481 = vector.broadcast %c0_i32_243 : i32 to vector<1x256xi32>
    %482 = arith.addi %18, %481 : vector<1x256xi32>
    %c16_i32_244 = arith.constant 16 : i32
    %483 = vector.broadcast %c16_i32_244 : i32 to vector<1x256xi32>
    %484 = arith.cmpi slt, %482, %483 : vector<1x256xi32>
    %485 = arith.andi %480, %484 : vector<1x256xi1>
    %486 = arith.extui %485 : vector<1x256xi1> to vector<1x256xi32>
    %487 = arith.sitofp %486 : vector<1x256xi32> to vector<1x256xf32>
    %488 = vector.broadcast %487 : vector<1x256xf32> to vector<8x256xf32>
    %489 = arith.mulf %476, %488 : vector<8x256xf32>
    %490 = arith.addf %433, %489 : vector<8x256xf32>
    %cst_245 = arith.constant 0.000000e+00 : f32
    %491 = vector.broadcast %cst_245 : f32 to vector<8x256xf32>
    %c0_246 = arith.constant 0 : index
    %c115 = arith.constant 115 : index
    %492 = vector.load %arg13[%c0_246, %c115] : memref<8x768xf32, #tpu.memory_space<vmem>>, vector<8x256xf32>
    %c4_247 = arith.constant 4 : index
    %c0_248 = arith.constant 0 : index
    %c0_249 = arith.constant 0 : index
    %493 = vector.load %arg6[%c4_247, %c0_248, %c0_249] : memref<49x8x1xf32, #tpu.memory_space<vmem>>, vector<1x8x1xf32>
    %494 = vector.shape_cast %493 : vector<1x8x1xf32> to vector<8x1xf32>
    %495 = vector.broadcast %494 : vector<8x1xf32> to vector<8x256xf32>
    %496 = arith.mulf %492, %495 : vector<8x256xf32>
    %497 = arith.addf %491, %496 : vector<8x256xf32>
    %c0_250 = arith.constant 0 : index
    %c163 = arith.constant 163 : index
    %498 = vector.load %arg13[%c0_250, %c163] : memref<8x768xf32, #tpu.memory_space<vmem>>, vector<8x256xf32>
    %c11_251 = arith.constant 11 : index
    %c0_252 = arith.constant 0 : index
    %c0_253 = arith.constant 0 : index
    %499 = vector.load %arg6[%c11_251, %c0_252, %c0_253] : memref<49x8x1xf32, #tpu.memory_space<vmem>>, vector<1x8x1xf32>
    %500 = vector.shape_cast %499 : vector<1x8x1xf32> to vector<8x1xf32>
    %501 = vector.broadcast %500 : vector<8x1xf32> to vector<8x256xf32>
    %502 = arith.mulf %498, %501 : vector<8x256xf32>
    %503 = arith.addf %497, %502 : vector<8x256xf32>
    %c0_254 = arith.constant 0 : index
    %c211 = arith.constant 211 : index
    %504 = vector.load %arg13[%c0_254, %c211] : memref<8x768xf32, #tpu.memory_space<vmem>>, vector<8x256xf32>
    %c18_255 = arith.constant 18 : index
    %c0_256 = arith.constant 0 : index
    %c0_257 = arith.constant 0 : index
    %505 = vector.load %arg6[%c18_255, %c0_256, %c0_257] : memref<49x8x1xf32, #tpu.memory_space<vmem>>, vector<1x8x1xf32>
    %506 = vector.shape_cast %505 : vector<1x8x1xf32> to vector<8x1xf32>
    %507 = vector.broadcast %506 : vector<8x1xf32> to vector<8x256xf32>
    %508 = arith.mulf %504, %507 : vector<8x256xf32>
    %509 = arith.addf %503, %508 : vector<8x256xf32>
    %c0_258 = arith.constant 0 : index
    %c259 = arith.constant 259 : index
    %510 = vector.load %arg13[%c0_258, %c259] : memref<8x768xf32, #tpu.memory_space<vmem>>, vector<8x256xf32>
    %c25 = arith.constant 25 : index
    %c0_259 = arith.constant 0 : index
    %c0_260 = arith.constant 0 : index
    %511 = vector.load %arg6[%c25, %c0_259, %c0_260] : memref<49x8x1xf32, #tpu.memory_space<vmem>>, vector<1x8x1xf32>
    %512 = vector.shape_cast %511 : vector<1x8x1xf32> to vector<8x1xf32>
    %513 = vector.broadcast %512 : vector<8x1xf32> to vector<8x256xf32>
    %514 = arith.mulf %510, %513 : vector<8x256xf32>
    %515 = arith.addf %509, %514 : vector<8x256xf32>
    %c0_261 = arith.constant 0 : index
    %c307 = arith.constant 307 : index
    %516 = vector.load %arg13[%c0_261, %c307] : memref<8x768xf32, #tpu.memory_space<vmem>>, vector<8x256xf32>
    %c32 = arith.constant 32 : index
    %c0_262 = arith.constant 0 : index
    %c0_263 = arith.constant 0 : index
    %517 = vector.load %arg6[%c32, %c0_262, %c0_263] : memref<49x8x1xf32, #tpu.memory_space<vmem>>, vector<1x8x1xf32>
    %518 = vector.shape_cast %517 : vector<1x8x1xf32> to vector<8x1xf32>
    %519 = vector.broadcast %518 : vector<8x1xf32> to vector<8x256xf32>
    %520 = arith.mulf %516, %519 : vector<8x256xf32>
    %521 = arith.addf %515, %520 : vector<8x256xf32>
    %c0_264 = arith.constant 0 : index
    %c355 = arith.constant 355 : index
    %522 = vector.load %arg13[%c0_264, %c355] : memref<8x768xf32, #tpu.memory_space<vmem>>, vector<8x256xf32>
    %c39 = arith.constant 39 : index
    %c0_265 = arith.constant 0 : index
    %c0_266 = arith.constant 0 : index
    %523 = vector.load %arg6[%c39, %c0_265, %c0_266] : memref<49x8x1xf32, #tpu.memory_space<vmem>>, vector<1x8x1xf32>
    %524 = vector.shape_cast %523 : vector<1x8x1xf32> to vector<8x1xf32>
    %525 = vector.broadcast %524 : vector<8x1xf32> to vector<8x256xf32>
    %526 = arith.mulf %522, %525 : vector<8x256xf32>
    %527 = arith.addf %521, %526 : vector<8x256xf32>
    %c0_267 = arith.constant 0 : index
    %c403 = arith.constant 403 : index
    %528 = vector.load %arg13[%c0_267, %c403] : memref<8x768xf32, #tpu.memory_space<vmem>>, vector<8x256xf32>
    %c46 = arith.constant 46 : index
    %c0_268 = arith.constant 0 : index
    %c0_269 = arith.constant 0 : index
    %529 = vector.load %arg6[%c46, %c0_268, %c0_269] : memref<49x8x1xf32, #tpu.memory_space<vmem>>, vector<1x8x1xf32>
    %530 = vector.shape_cast %529 : vector<1x8x1xf32> to vector<8x1xf32>
    %531 = vector.broadcast %530 : vector<8x1xf32> to vector<8x256xf32>
    %532 = arith.mulf %528, %531 : vector<8x256xf32>
    %533 = arith.addf %527, %532 : vector<8x256xf32>
    %c3_i32 = arith.constant 3 : i32
    %534 = vector.broadcast %c3_i32 : i32 to vector<1x256xi32>
    %535 = arith.addi %18, %534 : vector<1x256xi32>
    %c0_i32_270 = arith.constant 0 : i32
    %536 = vector.broadcast %c0_i32_270 : i32 to vector<1x256xi32>
    %537 = arith.cmpi sge, %535, %536 : vector<1x256xi32>
    %c3_i32_271 = arith.constant 3 : i32
    %538 = vector.broadcast %c3_i32_271 : i32 to vector<1x256xi32>
    %539 = arith.addi %18, %538 : vector<1x256xi32>
    %c16_i32_272 = arith.constant 16 : i32
    %540 = vector.broadcast %c16_i32_272 : i32 to vector<1x256xi32>
    %541 = arith.cmpi slt, %539, %540 : vector<1x256xi32>
    %542 = arith.andi %537, %541 : vector<1x256xi1>
    %543 = arith.extui %542 : vector<1x256xi1> to vector<1x256xi32>
    %544 = arith.sitofp %543 : vector<1x256xi32> to vector<1x256xf32>
    %545 = vector.broadcast %544 : vector<1x256xf32> to vector<8x256xf32>
    %546 = arith.mulf %533, %545 : vector<8x256xf32>
    %547 = arith.addf %490, %546 : vector<8x256xf32>
    %cst_273 = arith.constant 0.000000e+00 : f32
    %548 = vector.broadcast %cst_273 : f32 to vector<8x256xf32>
    %c0_274 = arith.constant 0 : index
    %c118 = arith.constant 118 : index
    %549 = vector.load %arg13[%c0_274, %c118] : memref<8x768xf32, #tpu.memory_space<vmem>>, vector<8x256xf32>
    %c5_275 = arith.constant 5 : index
    %c0_276 = arith.constant 0 : index
    %c0_277 = arith.constant 0 : index
    %550 = vector.load %arg6[%c5_275, %c0_276, %c0_277] : memref<49x8x1xf32, #tpu.memory_space<vmem>>, vector<1x8x1xf32>
    %551 = vector.shape_cast %550 : vector<1x8x1xf32> to vector<8x1xf32>
    %552 = vector.broadcast %551 : vector<8x1xf32> to vector<8x256xf32>
    %553 = arith.mulf %549, %552 : vector<8x256xf32>
    %554 = arith.addf %548, %553 : vector<8x256xf32>
    %c0_278 = arith.constant 0 : index
    %c166 = arith.constant 166 : index
    %555 = vector.load %arg13[%c0_278, %c166] : memref<8x768xf32, #tpu.memory_space<vmem>>, vector<8x256xf32>
    %c12_279 = arith.constant 12 : index
    %c0_280 = arith.constant 0 : index
    %c0_281 = arith.constant 0 : index
    %556 = vector.load %arg6[%c12_279, %c0_280, %c0_281] : memref<49x8x1xf32, #tpu.memory_space<vmem>>, vector<1x8x1xf32>
    %557 = vector.shape_cast %556 : vector<1x8x1xf32> to vector<8x1xf32>
    %558 = vector.broadcast %557 : vector<8x1xf32> to vector<8x256xf32>
    %559 = arith.mulf %555, %558 : vector<8x256xf32>
    %560 = arith.addf %554, %559 : vector<8x256xf32>
    %c0_282 = arith.constant 0 : index
    %c214 = arith.constant 214 : index
    %561 = vector.load %arg13[%c0_282, %c214] : memref<8x768xf32, #tpu.memory_space<vmem>>, vector<8x256xf32>
    %c19_283 = arith.constant 19 : index
    %c0_284 = arith.constant 0 : index
    %c0_285 = arith.constant 0 : index
    %562 = vector.load %arg6[%c19_283, %c0_284, %c0_285] : memref<49x8x1xf32, #tpu.memory_space<vmem>>, vector<1x8x1xf32>
    %563 = vector.shape_cast %562 : vector<1x8x1xf32> to vector<8x1xf32>
    %564 = vector.broadcast %563 : vector<8x1xf32> to vector<8x256xf32>
    %565 = arith.mulf %561, %564 : vector<8x256xf32>
    %566 = arith.addf %560, %565 : vector<8x256xf32>
    %c0_286 = arith.constant 0 : index
    %c262 = arith.constant 262 : index
    %567 = vector.load %arg13[%c0_286, %c262] : memref<8x768xf32, #tpu.memory_space<vmem>>, vector<8x256xf32>
    %c26 = arith.constant 26 : index
    %c0_287 = arith.constant 0 : index
    %c0_288 = arith.constant 0 : index
    %568 = vector.load %arg6[%c26, %c0_287, %c0_288] : memref<49x8x1xf32, #tpu.memory_space<vmem>>, vector<1x8x1xf32>
    %569 = vector.shape_cast %568 : vector<1x8x1xf32> to vector<8x1xf32>
    %570 = vector.broadcast %569 : vector<8x1xf32> to vector<8x256xf32>
    %571 = arith.mulf %567, %570 : vector<8x256xf32>
    %572 = arith.addf %566, %571 : vector<8x256xf32>
    %c0_289 = arith.constant 0 : index
    %c310 = arith.constant 310 : index
    %573 = vector.load %arg13[%c0_289, %c310] : memref<8x768xf32, #tpu.memory_space<vmem>>, vector<8x256xf32>
    %c33 = arith.constant 33 : index
    %c0_290 = arith.constant 0 : index
    %c0_291 = arith.constant 0 : index
    %574 = vector.load %arg6[%c33, %c0_290, %c0_291] : memref<49x8x1xf32, #tpu.memory_space<vmem>>, vector<1x8x1xf32>
    %575 = vector.shape_cast %574 : vector<1x8x1xf32> to vector<8x1xf32>
    %576 = vector.broadcast %575 : vector<8x1xf32> to vector<8x256xf32>
    %577 = arith.mulf %573, %576 : vector<8x256xf32>
    %578 = arith.addf %572, %577 : vector<8x256xf32>
    %c0_292 = arith.constant 0 : index
    %c358 = arith.constant 358 : index
    %579 = vector.load %arg13[%c0_292, %c358] : memref<8x768xf32, #tpu.memory_space<vmem>>, vector<8x256xf32>
    %c40 = arith.constant 40 : index
    %c0_293 = arith.constant 0 : index
    %c0_294 = arith.constant 0 : index
    %580 = vector.load %arg6[%c40, %c0_293, %c0_294] : memref<49x8x1xf32, #tpu.memory_space<vmem>>, vector<1x8x1xf32>
    %581 = vector.shape_cast %580 : vector<1x8x1xf32> to vector<8x1xf32>
    %582 = vector.broadcast %581 : vector<8x1xf32> to vector<8x256xf32>
    %583 = arith.mulf %579, %582 : vector<8x256xf32>
    %584 = arith.addf %578, %583 : vector<8x256xf32>
    %c0_295 = arith.constant 0 : index
    %c406 = arith.constant 406 : index
    %585 = vector.load %arg13[%c0_295, %c406] : memref<8x768xf32, #tpu.memory_space<vmem>>, vector<8x256xf32>
    %c47 = arith.constant 47 : index
    %c0_296 = arith.constant 0 : index
    %c0_297 = arith.constant 0 : index
    %586 = vector.load %arg6[%c47, %c0_296, %c0_297] : memref<49x8x1xf32, #tpu.memory_space<vmem>>, vector<1x8x1xf32>
    %587 = vector.shape_cast %586 : vector<1x8x1xf32> to vector<8x1xf32>
    %588 = vector.broadcast %587 : vector<8x1xf32> to vector<8x256xf32>
    %589 = arith.mulf %585, %588 : vector<8x256xf32>
    %590 = arith.addf %584, %589 : vector<8x256xf32>
    %c6_i32 = arith.constant 6 : i32
    %591 = vector.broadcast %c6_i32 : i32 to vector<1x256xi32>
    %592 = arith.addi %18, %591 : vector<1x256xi32>
    %c0_i32_298 = arith.constant 0 : i32
    %593 = vector.broadcast %c0_i32_298 : i32 to vector<1x256xi32>
    %594 = arith.cmpi sge, %592, %593 : vector<1x256xi32>
    %c6_i32_299 = arith.constant 6 : i32
    %595 = vector.broadcast %c6_i32_299 : i32 to vector<1x256xi32>
    %596 = arith.addi %18, %595 : vector<1x256xi32>
    %c16_i32_300 = arith.constant 16 : i32
    %597 = vector.broadcast %c16_i32_300 : i32 to vector<1x256xi32>
    %598 = arith.cmpi slt, %596, %597 : vector<1x256xi32>
    %599 = arith.andi %594, %598 : vector<1x256xi1>
    %600 = arith.extui %599 : vector<1x256xi1> to vector<1x256xi32>
    %601 = arith.sitofp %600 : vector<1x256xi32> to vector<1x256xf32>
    %602 = vector.broadcast %601 : vector<1x256xf32> to vector<8x256xf32>
    %603 = arith.mulf %590, %602 : vector<8x256xf32>
    %604 = arith.addf %547, %603 : vector<8x256xf32>
    %cst_301 = arith.constant 0.000000e+00 : f32
    %605 = vector.broadcast %cst_301 : f32 to vector<8x256xf32>
    %c0_302 = arith.constant 0 : index
    %c121 = arith.constant 121 : index
    %606 = vector.load %arg13[%c0_302, %c121] : memref<8x768xf32, #tpu.memory_space<vmem>>, vector<8x256xf32>
    %c6_303 = arith.constant 6 : index
    %c0_304 = arith.constant 0 : index
    %c0_305 = arith.constant 0 : index
    %607 = vector.load %arg6[%c6_303, %c0_304, %c0_305] : memref<49x8x1xf32, #tpu.memory_space<vmem>>, vector<1x8x1xf32>
    %608 = vector.shape_cast %607 : vector<1x8x1xf32> to vector<8x1xf32>
    %609 = vector.broadcast %608 : vector<8x1xf32> to vector<8x256xf32>
    %610 = arith.mulf %606, %609 : vector<8x256xf32>
    %611 = arith.addf %605, %610 : vector<8x256xf32>
    %c0_306 = arith.constant 0 : index
    %c169 = arith.constant 169 : index
    %612 = vector.load %arg13[%c0_306, %c169] : memref<8x768xf32, #tpu.memory_space<vmem>>, vector<8x256xf32>
    %c13_307 = arith.constant 13 : index
    %c0_308 = arith.constant 0 : index
    %c0_309 = arith.constant 0 : index
    %613 = vector.load %arg6[%c13_307, %c0_308, %c0_309] : memref<49x8x1xf32, #tpu.memory_space<vmem>>, vector<1x8x1xf32>
    %614 = vector.shape_cast %613 : vector<1x8x1xf32> to vector<8x1xf32>
    %615 = vector.broadcast %614 : vector<8x1xf32> to vector<8x256xf32>
    %616 = arith.mulf %612, %615 : vector<8x256xf32>
    %617 = arith.addf %611, %616 : vector<8x256xf32>
    %c0_310 = arith.constant 0 : index
    %c217 = arith.constant 217 : index
    %618 = vector.load %arg13[%c0_310, %c217] : memref<8x768xf32, #tpu.memory_space<vmem>>, vector<8x256xf32>
    %c20_311 = arith.constant 20 : index
    %c0_312 = arith.constant 0 : index
    %c0_313 = arith.constant 0 : index
    %619 = vector.load %arg6[%c20_311, %c0_312, %c0_313] : memref<49x8x1xf32, #tpu.memory_space<vmem>>, vector<1x8x1xf32>
    %620 = vector.shape_cast %619 : vector<1x8x1xf32> to vector<8x1xf32>
    %621 = vector.broadcast %620 : vector<8x1xf32> to vector<8x256xf32>
    %622 = arith.mulf %618, %621 : vector<8x256xf32>
    %623 = arith.addf %617, %622 : vector<8x256xf32>
    %c0_314 = arith.constant 0 : index
    %c265 = arith.constant 265 : index
    %624 = vector.load %arg13[%c0_314, %c265] : memref<8x768xf32, #tpu.memory_space<vmem>>, vector<8x256xf32>
    %c27 = arith.constant 27 : index
    %c0_315 = arith.constant 0 : index
    %c0_316 = arith.constant 0 : index
    %625 = vector.load %arg6[%c27, %c0_315, %c0_316] : memref<49x8x1xf32, #tpu.memory_space<vmem>>, vector<1x8x1xf32>
    %626 = vector.shape_cast %625 : vector<1x8x1xf32> to vector<8x1xf32>
    %627 = vector.broadcast %626 : vector<8x1xf32> to vector<8x256xf32>
    %628 = arith.mulf %624, %627 : vector<8x256xf32>
    %629 = arith.addf %623, %628 : vector<8x256xf32>
    %c0_317 = arith.constant 0 : index
    %c313 = arith.constant 313 : index
    %630 = vector.load %arg13[%c0_317, %c313] : memref<8x768xf32, #tpu.memory_space<vmem>>, vector<8x256xf32>
    %c34 = arith.constant 34 : index
    %c0_318 = arith.constant 0 : index
    %c0_319 = arith.constant 0 : index
    %631 = vector.load %arg6[%c34, %c0_318, %c0_319] : memref<49x8x1xf32, #tpu.memory_space<vmem>>, vector<1x8x1xf32>
    %632 = vector.shape_cast %631 : vector<1x8x1xf32> to vector<8x1xf32>
    %633 = vector.broadcast %632 : vector<8x1xf32> to vector<8x256xf32>
    %634 = arith.mulf %630, %633 : vector<8x256xf32>
    %635 = arith.addf %629, %634 : vector<8x256xf32>
    %c0_320 = arith.constant 0 : index
    %c361 = arith.constant 361 : index
    %636 = vector.load %arg13[%c0_320, %c361] : memref<8x768xf32, #tpu.memory_space<vmem>>, vector<8x256xf32>
    %c41 = arith.constant 41 : index
    %c0_321 = arith.constant 0 : index
    %c0_322 = arith.constant 0 : index
    %637 = vector.load %arg6[%c41, %c0_321, %c0_322] : memref<49x8x1xf32, #tpu.memory_space<vmem>>, vector<1x8x1xf32>
    %638 = vector.shape_cast %637 : vector<1x8x1xf32> to vector<8x1xf32>
    %639 = vector.broadcast %638 : vector<8x1xf32> to vector<8x256xf32>
    %640 = arith.mulf %636, %639 : vector<8x256xf32>
    %641 = arith.addf %635, %640 : vector<8x256xf32>
    %c0_323 = arith.constant 0 : index
    %c409 = arith.constant 409 : index
    %642 = vector.load %arg13[%c0_323, %c409] : memref<8x768xf32, #tpu.memory_space<vmem>>, vector<8x256xf32>
    %c48 = arith.constant 48 : index
    %c0_324 = arith.constant 0 : index
    %c0_325 = arith.constant 0 : index
    %643 = vector.load %arg6[%c48, %c0_324, %c0_325] : memref<49x8x1xf32, #tpu.memory_space<vmem>>, vector<1x8x1xf32>
    %644 = vector.shape_cast %643 : vector<1x8x1xf32> to vector<8x1xf32>
    %645 = vector.broadcast %644 : vector<8x1xf32> to vector<8x256xf32>
    %646 = arith.mulf %642, %645 : vector<8x256xf32>
    %647 = arith.addf %641, %646 : vector<8x256xf32>
    %c9_i32 = arith.constant 9 : i32
    %648 = vector.broadcast %c9_i32 : i32 to vector<1x256xi32>
    %649 = arith.addi %18, %648 : vector<1x256xi32>
    %c0_i32_326 = arith.constant 0 : i32
    %650 = vector.broadcast %c0_i32_326 : i32 to vector<1x256xi32>
    %651 = arith.cmpi sge, %649, %650 : vector<1x256xi32>
    %c9_i32_327 = arith.constant 9 : i32
    %652 = vector.broadcast %c9_i32_327 : i32 to vector<1x256xi32>
    %653 = arith.addi %18, %652 : vector<1x256xi32>
    %c16_i32_328 = arith.constant 16 : i32
    %654 = vector.broadcast %c16_i32_328 : i32 to vector<1x256xi32>
    %655 = arith.cmpi slt, %653, %654 : vector<1x256xi32>
    %656 = arith.andi %651, %655 : vector<1x256xi1>
    %657 = arith.extui %656 : vector<1x256xi1> to vector<1x256xi32>
    %658 = arith.sitofp %657 : vector<1x256xi32> to vector<1x256xf32>
    %659 = vector.broadcast %658 : vector<1x256xf32> to vector<8x256xf32>
    %660 = arith.mulf %647, %659 : vector<8x256xf32>
    %661 = arith.addf %604, %660 : vector<8x256xf32>
    %c0_329 = arith.constant 0 : index
    %c0_330 = arith.constant 0 : index
    %662 = vector.load %arg7[%c0_329, %c0_330] : memref<8x1xf32, #tpu.memory_space<vmem>>, vector<8x1xf32>
    %663 = vector.broadcast %662 : vector<8x1xf32> to vector<8x256xf32>
    %664 = arith.addf %661, %663 : vector<8x256xf32>
    %665 = tpu.concatenate %260, %664 in 0 : vector<8x256xf32>, vector<8x256xf32> -> vector<16x256xf32>
    %c0_331 = arith.constant 0 : index
    %c0_332 = arith.constant 0 : index
    %666 = vector.load %arg8[%c0_331, %c0_332] : memref<8x16xf32, #tpu.memory_space<vmem>>, vector<8x16xf32>
    %cst_333 = arith.constant dense<0.000000e+00> : vector<8x256xf32>
    %667 = tpu.matmul %666, %665, %cst_333 {dimension_numbers = #tpu.dot_dimension_numbers<[1], [0], [0], [1], [0, 0, 1, 1], [], []>} : vector<8x16xf32>, vector<16x256xf32>, vector<8x256xf32> -> vector<8x256xf32>
    %c0_334 = arith.constant 0 : index
    %c0_335 = arith.constant 0 : index
    %668 = vector.load %arg9[%c0_334, %c0_335] : memref<8x1xf32, #tpu.memory_space<vmem>>, vector<8x1xf32>
    %669 = vector.broadcast %668 : vector<8x1xf32> to vector<8x256xf32>
    %670 = arith.addf %667, %669 : vector<8x256xf32>
    %671 = vector.extract_strided_slice %670 {offsets = [0, 0], sizes = [4, 256], strides = [1, 1]} : vector<8x256xf32> to vector<4x256xf32>
    %672 = vector.extract_strided_slice %670 {offsets = [4, 0], sizes = [4, 256], strides = [1, 1]} : vector<8x256xf32> to vector<4x256xf32>
    %cst_336 = arith.constant dense<0.000000e+00> : vector<256xf32>
    %673 = vector.multi_reduction <add>, %670, %cst_336 [0] : vector<8x256xf32> to vector<256xf32>
    %674 = vector.shape_cast %673 : vector<256xf32> to vector<1x256xf32>
    %cst_337 = arith.constant 8.000000e+00 : f32
    %675 = vector.broadcast %cst_337 : f32 to vector<1x256xf32>
    %676 = arith.divf %674, %675 : vector<1x256xf32>
    %cst_338 = arith.constant dense<0xFF800000> : vector<256xf32>
    %677 = vector.multi_reduction <maximumf>, %670, %cst_338 [0] : vector<8x256xf32> to vector<256xf32>
    %678 = vector.shape_cast %677 : vector<256xf32> to vector<1x256xf32>
    %679 = tpu.concatenate %676, %678 in 0 : vector<1x256xf32>, vector<1x256xf32> -> vector<2x256xf32>
    %c0_339 = arith.constant 0 : index
    %c128_340 = arith.constant 128 : index
    %680 = vector.load %arg14[%c0_339, %c128_340] : memref<2x512xf32, #tpu.memory_space<vmem>>, vector<2x256xf32>
    tpu.vector_store %arg14[%c0_339, %c128_340], %679 {strides = array<i32>} : memref<2x512xf32, #tpu.memory_space<vmem>>, vector<2x256xf32>,
    %cst_341 = arith.constant 0.000000e+00 : f32
    %681 = vector.broadcast %cst_341 : f32 to vector<1x256xf32>
    %cst_342 = arith.constant 0.000000e+00 : f32
    %682 = vector.broadcast %cst_342 : f32 to vector<1x256xf32>
    %cst_343 = arith.constant 0.000000e+00 : f32
    %683 = vector.broadcast %cst_343 : f32 to vector<1x256xf32>
    %cst_344 = arith.constant 0.000000e+00 : f32
    %684 = vector.broadcast %cst_344 : f32 to vector<1x256xf32>
    %c0_345 = arith.constant 0 : index
    %c77 = arith.constant 77 : index
    %685 = vector.load %arg14[%c0_345, %c77] : memref<2x512xf32, #tpu.memory_space<vmem>>, vector<2x256xf32>
    %686 = vector.extract_strided_slice %685 {offsets = [0, 0], sizes = [1, 256], strides = [1, 1]} : vector<2x256xf32> to vector<1x256xf32>
    %687 = vector.extract_strided_slice %685 {offsets = [1, 0], sizes = [1, 256], strides = [1, 1]} : vector<2x256xf32> to vector<1x256xf32>
    %c0_346 = arith.constant 0 : index
    %688 = memref.load %arg1[%c0_346] : memref<196xf32, #tpu.memory_space<smem>>
    %689 = vector.broadcast %688 : f32 to vector<1x256xf32>
    %690 = arith.mulf %686, %689 : vector<1x256xf32>
    %691 = arith.addf %683, %690 : vector<1x256xf32>
    %c2_347 = arith.constant 2 : index
    %692 = memref.load %arg1[%c2_347] : memref<196xf32, #tpu.memory_space<smem>>
    %693 = vector.broadcast %692 : f32 to vector<1x256xf32>
    %694 = arith.mulf %687, %693 : vector<1x256xf32>
    %695 = arith.addf %691, %694 : vector<1x256xf32>
    %c1_348 = arith.constant 1 : index
    %696 = memref.load %arg1[%c1_348] : memref<196xf32, #tpu.memory_space<smem>>
    %697 = vector.broadcast %696 : f32 to vector<1x256xf32>
    %698 = arith.mulf %686, %697 : vector<1x256xf32>
    %699 = arith.addf %684, %698 : vector<1x256xf32>
    %c3_349 = arith.constant 3 : index
    %700 = memref.load %arg1[%c3_349] : memref<196xf32, #tpu.memory_space<smem>>
    %701 = vector.broadcast %700 : f32 to vector<1x256xf32>
    %702 = arith.mulf %687, %701 : vector<1x256xf32>
    %703 = arith.addf %699, %702 : vector<1x256xf32>
    %c0_350 = arith.constant 0 : index
    %c93 = arith.constant 93 : index
    %704 = vector.load %arg14[%c0_350, %c93] : memref<2x512xf32, #tpu.memory_space<vmem>>, vector<2x256xf32>
    %705 = vector.extract_strided_slice %704 {offsets = [0, 0], sizes = [1, 256], strides = [1, 1]} : vector<2x256xf32> to vector<1x256xf32>
    %706 = vector.extract_strided_slice %704 {offsets = [1, 0], sizes = [1, 256], strides = [1, 1]} : vector<2x256xf32> to vector<1x256xf32>
    %c28_351 = arith.constant 28 : index
    %707 = memref.load %arg1[%c28_351] : memref<196xf32, #tpu.memory_space<smem>>
    %708 = vector.broadcast %707 : f32 to vector<1x256xf32>
    %709 = arith.mulf %705, %708 : vector<1x256xf32>
    %710 = arith.addf %695, %709 : vector<1x256xf32>
    %c30_352 = arith.constant 30 : index
    %711 = memref.load %arg1[%c30_352] : memref<196xf32, #tpu.memory_space<smem>>
    %712 = vector.broadcast %711 : f32 to vector<1x256xf32>
    %713 = arith.mulf %706, %712 : vector<1x256xf32>
    %714 = arith.addf %710, %713 : vector<1x256xf32>
    %c29_353 = arith.constant 29 : index
    %715 = memref.load %arg1[%c29_353] : memref<196xf32, #tpu.memory_space<smem>>
    %716 = vector.broadcast %715 : f32 to vector<1x256xf32>
    %717 = arith.mulf %705, %716 : vector<1x256xf32>
    %718 = arith.addf %703, %717 : vector<1x256xf32>
    %c31_354 = arith.constant 31 : index
    %719 = memref.load %arg1[%c31_354] : memref<196xf32, #tpu.memory_space<smem>>
    %720 = vector.broadcast %719 : f32 to vector<1x256xf32>
    %721 = arith.mulf %706, %720 : vector<1x256xf32>
    %722 = arith.addf %718, %721 : vector<1x256xf32>
    %c0_355 = arith.constant 0 : index
    %c109_356 = arith.constant 109 : index
    %723 = vector.load %arg14[%c0_355, %c109_356] : memref<2x512xf32, #tpu.memory_space<vmem>>, vector<2x256xf32>
    %724 = vector.extract_strided_slice %723 {offsets = [0, 0], sizes = [1, 256], strides = [1, 1]} : vector<2x256xf32> to vector<1x256xf32>
    %725 = vector.extract_strided_slice %723 {offsets = [1, 0], sizes = [1, 256], strides = [1, 1]} : vector<2x256xf32> to vector<1x256xf32>
    %c56 = arith.constant 56 : index
    %726 = memref.load %arg1[%c56] : memref<196xf32, #tpu.memory_space<smem>>
    %727 = vector.broadcast %726 : f32 to vector<1x256xf32>
    %728 = arith.mulf %724, %727 : vector<1x256xf32>
    %729 = arith.addf %714, %728 : vector<1x256xf32>
    %c58 = arith.constant 58 : index
    %730 = memref.load %arg1[%c58] : memref<196xf32, #tpu.memory_space<smem>>
    %731 = vector.broadcast %730 : f32 to vector<1x256xf32>
    %732 = arith.mulf %725, %731 : vector<1x256xf32>
    %733 = arith.addf %729, %732 : vector<1x256xf32>
    %c57 = arith.constant 57 : index
    %734 = memref.load %arg1[%c57] : memref<196xf32, #tpu.memory_space<smem>>
    %735 = vector.broadcast %734 : f32 to vector<1x256xf32>
    %736 = arith.mulf %724, %735 : vector<1x256xf32>
    %737 = arith.addf %722, %736 : vector<1x256xf32>
    %c59 = arith.constant 59 : index
    %738 = memref.load %arg1[%c59] : memref<196xf32, #tpu.memory_space<smem>>
    %739 = vector.broadcast %738 : f32 to vector<1x256xf32>
    %740 = arith.mulf %725, %739 : vector<1x256xf32>
    %741 = arith.addf %737, %740 : vector<1x256xf32>
    %c0_357 = arith.constant 0 : index
    %c125 = arith.constant 125 : index
    %742 = vector.load %arg14[%c0_357, %c125] : memref<2x512xf32, #tpu.memory_space<vmem>>, vector<2x256xf32>
    %743 = vector.extract_strided_slice %742 {offsets = [0, 0], sizes = [1, 256], strides = [1, 1]} : vector<2x256xf32> to vector<1x256xf32>
    %744 = vector.extract_strided_slice %742 {offsets = [1, 0], sizes = [1, 256], strides = [1, 1]} : vector<2x256xf32> to vector<1x256xf32>
    %c84 = arith.constant 84 : index
    %745 = memref.load %arg1[%c84] : memref<196xf32, #tpu.memory_space<smem>>
    %746 = vector.broadcast %745 : f32 to vector<1x256xf32>
    %747 = arith.mulf %743, %746 : vector<1x256xf32>
    %748 = arith.addf %733, %747 : vector<1x256xf32>
    %c86 = arith.constant 86 : index
    %749 = memref.load %arg1[%c86] : memref<196xf32, #tpu.memory_space<smem>>
    %750 = vector.broadcast %749 : f32 to vector<1x256xf32>
    %751 = arith.mulf %744, %750 : vector<1x256xf32>
    %752 = arith.addf %748, %751 : vector<1x256xf32>
    %c85 = arith.constant 85 : index
    %753 = memref.load %arg1[%c85] : memref<196xf32, #tpu.memory_space<smem>>
    %754 = vector.broadcast %753 : f32 to vector<1x256xf32>
    %755 = arith.mulf %743, %754 : vector<1x256xf32>
    %756 = arith.addf %741, %755 : vector<1x256xf32>
    %c87 = arith.constant 87 : index
    %757 = memref.load %arg1[%c87] : memref<196xf32, #tpu.memory_space<smem>>
    %758 = vector.broadcast %757 : f32 to vector<1x256xf32>
    %759 = arith.mulf %744, %758 : vector<1x256xf32>
    %760 = arith.addf %756, %759 : vector<1x256xf32>
    %c0_358 = arith.constant 0 : index
    %c141 = arith.constant 141 : index
    %761 = vector.load %arg14[%c0_358, %c141] : memref<2x512xf32, #tpu.memory_space<vmem>>, vector<2x256xf32>
    %762 = vector.extract_strided_slice %761 {offsets = [0, 0], sizes = [1, 256], strides = [1, 1]} : vector<2x256xf32> to vector<1x256xf32>
    %763 = vector.extract_strided_slice %761 {offsets = [1, 0], sizes = [1, 256], strides = [1, 1]} : vector<2x256xf32> to vector<1x256xf32>
    %c112_359 = arith.constant 112 : index
    %764 = memref.load %arg1[%c112_359] : memref<196xf32, #tpu.memory_space<smem>>
    %765 = vector.broadcast %764 : f32 to vector<1x256xf32>
    %766 = arith.mulf %762, %765 : vector<1x256xf32>
    %767 = arith.addf %752, %766 : vector<1x256xf32>
    %c114_360 = arith.constant 114 : index
    %768 = memref.load %arg1[%c114_360] : memref<196xf32, #tpu.memory_space<smem>>
    %769 = vector.broadcast %768 : f32 to vector<1x256xf32>
    %770 = arith.mulf %763, %769 : vector<1x256xf32>
    %771 = arith.addf %767, %770 : vector<1x256xf32>
    %c113_361 = arith.constant 113 : index
    %772 = memref.load %arg1[%c113_361] : memref<196xf32, #tpu.memory_space<smem>>
    %773 = vector.broadcast %772 : f32 to vector<1x256xf32>
    %774 = arith.mulf %762, %773 : vector<1x256xf32>
    %775 = arith.addf %760, %774 : vector<1x256xf32>
    %c115_362 = arith.constant 115 : index
    %776 = memref.load %arg1[%c115_362] : memref<196xf32, #tpu.memory_space<smem>>
    %777 = vector.broadcast %776 : f32 to vector<1x256xf32>
    %778 = arith.mulf %763, %777 : vector<1x256xf32>
    %779 = arith.addf %775, %778 : vector<1x256xf32>
    %c0_363 = arith.constant 0 : index
    %c157_364 = arith.constant 157 : index
    %780 = vector.load %arg14[%c0_363, %c157_364] : memref<2x512xf32, #tpu.memory_space<vmem>>, vector<2x256xf32>
    %781 = vector.extract_strided_slice %780 {offsets = [0, 0], sizes = [1, 256], strides = [1, 1]} : vector<2x256xf32> to vector<1x256xf32>
    %782 = vector.extract_strided_slice %780 {offsets = [1, 0], sizes = [1, 256], strides = [1, 1]} : vector<2x256xf32> to vector<1x256xf32>
    %c140 = arith.constant 140 : index
    %783 = memref.load %arg1[%c140] : memref<196xf32, #tpu.memory_space<smem>>
    %784 = vector.broadcast %783 : f32 to vector<1x256xf32>
    %785 = arith.mulf %781, %784 : vector<1x256xf32>
    %786 = arith.addf %771, %785 : vector<1x256xf32>
    %c142_365 = arith.constant 142 : index
    %787 = memref.load %arg1[%c142_365] : memref<196xf32, #tpu.memory_space<smem>>
    %788 = vector.broadcast %787 : f32 to vector<1x256xf32>
    %789 = arith.mulf %782, %788 : vector<1x256xf32>
    %790 = arith.addf %786, %789 : vector<1x256xf32>
    %c141_366 = arith.constant 141 : index
    %791 = memref.load %arg1[%c141_366] : memref<196xf32, #tpu.memory_space<smem>>
    %792 = vector.broadcast %791 : f32 to vector<1x256xf32>
    %793 = arith.mulf %781, %792 : vector<1x256xf32>
    %794 = arith.addf %779, %793 : vector<1x256xf32>
    %c143_367 = arith.constant 143 : index
    %795 = memref.load %arg1[%c143_367] : memref<196xf32, #tpu.memory_space<smem>>
    %796 = vector.broadcast %795 : f32 to vector<1x256xf32>
    %797 = arith.mulf %782, %796 : vector<1x256xf32>
    %798 = arith.addf %794, %797 : vector<1x256xf32>
    %c0_368 = arith.constant 0 : index
    %c173 = arith.constant 173 : index
    %799 = vector.load %arg14[%c0_368, %c173] : memref<2x512xf32, #tpu.memory_space<vmem>>, vector<2x256xf32>
    %800 = vector.extract_strided_slice %799 {offsets = [0, 0], sizes = [1, 256], strides = [1, 1]} : vector<2x256xf32> to vector<1x256xf32>
    %801 = vector.extract_strided_slice %799 {offsets = [1, 0], sizes = [1, 256], strides = [1, 1]} : vector<2x256xf32> to vector<1x256xf32>
    %c168 = arith.constant 168 : index
    %802 = memref.load %arg1[%c168] : memref<196xf32, #tpu.memory_space<smem>>
    %803 = vector.broadcast %802 : f32 to vector<1x256xf32>
    %804 = arith.mulf %800, %803 : vector<1x256xf32>
    %805 = arith.addf %790, %804 : vector<1x256xf32>
    %c170 = arith.constant 170 : index
    %806 = memref.load %arg1[%c170] : memref<196xf32, #tpu.memory_space<smem>>
    %807 = vector.broadcast %806 : f32 to vector<1x256xf32>
    %808 = arith.mulf %801, %807 : vector<1x256xf32>
    %809 = arith.addf %805, %808 : vector<1x256xf32>
    %c169_369 = arith.constant 169 : index
    %810 = memref.load %arg1[%c169_369] : memref<196xf32, #tpu.memory_space<smem>>
    %811 = vector.broadcast %810 : f32 to vector<1x256xf32>
    %812 = arith.mulf %800, %811 : vector<1x256xf32>
    %813 = arith.addf %798, %812 : vector<1x256xf32>
    %c171 = arith.constant 171 : index
    %814 = memref.load %arg1[%c171] : memref<196xf32, #tpu.memory_space<smem>>
    %815 = vector.broadcast %814 : f32 to vector<1x256xf32>
    %816 = arith.mulf %801, %815 : vector<1x256xf32>
    %817 = arith.addf %813, %816 : vector<1x256xf32>
    %c-3_i32_370 = arith.constant -3 : i32
    %818 = vector.broadcast %c-3_i32_370 : i32 to vector<1x256xi32>
    %819 = arith.addi %18, %818 : vector<1x256xi32>
    %c0_i32_371 = arith.constant 0 : i32
    %820 = vector.broadcast %c0_i32_371 : i32 to vector<1x256xi32>
    %821 = arith.cmpi sge, %819, %820 : vector<1x256xi32>
    %c-3_i32_372 = arith.constant -3 : i32
    %822 = vector.broadcast %c-3_i32_372 : i32 to vector<1x256xi32>
    %823 = arith.addi %18, %822 : vector<1x256xi32>
    %c16_i32_373 = arith.constant 16 : i32
    %824 = vector.broadcast %c16_i32_373 : i32 to vector<1x256xi32>
    %825 = arith.cmpi slt, %823, %824 : vector<1x256xi32>
    %826 = arith.andi %821, %825 : vector<1x256xi1>
    %827 = arith.extui %826 : vector<1x256xi1> to vector<1x256xi32>
    %828 = arith.sitofp %827 : vector<1x256xi32> to vector<1x256xf32>
    %829 = arith.mulf %809, %828 : vector<1x256xf32>
    %830 = arith.addf %681, %829 : vector<1x256xf32>
    %831 = arith.mulf %817, %828 : vector<1x256xf32>
    %832 = arith.addf %682, %831 : vector<1x256xf32>
    %cst_374 = arith.constant 0.000000e+00 : f32
    %833 = vector.broadcast %cst_374 : f32 to vector<1x256xf32>
    %cst_375 = arith.constant 0.000000e+00 : f32
    %834 = vector.broadcast %cst_375 : f32 to vector<1x256xf32>
    %c0_376 = arith.constant 0 : index
    %c78 = arith.constant 78 : index
    %835 = vector.load %arg14[%c0_376, %c78] : memref<2x512xf32, #tpu.memory_space<vmem>>, vector<2x256xf32>
    %836 = vector.extract_strided_slice %835 {offsets = [0, 0], sizes = [1, 256], strides = [1, 1]} : vector<2x256xf32> to vector<1x256xf32>
    %837 = vector.extract_strided_slice %835 {offsets = [1, 0], sizes = [1, 256], strides = [1, 1]} : vector<2x256xf32> to vector<1x256xf32>
    %c4_377 = arith.constant 4 : index
    %838 = memref.load %arg1[%c4_377] : memref<196xf32, #tpu.memory_space<smem>>
    %839 = vector.broadcast %838 : f32 to vector<1x256xf32>
    %840 = arith.mulf %836, %839 : vector<1x256xf32>
    %841 = arith.addf %833, %840 : vector<1x256xf32>
    %c6_378 = arith.constant 6 : index
    %842 = memref.load %arg1[%c6_378] : memref<196xf32, #tpu.memory_space<smem>>
    %843 = vector.broadcast %842 : f32 to vector<1x256xf32>
    %844 = arith.mulf %837, %843 : vector<1x256xf32>
    %845 = arith.addf %841, %844 : vector<1x256xf32>
    %c5_379 = arith.constant 5 : index
    %846 = memref.load %arg1[%c5_379] : memref<196xf32, #tpu.memory_space<smem>>
    %847 = vector.broadcast %846 : f32 to vector<1x256xf32>
    %848 = arith.mulf %836, %847 : vector<1x256xf32>
    %849 = arith.addf %834, %848 : vector<1x256xf32>
    %c7_380 = arith.constant 7 : index
    %850 = memref.load %arg1[%c7_380] : memref<196xf32, #tpu.memory_space<smem>>
    %851 = vector.broadcast %850 : f32 to vector<1x256xf32>
    %852 = arith.mulf %837, %851 : vector<1x256xf32>
    %853 = arith.addf %849, %852 : vector<1x256xf32>
    %c0_381 = arith.constant 0 : index
    %c94_382 = arith.constant 94 : index
    %854 = vector.load %arg14[%c0_381, %c94_382] : memref<2x512xf32, #tpu.memory_space<vmem>>, vector<2x256xf32>
    %855 = vector.extract_strided_slice %854 {offsets = [0, 0], sizes = [1, 256], strides = [1, 1]} : vector<2x256xf32> to vector<1x256xf32>
    %856 = vector.extract_strided_slice %854 {offsets = [1, 0], sizes = [1, 256], strides = [1, 1]} : vector<2x256xf32> to vector<1x256xf32>
    %c32_383 = arith.constant 32 : index
    %857 = memref.load %arg1[%c32_383] : memref<196xf32, #tpu.memory_space<smem>>
    %858 = vector.broadcast %857 : f32 to vector<1x256xf32>
    %859 = arith.mulf %855, %858 : vector<1x256xf32>
    %860 = arith.addf %845, %859 : vector<1x256xf32>
    %c34_384 = arith.constant 34 : index
    %861 = memref.load %arg1[%c34_384] : memref<196xf32, #tpu.memory_space<smem>>
    %862 = vector.broadcast %861 : f32 to vector<1x256xf32>
    %863 = arith.mulf %856, %862 : vector<1x256xf32>
    %864 = arith.addf %860, %863 : vector<1x256xf32>
    %c33_385 = arith.constant 33 : index
    %865 = memref.load %arg1[%c33_385] : memref<196xf32, #tpu.memory_space<smem>>
    %866 = vector.broadcast %865 : f32 to vector<1x256xf32>
    %867 = arith.mulf %855, %866 : vector<1x256xf32>
    %868 = arith.addf %853, %867 : vector<1x256xf32>
    %c35_386 = arith.constant 35 : index
    %869 = memref.load %arg1[%c35_386] : memref<196xf32, #tpu.memory_space<smem>>
    %870 = vector.broadcast %869 : f32 to vector<1x256xf32>
    %871 = arith.mulf %856, %870 : vector<1x256xf32>
    %872 = arith.addf %868, %871 : vector<1x256xf32>
    %c0_387 = arith.constant 0 : index
    %c110_388 = arith.constant 110 : index
    %873 = vector.load %arg14[%c0_387, %c110_388] : memref<2x512xf32, #tpu.memory_space<vmem>>, vector<2x256xf32>
    %874 = vector.extract_strided_slice %873 {offsets = [0, 0], sizes = [1, 256], strides = [1, 1]} : vector<2x256xf32> to vector<1x256xf32>
    %875 = vector.extract_strided_slice %873 {offsets = [1, 0], sizes = [1, 256], strides = [1, 1]} : vector<2x256xf32> to vector<1x256xf32>
    %c60 = arith.constant 60 : index
    %876 = memref.load %arg1[%c60] : memref<196xf32, #tpu.memory_space<smem>>
    %877 = vector.broadcast %876 : f32 to vector<1x256xf32>
    %878 = arith.mulf %874, %877 : vector<1x256xf32>
    %879 = arith.addf %864, %878 : vector<1x256xf32>
    %c62 = arith.constant 62 : index
    %880 = memref.load %arg1[%c62] : memref<196xf32, #tpu.memory_space<smem>>
    %881 = vector.broadcast %880 : f32 to vector<1x256xf32>
    %882 = arith.mulf %875, %881 : vector<1x256xf32>
    %883 = arith.addf %879, %882 : vector<1x256xf32>
    %c61 = arith.constant 61 : index
    %884 = memref.load %arg1[%c61] : memref<196xf32, #tpu.memory_space<smem>>
    %885 = vector.broadcast %884 : f32 to vector<1x256xf32>
    %886 = arith.mulf %874, %885 : vector<1x256xf32>
    %887 = arith.addf %872, %886 : vector<1x256xf32>
    %c63 = arith.constant 63 : index
    %888 = memref.load %arg1[%c63] : memref<196xf32, #tpu.memory_space<smem>>
    %889 = vector.broadcast %888 : f32 to vector<1x256xf32>
    %890 = arith.mulf %875, %889 : vector<1x256xf32>
    %891 = arith.addf %887, %890 : vector<1x256xf32>
    %c0_389 = arith.constant 0 : index
    %c126_390 = arith.constant 126 : index
    %892 = vector.load %arg14[%c0_389, %c126_390] : memref<2x512xf32, #tpu.memory_space<vmem>>, vector<2x256xf32>
    %893 = vector.extract_strided_slice %892 {offsets = [0, 0], sizes = [1, 256], strides = [1, 1]} : vector<2x256xf32> to vector<1x256xf32>
    %894 = vector.extract_strided_slice %892 {offsets = [1, 0], sizes = [1, 256], strides = [1, 1]} : vector<2x256xf32> to vector<1x256xf32>
    %c88 = arith.constant 88 : index
    %895 = memref.load %arg1[%c88] : memref<196xf32, #tpu.memory_space<smem>>
    %896 = vector.broadcast %895 : f32 to vector<1x256xf32>
    %897 = arith.mulf %893, %896 : vector<1x256xf32>
    %898 = arith.addf %883, %897 : vector<1x256xf32>
    %c90 = arith.constant 90 : index
    %899 = memref.load %arg1[%c90] : memref<196xf32, #tpu.memory_space<smem>>
    %900 = vector.broadcast %899 : f32 to vector<1x256xf32>
    %901 = arith.mulf %894, %900 : vector<1x256xf32>
    %902 = arith.addf %898, %901 : vector<1x256xf32>
    %c89 = arith.constant 89 : index
    %903 = memref.load %arg1[%c89] : memref<196xf32, #tpu.memory_space<smem>>
    %904 = vector.broadcast %903 : f32 to vector<1x256xf32>
    %905 = arith.mulf %893, %904 : vector<1x256xf32>
    %906 = arith.addf %891, %905 : vector<1x256xf32>
    %c91 = arith.constant 91 : index
    %907 = memref.load %arg1[%c91] : memref<196xf32, #tpu.memory_space<smem>>
    %908 = vector.broadcast %907 : f32 to vector<1x256xf32>
    %909 = arith.mulf %894, %908 : vector<1x256xf32>
    %910 = arith.addf %906, %909 : vector<1x256xf32>
    %c0_391 = arith.constant 0 : index
    %c142_392 = arith.constant 142 : index
    %911 = vector.load %arg14[%c0_391, %c142_392] : memref<2x512xf32, #tpu.memory_space<vmem>>, vector<2x256xf32>
    %912 = vector.extract_strided_slice %911 {offsets = [0, 0], sizes = [1, 256], strides = [1, 1]} : vector<2x256xf32> to vector<1x256xf32>
    %913 = vector.extract_strided_slice %911 {offsets = [1, 0], sizes = [1, 256], strides = [1, 1]} : vector<2x256xf32> to vector<1x256xf32>
    %c116 = arith.constant 116 : index
    %914 = memref.load %arg1[%c116] : memref<196xf32, #tpu.memory_space<smem>>
    %915 = vector.broadcast %914 : f32 to vector<1x256xf32>
    %916 = arith.mulf %912, %915 : vector<1x256xf32>
    %917 = arith.addf %902, %916 : vector<1x256xf32>
    %c118_393 = arith.constant 118 : index
    %918 = memref.load %arg1[%c118_393] : memref<196xf32, #tpu.memory_space<smem>>
    %919 = vector.broadcast %918 : f32 to vector<1x256xf32>
    %920 = arith.mulf %913, %919 : vector<1x256xf32>
    %921 = arith.addf %917, %920 : vector<1x256xf32>
    %c117 = arith.constant 117 : index
    %922 = memref.load %arg1[%c117] : memref<196xf32, #tpu.memory_space<smem>>
    %923 = vector.broadcast %922 : f32 to vector<1x256xf32>
    %924 = arith.mulf %912, %923 : vector<1x256xf32>
    %925 = arith.addf %910, %924 : vector<1x256xf32>
    %c119 = arith.constant 119 : index
    %926 = memref.load %arg1[%c119] : memref<196xf32, #tpu.memory_space<smem>>
    %927 = vector.broadcast %926 : f32 to vector<1x256xf32>
    %928 = arith.mulf %913, %927 : vector<1x256xf32>
    %929 = arith.addf %925, %928 : vector<1x256xf32>
    %c0_394 = arith.constant 0 : index
    %c158_395 = arith.constant 158 : index
    %930 = vector.load %arg14[%c0_394, %c158_395] : memref<2x512xf32, #tpu.memory_space<vmem>>, vector<2x256xf32>
    %931 = vector.extract_strided_slice %930 {offsets = [0, 0], sizes = [1, 256], strides = [1, 1]} : vector<2x256xf32> to vector<1x256xf32>
    %932 = vector.extract_strided_slice %930 {offsets = [1, 0], sizes = [1, 256], strides = [1, 1]} : vector<2x256xf32> to vector<1x256xf32>
    %c144_396 = arith.constant 144 : index
    %933 = memref.load %arg1[%c144_396] : memref<196xf32, #tpu.memory_space<smem>>
    %934 = vector.broadcast %933 : f32 to vector<1x256xf32>
    %935 = arith.mulf %931, %934 : vector<1x256xf32>
    %936 = arith.addf %921, %935 : vector<1x256xf32>
    %c146_397 = arith.constant 146 : index
    %937 = memref.load %arg1[%c146_397] : memref<196xf32, #tpu.memory_space<smem>>
    %938 = vector.broadcast %937 : f32 to vector<1x256xf32>
    %939 = arith.mulf %932, %938 : vector<1x256xf32>
    %940 = arith.addf %936, %939 : vector<1x256xf32>
    %c145_398 = arith.constant 145 : index
    %941 = memref.load %arg1[%c145_398] : memref<196xf32, #tpu.memory_space<smem>>
    %942 = vector.broadcast %941 : f32 to vector<1x256xf32>
    %943 = arith.mulf %931, %942 : vector<1x256xf32>
    %944 = arith.addf %929, %943 : vector<1x256xf32>
    %c147 = arith.constant 147 : index
    %945 = memref.load %arg1[%c147] : memref<196xf32, #tpu.memory_space<smem>>
    %946 = vector.broadcast %945 : f32 to vector<1x256xf32>
    %947 = arith.mulf %932, %946 : vector<1x256xf32>
    %948 = arith.addf %944, %947 : vector<1x256xf32>
    %c0_399 = arith.constant 0 : index
    %c174 = arith.constant 174 : index
    %949 = vector.load %arg14[%c0_399, %c174] : memref<2x512xf32, #tpu.memory_space<vmem>>, vector<2x256xf32>
    %950 = vector.extract_strided_slice %949 {offsets = [0, 0], sizes = [1, 256], strides = [1, 1]} : vector<2x256xf32> to vector<1x256xf32>
    %951 = vector.extract_strided_slice %949 {offsets = [1, 0], sizes = [1, 256], strides = [1, 1]} : vector<2x256xf32> to vector<1x256xf32>
    %c172 = arith.constant 172 : index
    %952 = memref.load %arg1[%c172] : memref<196xf32, #tpu.memory_space<smem>>
    %953 = vector.broadcast %952 : f32 to vector<1x256xf32>
    %954 = arith.mulf %950, %953 : vector<1x256xf32>
    %955 = arith.addf %940, %954 : vector<1x256xf32>
    %c174_400 = arith.constant 174 : index
    %956 = memref.load %arg1[%c174_400] : memref<196xf32, #tpu.memory_space<smem>>
    %957 = vector.broadcast %956 : f32 to vector<1x256xf32>
    %958 = arith.mulf %951, %957 : vector<1x256xf32>
    %959 = arith.addf %955, %958 : vector<1x256xf32>
    %c173_401 = arith.constant 173 : index
    %960 = memref.load %arg1[%c173_401] : memref<196xf32, #tpu.memory_space<smem>>
    %961 = vector.broadcast %960 : f32 to vector<1x256xf32>
    %962 = arith.mulf %950, %961 : vector<1x256xf32>
    %963 = arith.addf %948, %962 : vector<1x256xf32>
    %c175 = arith.constant 175 : index
    %964 = memref.load %arg1[%c175] : memref<196xf32, #tpu.memory_space<smem>>
    %965 = vector.broadcast %964 : f32 to vector<1x256xf32>
    %966 = arith.mulf %951, %965 : vector<1x256xf32>
    %967 = arith.addf %963, %966 : vector<1x256xf32>
    %c-2_i32_402 = arith.constant -2 : i32
    %968 = vector.broadcast %c-2_i32_402 : i32 to vector<1x256xi32>
    %969 = arith.addi %18, %968 : vector<1x256xi32>
    %c0_i32_403 = arith.constant 0 : i32
    %970 = vector.broadcast %c0_i32_403 : i32 to vector<1x256xi32>
    %971 = arith.cmpi sge, %969, %970 : vector<1x256xi32>
    %c-2_i32_404 = arith.constant -2 : i32
    %972 = vector.broadcast %c-2_i32_404 : i32 to vector<1x256xi32>
    %973 = arith.addi %18, %972 : vector<1x256xi32>
    %c16_i32_405 = arith.constant 16 : i32
    %974 = vector.broadcast %c16_i32_405 : i32 to vector<1x256xi32>
    %975 = arith.cmpi slt, %973, %974 : vector<1x256xi32>
    %976 = arith.andi %971, %975 : vector<1x256xi1>
    %977 = arith.extui %976 : vector<1x256xi1> to vector<1x256xi32>
    %978 = arith.sitofp %977 : vector<1x256xi32> to vector<1x256xf32>
    %979 = arith.mulf %959, %978 : vector<1x256xf32>
    %980 = arith.addf %830, %979 : vector<1x256xf32>
    %981 = arith.mulf %967, %978 : vector<1x256xf32>
    %982 = arith.addf %832, %981 : vector<1x256xf32>
    %cst_406 = arith.constant 0.000000e+00 : f32
    %983 = vector.broadcast %cst_406 : f32 to vector<1x256xf32>
    %cst_407 = arith.constant 0.000000e+00 : f32
    %984 = vector.broadcast %cst_407 : f32 to vector<1x256xf32>
    %c0_408 = arith.constant 0 : index
    %c79 = arith.constant 79 : index
    %985 = vector.load %arg14[%c0_408, %c79] : memref<2x512xf32, #tpu.memory_space<vmem>>, vector<2x256xf32>
    %986 = vector.extract_strided_slice %985 {offsets = [0, 0], sizes = [1, 256], strides = [1, 1]} : vector<2x256xf32> to vector<1x256xf32>
    %987 = vector.extract_strided_slice %985 {offsets = [1, 0], sizes = [1, 256], strides = [1, 1]} : vector<2x256xf32> to vector<1x256xf32>
    %c8_409 = arith.constant 8 : index
    %988 = memref.load %arg1[%c8_409] : memref<196xf32, #tpu.memory_space<smem>>
    %989 = vector.broadcast %988 : f32 to vector<1x256xf32>
    %990 = arith.mulf %986, %989 : vector<1x256xf32>
    %991 = arith.addf %983, %990 : vector<1x256xf32>
    %c10_410 = arith.constant 10 : index
    %992 = memref.load %arg1[%c10_410] : memref<196xf32, #tpu.memory_space<smem>>
    %993 = vector.broadcast %992 : f32 to vector<1x256xf32>
    %994 = arith.mulf %987, %993 : vector<1x256xf32>
    %995 = arith.addf %991, %994 : vector<1x256xf32>
    %c9_411 = arith.constant 9 : index
    %996 = memref.load %arg1[%c9_411] : memref<196xf32, #tpu.memory_space<smem>>
    %997 = vector.broadcast %996 : f32 to vector<1x256xf32>
    %998 = arith.mulf %986, %997 : vector<1x256xf32>
    %999 = arith.addf %984, %998 : vector<1x256xf32>
    %c11_412 = arith.constant 11 : index
    %1000 = memref.load %arg1[%c11_412] : memref<196xf32, #tpu.memory_space<smem>>
    %1001 = vector.broadcast %1000 : f32 to vector<1x256xf32>
    %1002 = arith.mulf %987, %1001 : vector<1x256xf32>
    %1003 = arith.addf %999, %1002 : vector<1x256xf32>
    %c0_413 = arith.constant 0 : index
    %c95_414 = arith.constant 95 : index
    %1004 = vector.load %arg14[%c0_413, %c95_414] : memref<2x512xf32, #tpu.memory_space<vmem>>, vector<2x256xf32>
    %1005 = vector.extract_strided_slice %1004 {offsets = [0, 0], sizes = [1, 256], strides = [1, 1]} : vector<2x256xf32> to vector<1x256xf32>
    %1006 = vector.extract_strided_slice %1004 {offsets = [1, 0], sizes = [1, 256], strides = [1, 1]} : vector<2x256xf32> to vector<1x256xf32>
    %c36_415 = arith.constant 36 : index
    %1007 = memref.load %arg1[%c36_415] : memref<196xf32, #tpu.memory_space<smem>>
    %1008 = vector.broadcast %1007 : f32 to vector<1x256xf32>
    %1009 = arith.mulf %1005, %1008 : vector<1x256xf32>
    %1010 = arith.addf %995, %1009 : vector<1x256xf32>
    %c38_416 = arith.constant 38 : index
    %1011 = memref.load %arg1[%c38_416] : memref<196xf32, #tpu.memory_space<smem>>
    %1012 = vector.broadcast %1011 : f32 to vector<1x256xf32>
    %1013 = arith.mulf %1006, %1012 : vector<1x256xf32>
    %1014 = arith.addf %1010, %1013 : vector<1x256xf32>
    %c37_417 = arith.constant 37 : index
    %1015 = memref.load %arg1[%c37_417] : memref<196xf32, #tpu.memory_space<smem>>
    %1016 = vector.broadcast %1015 : f32 to vector<1x256xf32>
    %1017 = arith.mulf %1005, %1016 : vector<1x256xf32>
    %1018 = arith.addf %1003, %1017 : vector<1x256xf32>
    %c39_418 = arith.constant 39 : index
    %1019 = memref.load %arg1[%c39_418] : memref<196xf32, #tpu.memory_space<smem>>
    %1020 = vector.broadcast %1019 : f32 to vector<1x256xf32>
    %1021 = arith.mulf %1006, %1020 : vector<1x256xf32>
    %1022 = arith.addf %1018, %1021 : vector<1x256xf32>
    %c0_419 = arith.constant 0 : index
    %c111_420 = arith.constant 111 : index
    %1023 = vector.load %arg14[%c0_419, %c111_420] : memref<2x512xf32, #tpu.memory_space<vmem>>, vector<2x256xf32>
    %1024 = vector.extract_strided_slice %1023 {offsets = [0, 0], sizes = [1, 256], strides = [1, 1]} : vector<2x256xf32> to vector<1x256xf32>
    %1025 = vector.extract_strided_slice %1023 {offsets = [1, 0], sizes = [1, 256], strides = [1, 1]} : vector<2x256xf32> to vector<1x256xf32>
    %c64 = arith.constant 64 : index
    %1026 = memref.load %arg1[%c64] : memref<196xf32, #tpu.memory_space<smem>>
    %1027 = vector.broadcast %1026 : f32 to vector<1x256xf32>
    %1028 = arith.mulf %1024, %1027 : vector<1x256xf32>
    %1029 = arith.addf %1014, %1028 : vector<1x256xf32>
    %c66 = arith.constant 66 : index
    %1030 = memref.load %arg1[%c66] : memref<196xf32, #tpu.memory_space<smem>>
    %1031 = vector.broadcast %1030 : f32 to vector<1x256xf32>
    %1032 = arith.mulf %1025, %1031 : vector<1x256xf32>
    %1033 = arith.addf %1029, %1032 : vector<1x256xf32>
    %c65 = arith.constant 65 : index
    %1034 = memref.load %arg1[%c65] : memref<196xf32, #tpu.memory_space<smem>>
    %1035 = vector.broadcast %1034 : f32 to vector<1x256xf32>
    %1036 = arith.mulf %1024, %1035 : vector<1x256xf32>
    %1037 = arith.addf %1022, %1036 : vector<1x256xf32>
    %c67 = arith.constant 67 : index
    %1038 = memref.load %arg1[%c67] : memref<196xf32, #tpu.memory_space<smem>>
    %1039 = vector.broadcast %1038 : f32 to vector<1x256xf32>
    %1040 = arith.mulf %1025, %1039 : vector<1x256xf32>
    %1041 = arith.addf %1037, %1040 : vector<1x256xf32>
    %c0_421 = arith.constant 0 : index
    %c127_422 = arith.constant 127 : index
    %1042 = vector.load %arg14[%c0_421, %c127_422] : memref<2x512xf32, #tpu.memory_space<vmem>>, vector<2x256xf32>
    %1043 = vector.extract_strided_slice %1042 {offsets = [0, 0], sizes = [1, 256], strides = [1, 1]} : vector<2x256xf32> to vector<1x256xf32>
    %1044 = vector.extract_strided_slice %1042 {offsets = [1, 0], sizes = [1, 256], strides = [1, 1]} : vector<2x256xf32> to vector<1x256xf32>
    %c92 = arith.constant 92 : index
    %1045 = memref.load %arg1[%c92] : memref<196xf32, #tpu.memory_space<smem>>
    %1046 = vector.broadcast %1045 : f32 to vector<1x256xf32>
    %1047 = arith.mulf %1043, %1046 : vector<1x256xf32>
    %1048 = arith.addf %1033, %1047 : vector<1x256xf32>
    %c94_423 = arith.constant 94 : index
    %1049 = memref.load %arg1[%c94_423] : memref<196xf32, #tpu.memory_space<smem>>
    %1050 = vector.broadcast %1049 : f32 to vector<1x256xf32>
    %1051 = arith.mulf %1044, %1050 : vector<1x256xf32>
    %1052 = arith.addf %1048, %1051 : vector<1x256xf32>
    %c93_424 = arith.constant 93 : index
    %1053 = memref.load %arg1[%c93_424] : memref<196xf32, #tpu.memory_space<smem>>
    %1054 = vector.broadcast %1053 : f32 to vector<1x256xf32>
    %1055 = arith.mulf %1043, %1054 : vector<1x256xf32>
    %1056 = arith.addf %1041, %1055 : vector<1x256xf32>
    %c95_425 = arith.constant 95 : index
    %1057 = memref.load %arg1[%c95_425] : memref<196xf32, #tpu.memory_space<smem>>
    %1058 = vector.broadcast %1057 : f32 to vector<1x256xf32>
    %1059 = arith.mulf %1044, %1058 : vector<1x256xf32>
    %1060 = arith.addf %1056, %1059 : vector<1x256xf32>
    %c0_426 = arith.constant 0 : index
    %c143_427 = arith.constant 143 : index
    %1061 = vector.load %arg14[%c0_426, %c143_427] : memref<2x512xf32, #tpu.memory_space<vmem>>, vector<2x256xf32>
    %1062 = vector.extract_strided_slice %1061 {offsets = [0, 0], sizes = [1, 256], strides = [1, 1]} : vector<2x256xf32> to vector<1x256xf32>
    %1063 = vector.extract_strided_slice %1061 {offsets = [1, 0], sizes = [1, 256], strides = [1, 1]} : vector<2x256xf32> to vector<1x256xf32>
    %c120 = arith.constant 120 : index
    %1064 = memref.load %arg1[%c120] : memref<196xf32, #tpu.memory_space<smem>>
    %1065 = vector.broadcast %1064 : f32 to vector<1x256xf32>
    %1066 = arith.mulf %1062, %1065 : vector<1x256xf32>
    %1067 = arith.addf %1052, %1066 : vector<1x256xf32>
    %c122 = arith.constant 122 : index
    %1068 = memref.load %arg1[%c122] : memref<196xf32, #tpu.memory_space<smem>>
    %1069 = vector.broadcast %1068 : f32 to vector<1x256xf32>
    %1070 = arith.mulf %1063, %1069 : vector<1x256xf32>
    %1071 = arith.addf %1067, %1070 : vector<1x256xf32>
    %c121_428 = arith.constant 121 : index
    %1072 = memref.load %arg1[%c121_428] : memref<196xf32, #tpu.memory_space<smem>>
    %1073 = vector.broadcast %1072 : f32 to vector<1x256xf32>
    %1074 = arith.mulf %1062, %1073 : vector<1x256xf32>
    %1075 = arith.addf %1060, %1074 : vector<1x256xf32>
    %c123 = arith.constant 123 : index
    %1076 = memref.load %arg1[%c123] : memref<196xf32, #tpu.memory_space<smem>>
    %1077 = vector.broadcast %1076 : f32 to vector<1x256xf32>
    %1078 = arith.mulf %1063, %1077 : vector<1x256xf32>
    %1079 = arith.addf %1075, %1078 : vector<1x256xf32>
    %c0_429 = arith.constant 0 : index
    %c159_430 = arith.constant 159 : index
    %1080 = vector.load %arg14[%c0_429, %c159_430] : memref<2x512xf32, #tpu.memory_space<vmem>>, vector<2x256xf32>
    %1081 = vector.extract_strided_slice %1080 {offsets = [0, 0], sizes = [1, 256], strides = [1, 1]} : vector<2x256xf32> to vector<1x256xf32>
    %1082 = vector.extract_strided_slice %1080 {offsets = [1, 0], sizes = [1, 256], strides = [1, 1]} : vector<2x256xf32> to vector<1x256xf32>
    %c148 = arith.constant 148 : index
    %1083 = memref.load %arg1[%c148] : memref<196xf32, #tpu.memory_space<smem>>
    %1084 = vector.broadcast %1083 : f32 to vector<1x256xf32>
    %1085 = arith.mulf %1081, %1084 : vector<1x256xf32>
    %1086 = arith.addf %1071, %1085 : vector<1x256xf32>
    %c150 = arith.constant 150 : index
    %1087 = memref.load %arg1[%c150] : memref<196xf32, #tpu.memory_space<smem>>
    %1088 = vector.broadcast %1087 : f32 to vector<1x256xf32>
    %1089 = arith.mulf %1082, %1088 : vector<1x256xf32>
    %1090 = arith.addf %1086, %1089 : vector<1x256xf32>
    %c149 = arith.constant 149 : index
    %1091 = memref.load %arg1[%c149] : memref<196xf32, #tpu.memory_space<smem>>
    %1092 = vector.broadcast %1091 : f32 to vector<1x256xf32>
    %1093 = arith.mulf %1081, %1092 : vector<1x256xf32>
    %1094 = arith.addf %1079, %1093 : vector<1x256xf32>
    %c151_431 = arith.constant 151 : index
    %1095 = memref.load %arg1[%c151_431] : memref<196xf32, #tpu.memory_space<smem>>
    %1096 = vector.broadcast %1095 : f32 to vector<1x256xf32>
    %1097 = arith.mulf %1082, %1096 : vector<1x256xf32>
    %1098 = arith.addf %1094, %1097 : vector<1x256xf32>
    %c0_432 = arith.constant 0 : index
    %c175_433 = arith.constant 175 : index
    %1099 = vector.load %arg14[%c0_432, %c175_433] : memref<2x512xf32, #tpu.memory_space<vmem>>, vector<2x256xf32>
    %1100 = vector.extract_strided_slice %1099 {offsets = [0, 0], sizes = [1, 256], strides = [1, 1]} : vector<2x256xf32> to vector<1x256xf32>
    %1101 = vector.extract_strided_slice %1099 {offsets = [1, 0], sizes = [1, 256], strides = [1, 1]} : vector<2x256xf32> to vector<1x256xf32>
    %c176 = arith.constant 176 : index
    %1102 = memref.load %arg1[%c176] : memref<196xf32, #tpu.memory_space<smem>>
    %1103 = vector.broadcast %1102 : f32 to vector<1x256xf32>
    %1104 = arith.mulf %1100, %1103 : vector<1x256xf32>
    %1105 = arith.addf %1090, %1104 : vector<1x256xf32>
    %c178 = arith.constant 178 : index
    %1106 = memref.load %arg1[%c178] : memref<196xf32, #tpu.memory_space<smem>>
    %1107 = vector.broadcast %1106 : f32 to vector<1x256xf32>
    %1108 = arith.mulf %1101, %1107 : vector<1x256xf32>
    %1109 = arith.addf %1105, %1108 : vector<1x256xf32>
    %c177 = arith.constant 177 : index
    %1110 = memref.load %arg1[%c177] : memref<196xf32, #tpu.memory_space<smem>>
    %1111 = vector.broadcast %1110 : f32 to vector<1x256xf32>
    %1112 = arith.mulf %1100, %1111 : vector<1x256xf32>
    %1113 = arith.addf %1098, %1112 : vector<1x256xf32>
    %c179 = arith.constant 179 : index
    %1114 = memref.load %arg1[%c179] : memref<196xf32, #tpu.memory_space<smem>>
    %1115 = vector.broadcast %1114 : f32 to vector<1x256xf32>
    %1116 = arith.mulf %1101, %1115 : vector<1x256xf32>
    %1117 = arith.addf %1113, %1116 : vector<1x256xf32>
    %c-1_i32_434 = arith.constant -1 : i32
    %1118 = vector.broadcast %c-1_i32_434 : i32 to vector<1x256xi32>
    %1119 = arith.addi %18, %1118 : vector<1x256xi32>
    %c0_i32_435 = arith.constant 0 : i32
    %1120 = vector.broadcast %c0_i32_435 : i32 to vector<1x256xi32>
    %1121 = arith.cmpi sge, %1119, %1120 : vector<1x256xi32>
    %c-1_i32_436 = arith.constant -1 : i32
    %1122 = vector.broadcast %c-1_i32_436 : i32 to vector<1x256xi32>
    %1123 = arith.addi %18, %1122 : vector<1x256xi32>
    %c16_i32_437 = arith.constant 16 : i32
    %1124 = vector.broadcast %c16_i32_437 : i32 to vector<1x256xi32>
    %1125 = arith.cmpi slt, %1123, %1124 : vector<1x256xi32>
    %1126 = arith.andi %1121, %1125 : vector<1x256xi1>
    %1127 = arith.extui %1126 : vector<1x256xi1> to vector<1x256xi32>
    %1128 = arith.sitofp %1127 : vector<1x256xi32> to vector<1x256xf32>
    %1129 = arith.mulf %1109, %1128 : vector<1x256xf32>
    %1130 = arith.addf %980, %1129 : vector<1x256xf32>
    %1131 = arith.mulf %1117, %1128 : vector<1x256xf32>
    %1132 = arith.addf %982, %1131 : vector<1x256xf32>
    %cst_438 = arith.constant 0.000000e+00 : f32
    %1133 = vector.broadcast %cst_438 : f32 to vector<1x256xf32>
    %cst_439 = arith.constant 0.000000e+00 : f32
    %1134 = vector.broadcast %cst_439 : f32 to vector<1x256xf32>
    %c0_440 = arith.constant 0 : index
    %c80 = arith.constant 80 : index
    %1135 = vector.load %arg14[%c0_440, %c80] : memref<2x512xf32, #tpu.memory_space<vmem>>, vector<2x256xf32>
    %1136 = vector.extract_strided_slice %1135 {offsets = [0, 0], sizes = [1, 256], strides = [1, 1]} : vector<2x256xf32> to vector<1x256xf32>
    %1137 = vector.extract_strided_slice %1135 {offsets = [1, 0], sizes = [1, 256], strides = [1, 1]} : vector<2x256xf32> to vector<1x256xf32>
    %c12_441 = arith.constant 12 : index
    %1138 = memref.load %arg1[%c12_441] : memref<196xf32, #tpu.memory_space<smem>>
    %1139 = vector.broadcast %1138 : f32 to vector<1x256xf32>
    %1140 = arith.mulf %1136, %1139 : vector<1x256xf32>
    %1141 = arith.addf %1133, %1140 : vector<1x256xf32>
    %c14_442 = arith.constant 14 : index
    %1142 = memref.load %arg1[%c14_442] : memref<196xf32, #tpu.memory_space<smem>>
    %1143 = vector.broadcast %1142 : f32 to vector<1x256xf32>
    %1144 = arith.mulf %1137, %1143 : vector<1x256xf32>
    %1145 = arith.addf %1141, %1144 : vector<1x256xf32>
    %c13_443 = arith.constant 13 : index
    %1146 = memref.load %arg1[%c13_443] : memref<196xf32, #tpu.memory_space<smem>>
    %1147 = vector.broadcast %1146 : f32 to vector<1x256xf32>
    %1148 = arith.mulf %1136, %1147 : vector<1x256xf32>
    %1149 = arith.addf %1134, %1148 : vector<1x256xf32>
    %c15_444 = arith.constant 15 : index
    %1150 = memref.load %arg1[%c15_444] : memref<196xf32, #tpu.memory_space<smem>>
    %1151 = vector.broadcast %1150 : f32 to vector<1x256xf32>
    %1152 = arith.mulf %1137, %1151 : vector<1x256xf32>
    %1153 = arith.addf %1149, %1152 : vector<1x256xf32>
    %c0_445 = arith.constant 0 : index
    %c96_446 = arith.constant 96 : index
    %1154 = vector.load %arg14[%c0_445, %c96_446] : memref<2x512xf32, #tpu.memory_space<vmem>>, vector<2x256xf32>
    %1155 = vector.extract_strided_slice %1154 {offsets = [0, 0], sizes = [1, 256], strides = [1, 1]} : vector<2x256xf32> to vector<1x256xf32>
    %1156 = vector.extract_strided_slice %1154 {offsets = [1, 0], sizes = [1, 256], strides = [1, 1]} : vector<2x256xf32> to vector<1x256xf32>
    %c40_447 = arith.constant 40 : index
    %1157 = memref.load %arg1[%c40_447] : memref<196xf32, #tpu.memory_space<smem>>
    %1158 = vector.broadcast %1157 : f32 to vector<1x256xf32>
    %1159 = arith.mulf %1155, %1158 : vector<1x256xf32>
    %1160 = arith.addf %1145, %1159 : vector<1x256xf32>
    %c42_448 = arith.constant 42 : index
    %1161 = memref.load %arg1[%c42_448] : memref<196xf32, #tpu.memory_space<smem>>
    %1162 = vector.broadcast %1161 : f32 to vector<1x256xf32>
    %1163 = arith.mulf %1156, %1162 : vector<1x256xf32>
    %1164 = arith.addf %1160, %1163 : vector<1x256xf32>
    %c41_449 = arith.constant 41 : index
    %1165 = memref.load %arg1[%c41_449] : memref<196xf32, #tpu.memory_space<smem>>
    %1166 = vector.broadcast %1165 : f32 to vector<1x256xf32>
    %1167 = arith.mulf %1155, %1166 : vector<1x256xf32>
    %1168 = arith.addf %1153, %1167 : vector<1x256xf32>
    %c43_450 = arith.constant 43 : index
    %1169 = memref.load %arg1[%c43_450] : memref<196xf32, #tpu.memory_space<smem>>
    %1170 = vector.broadcast %1169 : f32 to vector<1x256xf32>
    %1171 = arith.mulf %1156, %1170 : vector<1x256xf32>
    %1172 = arith.addf %1168, %1171 : vector<1x256xf32>
    %c0_451 = arith.constant 0 : index
    %c112_452 = arith.constant 112 : index
    %1173 = vector.load %arg14[%c0_451, %c112_452] : memref<2x512xf32, #tpu.memory_space<vmem>>, vector<2x256xf32>
    %1174 = vector.extract_strided_slice %1173 {offsets = [0, 0], sizes = [1, 256], strides = [1, 1]} : vector<2x256xf32> to vector<1x256xf32>
    %1175 = vector.extract_strided_slice %1173 {offsets = [1, 0], sizes = [1, 256], strides = [1, 1]} : vector<2x256xf32> to vector<1x256xf32>
    %c68 = arith.constant 68 : index
    %1176 = memref.load %arg1[%c68] : memref<196xf32, #tpu.memory_space<smem>>
    %1177 = vector.broadcast %1176 : f32 to vector<1x256xf32>
    %1178 = arith.mulf %1174, %1177 : vector<1x256xf32>
    %1179 = arith.addf %1164, %1178 : vector<1x256xf32>
    %c70 = arith.constant 70 : index
    %1180 = memref.load %arg1[%c70] : memref<196xf32, #tpu.memory_space<smem>>
    %1181 = vector.broadcast %1180 : f32 to vector<1x256xf32>
    %1182 = arith.mulf %1175, %1181 : vector<1x256xf32>
    %1183 = arith.addf %1179, %1182 : vector<1x256xf32>
    %c69 = arith.constant 69 : index
    %1184 = memref.load %arg1[%c69] : memref<196xf32, #tpu.memory_space<smem>>
    %1185 = vector.broadcast %1184 : f32 to vector<1x256xf32>
    %1186 = arith.mulf %1174, %1185 : vector<1x256xf32>
    %1187 = arith.addf %1172, %1186 : vector<1x256xf32>
    %c71 = arith.constant 71 : index
    %1188 = memref.load %arg1[%c71] : memref<196xf32, #tpu.memory_space<smem>>
    %1189 = vector.broadcast %1188 : f32 to vector<1x256xf32>
    %1190 = arith.mulf %1175, %1189 : vector<1x256xf32>
    %1191 = arith.addf %1187, %1190 : vector<1x256xf32>
    %c0_453 = arith.constant 0 : index
    %c128_454 = arith.constant 128 : index
    %1192 = vector.load %arg14[%c0_453, %c128_454] : memref<2x512xf32, #tpu.memory_space<vmem>>, vector<2x256xf32>
    %1193 = vector.extract_strided_slice %1192 {offsets = [0, 0], sizes = [1, 256], strides = [1, 1]} : vector<2x256xf32> to vector<1x256xf32>
    %1194 = vector.extract_strided_slice %1192 {offsets = [1, 0], sizes = [1, 256], strides = [1, 1]} : vector<2x256xf32> to vector<1x256xf32>
    %c96_455 = arith.constant 96 : index
    %1195 = memref.load %arg1[%c96_455] : memref<196xf32, #tpu.memory_space<smem>>
    %1196 = vector.broadcast %1195 : f32 to vector<1x256xf32>
    %1197 = arith.mulf %1193, %1196 : vector<1x256xf32>
    %1198 = arith.addf %1183, %1197 : vector<1x256xf32>
    %c98_456 = arith.constant 98 : index
    %1199 = memref.load %arg1[%c98_456] : memref<196xf32, #tpu.memory_space<smem>>
    %1200 = vector.broadcast %1199 : f32 to vector<1x256xf32>
    %1201 = arith.mulf %1194, %1200 : vector<1x256xf32>
    %1202 = arith.addf %1198, %1201 : vector<1x256xf32>
    %c97_457 = arith.constant 97 : index
    %1203 = memref.load %arg1[%c97_457] : memref<196xf32, #tpu.memory_space<smem>>
    %1204 = vector.broadcast %1203 : f32 to vector<1x256xf32>
    %1205 = arith.mulf %1193, %1204 : vector<1x256xf32>
    %1206 = arith.addf %1191, %1205 : vector<1x256xf32>
    %c99 = arith.constant 99 : index
    %1207 = memref.load %arg1[%c99] : memref<196xf32, #tpu.memory_space<smem>>
    %1208 = vector.broadcast %1207 : f32 to vector<1x256xf32>
    %1209 = arith.mulf %1194, %1208 : vector<1x256xf32>
    %1210 = arith.addf %1206, %1209 : vector<1x256xf32>
    %c0_458 = arith.constant 0 : index
    %c144_459 = arith.constant 144 : index
    %1211 = vector.load %arg14[%c0_458, %c144_459] : memref<2x512xf32, #tpu.memory_space<vmem>>, vector<2x256xf32>
    %1212 = vector.extract_strided_slice %1211 {offsets = [0, 0], sizes = [1, 256], strides = [1, 1]} : vector<2x256xf32> to vector<1x256xf32>
    %1213 = vector.extract_strided_slice %1211 {offsets = [1, 0], sizes = [1, 256], strides = [1, 1]} : vector<2x256xf32> to vector<1x256xf32>
    %c124 = arith.constant 124 : index
    %1214 = memref.load %arg1[%c124] : memref<196xf32, #tpu.memory_space<smem>>
    %1215 = vector.broadcast %1214 : f32 to vector<1x256xf32>
    %1216 = arith.mulf %1212, %1215 : vector<1x256xf32>
    %1217 = arith.addf %1202, %1216 : vector<1x256xf32>
    %c126_460 = arith.constant 126 : index
    %1218 = memref.load %arg1[%c126_460] : memref<196xf32, #tpu.memory_space<smem>>
    %1219 = vector.broadcast %1218 : f32 to vector<1x256xf32>
    %1220 = arith.mulf %1213, %1219 : vector<1x256xf32>
    %1221 = arith.addf %1217, %1220 : vector<1x256xf32>
    %c125_461 = arith.constant 125 : index
    %1222 = memref.load %arg1[%c125_461] : memref<196xf32, #tpu.memory_space<smem>>
    %1223 = vector.broadcast %1222 : f32 to vector<1x256xf32>
    %1224 = arith.mulf %1212, %1223 : vector<1x256xf32>
    %1225 = arith.addf %1210, %1224 : vector<1x256xf32>
    %c127_462 = arith.constant 127 : index
    %1226 = memref.load %arg1[%c127_462] : memref<196xf32, #tpu.memory_space<smem>>
    %1227 = vector.broadcast %1226 : f32 to vector<1x256xf32>
    %1228 = arith.mulf %1213, %1227 : vector<1x256xf32>
    %1229 = arith.addf %1225, %1228 : vector<1x256xf32>
    %c0_463 = arith.constant 0 : index
    %c160_464 = arith.constant 160 : index
    %1230 = vector.load %arg14[%c0_463, %c160_464] : memref<2x512xf32, #tpu.memory_space<vmem>>, vector<2x256xf32>
    %1231 = vector.extract_strided_slice %1230 {offsets = [0, 0], sizes = [1, 256], strides = [1, 1]} : vector<2x256xf32> to vector<1x256xf32>
    %1232 = vector.extract_strided_slice %1230 {offsets = [1, 0], sizes = [1, 256], strides = [1, 1]} : vector<2x256xf32> to vector<1x256xf32>
    %c152 = arith.constant 152 : index
    %1233 = memref.load %arg1[%c152] : memref<196xf32, #tpu.memory_space<smem>>
    %1234 = vector.broadcast %1233 : f32 to vector<1x256xf32>
    %1235 = arith.mulf %1231, %1234 : vector<1x256xf32>
    %1236 = arith.addf %1221, %1235 : vector<1x256xf32>
    %c154_465 = arith.constant 154 : index
    %1237 = memref.load %arg1[%c154_465] : memref<196xf32, #tpu.memory_space<smem>>
    %1238 = vector.broadcast %1237 : f32 to vector<1x256xf32>
    %1239 = arith.mulf %1232, %1238 : vector<1x256xf32>
    %1240 = arith.addf %1236, %1239 : vector<1x256xf32>
    %c153 = arith.constant 153 : index
    %1241 = memref.load %arg1[%c153] : memref<196xf32, #tpu.memory_space<smem>>
    %1242 = vector.broadcast %1241 : f32 to vector<1x256xf32>
    %1243 = arith.mulf %1231, %1242 : vector<1x256xf32>
    %1244 = arith.addf %1229, %1243 : vector<1x256xf32>
    %c155 = arith.constant 155 : index
    %1245 = memref.load %arg1[%c155] : memref<196xf32, #tpu.memory_space<smem>>
    %1246 = vector.broadcast %1245 : f32 to vector<1x256xf32>
    %1247 = arith.mulf %1232, %1246 : vector<1x256xf32>
    %1248 = arith.addf %1244, %1247 : vector<1x256xf32>
    %c0_466 = arith.constant 0 : index
    %c176_467 = arith.constant 176 : index
    %1249 = vector.load %arg14[%c0_466, %c176_467] : memref<2x512xf32, #tpu.memory_space<vmem>>, vector<2x256xf32>
    %1250 = vector.extract_strided_slice %1249 {offsets = [0, 0], sizes = [1, 256], strides = [1, 1]} : vector<2x256xf32> to vector<1x256xf32>
    %1251 = vector.extract_strided_slice %1249 {offsets = [1, 0], sizes = [1, 256], strides = [1, 1]} : vector<2x256xf32> to vector<1x256xf32>
    %c180 = arith.constant 180 : index
    %1252 = memref.load %arg1[%c180] : memref<196xf32, #tpu.memory_space<smem>>
    %1253 = vector.broadcast %1252 : f32 to vector<1x256xf32>
    %1254 = arith.mulf %1250, %1253 : vector<1x256xf32>
    %1255 = arith.addf %1240, %1254 : vector<1x256xf32>
    %c182 = arith.constant 182 : index
    %1256 = memref.load %arg1[%c182] : memref<196xf32, #tpu.memory_space<smem>>
    %1257 = vector.broadcast %1256 : f32 to vector<1x256xf32>
    %1258 = arith.mulf %1251, %1257 : vector<1x256xf32>
    %1259 = arith.addf %1255, %1258 : vector<1x256xf32>
    %c181 = arith.constant 181 : index
    %1260 = memref.load %arg1[%c181] : memref<196xf32, #tpu.memory_space<smem>>
    %1261 = vector.broadcast %1260 : f32 to vector<1x256xf32>
    %1262 = arith.mulf %1250, %1261 : vector<1x256xf32>
    %1263 = arith.addf %1248, %1262 : vector<1x256xf32>
    %c183 = arith.constant 183 : index
    %1264 = memref.load %arg1[%c183] : memref<196xf32, #tpu.memory_space<smem>>
    %1265 = vector.broadcast %1264 : f32 to vector<1x256xf32>
    %1266 = arith.mulf %1251, %1265 : vector<1x256xf32>
    %1267 = arith.addf %1263, %1266 : vector<1x256xf32>
    %c0_i32_468 = arith.constant 0 : i32
    %1268 = vector.broadcast %c0_i32_468 : i32 to vector<1x256xi32>
    %1269 = arith.addi %18, %1268 : vector<1x256xi32>
    %c0_i32_469 = arith.constant 0 : i32
    %1270 = vector.broadcast %c0_i32_469 : i32 to vector<1x256xi32>
    %1271 = arith.cmpi sge, %1269, %1270 : vector<1x256xi32>
    %c0_i32_470 = arith.constant 0 : i32
    %1272 = vector.broadcast %c0_i32_470 : i32 to vector<1x256xi32>
    %1273 = arith.addi %18, %1272 : vector<1x256xi32>
    %c16_i32_471 = arith.constant 16 : i32
    %1274 = vector.broadcast %c16_i32_471 : i32 to vector<1x256xi32>
    %1275 = arith.cmpi slt, %1273, %1274 : vector<1x256xi32>
    %1276 = arith.andi %1271, %1275 : vector<1x256xi1>
    %1277 = arith.extui %1276 : vector<1x256xi1> to vector<1x256xi32>
    %1278 = arith.sitofp %1277 : vector<1x256xi32> to vector<1x256xf32>
    %1279 = arith.mulf %1259, %1278 : vector<1x256xf32>
    %1280 = arith.addf %1130, %1279 : vector<1x256xf32>
    %1281 = arith.mulf %1267, %1278 : vector<1x256xf32>
    %1282 = arith.addf %1132, %1281 : vector<1x256xf32>
    %cst_472 = arith.constant 0.000000e+00 : f32
    %1283 = vector.broadcast %cst_472 : f32 to vector<1x256xf32>
    %cst_473 = arith.constant 0.000000e+00 : f32
    %1284 = vector.broadcast %cst_473 : f32 to vector<1x256xf32>
    %c0_474 = arith.constant 0 : index
    %c81 = arith.constant 81 : index
    %1285 = vector.load %arg14[%c0_474, %c81] : memref<2x512xf32, #tpu.memory_space<vmem>>, vector<2x256xf32>
    %1286 = vector.extract_strided_slice %1285 {offsets = [0, 0], sizes = [1, 256], strides = [1, 1]} : vector<2x256xf32> to vector<1x256xf32>
    %1287 = vector.extract_strided_slice %1285 {offsets = [1, 0], sizes = [1, 256], strides = [1, 1]} : vector<2x256xf32> to vector<1x256xf32>
    %c16_475 = arith.constant 16 : index
    %1288 = memref.load %arg1[%c16_475] : memref<196xf32, #tpu.memory_space<smem>>
    %1289 = vector.broadcast %1288 : f32 to vector<1x256xf32>
    %1290 = arith.mulf %1286, %1289 : vector<1x256xf32>
    %1291 = arith.addf %1283, %1290 : vector<1x256xf32>
    %c18_476 = arith.constant 18 : index
    %1292 = memref.load %arg1[%c18_476] : memref<196xf32, #tpu.memory_space<smem>>
    %1293 = vector.broadcast %1292 : f32 to vector<1x256xf32>
    %1294 = arith.mulf %1287, %1293 : vector<1x256xf32>
    %1295 = arith.addf %1291, %1294 : vector<1x256xf32>
    %c17_477 = arith.constant 17 : index
    %1296 = memref.load %arg1[%c17_477] : memref<196xf32, #tpu.memory_space<smem>>
    %1297 = vector.broadcast %1296 : f32 to vector<1x256xf32>
    %1298 = arith.mulf %1286, %1297 : vector<1x256xf32>
    %1299 = arith.addf %1284, %1298 : vector<1x256xf32>
    %c19_478 = arith.constant 19 : index
    %1300 = memref.load %arg1[%c19_478] : memref<196xf32, #tpu.memory_space<smem>>
    %1301 = vector.broadcast %1300 : f32 to vector<1x256xf32>
    %1302 = arith.mulf %1287, %1301 : vector<1x256xf32>
    %1303 = arith.addf %1299, %1302 : vector<1x256xf32>
    %c0_479 = arith.constant 0 : index
    %c97_480 = arith.constant 97 : index
    %1304 = vector.load %arg14[%c0_479, %c97_480] : memref<2x512xf32, #tpu.memory_space<vmem>>, vector<2x256xf32>
    %1305 = vector.extract_strided_slice %1304 {offsets = [0, 0], sizes = [1, 256], strides = [1, 1]} : vector<2x256xf32> to vector<1x256xf32>
    %1306 = vector.extract_strided_slice %1304 {offsets = [1, 0], sizes = [1, 256], strides = [1, 1]} : vector<2x256xf32> to vector<1x256xf32>
    %c44_481 = arith.constant 44 : index
    %1307 = memref.load %arg1[%c44_481] : memref<196xf32, #tpu.memory_space<smem>>
    %1308 = vector.broadcast %1307 : f32 to vector<1x256xf32>
    %1309 = arith.mulf %1305, %1308 : vector<1x256xf32>
    %1310 = arith.addf %1295, %1309 : vector<1x256xf32>
    %c46_482 = arith.constant 46 : index
    %1311 = memref.load %arg1[%c46_482] : memref<196xf32, #tpu.memory_space<smem>>
    %1312 = vector.broadcast %1311 : f32 to vector<1x256xf32>
    %1313 = arith.mulf %1306, %1312 : vector<1x256xf32>
    %1314 = arith.addf %1310, %1313 : vector<1x256xf32>
    %c45_483 = arith.constant 45 : index
    %1315 = memref.load %arg1[%c45_483] : memref<196xf32, #tpu.memory_space<smem>>
    %1316 = vector.broadcast %1315 : f32 to vector<1x256xf32>
    %1317 = arith.mulf %1305, %1316 : vector<1x256xf32>
    %1318 = arith.addf %1303, %1317 : vector<1x256xf32>
    %c47_484 = arith.constant 47 : index
    %1319 = memref.load %arg1[%c47_484] : memref<196xf32, #tpu.memory_space<smem>>
    %1320 = vector.broadcast %1319 : f32 to vector<1x256xf32>
    %1321 = arith.mulf %1306, %1320 : vector<1x256xf32>
    %1322 = arith.addf %1318, %1321 : vector<1x256xf32>
    %c0_485 = arith.constant 0 : index
    %c113_486 = arith.constant 113 : index
    %1323 = vector.load %arg14[%c0_485, %c113_486] : memref<2x512xf32, #tpu.memory_space<vmem>>, vector<2x256xf32>
    %1324 = vector.extract_strided_slice %1323 {offsets = [0, 0], sizes = [1, 256], strides = [1, 1]} : vector<2x256xf32> to vector<1x256xf32>
    %1325 = vector.extract_strided_slice %1323 {offsets = [1, 0], sizes = [1, 256], strides = [1, 1]} : vector<2x256xf32> to vector<1x256xf32>
    %c72 = arith.constant 72 : index
    %1326 = memref.load %arg1[%c72] : memref<196xf32, #tpu.memory_space<smem>>
    %1327 = vector.broadcast %1326 : f32 to vector<1x256xf32>
    %1328 = arith.mulf %1324, %1327 : vector<1x256xf32>
    %1329 = arith.addf %1314, %1328 : vector<1x256xf32>
    %c74 = arith.constant 74 : index
    %1330 = memref.load %arg1[%c74] : memref<196xf32, #tpu.memory_space<smem>>
    %1331 = vector.broadcast %1330 : f32 to vector<1x256xf32>
    %1332 = arith.mulf %1325, %1331 : vector<1x256xf32>
    %1333 = arith.addf %1329, %1332 : vector<1x256xf32>
    %c73 = arith.constant 73 : index
    %1334 = memref.load %arg1[%c73] : memref<196xf32, #tpu.memory_space<smem>>
    %1335 = vector.broadcast %1334 : f32 to vector<1x256xf32>
    %1336 = arith.mulf %1324, %1335 : vector<1x256xf32>
    %1337 = arith.addf %1322, %1336 : vector<1x256xf32>
    %c75 = arith.constant 75 : index
    %1338 = memref.load %arg1[%c75] : memref<196xf32, #tpu.memory_space<smem>>
    %1339 = vector.broadcast %1338 : f32 to vector<1x256xf32>
    %1340 = arith.mulf %1325, %1339 : vector<1x256xf32>
    %1341 = arith.addf %1337, %1340 : vector<1x256xf32>
    %c0_487 = arith.constant 0 : index
    %c129_488 = arith.constant 129 : index
    %1342 = vector.load %arg14[%c0_487, %c129_488] : memref<2x512xf32, #tpu.memory_space<vmem>>, vector<2x256xf32>
    %1343 = vector.extract_strided_slice %1342 {offsets = [0, 0], sizes = [1, 256], strides = [1, 1]} : vector<2x256xf32> to vector<1x256xf32>
    %1344 = vector.extract_strided_slice %1342 {offsets = [1, 0], sizes = [1, 256], strides = [1, 1]} : vector<2x256xf32> to vector<1x256xf32>
    %c100 = arith.constant 100 : index
    %1345 = memref.load %arg1[%c100] : memref<196xf32, #tpu.memory_space<smem>>
    %1346 = vector.broadcast %1345 : f32 to vector<1x256xf32>
    %1347 = arith.mulf %1343, %1346 : vector<1x256xf32>
    %1348 = arith.addf %1333, %1347 : vector<1x256xf32>
    %c102 = arith.constant 102 : index
    %1349 = memref.load %arg1[%c102] : memref<196xf32, #tpu.memory_space<smem>>
    %1350 = vector.broadcast %1349 : f32 to vector<1x256xf32>
    %1351 = arith.mulf %1344, %1350 : vector<1x256xf32>
    %1352 = arith.addf %1348, %1351 : vector<1x256xf32>
    %c101 = arith.constant 101 : index
    %1353 = memref.load %arg1[%c101] : memref<196xf32, #tpu.memory_space<smem>>
    %1354 = vector.broadcast %1353 : f32 to vector<1x256xf32>
    %1355 = arith.mulf %1343, %1354 : vector<1x256xf32>
    %1356 = arith.addf %1341, %1355 : vector<1x256xf32>
    %c103_489 = arith.constant 103 : index
    %1357 = memref.load %arg1[%c103_489] : memref<196xf32, #tpu.memory_space<smem>>
    %1358 = vector.broadcast %1357 : f32 to vector<1x256xf32>
    %1359 = arith.mulf %1344, %1358 : vector<1x256xf32>
    %1360 = arith.addf %1356, %1359 : vector<1x256xf32>
    %c0_490 = arith.constant 0 : index
    %c145_491 = arith.constant 145 : index
    %1361 = vector.load %arg14[%c0_490, %c145_491] : memref<2x512xf32, #tpu.memory_space<vmem>>, vector<2x256xf32>
    %1362 = vector.extract_strided_slice %1361 {offsets = [0, 0], sizes = [1, 256], strides = [1, 1]} : vector<2x256xf32> to vector<1x256xf32>
    %1363 = vector.extract_strided_slice %1361 {offsets = [1, 0], sizes = [1, 256], strides = [1, 1]} : vector<2x256xf32> to vector<1x256xf32>
    %c128_492 = arith.constant 128 : index
    %1364 = memref.load %arg1[%c128_492] : memref<196xf32, #tpu.memory_space<smem>>
    %1365 = vector.broadcast %1364 : f32 to vector<1x256xf32>
    %1366 = arith.mulf %1362, %1365 : vector<1x256xf32>
    %1367 = arith.addf %1352, %1366 : vector<1x256xf32>
    %c130_493 = arith.constant 130 : index
    %1368 = memref.load %arg1[%c130_493] : memref<196xf32, #tpu.memory_space<smem>>
    %1369 = vector.broadcast %1368 : f32 to vector<1x256xf32>
    %1370 = arith.mulf %1363, %1369 : vector<1x256xf32>
    %1371 = arith.addf %1367, %1370 : vector<1x256xf32>
    %c129_494 = arith.constant 129 : index
    %1372 = memref.load %arg1[%c129_494] : memref<196xf32, #tpu.memory_space<smem>>
    %1373 = vector.broadcast %1372 : f32 to vector<1x256xf32>
    %1374 = arith.mulf %1362, %1373 : vector<1x256xf32>
    %1375 = arith.addf %1360, %1374 : vector<1x256xf32>
    %c131 = arith.constant 131 : index
    %1376 = memref.load %arg1[%c131] : memref<196xf32, #tpu.memory_space<smem>>
    %1377 = vector.broadcast %1376 : f32 to vector<1x256xf32>
    %1378 = arith.mulf %1363, %1377 : vector<1x256xf32>
    %1379 = arith.addf %1375, %1378 : vector<1x256xf32>
    %c0_495 = arith.constant 0 : index
    %c161_496 = arith.constant 161 : index
    %1380 = vector.load %arg14[%c0_495, %c161_496] : memref<2x512xf32, #tpu.memory_space<vmem>>, vector<2x256xf32>
    %1381 = vector.extract_strided_slice %1380 {offsets = [0, 0], sizes = [1, 256], strides = [1, 1]} : vector<2x256xf32> to vector<1x256xf32>
    %1382 = vector.extract_strided_slice %1380 {offsets = [1, 0], sizes = [1, 256], strides = [1, 1]} : vector<2x256xf32> to vector<1x256xf32>
    %c156 = arith.constant 156 : index
    %1383 = memref.load %arg1[%c156] : memref<196xf32, #tpu.memory_space<smem>>
    %1384 = vector.broadcast %1383 : f32 to vector<1x256xf32>
    %1385 = arith.mulf %1381, %1384 : vector<1x256xf32>
    %1386 = arith.addf %1371, %1385 : vector<1x256xf32>
    %c158_497 = arith.constant 158 : index
    %1387 = memref.load %arg1[%c158_497] : memref<196xf32, #tpu.memory_space<smem>>
    %1388 = vector.broadcast %1387 : f32 to vector<1x256xf32>
    %1389 = arith.mulf %1382, %1388 : vector<1x256xf32>
    %1390 = arith.addf %1386, %1389 : vector<1x256xf32>
    %c157_498 = arith.constant 157 : index
    %1391 = memref.load %arg1[%c157_498] : memref<196xf32, #tpu.memory_space<smem>>
    %1392 = vector.broadcast %1391 : f32 to vector<1x256xf32>
    %1393 = arith.mulf %1381, %1392 : vector<1x256xf32>
    %1394 = arith.addf %1379, %1393 : vector<1x256xf32>
    %c159_499 = arith.constant 159 : index
    %1395 = memref.load %arg1[%c159_499] : memref<196xf32, #tpu.memory_space<smem>>
    %1396 = vector.broadcast %1395 : f32 to vector<1x256xf32>
    %1397 = arith.mulf %1382, %1396 : vector<1x256xf32>
    %1398 = arith.addf %1394, %1397 : vector<1x256xf32>
    %c0_500 = arith.constant 0 : index
    %c177_501 = arith.constant 177 : index
    %1399 = vector.load %arg14[%c0_500, %c177_501] : memref<2x512xf32, #tpu.memory_space<vmem>>, vector<2x256xf32>
    %1400 = vector.extract_strided_slice %1399 {offsets = [0, 0], sizes = [1, 256], strides = [1, 1]} : vector<2x256xf32> to vector<1x256xf32>
    %1401 = vector.extract_strided_slice %1399 {offsets = [1, 0], sizes = [1, 256], strides = [1, 1]} : vector<2x256xf32> to vector<1x256xf32>
    %c184 = arith.constant 184 : index
    %1402 = memref.load %arg1[%c184] : memref<196xf32, #tpu.memory_space<smem>>
    %1403 = vector.broadcast %1402 : f32 to vector<1x256xf32>
    %1404 = arith.mulf %1400, %1403 : vector<1x256xf32>
    %1405 = arith.addf %1390, %1404 : vector<1x256xf32>
    %c186 = arith.constant 186 : index
    %1406 = memref.load %arg1[%c186] : memref<196xf32, #tpu.memory_space<smem>>
    %1407 = vector.broadcast %1406 : f32 to vector<1x256xf32>
    %1408 = arith.mulf %1401, %1407 : vector<1x256xf32>
    %1409 = arith.addf %1405, %1408 : vector<1x256xf32>
    %c185 = arith.constant 185 : index
    %1410 = memref.load %arg1[%c185] : memref<196xf32, #tpu.memory_space<smem>>
    %1411 = vector.broadcast %1410 : f32 to vector<1x256xf32>
    %1412 = arith.mulf %1400, %1411 : vector<1x256xf32>
    %1413 = arith.addf %1398, %1412 : vector<1x256xf32>
    %c187 = arith.constant 187 : index
    %1414 = memref.load %arg1[%c187] : memref<196xf32, #tpu.memory_space<smem>>
    %1415 = vector.broadcast %1414 : f32 to vector<1x256xf32>
    %1416 = arith.mulf %1401, %1415 : vector<1x256xf32>
    %1417 = arith.addf %1413, %1416 : vector<1x256xf32>
    %c1_i32_502 = arith.constant 1 : i32
    %1418 = vector.broadcast %c1_i32_502 : i32 to vector<1x256xi32>
    %1419 = arith.addi %18, %1418 : vector<1x256xi32>
    %c0_i32_503 = arith.constant 0 : i32
    %1420 = vector.broadcast %c0_i32_503 : i32 to vector<1x256xi32>
    %1421 = arith.cmpi sge, %1419, %1420 : vector<1x256xi32>
    %c1_i32_504 = arith.constant 1 : i32
    %1422 = vector.broadcast %c1_i32_504 : i32 to vector<1x256xi32>
    %1423 = arith.addi %18, %1422 : vector<1x256xi32>
    %c16_i32_505 = arith.constant 16 : i32
    %1424 = vector.broadcast %c16_i32_505 : i32 to vector<1x256xi32>
    %1425 = arith.cmpi slt, %1423, %1424 : vector<1x256xi32>
    %1426 = arith.andi %1421, %1425 : vector<1x256xi1>
    %1427 = arith.extui %1426 : vector<1x256xi1> to vector<1x256xi32>
    %1428 = arith.sitofp %1427 : vector<1x256xi32> to vector<1x256xf32>
    %1429 = arith.mulf %1409, %1428 : vector<1x256xf32>
    %1430 = arith.addf %1280, %1429 : vector<1x256xf32>
    %1431 = arith.mulf %1417, %1428 : vector<1x256xf32>
    %1432 = arith.addf %1282, %1431 : vector<1x256xf32>
    %cst_506 = arith.constant 0.000000e+00 : f32
    %1433 = vector.broadcast %cst_506 : f32 to vector<1x256xf32>
    %cst_507 = arith.constant 0.000000e+00 : f32
    %1434 = vector.broadcast %cst_507 : f32 to vector<1x256xf32>
    %c0_508 = arith.constant 0 : index
    %c82 = arith.constant 82 : index
    %1435 = vector.load %arg14[%c0_508, %c82] : memref<2x512xf32, #tpu.memory_space<vmem>>, vector<2x256xf32>
    %1436 = vector.extract_strided_slice %1435 {offsets = [0, 0], sizes = [1, 256], strides = [1, 1]} : vector<2x256xf32> to vector<1x256xf32>
    %1437 = vector.extract_strided_slice %1435 {offsets = [1, 0], sizes = [1, 256], strides = [1, 1]} : vector<2x256xf32> to vector<1x256xf32>
    %c20_509 = arith.constant 20 : index
    %1438 = memref.load %arg1[%c20_509] : memref<196xf32, #tpu.memory_space<smem>>
    %1439 = vector.broadcast %1438 : f32 to vector<1x256xf32>
    %1440 = arith.mulf %1436, %1439 : vector<1x256xf32>
    %1441 = arith.addf %1433, %1440 : vector<1x256xf32>
    %c22_510 = arith.constant 22 : index
    %1442 = memref.load %arg1[%c22_510] : memref<196xf32, #tpu.memory_space<smem>>
    %1443 = vector.broadcast %1442 : f32 to vector<1x256xf32>
    %1444 = arith.mulf %1437, %1443 : vector<1x256xf32>
    %1445 = arith.addf %1441, %1444 : vector<1x256xf32>
    %c21_511 = arith.constant 21 : index
    %1446 = memref.load %arg1[%c21_511] : memref<196xf32, #tpu.memory_space<smem>>
    %1447 = vector.broadcast %1446 : f32 to vector<1x256xf32>
    %1448 = arith.mulf %1436, %1447 : vector<1x256xf32>
    %1449 = arith.addf %1434, %1448 : vector<1x256xf32>
    %c23_512 = arith.constant 23 : index
    %1450 = memref.load %arg1[%c23_512] : memref<196xf32, #tpu.memory_space<smem>>
    %1451 = vector.broadcast %1450 : f32 to vector<1x256xf32>
    %1452 = arith.mulf %1437, %1451 : vector<1x256xf32>
    %1453 = arith.addf %1449, %1452 : vector<1x256xf32>
    %c0_513 = arith.constant 0 : index
    %c98_514 = arith.constant 98 : index
    %1454 = vector.load %arg14[%c0_513, %c98_514] : memref<2x512xf32, #tpu.memory_space<vmem>>, vector<2x256xf32>
    %1455 = vector.extract_strided_slice %1454 {offsets = [0, 0], sizes = [1, 256], strides = [1, 1]} : vector<2x256xf32> to vector<1x256xf32>
    %1456 = vector.extract_strided_slice %1454 {offsets = [1, 0], sizes = [1, 256], strides = [1, 1]} : vector<2x256xf32> to vector<1x256xf32>
    %c48_515 = arith.constant 48 : index
    %1457 = memref.load %arg1[%c48_515] : memref<196xf32, #tpu.memory_space<smem>>
    %1458 = vector.broadcast %1457 : f32 to vector<1x256xf32>
    %1459 = arith.mulf %1455, %1458 : vector<1x256xf32>
    %1460 = arith.addf %1445, %1459 : vector<1x256xf32>
    %c50 = arith.constant 50 : index
    %1461 = memref.load %arg1[%c50] : memref<196xf32, #tpu.memory_space<smem>>
    %1462 = vector.broadcast %1461 : f32 to vector<1x256xf32>
    %1463 = arith.mulf %1456, %1462 : vector<1x256xf32>
    %1464 = arith.addf %1460, %1463 : vector<1x256xf32>
    %c49 = arith.constant 49 : index
    %1465 = memref.load %arg1[%c49] : memref<196xf32, #tpu.memory_space<smem>>
    %1466 = vector.broadcast %1465 : f32 to vector<1x256xf32>
    %1467 = arith.mulf %1455, %1466 : vector<1x256xf32>
    %1468 = arith.addf %1453, %1467 : vector<1x256xf32>
    %c51 = arith.constant 51 : index
    %1469 = memref.load %arg1[%c51] : memref<196xf32, #tpu.memory_space<smem>>
    %1470 = vector.broadcast %1469 : f32 to vector<1x256xf32>
    %1471 = arith.mulf %1456, %1470 : vector<1x256xf32>
    %1472 = arith.addf %1468, %1471 : vector<1x256xf32>
    %c0_516 = arith.constant 0 : index
    %c114_517 = arith.constant 114 : index
    %1473 = vector.load %arg14[%c0_516, %c114_517] : memref<2x512xf32, #tpu.memory_space<vmem>>, vector<2x256xf32>
    %1474 = vector.extract_strided_slice %1473 {offsets = [0, 0], sizes = [1, 256], strides = [1, 1]} : vector<2x256xf32> to vector<1x256xf32>
    %1475 = vector.extract_strided_slice %1473 {offsets = [1, 0], sizes = [1, 256], strides = [1, 1]} : vector<2x256xf32> to vector<1x256xf32>
    %c76 = arith.constant 76 : index
    %1476 = memref.load %arg1[%c76] : memref<196xf32, #tpu.memory_space<smem>>
    %1477 = vector.broadcast %1476 : f32 to vector<1x256xf32>
    %1478 = arith.mulf %1474, %1477 : vector<1x256xf32>
    %1479 = arith.addf %1464, %1478 : vector<1x256xf32>
    %c78_518 = arith.constant 78 : index
    %1480 = memref.load %arg1[%c78_518] : memref<196xf32, #tpu.memory_space<smem>>
    %1481 = vector.broadcast %1480 : f32 to vector<1x256xf32>
    %1482 = arith.mulf %1475, %1481 : vector<1x256xf32>
    %1483 = arith.addf %1479, %1482 : vector<1x256xf32>
    %c77_519 = arith.constant 77 : index
    %1484 = memref.load %arg1[%c77_519] : memref<196xf32, #tpu.memory_space<smem>>
    %1485 = vector.broadcast %1484 : f32 to vector<1x256xf32>
    %1486 = arith.mulf %1474, %1485 : vector<1x256xf32>
    %1487 = arith.addf %1472, %1486 : vector<1x256xf32>
    %c79_520 = arith.constant 79 : index
    %1488 = memref.load %arg1[%c79_520] : memref<196xf32, #tpu.memory_space<smem>>
    %1489 = vector.broadcast %1488 : f32 to vector<1x256xf32>
    %1490 = arith.mulf %1475, %1489 : vector<1x256xf32>
    %1491 = arith.addf %1487, %1490 : vector<1x256xf32>
    %c0_521 = arith.constant 0 : index
    %c130_522 = arith.constant 130 : index
    %1492 = vector.load %arg14[%c0_521, %c130_522] : memref<2x512xf32, #tpu.memory_space<vmem>>, vector<2x256xf32>
    %1493 = vector.extract_strided_slice %1492 {offsets = [0, 0], sizes = [1, 256], strides = [1, 1]} : vector<2x256xf32> to vector<1x256xf32>
    %1494 = vector.extract_strided_slice %1492 {offsets = [1, 0], sizes = [1, 256], strides = [1, 1]} : vector<2x256xf32> to vector<1x256xf32>
    %c104 = arith.constant 104 : index
    %1495 = memref.load %arg1[%c104] : memref<196xf32, #tpu.memory_space<smem>>
    %1496 = vector.broadcast %1495 : f32 to vector<1x256xf32>
    %1497 = arith.mulf %1493, %1496 : vector<1x256xf32>
    %1498 = arith.addf %1483, %1497 : vector<1x256xf32>
    %c106_523 = arith.constant 106 : index
    %1499 = memref.load %arg1[%c106_523] : memref<196xf32, #tpu.memory_space<smem>>
    %1500 = vector.broadcast %1499 : f32 to vector<1x256xf32>
    %1501 = arith.mulf %1494, %1500 : vector<1x256xf32>
    %1502 = arith.addf %1498, %1501 : vector<1x256xf32>
    %c105 = arith.constant 105 : index
    %1503 = memref.load %arg1[%c105] : memref<196xf32, #tpu.memory_space<smem>>
    %1504 = vector.broadcast %1503 : f32 to vector<1x256xf32>
    %1505 = arith.mulf %1493, %1504 : vector<1x256xf32>
    %1506 = arith.addf %1491, %1505 : vector<1x256xf32>
    %c107 = arith.constant 107 : index
    %1507 = memref.load %arg1[%c107] : memref<196xf32, #tpu.memory_space<smem>>
    %1508 = vector.broadcast %1507 : f32 to vector<1x256xf32>
    %1509 = arith.mulf %1494, %1508 : vector<1x256xf32>
    %1510 = arith.addf %1506, %1509 : vector<1x256xf32>
    %c0_524 = arith.constant 0 : index
    %c146_525 = arith.constant 146 : index
    %1511 = vector.load %arg14[%c0_524, %c146_525] : memref<2x512xf32, #tpu.memory_space<vmem>>, vector<2x256xf32>
    %1512 = vector.extract_strided_slice %1511 {offsets = [0, 0], sizes = [1, 256], strides = [1, 1]} : vector<2x256xf32> to vector<1x256xf32>
    %1513 = vector.extract_strided_slice %1511 {offsets = [1, 0], sizes = [1, 256], strides = [1, 1]} : vector<2x256xf32> to vector<1x256xf32>
    %c132 = arith.constant 132 : index
    %1514 = memref.load %arg1[%c132] : memref<196xf32, #tpu.memory_space<smem>>
    %1515 = vector.broadcast %1514 : f32 to vector<1x256xf32>
    %1516 = arith.mulf %1512, %1515 : vector<1x256xf32>
    %1517 = arith.addf %1502, %1516 : vector<1x256xf32>
    %c134 = arith.constant 134 : index
    %1518 = memref.load %arg1[%c134] : memref<196xf32, #tpu.memory_space<smem>>
    %1519 = vector.broadcast %1518 : f32 to vector<1x256xf32>
    %1520 = arith.mulf %1513, %1519 : vector<1x256xf32>
    %1521 = arith.addf %1517, %1520 : vector<1x256xf32>
    %c133 = arith.constant 133 : index
    %1522 = memref.load %arg1[%c133] : memref<196xf32, #tpu.memory_space<smem>>
    %1523 = vector.broadcast %1522 : f32 to vector<1x256xf32>
    %1524 = arith.mulf %1512, %1523 : vector<1x256xf32>
    %1525 = arith.addf %1510, %1524 : vector<1x256xf32>
    %c135 = arith.constant 135 : index
    %1526 = memref.load %arg1[%c135] : memref<196xf32, #tpu.memory_space<smem>>
    %1527 = vector.broadcast %1526 : f32 to vector<1x256xf32>
    %1528 = arith.mulf %1513, %1527 : vector<1x256xf32>
    %1529 = arith.addf %1525, %1528 : vector<1x256xf32>
    %c0_526 = arith.constant 0 : index
    %c162_527 = arith.constant 162 : index
    %1530 = vector.load %arg14[%c0_526, %c162_527] : memref<2x512xf32, #tpu.memory_space<vmem>>, vector<2x256xf32>
    %1531 = vector.extract_strided_slice %1530 {offsets = [0, 0], sizes = [1, 256], strides = [1, 1]} : vector<2x256xf32> to vector<1x256xf32>
    %1532 = vector.extract_strided_slice %1530 {offsets = [1, 0], sizes = [1, 256], strides = [1, 1]} : vector<2x256xf32> to vector<1x256xf32>
    %c160_528 = arith.constant 160 : index
    %1533 = memref.load %arg1[%c160_528] : memref<196xf32, #tpu.memory_space<smem>>
    %1534 = vector.broadcast %1533 : f32 to vector<1x256xf32>
    %1535 = arith.mulf %1531, %1534 : vector<1x256xf32>
    %1536 = arith.addf %1521, %1535 : vector<1x256xf32>
    %c162_529 = arith.constant 162 : index
    %1537 = memref.load %arg1[%c162_529] : memref<196xf32, #tpu.memory_space<smem>>
    %1538 = vector.broadcast %1537 : f32 to vector<1x256xf32>
    %1539 = arith.mulf %1532, %1538 : vector<1x256xf32>
    %1540 = arith.addf %1536, %1539 : vector<1x256xf32>
    %c161_530 = arith.constant 161 : index
    %1541 = memref.load %arg1[%c161_530] : memref<196xf32, #tpu.memory_space<smem>>
    %1542 = vector.broadcast %1541 : f32 to vector<1x256xf32>
    %1543 = arith.mulf %1531, %1542 : vector<1x256xf32>
    %1544 = arith.addf %1529, %1543 : vector<1x256xf32>
    %c163_531 = arith.constant 163 : index
    %1545 = memref.load %arg1[%c163_531] : memref<196xf32, #tpu.memory_space<smem>>
    %1546 = vector.broadcast %1545 : f32 to vector<1x256xf32>
    %1547 = arith.mulf %1532, %1546 : vector<1x256xf32>
    %1548 = arith.addf %1544, %1547 : vector<1x256xf32>
    %c0_532 = arith.constant 0 : index
    %c178_533 = arith.constant 178 : index
    %1549 = vector.load %arg14[%c0_532, %c178_533] : memref<2x512xf32, #tpu.memory_space<vmem>>, vector<2x256xf32>
    %1550 = vector.extract_strided_slice %1549 {offsets = [0, 0], sizes = [1, 256], strides = [1, 1]} : vector<2x256xf32> to vector<1x256xf32>
    %1551 = vector.extract_strided_slice %1549 {offsets = [1, 0], sizes = [1, 256], strides = [1, 1]} : vector<2x256xf32> to vector<1x256xf32>
    %c188 = arith.constant 188 : index
    %1552 = memref.load %arg1[%c188] : memref<196xf32, #tpu.memory_space<smem>>
    %1553 = vector.broadcast %1552 : f32 to vector<1x256xf32>
    %1554 = arith.mulf %1550, %1553 : vector<1x256xf32>
    %1555 = arith.addf %1540, %1554 : vector<1x256xf32>
    %c190 = arith.constant 190 : index
    %1556 = memref.load %arg1[%c190] : memref<196xf32, #tpu.memory_space<smem>>
    %1557 = vector.broadcast %1556 : f32 to vector<1x256xf32>
    %1558 = arith.mulf %1551, %1557 : vector<1x256xf32>
    %1559 = arith.addf %1555, %1558 : vector<1x256xf32>
    %c189 = arith.constant 189 : index
    %1560 = memref.load %arg1[%c189] : memref<196xf32, #tpu.memory_space<smem>>
    %1561 = vector.broadcast %1560 : f32 to vector<1x256xf32>
    %1562 = arith.mulf %1550, %1561 : vector<1x256xf32>
    %1563 = arith.addf %1548, %1562 : vector<1x256xf32>
    %c191 = arith.constant 191 : index
    %1564 = memref.load %arg1[%c191] : memref<196xf32, #tpu.memory_space<smem>>
    %1565 = vector.broadcast %1564 : f32 to vector<1x256xf32>
    %1566 = arith.mulf %1551, %1565 : vector<1x256xf32>
    %1567 = arith.addf %1563, %1566 : vector<1x256xf32>
    %c2_i32_534 = arith.constant 2 : i32
    %1568 = vector.broadcast %c2_i32_534 : i32 to vector<1x256xi32>
    %1569 = arith.addi %18, %1568 : vector<1x256xi32>
    %c0_i32_535 = arith.constant 0 : i32
    %1570 = vector.broadcast %c0_i32_535 : i32 to vector<1x256xi32>
    %1571 = arith.cmpi sge, %1569, %1570 : vector<1x256xi32>
    %c2_i32_536 = arith.constant 2 : i32
    %1572 = vector.broadcast %c2_i32_536 : i32 to vector<1x256xi32>
    %1573 = arith.addi %18, %1572 : vector<1x256xi32>
    %c16_i32_537 = arith.constant 16 : i32
    %1574 = vector.broadcast %c16_i32_537 : i32 to vector<1x256xi32>
    %1575 = arith.cmpi slt, %1573, %1574 : vector<1x256xi32>
    %1576 = arith.andi %1571, %1575 : vector<1x256xi1>
    %1577 = arith.extui %1576 : vector<1x256xi1> to vector<1x256xi32>
    %1578 = arith.sitofp %1577 : vector<1x256xi32> to vector<1x256xf32>
    %1579 = arith.mulf %1559, %1578 : vector<1x256xf32>
    %1580 = arith.addf %1430, %1579 : vector<1x256xf32>
    %1581 = arith.mulf %1567, %1578 : vector<1x256xf32>
    %1582 = arith.addf %1432, %1581 : vector<1x256xf32>
    %cst_538 = arith.constant 0.000000e+00 : f32
    %1583 = vector.broadcast %cst_538 : f32 to vector<1x256xf32>
    %cst_539 = arith.constant 0.000000e+00 : f32
    %1584 = vector.broadcast %cst_539 : f32 to vector<1x256xf32>
    %c0_540 = arith.constant 0 : index
    %c83 = arith.constant 83 : index
    %1585 = vector.load %arg14[%c0_540, %c83] : memref<2x512xf32, #tpu.memory_space<vmem>>, vector<2x256xf32>
    %1586 = vector.extract_strided_slice %1585 {offsets = [0, 0], sizes = [1, 256], strides = [1, 1]} : vector<2x256xf32> to vector<1x256xf32>
    %1587 = vector.extract_strided_slice %1585 {offsets = [1, 0], sizes = [1, 256], strides = [1, 1]} : vector<2x256xf32> to vector<1x256xf32>
    %c24_541 = arith.constant 24 : index
    %1588 = memref.load %arg1[%c24_541] : memref<196xf32, #tpu.memory_space<smem>>
    %1589 = vector.broadcast %1588 : f32 to vector<1x256xf32>
    %1590 = arith.mulf %1586, %1589 : vector<1x256xf32>
    %1591 = arith.addf %1583, %1590 : vector<1x256xf32>
    %c26_542 = arith.constant 26 : index
    %1592 = memref.load %arg1[%c26_542] : memref<196xf32, #tpu.memory_space<smem>>
    %1593 = vector.broadcast %1592 : f32 to vector<1x256xf32>
    %1594 = arith.mulf %1587, %1593 : vector<1x256xf32>
    %1595 = arith.addf %1591, %1594 : vector<1x256xf32>
    %c25_543 = arith.constant 25 : index
    %1596 = memref.load %arg1[%c25_543] : memref<196xf32, #tpu.memory_space<smem>>
    %1597 = vector.broadcast %1596 : f32 to vector<1x256xf32>
    %1598 = arith.mulf %1586, %1597 : vector<1x256xf32>
    %1599 = arith.addf %1584, %1598 : vector<1x256xf32>
    %c27_544 = arith.constant 27 : index
    %1600 = memref.load %arg1[%c27_544] : memref<196xf32, #tpu.memory_space<smem>>
    %1601 = vector.broadcast %1600 : f32 to vector<1x256xf32>
    %1602 = arith.mulf %1587, %1601 : vector<1x256xf32>
    %1603 = arith.addf %1599, %1602 : vector<1x256xf32>
    %c0_545 = arith.constant 0 : index
    %c99_546 = arith.constant 99 : index
    %1604 = vector.load %arg14[%c0_545, %c99_546] : memref<2x512xf32, #tpu.memory_space<vmem>>, vector<2x256xf32>
    %1605 = vector.extract_strided_slice %1604 {offsets = [0, 0], sizes = [1, 256], strides = [1, 1]} : vector<2x256xf32> to vector<1x256xf32>
    %1606 = vector.extract_strided_slice %1604 {offsets = [1, 0], sizes = [1, 256], strides = [1, 1]} : vector<2x256xf32> to vector<1x256xf32>
    %c52 = arith.constant 52 : index
    %1607 = memref.load %arg1[%c52] : memref<196xf32, #tpu.memory_space<smem>>
    %1608 = vector.broadcast %1607 : f32 to vector<1x256xf32>
    %1609 = arith.mulf %1605, %1608 : vector<1x256xf32>
    %1610 = arith.addf %1595, %1609 : vector<1x256xf32>
    %c54 = arith.constant 54 : index
    %1611 = memref.load %arg1[%c54] : memref<196xf32, #tpu.memory_space<smem>>
    %1612 = vector.broadcast %1611 : f32 to vector<1x256xf32>
    %1613 = arith.mulf %1606, %1612 : vector<1x256xf32>
    %1614 = arith.addf %1610, %1613 : vector<1x256xf32>
    %c53 = arith.constant 53 : index
    %1615 = memref.load %arg1[%c53] : memref<196xf32, #tpu.memory_space<smem>>
    %1616 = vector.broadcast %1615 : f32 to vector<1x256xf32>
    %1617 = arith.mulf %1605, %1616 : vector<1x256xf32>
    %1618 = arith.addf %1603, %1617 : vector<1x256xf32>
    %c55 = arith.constant 55 : index
    %1619 = memref.load %arg1[%c55] : memref<196xf32, #tpu.memory_space<smem>>
    %1620 = vector.broadcast %1619 : f32 to vector<1x256xf32>
    %1621 = arith.mulf %1606, %1620 : vector<1x256xf32>
    %1622 = arith.addf %1618, %1621 : vector<1x256xf32>
    %c0_547 = arith.constant 0 : index
    %c115_548 = arith.constant 115 : index
    %1623 = vector.load %arg14[%c0_547, %c115_548] : memref<2x512xf32, #tpu.memory_space<vmem>>, vector<2x256xf32>
    %1624 = vector.extract_strided_slice %1623 {offsets = [0, 0], sizes = [1, 256], strides = [1, 1]} : vector<2x256xf32> to vector<1x256xf32>
    %1625 = vector.extract_strided_slice %1623 {offsets = [1, 0], sizes = [1, 256], strides = [1, 1]} : vector<2x256xf32> to vector<1x256xf32>
    %c80_549 = arith.constant 80 : index
    %1626 = memref.load %arg1[%c80_549] : memref<196xf32, #tpu.memory_space<smem>>
    %1627 = vector.broadcast %1626 : f32 to vector<1x256xf32>
    %1628 = arith.mulf %1624, %1627 : vector<1x256xf32>
    %1629 = arith.addf %1614, %1628 : vector<1x256xf32>
    %c82_550 = arith.constant 82 : index
    %1630 = memref.load %arg1[%c82_550] : memref<196xf32, #tpu.memory_space<smem>>
    %1631 = vector.broadcast %1630 : f32 to vector<1x256xf32>
    %1632 = arith.mulf %1625, %1631 : vector<1x256xf32>
    %1633 = arith.addf %1629, %1632 : vector<1x256xf32>
    %c81_551 = arith.constant 81 : index
    %1634 = memref.load %arg1[%c81_551] : memref<196xf32, #tpu.memory_space<smem>>
    %1635 = vector.broadcast %1634 : f32 to vector<1x256xf32>
    %1636 = arith.mulf %1624, %1635 : vector<1x256xf32>
    %1637 = arith.addf %1622, %1636 : vector<1x256xf32>
    %c83_552 = arith.constant 83 : index
    %1638 = memref.load %arg1[%c83_552] : memref<196xf32, #tpu.memory_space<smem>>
    %1639 = vector.broadcast %1638 : f32 to vector<1x256xf32>
    %1640 = arith.mulf %1625, %1639 : vector<1x256xf32>
    %1641 = arith.addf %1637, %1640 : vector<1x256xf32>
    %c0_553 = arith.constant 0 : index
    %c131_554 = arith.constant 131 : index
    %1642 = vector.load %arg14[%c0_553, %c131_554] : memref<2x512xf32, #tpu.memory_space<vmem>>, vector<2x256xf32>
    %1643 = vector.extract_strided_slice %1642 {offsets = [0, 0], sizes = [1, 256], strides = [1, 1]} : vector<2x256xf32> to vector<1x256xf32>
    %1644 = vector.extract_strided_slice %1642 {offsets = [1, 0], sizes = [1, 256], strides = [1, 1]} : vector<2x256xf32> to vector<1x256xf32>
    %c108 = arith.constant 108 : index
    %1645 = memref.load %arg1[%c108] : memref<196xf32, #tpu.memory_space<smem>>
    %1646 = vector.broadcast %1645 : f32 to vector<1x256xf32>
    %1647 = arith.mulf %1643, %1646 : vector<1x256xf32>
    %1648 = arith.addf %1633, %1647 : vector<1x256xf32>
    %c110_555 = arith.constant 110 : index
    %1649 = memref.load %arg1[%c110_555] : memref<196xf32, #tpu.memory_space<smem>>
    %1650 = vector.broadcast %1649 : f32 to vector<1x256xf32>
    %1651 = arith.mulf %1644, %1650 : vector<1x256xf32>
    %1652 = arith.addf %1648, %1651 : vector<1x256xf32>
    %c109_556 = arith.constant 109 : index
    %1653 = memref.load %arg1[%c109_556] : memref<196xf32, #tpu.memory_space<smem>>
    %1654 = vector.broadcast %1653 : f32 to vector<1x256xf32>
    %1655 = arith.mulf %1643, %1654 : vector<1x256xf32>
    %1656 = arith.addf %1641, %1655 : vector<1x256xf32>
    %c111_557 = arith.constant 111 : index
    %1657 = memref.load %arg1[%c111_557] : memref<196xf32, #tpu.memory_space<smem>>
    %1658 = vector.broadcast %1657 : f32 to vector<1x256xf32>
    %1659 = arith.mulf %1644, %1658 : vector<1x256xf32>
    %1660 = arith.addf %1656, %1659 : vector<1x256xf32>
    %c0_558 = arith.constant 0 : index
    %c147_559 = arith.constant 147 : index
    %1661 = vector.load %arg14[%c0_558, %c147_559] : memref<2x512xf32, #tpu.memory_space<vmem>>, vector<2x256xf32>
    %1662 = vector.extract_strided_slice %1661 {offsets = [0, 0], sizes = [1, 256], strides = [1, 1]} : vector<2x256xf32> to vector<1x256xf32>
    %1663 = vector.extract_strided_slice %1661 {offsets = [1, 0], sizes = [1, 256], strides = [1, 1]} : vector<2x256xf32> to vector<1x256xf32>
    %c136 = arith.constant 136 : index
    %1664 = memref.load %arg1[%c136] : memref<196xf32, #tpu.memory_space<smem>>
    %1665 = vector.broadcast %1664 : f32 to vector<1x256xf32>
    %1666 = arith.mulf %1662, %1665 : vector<1x256xf32>
    %1667 = arith.addf %1652, %1666 : vector<1x256xf32>
    %c138 = arith.constant 138 : index
    %1668 = memref.load %arg1[%c138] : memref<196xf32, #tpu.memory_space<smem>>
    %1669 = vector.broadcast %1668 : f32 to vector<1x256xf32>
    %1670 = arith.mulf %1663, %1669 : vector<1x256xf32>
    %1671 = arith.addf %1667, %1670 : vector<1x256xf32>
    %c137 = arith.constant 137 : index
    %1672 = memref.load %arg1[%c137] : memref<196xf32, #tpu.memory_space<smem>>
    %1673 = vector.broadcast %1672 : f32 to vector<1x256xf32>
    %1674 = arith.mulf %1662, %1673 : vector<1x256xf32>
    %1675 = arith.addf %1660, %1674 : vector<1x256xf32>
    %c139 = arith.constant 139 : index
    %1676 = memref.load %arg1[%c139] : memref<196xf32, #tpu.memory_space<smem>>
    %1677 = vector.broadcast %1676 : f32 to vector<1x256xf32>
    %1678 = arith.mulf %1663, %1677 : vector<1x256xf32>
    %1679 = arith.addf %1675, %1678 : vector<1x256xf32>
    %c0_560 = arith.constant 0 : index
    %c163_561 = arith.constant 163 : index
    %1680 = vector.load %arg14[%c0_560, %c163_561] : memref<2x512xf32, #tpu.memory_space<vmem>>, vector<2x256xf32>
    %1681 = vector.extract_strided_slice %1680 {offsets = [0, 0], sizes = [1, 256], strides = [1, 1]} : vector<2x256xf32> to vector<1x256xf32>
    %1682 = vector.extract_strided_slice %1680 {offsets = [1, 0], sizes = [1, 256], strides = [1, 1]} : vector<2x256xf32> to vector<1x256xf32>
    %c164 = arith.constant 164 : index
    %1683 = memref.load %arg1[%c164] : memref<196xf32, #tpu.memory_space<smem>>
    %1684 = vector.broadcast %1683 : f32 to vector<1x256xf32>
    %1685 = arith.mulf %1681, %1684 : vector<1x256xf32>
    %1686 = arith.addf %1671, %1685 : vector<1x256xf32>
    %c166_562 = arith.constant 166 : index
    %1687 = memref.load %arg1[%c166_562] : memref<196xf32, #tpu.memory_space<smem>>
    %1688 = vector.broadcast %1687 : f32 to vector<1x256xf32>
    %1689 = arith.mulf %1682, %1688 : vector<1x256xf32>
    %1690 = arith.addf %1686, %1689 : vector<1x256xf32>
    %c165 = arith.constant 165 : index
    %1691 = memref.load %arg1[%c165] : memref<196xf32, #tpu.memory_space<smem>>
    %1692 = vector.broadcast %1691 : f32 to vector<1x256xf32>
    %1693 = arith.mulf %1681, %1692 : vector<1x256xf32>
    %1694 = arith.addf %1679, %1693 : vector<1x256xf32>
    %c167 = arith.constant 167 : index
    %1695 = memref.load %arg1[%c167] : memref<196xf32, #tpu.memory_space<smem>>
    %1696 = vector.broadcast %1695 : f32 to vector<1x256xf32>
    %1697 = arith.mulf %1682, %1696 : vector<1x256xf32>
    %1698 = arith.addf %1694, %1697 : vector<1x256xf32>
    %c0_563 = arith.constant 0 : index
    %c179_564 = arith.constant 179 : index
    %1699 = vector.load %arg14[%c0_563, %c179_564] : memref<2x512xf32, #tpu.memory_space<vmem>>, vector<2x256xf32>
    %1700 = vector.extract_strided_slice %1699 {offsets = [0, 0], sizes = [1, 256], strides = [1, 1]} : vector<2x256xf32> to vector<1x256xf32>
    %1701 = vector.extract_strided_slice %1699 {offsets = [1, 0], sizes = [1, 256], strides = [1, 1]} : vector<2x256xf32> to vector<1x256xf32>
    %c192 = arith.constant 192 : index
    %1702 = memref.load %arg1[%c192] : memref<196xf32, #tpu.memory_space<smem>>
    %1703 = vector.broadcast %1702 : f32 to vector<1x256xf32>
    %1704 = arith.mulf %1700, %1703 : vector<1x256xf32>
    %1705 = arith.addf %1690, %1704 : vector<1x256xf32>
    %c194 = arith.constant 194 : index
    %1706 = memref.load %arg1[%c194] : memref<196xf32, #tpu.memory_space<smem>>
    %1707 = vector.broadcast %1706 : f32 to vector<1x256xf32>
    %1708 = arith.mulf %1701, %1707 : vector<1x256xf32>
    %1709 = arith.addf %1705, %1708 : vector<1x256xf32>
    %c193 = arith.constant 193 : index
    %1710 = memref.load %arg1[%c193] : memref<196xf32, #tpu.memory_space<smem>>
    %1711 = vector.broadcast %1710 : f32 to vector<1x256xf32>
    %1712 = arith.mulf %1700, %1711 : vector<1x256xf32>
    %1713 = arith.addf %1698, %1712 : vector<1x256xf32>
    %c195 = arith.constant 195 : index
    %1714 = memref.load %arg1[%c195] : memref<196xf32, #tpu.memory_space<smem>>
    %1715 = vector.broadcast %1714 : f32 to vector<1x256xf32>
    %1716 = arith.mulf %1701, %1715 : vector<1x256xf32>
    %1717 = arith.addf %1713, %1716 : vector<1x256xf32>
    %c3_i32_565 = arith.constant 3 : i32
    %1718 = vector.broadcast %c3_i32_565 : i32 to vector<1x256xi32>
    %1719 = arith.addi %18, %1718 : vector<1x256xi32>
    %c0_i32_566 = arith.constant 0 : i32
    %1720 = vector.broadcast %c0_i32_566 : i32 to vector<1x256xi32>
    %1721 = arith.cmpi sge, %1719, %1720 : vector<1x256xi32>
    %c3_i32_567 = arith.constant 3 : i32
    %1722 = vector.broadcast %c3_i32_567 : i32 to vector<1x256xi32>
    %1723 = arith.addi %18, %1722 : vector<1x256xi32>
    %c16_i32_568 = arith.constant 16 : i32
    %1724 = vector.broadcast %c16_i32_568 : i32 to vector<1x256xi32>
    %1725 = arith.cmpi slt, %1723, %1724 : vector<1x256xi32>
    %1726 = arith.andi %1721, %1725 : vector<1x256xi1>
    %1727 = arith.extui %1726 : vector<1x256xi1> to vector<1x256xi32>
    %1728 = arith.sitofp %1727 : vector<1x256xi32> to vector<1x256xf32>
    %1729 = arith.mulf %1709, %1728 : vector<1x256xf32>
    %1730 = arith.addf %1580, %1729 : vector<1x256xf32>
    %1731 = arith.mulf %1717, %1728 : vector<1x256xf32>
    %1732 = arith.addf %1582, %1731 : vector<1x256xf32>
    %c0_569 = arith.constant 0 : index
    %1733 = memref.load %arg2[%c0_569] : memref<2xf32, #tpu.memory_space<smem>>
    %1734 = vector.broadcast %1733 : f32 to vector<1x256xf32>
    %1735 = arith.addf %1730, %1734 : vector<1x256xf32>
    %1736 = arith.negf %1735 : vector<1x256xf32>
    %1737 = math.exp %1736 : vector<1x256xf32>
    %cst_570 = arith.constant 1.000000e+00 : f32
    %1738 = vector.broadcast %cst_570 : f32 to vector<1x256xf32>
    %1739 = arith.addf %1738, %1737 : vector<1x256xf32>
    %1740 = arith.divf %1738, %1739 : vector<1x256xf32>
    %c1_571 = arith.constant 1 : index
    %1741 = memref.load %arg2[%c1_571] : memref<2xf32, #tpu.memory_space<smem>>
    %1742 = vector.broadcast %1741 : f32 to vector<1x256xf32>
    %1743 = arith.addf %1732, %1742 : vector<1x256xf32>
    %1744 = arith.negf %1743 : vector<1x256xf32>
    %1745 = math.exp %1744 : vector<1x256xf32>
    %cst_572 = arith.constant 1.000000e+00 : f32
    %1746 = vector.broadcast %cst_572 : f32 to vector<1x256xf32>
    %1747 = arith.addf %1746, %1745 : vector<1x256xf32>
    %1748 = arith.divf %1746, %1747 : vector<1x256xf32>
    %1749 = vector.broadcast %1740 : vector<1x256xf32> to vector<4x256xf32>
    %1750 = arith.mulf %671, %1749 : vector<4x256xf32>
    %1751 = vector.broadcast %1748 : vector<1x256xf32> to vector<4x256xf32>
    %1752 = arith.mulf %672, %1751 : vector<4x256xf32>
    %1753 = arith.addf %1750, %1752 : vector<4x256xf32>
    %cst_573 = arith.constant 1.000000e+00 : f32
    %1754 = vector.broadcast %cst_573 : f32 to vector<1x256xf32>
    %cst_574 = arith.constant 0.000000e+00 : f32
    %1755 = vector.broadcast %cst_574 : f32 to vector<3x256xf32>
    %1756 = tpu.concatenate %1753, %1754, %1755 in 0 : vector<4x256xf32>, vector<1x256xf32>, vector<3x256xf32> -> vector<8x256xf32>
    %cst_575 = arith.constant dense<0.000000e+00> : vector<8x8xf32>
    %1757 = tpu.matmul %1756, %1, %cst_575 {dimension_numbers = #tpu.dot_dimension_numbers<[1], [1], [0], [0], [0, 0, 1, 0], [], []>} : vector<8x256xf32>, vector<8x256xf32>, vector<8x8xf32> -> vector<8x8xf32>
    %c0_576 = arith.constant 0 : index
    %c0_577 = arith.constant 0 : index
    %1758 = vector.load %arg10[%c0_576, %c0_577] : memref<8x8xf32, #tpu.memory_space<vmem>>, vector<8x8xf32>
    %1759 = arith.mulf %1757, %1758 : vector<8x8xf32>
    %cst_578 = arith.constant dense<0.000000e+00> : vector<8xf32>
    %1760 = vector.multi_reduction <add>, %1759, %cst_578 [0] : vector<8x8xf32> to vector<8xf32>
    %1761 = vector.shape_cast %1760 : vector<8xf32> to vector<1x8xf32>
    %cst_579 = arith.constant 3.906250e-03 : f32
    %1762 = vector.broadcast %cst_579 : f32 to vector<1x8xf32>
    %1763 = arith.mulf %1761, %1762 : vector<1x8xf32>
    %1764 = vector.shape_cast %1763 : vector<1x8xf32> to vector<1x1x8xf32>
    %c0_580 = arith.constant 0 : index
    %c0_581 = arith.constant 0 : index
    %c0_582 = arith.constant 0 : index
    %1765 = vector.load %arg11[%c0_580, %c0_581, %c0_582] : memref<1x1x8xf32, #tpu.memory_space<vmem>>, vector<1x1x8xf32>
    tpu.vector_store %arg11[%c0_580, %c0_581, %c0_582], %1764 {strides = array<i32>} : memref<1x1x8xf32, #tpu.memory_space<vmem>>, vector<1x1x8xf32>,
    return
  }
  func.func @transform_0(%arg0: i32) -> i32 {
    %c0_i32 = arith.constant 0 : i32
    %c0_i32_0 = arith.constant 0 : i32
    return %c0_i32 : i32
  }
  func.func @transform_1(%arg0: i32) -> i32 {
    %c0_i32 = arith.constant 0 : i32
    %c0_i32_0 = arith.constant 0 : i32
    return %c0_i32 : i32
  }
  func.func @transform_2(%arg0: i32) -> (i32, i32, i32) {
    %c0_i32 = arith.constant 0 : i32
    %c0_i32_0 = arith.constant 0 : i32
    %c0_i32_1 = arith.constant 0 : i32
    return %arg0, %c0_i32, %c0_i32_0 : i32, i32, i32
  }
  func.func @transform_3(%arg0: i32) -> (i32, i32, i32) {
    %c0_i32 = arith.constant 0 : i32
    %c0_i32_0 = arith.constant 0 : i32
    %c0_i32_1 = arith.constant 0 : i32
    %c0_i32_2 = arith.constant 0 : i32
    return %c0_i32, %c0_i32_0, %c0_i32_1 : i32, i32, i32
  }
  func.func @transform_4(%arg0: i32) -> (i32, i32) {
    %c0_i32 = arith.constant 0 : i32
    %c0_i32_0 = arith.constant 0 : i32
    %c0_i32_1 = arith.constant 0 : i32
    return %c0_i32, %c0_i32_0 : i32, i32
  }
  func.func @transform_5(%arg0: i32) -> (i32, i32, i32) {
    %c0_i32 = arith.constant 0 : i32
    %c0_i32_0 = arith.constant 0 : i32
    %c0_i32_1 = arith.constant 0 : i32
    %c0_i32_2 = arith.constant 0 : i32
    return %c0_i32, %c0_i32_0, %c0_i32_1 : i32, i32, i32
  }
  func.func @transform_6(%arg0: i32) -> (i32, i32) {
    %c0_i32 = arith.constant 0 : i32
    %c0_i32_0 = arith.constant 0 : i32
    %c0_i32_1 = arith.constant 0 : i32
    return %c0_i32, %c0_i32_0 : i32, i32
  }
  func.func @transform_7(%arg0: i32) -> (i32, i32) {
    %c0_i32 = arith.constant 0 : i32
    %c0_i32_0 = arith.constant 0 : i32
    %c0_i32_1 = arith.constant 0 : i32
    return %c0_i32, %c0_i32_0 : i32, i32
  }
  func.func @transform_8(%arg0: i32) -> (i32, i32) {
    %c0_i32 = arith.constant 0 : i32
    %c0_i32_0 = arith.constant 0 : i32
    %c0_i32_1 = arith.constant 0 : i32
    return %c0_i32, %c0_i32_0 : i32, i32
  }
  func.func @transform_9(%arg0: i32) -> (i32, i32) {
    %c0_i32 = arith.constant 0 : i32
    %c0_i32_0 = arith.constant 0 : i32
    %c0_i32_1 = arith.constant 0 : i32
    return %c0_i32, %c0_i32_0 : i32, i32
  }
  func.func @transform_10(%arg0: i32) -> (i32, i32, i32) {
    %c0_i32 = arith.constant 0 : i32
    %c0_i32_0 = arith.constant 0 : i32
    %c0_i32_1 = arith.constant 0 : i32
    return %arg0, %c0_i32, %c0_i32_0 : i32, i32, i32
  }
}

</mosaic_0001>

<llo_original>
// kernel: tpu_custom_call.1
$region0: #{tpu_custom_call.1}
  #allocation0 [shape = 'u32[]', space=smem, size = 0x4, offset = 0x4, fixed_abs, tag = 'smem constant byte address 0x4 - core index']
  #allocation1 [shape = 'u32[144,128]{1,0:T(1,128)}', space=vmem, size = 0x12000, scoped, tag = 'internal scratch']
  #allocation2 [shape = 'f32[8,512]{1,0:T(8,128)}', space=vmem, size = 0x4000, scoped, tag = 'scratch operand']
  #allocation3 [shape = 'f32[8,768]{1,0:T(8,128)}', space=vmem, size = 0x6000, scoped, tag = 'scratch operand']
  #allocation4 [shape = 'f32[2,512]{1,0:T(2,128)}', space=vmem, size = 0x1000, scoped, tag = 'scratch operand']
  %s0 = inlined_call_operand.vmem [shape: f32[196], index: 0, kind: input, shape index: {}]
  %s1 = inlined_call_operand.vmem [shape: f32[2], index: 1, kind: input, shape index: {}]
  %s2 = inlined_call_operand.vmem [shape: f32[2,8,256], index: 2, kind: input, shape index: {}]
  %s3 = inlined_call_operand.vmem [shape: f32[25,8,1], index: 3, kind: input, shape index: {}]
  %s4 = inlined_call_operand.vmem [shape: f32[8,1], index: 4, kind: input, shape index: {}]
  %s5 = inlined_call_operand.vmem [shape: f32[49,8,1], index: 5, kind: input, shape index: {}]
  %s6 = inlined_call_operand.vmem [shape: f32[8,1], index: 6, kind: input, shape index: {}]
  %s7 = inlined_call_operand.vmem [shape: f32[8,16], index: 7, kind: input, shape index: {}]
  %s8 = inlined_call_operand.vmem [shape: f32[8,1], index: 8, kind: input, shape index: {}]
  %s9 = inlined_call_operand.vmem [shape: f32[8,8], index: 9, kind: input, shape index: {}]
  %s10 = inlined_call_operand.hbm [shape: f32[2,1,8], index: 10, kind: output, shape index: {}]
  %s11 = sld [smem:[#allocation0]]
  $region81: #{tpu_custom_call.1} parent=0
    _
  %s13 = ssub.s32 1, %s11
  %s14 = scalar_select 0, %s13, %s11
  $region1: #{tpu_custom_call.1} parent=0
    #allocation5 [shape = 'u8[1024]{0}', space=smem, size = 0x400, scoped, tag = 'input window, operand 0, single buffered']
    #allocation6 [shape = 's32[2]{0}', space=sflag, size = 0x8, scoped, tag = 'scoped memory for tpu_custom_call.1']
    #allocation7 [shape = 's32[2]{0}', space=sflag, size = 0x8, scoped, tag = 'scoped memory for tpu_custom_call.1']
    #allocation8 [shape = 'u8[512]{0}', space=smem, size = 0x200, scoped, tag = 'input window, operand 1, single buffered']
    #allocation9 [shape = 's32[1]{0}', space=sflag, size = 0x4, scoped, tag = 'scoped memory for tpu_custom_call.1']
    #allocation10 [shape = 'u8[1024]{0}', space=vmem, size = 0x400, scoped, tag = 'output window, operand 0']
    %15 = vsyncpa [#allocation7], 0
    %16 = vsyncpa [#allocation9], 0
    %17 = vsyncpa [#allocation6], 0
    %s18 = scalar_lea.sflag [#allocation6], 1
    %19 = vsyncpa %s18, 0
    loop: start=0, step=1, limit=4
    $region2: #{tpu_custom_call.1} parent=1 // loop_pre_header
      _
    $region3: #{tpu_custom_call.1} parent=1 // loop_header
      %s21 = sphi 0, %s25
      %p22 = scmp.ge.s32.totalorder %s21, 4
      %s29 = sphi 0, %s29
      %s31 = sphi 0, %s29
      %s32 = sphi 0, %s31
      %s46 = sphi 0, %s32
      %s50 = sphi 0, %s50
      %s52 = sphi 0, %s50
      %s53 = sphi 0, %s52
      %s67 = sphi 0, %s53
      %s73 = sphi 0, %s75
      %s76 = sphi 0, %s73
      %s77 = sphi 0, %s76
      %s93 = sphi 0, %s77
      %s97 = sphi 0, %s97
      %s99 = sphi 0, %s97
      %s100 = sphi 0, %s99
      %s114 = sphi 0, %s100
      %s118 = sphi 0, %s118
      %s120 = sphi 0, %s118
      %s121 = sphi 0, %s120
      %s135 = sphi 0, %s121
      %s139 = sphi 0, %s139
      %s141 = sphi 0, %s139
      %s142 = sphi 0, %s141
      %s156 = sphi 0, %s142
      %s160 = sphi 0, %s160
      %s162 = sphi 0, %s160
      %s163 = sphi 0, %s162
      %s177 = sphi 0, %s163
      %s181 = sphi 0, %s181
      %s183 = sphi 0, %s181
      %s184 = sphi 0, %s183
      %s198 = sphi 0, %s184
      %s202 = sphi 0, %s202
      %s204 = sphi 0, %s202
      %s205 = sphi 0, %s204
      %s219 = sphi 0, %s205
      %s223 = sphi 0, %s223
      %s225 = sphi 0, %s223
      %s226 = sphi 0, %s225
      %s240 = sphi 0, %s226
      %s246 = sphi 0, %s248
      %s249 = sphi 0, %s246
      %s250 = sphi 0, %s249
      %s266 = sphi 0, %s250
    $region4: #{tpu_custom_call.1} parent=1 // loop_header_branch
      %24 = sbr.rel (%p22) target = $region8
    $region5: #{tpu_custom_call.1} parent=1 // loop_body
      %s26 = ssub.s32 %s21, 1
      %s27 = ssub.s32 %s21, 2
      %s28 = sadd.s32 %s21, 1
      %s30 = sadd.s32 %s29, 1
      %p33 = scmp.eq.s32.totalorder %s21, 1
      %p34 = scmp.ne.s32.totalorder %s29, %s31
      %p35 = scmp.eq.s32.totalorder %s21, 0
      %p36 = por %p34, %p35
      %p37 = scmp.ne.s32.totalorder %s29, %s31
      %p38 = scmp.eq.s32.totalorder %s26, 1
      %p39 = por %p37, %p38
      %p40 = scmp.ne.s32.totalorder %s31, %s32
      %p41 = scmp.eq.s32.totalorder %s26, 0
      %p42 = por %p40, %p41
      %p43 = scmp.ne.s32.totalorder %s31, %s32
      %p44 = scmp.eq.s32.totalorder %s27, 1
      %p45 = por %p43, %p44
      %p47 = scmp.ne.s32.totalorder %s32, %s46
      %p48 = scmp.eq.s32.totalorder %s27, 0
      %p49 = por %p47, %p48
      %s51 = sadd.s32 %s50, 1
      %p54 = scmp.eq.s32.totalorder %s21, 1
      %p55 = scmp.ne.s32.totalorder %s50, %s52
      %p56 = scmp.eq.s32.totalorder %s21, 0
      %p57 = por %p55, %p56
      %p58 = scmp.ne.s32.totalorder %s50, %s52
      %p59 = scmp.eq.s32.totalorder %s26, 1
      %p60 = por %p58, %p59
      %p61 = scmp.ne.s32.totalorder %s52, %s53
      %p62 = scmp.eq.s32.totalorder %s26, 0
      %p63 = por %p61, %p62
      %p64 = scmp.ne.s32.totalorder %s52, %s53
      %p65 = scmp.eq.s32.totalorder %s27, 1
      %p66 = por %p64, %p65
      %p68 = scmp.ne.s32.totalorder %s53, %s67
      %p69 = scmp.eq.s32.totalorder %s27, 0
      %p70 = por %p68, %p69
      %s71 = ssub.s32 %s21, %s28
      %p72 = scmp.eq.s32.totalorder %s71, 0
      %s74 = sadd.s32 %s73, 1
      %s75 = scalar_select %p72, %s73, %s74
      %p78 = pneg %p72
      %p79 = scmp.eq.s32.totalorder %s21, 1
      %p80 = por %p78, %p79
      %p81 = scmp.ne.s32.totalorder %s73, %s76
      %p82 = scmp.eq.s32.totalorder %s21, 0
      %p83 = por %p81, %p82
      %p84 = scmp.ne.s32.totalorder %s73, %s76
      %p85 = scmp.eq.s32.totalorder %s26, 1
      %p86 = por %p84, %p85
      %p87 = scmp.ne.s32.totalorder %s76, %s77
      %p88 = scmp.eq.s32.totalorder %s26, 0
      %p89 = por %p87, %p88
      %p90 = scmp.ne.s32.totalorder %s76, %s77
      %p91 = scmp.eq.s32.totalorder %s27, 1
      %p92 = por %p90, %p91
      %p94 = scmp.ne.s32.totalorder %s77, %s93
      %p95 = scmp.eq.s32.totalorder %s27, 0
      %p96 = por %p94, %p95
      %s98 = sadd.s32 %s97, 1
      %p101 = scmp.eq.s32.totalorder %s21, 1
      %p102 = scmp.ne.s32.totalorder %s97, %s99
      %p103 = scmp.eq.s32.totalorder %s21, 0
      %p104 = por %p102, %p103
      %p105 = scmp.ne.s32.totalorder %s97, %s99
      %p106 = scmp.eq.s32.totalorder %s26, 1
      %p107 = por %p105, %p106
      %p108 = scmp.ne.s32.totalorder %s99, %s100
      %p109 = scmp.eq.s32.totalorder %s26, 0
      %p110 = por %p108, %p109
      %p111 = scmp.ne.s32.totalorder %s99, %s100
      %p112 = scmp.eq.s32.totalorder %s27, 1
      %p113 = por %p111, %p112
      %p115 = scmp.ne.s32.totalorder %s100, %s114
      %p116 = scmp.eq.s32.totalorder %s27, 0
      %p117 = por %p115, %p116
      %s119 = sadd.s32 %s118, 1
      %p122 = scmp.eq.s32.totalorder %s21, 1
      %p123 = scmp.ne.s32.totalorder %s118, %s120
      %p124 = scmp.eq.s32.totalorder %s21, 0
      %p125 = por %p123, %p124
      %p126 = scmp.ne.s32.totalorder %s118, %s120
      %p127 = scmp.eq.s32.totalorder %s26, 1
      %p128 = por %p126, %p127
      %p129 = scmp.ne.s32.totalorder %s120, %s121
      %p130 = scmp.eq.s32.totalorder %s26, 0
      %p131 = por %p129, %p130
      %p132 = scmp.ne.s32.totalorder %s120, %s121
      %p133 = scmp.eq.s32.totalorder %s27, 1
      %p134 = por %p132, %p133
      %p136 = scmp.ne.s32.totalorder %s121, %s135
      %p137 = scmp.eq.s32.totalorder %s27, 0
      %p138 = por %p136, %p137
      %s140 = sadd.s32 %s139, 1
      %p143 = scmp.eq.s32.totalorder %s21, 1
      %p144 = scmp.ne.s32.totalorder %s139, %s141
      %p145 = scmp.eq.s32.totalorder %s21, 0
      %p146 = por %p144, %p145
      %p147 = scmp.ne.s32.totalorder %s139, %s141
      %p148 = scmp.eq.s32.totalorder %s26, 1
      %p149 = por %p147, %p148
      %p150 = scmp.ne.s32.totalorder %s141, %s142
      %p151 = scmp.eq.s32.totalorder %s26, 0
      %p152 = por %p150, %p151
      %p153 = scmp.ne.s32.totalorder %s141, %s142
      %p154 = scmp.eq.s32.totalorder %s27, 1
      %p155 = por %p153, %p154
      %p157 = scmp.ne.s32.totalorder %s142, %s156
      %p158 = scmp.eq.s32.totalorder %s27, 0
      %p159 = por %p157, %p158
      %s161 = sadd.s32 %s160, 1
      %p164 = scmp.eq.s32.totalorder %s21, 1
      %p165 = scmp.ne.s32.totalorder %s160, %s162
      %p166 = scmp.eq.s32.totalorder %s21, 0
      %p167 = por %p165, %p166
      %p168 = scmp.ne.s32.totalorder %s160, %s162
      %p169 = scmp.eq.s32.totalorder %s26, 1
      %p170 = por %p168, %p169
      %p171 = scmp.ne.s32.totalorder %s162, %s163
      %p172 = scmp.eq.s32.totalorder %s26, 0
      %p173 = por %p171, %p172
      %p174 = scmp.ne.s32.totalorder %s162, %s163
      %p175 = scmp.eq.s32.totalorder %s27, 1
      %p176 = por %p174, %p175
      %p178 = scmp.ne.s32.totalorder %s163, %s177
      %p179 = scmp.eq.s32.totalorder %s27, 0
      %p180 = por %p178, %p179
      %s182 = sadd.s32 %s181, 1
      %p185 = scmp.eq.s32.totalorder %s21, 1
      %p186 = scmp.ne.s32.totalorder %s181, %s183
      %p187 = scmp.eq.s32.totalorder %s21, 0
      %p188 = por %p186, %p187
      %p189 = scmp.ne.s32.totalorder %s181, %s183
      %p190 = scmp.eq.s32.totalorder %s26, 1
      %p191 = por %p189, %p190
      %p192 = scmp.ne.s32.totalorder %s183, %s184
      %p193 = scmp.eq.s32.totalorder %s26, 0
      %p194 = por %p192, %p193
      %p195 = scmp.ne.s32.totalorder %s183, %s184
      %p196 = scmp.eq.s32.totalorder %s27, 1
      %p197 = por %p195, %p196
      %p199 = scmp.ne.s32.totalorder %s184, %s198
      %p200 = scmp.eq.s32.totalorder %s27, 0
      %p201 = por %p199, %p200
      %s203 = sadd.s32 %s202, 1
      %p206 = scmp.eq.s32.totalorder %s21, 1
      %p207 = scmp.ne.s32.totalorder %s202, %s204
      %p208 = scmp.eq.s32.totalorder %s21, 0
      %p209 = por %p207, %p208
      %p210 = scmp.ne.s32.totalorder %s202, %s204
      %p211 = scmp.eq.s32.totalorder %s26, 1
      %p212 = por %p210, %p211
      %p213 = scmp.ne.s32.totalorder %s204, %s205
      %p214 = scmp.eq.s32.totalorder %s26, 0
      %p215 = por %p213, %p214
      %p216 = scmp.ne.s32.totalorder %s204, %s205
      %p217 = scmp.eq.s32.totalorder %s27, 1
      %p218 = por %p216, %p217
      %p220 = scmp.ne.s32.totalorder %s205, %s219
      %p221 = scmp.eq.s32.totalorder %s27, 0
      %p222 = por %p220, %p221
      %s224 = sadd.s32 %s223, 1
      %p227 = scmp.eq.s32.totalorder %s21, 1
      %p228 = scmp.ne.s32.totalorder %s223, %s225
      %p229 = scmp.eq.s32.totalorder %s21, 0
      %p230 = por %p228, %p229
      %p231 = scmp.ne.s32.totalorder %s223, %s225
      %p232 = scmp.eq.s32.totalorder %s26, 1
      %p233 = por %p231, %p232
      %p234 = scmp.ne.s32.totalorder %s225, %s226
      %p235 = scmp.eq.s32.totalorder %s26, 0
      %p236 = por %p234, %p235
      %p237 = scmp.ne.s32.totalorder %s225, %s226
      %p238 = scmp.eq.s32.totalorder %s27, 1
      %p239 = por %p237, %p238
      %p241 = scmp.ne.s32.totalorder %s226, %s240
      %p242 = scmp.eq.s32.totalorder %s27, 0
      %p243 = por %p241, %p242
      %s244 = ssub.s32 %s21, %s28
      %p245 = scmp.eq.s32.totalorder %s244, 0
      %s247 = sadd.s32 %s246, 1
      %s248 = scalar_select %p245, %s246, %s247
      %p251 = pneg %p245
      %p252 = scmp.eq.s32.totalorder %s21, 1
      %p253 = por %p251, %p252
      %p254 = scmp.ne.s32.totalorder %s246, %s249
      %p255 = scmp.eq.s32.totalorder %s21, 0
      %p256 = por %p254, %p255
      %p257 = scmp.ne.s32.totalorder %s246, %s249
      %p258 = scmp.eq.s32.totalorder %s26, 1
      %p259 = por %p257, %p258
      %p260 = scmp.ne.s32.totalorder %s249, %s250
      %p261 = scmp.eq.s32.totalorder %s26, 0
      %p262 = por %p260, %p261
      %p263 = scmp.ne.s32.totalorder %s249, %s250
      %p264 = scmp.eq.s32.totalorder %s27, 1
      %p265 = por %p263, %p264
      %p267 = scmp.ne.s32.totalorder %s250, %s266
      %p268 = scmp.eq.s32.totalorder %s27, 0
      %p269 = por %p267, %p268
      %p270 = scmp.le.s32.totalorder 1, %s21
      %p271 = scmp.lt.s32.totalorder %s21, 3
      %p272 = pnand %p270, %p271
      %p273 = pneg %p272
      // Predicated region
      $region9: #{tpu_custom_call.1} parent=5 // pred_check
        _
      $region10: #{tpu_custom_call.1} parent=5 // pred_check_branch
        %275 = sbr.rel (%p272) target = $region12
      $region11: #{tpu_custom_call.1} parent=5 // pred_region
        %s276 = ssub.s32 %s21, 1
        // Predicated region
        $region13: #{tpu_custom_call.1} parent=11 // pred_check
          %p277 = pneg %p42
        $region14: #{tpu_custom_call.1} parent=11 // pred_check_branch
          %279 = sbr.rel (%p277) target = $region16
        $region15: #{tpu_custom_call.1} parent=11 // pred_region
          %s281 = ssub.s32 32, 32
          %282 = vsyncadd [#allocation7], %s281
          %s284 = sshll.u32 %s0, 4
          %s285 = int_to_ptr.vmem [resolvable:$true] %s284
          %287 = dma.vmem_to_smem %s285, 32, [#allocation5], [#allocation7]
        $region16: #{tpu_custom_call.1} parent=11 // pred_fallthru
          _
        // Predicated region
        $region17: #{tpu_custom_call.1} parent=11 // pred_check
          %p288 = pneg %p63
        $region18: #{tpu_custom_call.1} parent=11 // pred_check_branch
          %290 = sbr.rel (%p288) target = $region20
        $region19: #{tpu_custom_call.1} parent=11 // pred_region
          %s292 = ssub.s32 16, 16
          %293 = vsyncadd [#allocation9], %s292
          %s295 = sshll.u32 %s1, 4
          %s296 = int_to_ptr.vmem [resolvable:$true] %s295
          %298 = dma.vmem_to_smem %s296, 16, [#allocation8], [#allocation9]
        $region20: #{tpu_custom_call.1} parent=11 // pred_fallthru
          _
        // Predicated region
        $region21: #{tpu_custom_call.1} parent=11 // pred_check
          %p299 = pneg %p110
        $region22: #{tpu_custom_call.1} parent=11 // pred_check_branch
          %301 = sbr.rel (%p299) target = $region24
        $region23: #{tpu_custom_call.1} parent=11 // pred_region
          _
        $region24: #{tpu_custom_call.1} parent=11 // pred_fallthru
          _
        // Predicated region
        $region25: #{tpu_custom_call.1} parent=11 // pred_check
          %p302 = pneg %p131
        $region26: #{tpu_custom_call.1} parent=11 // pred_check_branch
          %304 = sbr.rel (%p302) target = $region28
        $region27: #{tpu_custom_call.1} parent=11 // pred_region
          _
        $region28: #{tpu_custom_call.1} parent=11 // pred_fallthru
          _
        // Predicated region
        $region29: #{tpu_custom_call.1} parent=11 // pred_check
          %p305 = pneg %p152
        $region30: #{tpu_custom_call.1} parent=11 // pred_check_branch
          %307 = sbr.rel (%p305) target = $region32
        $region31: #{tpu_custom_call.1} parent=11 // pred_region
          _
        $region32: #{tpu_custom_call.1} parent=11 // pred_fallthru
          _
        // Predicated region
        $region33: #{tpu_custom_call.1} parent=11 // pred_check
          %p308 = pneg %p173
        $region34: #{tpu_custom_call.1} parent=11 // pred_check_branch
          %310 = sbr.rel (%p308) target = $region36
        $region35: #{tpu_custom_call.1} parent=11 // pred_region
          _
        $region36: #{tpu_custom_call.1} parent=11 // pred_fallthru
          _
        // Predicated region
        $region37: #{tpu_custom_call.1} parent=11 // pred_check
          %p311 = pneg %p194
        $region38: #{tpu_custom_call.1} parent=11 // pred_check_branch
          %313 = sbr.rel (%p311) target = $region40
        $region39: #{tpu_custom_call.1} parent=11 // pred_region
          _
        $region40: #{tpu_custom_call.1} parent=11 // pred_fallthru
          _
        // Predicated region
        $region41: #{tpu_custom_call.1} parent=11 // pred_check
          %p314 = pneg %p215
        $region42: #{tpu_custom_call.1} parent=11 // pred_check_branch
          %316 = sbr.rel (%p314) target = $region44
        $region43: #{tpu_custom_call.1} parent=11 // pred_region
          _
        $region44: #{tpu_custom_call.1} parent=11 // pred_fallthru
          _
        // Predicated region
        $region45: #{tpu_custom_call.1} parent=11 // pred_check
          %p317 = pneg %p236
        $region46: #{tpu_custom_call.1} parent=11 // pred_check_branch
          %319 = sbr.rel (%p317) target = $region48
        $region47: #{tpu_custom_call.1} parent=11 // pred_region
          _
        $region48: #{tpu_custom_call.1} parent=11 // pred_fallthru
          _
      $region12: #{tpu_custom_call.1} parent=5 // pred_fallthru
        _
      %p320 = scmp.lt.s32.totalorder %s21, 2
      // Predicated region
      $region49: #{tpu_custom_call.1} parent=5 // pred_check
        %p321 = pneg %p320
      $region50: #{tpu_custom_call.1} parent=5 // pred_check_branch
        %323 = sbr.rel (%p321) target = $region52
      $region51: #{tpu_custom_call.1} parent=5 // pred_region
        // Predicated region
        $region53: #{tpu_custom_call.1} parent=51 // pred_check
          %p324 = pneg %p83
        $region54: #{tpu_custom_call.1} parent=51 // pred_check_branch
          %326 = sbr.rel (%p324) target = $region56
        $region55: #{tpu_custom_call.1} parent=51 // pred_region
          %p327 = scmp.lt.s32.totalorder %s21, 1
          %s328 = scalar_select %p327, %s21, 1
          %s329 = smul.addr %s328, 2
          %s330 = smul.addr %s329, 8
          %s331 = scalar_lea.vmem %s2, %s330
        $region56: #{tpu_custom_call.1} parent=51 // pred_fallthru
          _
      $region52: #{tpu_custom_call.1} parent=5 // pred_fallthru
        _
      %p332 = scmp.le.s32.totalorder 1, %s21
      %p333 = scmp.lt.s32.totalorder %s21, 3
      %p334 = pnand %p332, %p333
      %p335 = pneg %p334
      // Predicated region
      $region57: #{tpu_custom_call.1} parent=5 // pred_check
        _
      $region58: #{tpu_custom_call.1} parent=5 // pred_check_branch
        %337 = sbr.rel (%p334) target = $region60
      $region59: #{tpu_custom_call.1} parent=5 // pred_region
        %s338 = ssub.s32 %s21, 1
        // Predicated region
        $region61: #{tpu_custom_call.1} parent=59 // pred_check
          %p339 = pneg %p42
        $region62: #{tpu_custom_call.1} parent=59 // pred_check_branch
          %341 = sbr.rel (%p339) target = $region64
        $region63: #{tpu_custom_call.1} parent=59 // pred_region
          %342 = dma.done [#allocation7], 32
        $region64: #{tpu_custom_call.1} parent=59 // pred_fallthru
          _
        // Predicated region
        $region65: #{tpu_custom_call.1} parent=59 // pred_check
          %p343 = pneg %p63
        $region66: #{tpu_custom_call.1} parent=59 // pred_check_branch
          %345 = sbr.rel (%p343) target = $region68
        $region67: #{tpu_custom_call.1} parent=59 // pred_region
          %346 = dma.done [#allocation9], 16
        $region68: #{tpu_custom_call.1} parent=59 // pred_fallthru
          _
        %347 = sfence
        %p348 = pneg %p42
        %p349 = pneg %p39
        %p350 = pneg %p63
        %p351 = pneg %p60
        %p352 = scmp.lt.s32.totalorder %s26, 1
        %s353 = scalar_select %p352, %s26, 1
        %s354 = smul.addr %s353, 2
        %s355 = smul.addr %s354, 8
        %s356 = scalar_lea.vmem %s2, %s355
        %p357 = pneg %p89
        %p358 = pneg %p86
        %p359 = pneg %p110
        %p360 = pneg %p107
        %p361 = pneg %p131
        %p362 = pneg %p128
        %p363 = pneg %p152
        %p364 = pneg %p149
        %p365 = pneg %p173
        %p366 = pneg %p170
        %p367 = pneg %p194
        %p368 = pneg %p191
        %p369 = pneg %p215
        %p370 = pneg %p212
        %p371 = pneg %p236
        %p372 = pneg %p233
        %p373 = pneg %p262
        %p374 = pneg %p259
        %s375 = sand.u32 %s249, 1
        %s376 = scalar_lea.sflag [#allocation6], %s375
        %s377 = sand.u32 %s249, 1
        %s378 = scalar_lea.vmem [#allocation10], %s377
        %p379 = scmp.lt.s32.totalorder %s26, 1
        %s380 = scalar_select %p379, %s26, 1
        %s381 = smul.addr %s380, 2
        %s382 = smul.addr %s381, 8
        %s383 = scalar_lea.vmem %s2, %s382
        %v384 = vld [vmem:[%s383] sm:$0xff]
        %v385 = vld [vmem:[%s383 + $0x8] sm:$0xff]
        %v386 = vlaneseq
        %v387 = vand.u32 %v386, 127
        %v388 = vadd.s32 %v387, 128
        %vm389 = vcmp.lt.s32.totalorder %v387, 0
        %v390 = vsub.s32 0, %v387
        %v391 = vsel %vm389, %v390, %v387
        %v392 = vshrl.u32 %v391, 4
        %v393 = vand.u32 %v391, 15
        %v394 = vsub.s32 0, %v393
        %v395 = vsel %vm389, %v394, %v393
        %vm396 = vcmp.lt.s32.totalorder %v388, 0
        %v397 = vsub.s32 0, %v388
        %v398 = vsel %vm396, %v397, %v388
        %v399 = vshrl.u32 %v398, 4
        %v400 = vand.u32 %v398, 15
        %v401 = vsub.s32 0, %v400
        %v402 = vsel %vm396, %v401, %v400
        %vm403 = vcmp.ne.s32.totalorder %v395, 0
        %vm404 = vcmp.ne.s32.totalorder %v402, 0
        %vm405 = vcmp.lt.s32.totalorder %v395, 0
        %vm406 = vcmp.lt.s32.totalorder %v402, 0
        %vm407 = vmand %vm405, %vm403
        %vm408 = vmand %vm406, %vm404
        %v409 = vadd.s32 %v395, 16
        %v410 = vadd.s32 %v402, 16
        %v411 = vsel %vm407, %v409, %v395
        %v412 = vsel %vm408, %v410, %v402
        %413 = vst [vmem:[#allocation2] sm:$0xff] 0.0
        %414 = vst [vmem:[#allocation2 + $0x18] sm:$0xff] 0.0
        %415 = vst [vmem:[#allocation3] sm:$0xff] 0.0
        %416 = vst [vmem:[#allocation3 + $0x8] sm:$0xff] 0.0
        %417 = vst [vmem:[#allocation3 + $0x20] sm:$0xff] 0.0
        %418 = vst [vmem:[#allocation3 + $0x28] sm:$0xff] 0.0
        %419 = vst [vmem:[#allocation4] sm:$0x3] 0.0
        %420 = vst [vmem:[#allocation4 + $0x6] sm:$0x3] 0.0
        %421 = vst [vmem:[#allocation2 + $0x8] sm:$0xff] %v384
        %422 = vst [vmem:[#allocation2 + $0x10] sm:$0xff] %v385
        %v423 = vld [vmem:[#allocation2] sm:$0xff]
        %v424 = vld [vmem:[#allocation2 + $0x8] sm:$0xff]
        %v425 = vld [vmem:[#allocation2 + $0x10] sm:$0xff]
        %v426 = vld [vmem:[%s3] sm:$0xff]
        %428 = vset.pattern.permute.xlu0 0
        %429 = vperm.xlu0 %428, %v426
        %v430 = vpop.permute.xlu0 %429
        %v432 = vmul.f32 %v423, %v430
        %v433 = vmul.f32 %v424, %v430
        %v434 = vmul.f32 %v425, %v430
        %v435 = vadd.f32 %v432, 0.0
        %v436 = vadd.f32 %v433, 0.0
        %v437 = vadd.f32 %v434, 0.0
        %s438 = scalar_lea.vmem %s3, 40
        %v439 = vld [vmem:[%s438] sm:$0xff]
        %441 = vset.pattern.permute.xlu0 0
        %442 = vperm.xlu0 %441, %v439
        %v443 = vpop.permute.xlu0 %442
        %v445 = vmul.f32 %v423, %v443
        %v446 = vmul.f32 %v424, %v443
        %v447 = vmul.f32 %v425, %v443
        %451 = vrot.lane.b32.xlu0 %v445, 112
        %v452 = vpop.permute.xlu0 %451
        %453 = vrot.lane.b32.xlu0 %v446, 112
        %v454 = vpop.permute.xlu0 %453
        %455 = vrot.lane.b32.xlu0 %v447, 112
        %v456 = vpop.permute.xlu0 %455
        %vm457 = vcmask 916480
        %v458 = vsel %vm457, %v452, %v454
        %v459 = vsel %vm457, %v454, %v456
        %v463 = vadd.f32 %v435, %v458
        %v464 = vadd.f32 %v436, %v459
        %v465 = vadd.f32 %v437, %v456
        %s466 = scalar_lea.vmem %s3, 80
        %v467 = vld [vmem:[%s466] sm:$0xff]
        %469 = vset.pattern.permute.xlu0 0
        %470 = vperm.xlu0 %469, %v467
        %v471 = vpop.permute.xlu0 %470
        %v473 = vmul.f32 %v423, %v471
        %v474 = vmul.f32 %v424, %v471
        %v475 = vmul.f32 %v425, %v471
        %479 = vrot.lane.b32.xlu0 %v473, 96
        %v480 = vpop.permute.xlu0 %479
        %481 = vrot.lane.b32.xlu0 %v474, 96
        %v482 = vpop.permute.xlu0 %481
        %483 = vrot.lane.b32.xlu0 %v475, 96
        %v484 = vpop.permute.xlu0 %483
        %vm485 = vcmask 785408
        %v486 = vsel %vm485, %v480, %v482
        %v487 = vsel %vm485, %v482, %v484
        %v491 = vadd.f32 %v463, %v486
        %v492 = vadd.f32 %v464, %v487
        %v493 = vadd.f32 %v465, %v484
        %v494 = vld [vmem:[#allocation2 + $0x8] sm:$0xff]
        %v495 = vld [vmem:[#allocation2 + $0x10] sm:$0xff]
        %v496 = vld [vmem:[#allocation2 + $0x18] sm:$0xff]
        %s497 = scalar_lea.vmem %s3, 120
        %v498 = vld [vmem:[%s497] sm:$0xff]
        %500 = vset.pattern.permute.xlu0 0
        %501 = vperm.xlu0 %500, %v498
        %v502 = vpop.permute.xlu0 %501
        %v504 = vmul.f32 %v494, %v502
        %v505 = vmul.f32 %v495, %v502
        %v506 = vmul.f32 %v496, %v502
        %510 = vrot.lane.b32.xlu0 %v504, 80
        %v511 = vpop.permute.xlu0 %510
        %512 = vrot.lane.b32.xlu0 %v505, 80
        %v513 = vpop.permute.xlu0 %512
        %514 = vrot.lane.b32.xlu0 %v506, 80
        %v515 = vpop.permute.xlu0 %514
        %vm516 = vcmask 654336
        %v517 = vsel %vm516, %v511, %v513
        %v518 = vsel %vm516, %v513, %v515
        %v522 = vadd.f32 %v491, %v511
        %v523 = vadd.f32 %v492, %v517
        %v524 = vadd.f32 %v493, %v518
        %s525 = scalar_lea.vmem %s3, 160
        %v526 = vld [vmem:[%s525] sm:$0xff]
        %528 = vset.pattern.permute.xlu0 0
        %529 = vperm.xlu0 %528, %v526
        %v530 = vpop.permute.xlu0 %529
        %v532 = vmul.f32 %v494, %v530
        %v533 = vmul.f32 %v495, %v530
        %v534 = vmul.f32 %v496, %v530
        %538 = vrot.lane.b32.xlu0 %v532, 64
        %v539 = vpop.permute.xlu0 %538
        %540 = vrot.lane.b32.xlu0 %v533, 64
        %v541 = vpop.permute.xlu0 %540
        %542 = vrot.lane.b32.xlu0 %v534, 64
        %v543 = vpop.permute.xlu0 %542
        %vm544 = vcmask 523264
        %v545 = vsel %vm544, %v539, %v541
        %v546 = vsel %vm544, %v541, %v543
        %v550 = vadd.f32 %v522, %v539
        %v551 = vadd.f32 %v523, %v545
        %v552 = vadd.f32 %v524, %v546
        %v553 = vadd.s32 %v411, 4294967294
        %v554 = vadd.s32 %v412, 4294967294
        %vm555 = vcmp.ge.s32.totalorder %v553, 0
        %vm556 = vcmp.ge.s32.totalorder %v554, 0
        %vm557 = vcmp.lt.s32.totalorder %v553, 16
        %vm558 = vcmp.lt.s32.totalorder %v554, 16
        %vm559 = vmand %vm555, %vm557
        %vm560 = vmand %vm556, %vm558
        %v561 = vsel %vm559, 1, 0
        %v562 = vsel %vm560, 1, 0
        %v563 = vcvt.s32.f32 %v561
        %v564 = vcvt.s32.f32 %v562
        %567 = vrot.lane.b32.xlu0 %v563, 94
        %v568 = vpop.permute.xlu0 %567
        %569 = vrot.lane.b32.xlu0 %v564, 94
        %v570 = vpop.permute.xlu0 %569
        %vm571 = vcmask 769024
        %v572 = vsel %vm571, %v568, %v570
        %v576 = vmul.f32 %v550, %v568
        %v577 = vmul.f32 %v551, %v572
        %v578 = vmul.f32 %v552, %v570
        %v579 = vadd.f32 %v576, 0.0
        %v580 = vadd.f32 %v577, 0.0
        %v581 = vadd.f32 %v578, 0.0
        %s582 = scalar_lea.vmem %s3, 8
        %v583 = vld [vmem:[%s582] sm:$0xff]
        %585 = vset.pattern.permute.xlu0 0
        %586 = vperm.xlu0 %585, %v583
        %v587 = vpop.permute.xlu0 %586
        %v589 = vmul.f32 %v423, %v587
        %v590 = vmul.f32 %v424, %v587
        %v591 = vmul.f32 %v425, %v587
        %v592 = vadd.f32 %v589, 0.0
        %v593 = vadd.f32 %v590, 0.0
        %v594 = vadd.f32 %v591, 0.0
        %s595 = scalar_lea.vmem %s3, 48
        %v596 = vld [vmem:[%s595] sm:$0xff]
        %598 = vset.pattern.permute.xlu0 0
        %599 = vperm.xlu0 %598, %v596
        %v600 = vpop.permute.xlu0 %599
        %v602 = vmul.f32 %v423, %v600
        %v603 = vmul.f32 %v424, %v600
        %v604 = vmul.f32 %v425, %v600
        %608 = vrot.lane.b32.xlu0 %v602, 112
        %v609 = vpop.permute.xlu0 %608
        %610 = vrot.lane.b32.xlu0 %v603, 112
        %v611 = vpop.permute.xlu0 %610
        %612 = vrot.lane.b32.xlu0 %v604, 112
        %v613 = vpop.permute.xlu0 %612
        %v614 = vsel %vm457, %v609, %v611
        %v615 = vsel %vm457, %v611, %v613
        %v619 = vadd.f32 %v592, %v614
        %v620 = vadd.f32 %v593, %v615
        %v621 = vadd.f32 %v594, %v613
        %s622 = scalar_lea.vmem %s3, 88
        %v623 = vld [vmem:[%s622] sm:$0xff]
        %625 = vset.pattern.permute.xlu0 0
        %626 = vperm.xlu0 %625, %v623
        %v627 = vpop.permute.xlu0 %626
        %v629 = vmul.f32 %v423, %v627
        %v630 = vmul.f32 %v424, %v627
        %v631 = vmul.f32 %v425, %v627
        %635 = vrot.lane.b32.xlu0 %v629, 96
        %v636 = vpop.permute.xlu0 %635
        %637 = vrot.lane.b32.xlu0 %v630, 96
        %v638 = vpop.permute.xlu0 %637
        %639 = vrot.lane.b32.xlu0 %v631, 96
        %v640 = vpop.permute.xlu0 %639
        %v641 = vsel %vm485, %v636, %v638
        %v642 = vsel %vm485, %v638, %v640
        %v646 = vadd.f32 %v619, %v641
        %v647 = vadd.f32 %v620, %v642
        %v648 = vadd.f32 %v621, %v640
        %s649 = scalar_lea.vmem %s3, 128
        %v650 = vld [vmem:[%s649] sm:$0xff]
        %652 = vset.pattern.permute.xlu0 0
        %653 = vperm.xlu0 %652, %v650
        %v654 = vpop.permute.xlu0 %653
        %v656 = vmul.f32 %v494, %v654
        %v657 = vmul.f32 %v495, %v654
        %v658 = vmul.f32 %v496, %v654
        %662 = vrot.lane.b32.xlu0 %v656, 80
        %v663 = vpop.permute.xlu0 %662
        %664 = vrot.lane.b32.xlu0 %v657, 80
        %v665 = vpop.permute.xlu0 %664
        %666 = vrot.lane.b32.xlu0 %v658, 80
        %v667 = vpop.permute.xlu0 %666
        %v668 = vsel %vm516, %v663, %v665
        %v669 = vsel %vm516, %v665, %v667
        %v673 = vadd.f32 %v646, %v663
        %v674 = vadd.f32 %v647, %v668
        %v675 = vadd.f32 %v648, %v669
        %s676 = scalar_lea.vmem %s3, 168
        %v677 = vld [vmem:[%s676] sm:$0xff]
        %679 = vset.pattern.permute.xlu0 0
        %680 = vperm.xlu0 %679, %v677
        %v681 = vpop.permute.xlu0 %680
        %v683 = vmul.f32 %v494, %v681
        %v684 = vmul.f32 %v495, %v681
        %v685 = vmul.f32 %v496, %v681
        %689 = vrot.lane.b32.xlu0 %v683, 64
        %v690 = vpop.permute.xlu0 %689
        %691 = vrot.lane.b32.xlu0 %v684, 64
        %v692 = vpop.permute.xlu0 %691
        %693 = vrot.lane.b32.xlu0 %v685, 64
        %v694 = vpop.permute.xlu0 %693
        %v695 = vsel %vm544, %v690, %v692
        %v696 = vsel %vm544, %v692, %v694
        %v700 = vadd.f32 %v673, %v690
        %v701 = vadd.f32 %v674, %v695
        %v702 = vadd.f32 %v675, %v696
        %v703 = vadd.s32 %v411, 4294967295
        %v704 = vadd.s32 %v412, 4294967295
        %vm705 = vcmp.ge.s32.totalorder %v703, 0
        %vm706 = vcmp.ge.s32.totalorder %v704, 0
        %vm707 = vcmp.lt.s32.totalorder %v703, 16
        %vm708 = vcmp.lt.s32.totalorder %v704, 16
        %vm709 = vmand %vm705, %vm707
        %vm710 = vmand %vm706, %vm708
        %v711 = vsel %vm709, 1, 0
        %v712 = vsel %vm710, 1, 0
        %v713 = vcvt.s32.f32 %v711
        %v714 = vcvt.s32.f32 %v712
        %717 = vrot.lane.b32.xlu0 %v713, 95
        %v718 = vpop.permute.xlu0 %717
        %719 = vrot.lane.b32.xlu0 %v714, 95
        %v720 = vpop.permute.xlu0 %719
        %vm721 = vcmask 777216
        %v722 = vsel %vm721, %v718, %v720
        %v726 = vmul.f32 %v700, %v718
        %v727 = vmul.f32 %v701, %v722
        %v728 = vmul.f32 %v702, %v720
        %732 = vrot.lane.b32.xlu0 %v726, 127
        %v733 = vpop.permute.xlu0 %732
        %734 = vrot.lane.b32.xlu0 %v727, 127
        %v735 = vpop.permute.xlu0 %734
        %736 = vrot.lane.b32.xlu0 %v728, 127
        %v737 = vpop.permute.xlu0 %736
        %vm738 = vcmask 1039360
        %v739 = vsel %vm738, %v733, %v735
        %v740 = vsel %vm738, %v735, %v737
        %v744 = vadd.f32 %v579, %v739
        %v745 = vadd.f32 %v580, %v740
        %v746 = vadd.f32 %v581, %v737
        %s747 = scalar_lea.vmem %s3, 16
        %v748 = vld [vmem:[%s747] sm:$0xff]
        %750 = vset.pattern.permute.xlu0 0
        %751 = vperm.xlu0 %750, %v748
        %v752 = vpop.permute.xlu0 %751
        %v754 = vmul.f32 %v423, %v752
        %v755 = vmul.f32 %v424, %v752
        %v756 = vmul.f32 %v425, %v752
        %v757 = vadd.f32 %v754, 0.0
        %v758 = vadd.f32 %v755, 0.0
        %v759 = vadd.f32 %v756, 0.0
        %s760 = scalar_lea.vmem %s3, 56
        %v761 = vld [vmem:[%s760] sm:$0xff]
        %763 = vset.pattern.permute.xlu0 0
        %764 = vperm.xlu0 %763, %v761
        %v765 = vpop.permute.xlu0 %764
        %v767 = vmul.f32 %v423, %v765
        %v768 = vmul.f32 %v424, %v765
        %v769 = vmul.f32 %v425, %v765
        %773 = vrot.lane.b32.xlu0 %v767, 112
        %v774 = vpop.permute.xlu0 %773
        %775 = vrot.lane.b32.xlu0 %v768, 112
        %v776 = vpop.permute.xlu0 %775
        %777 = vrot.lane.b32.xlu0 %v769, 112
        %v778 = vpop.permute.xlu0 %777
        %v779 = vsel %vm457, %v774, %v776
        %v780 = vsel %vm457, %v776, %v778
        %v784 = vadd.f32 %v757, %v779
        %v785 = vadd.f32 %v758, %v780
        %v786 = vadd.f32 %v759, %v778
        %s787 = scalar_lea.vmem %s3, 96
        %v788 = vld [vmem:[%s787] sm:$0xff]
        %790 = vset.pattern.permute.xlu0 0
        %791 = vperm.xlu0 %790, %v788
        %v792 = vpop.permute.xlu0 %791
        %v794 = vmul.f32 %v424, %v792
        %v795 = vmul.f32 %v425, %v792
        %798 = vrot.lane.b32.xlu0 %v794, 96
        %v799 = vpop.permute.xlu0 %798
        %800 = vrot.lane.b32.xlu0 %v795, 96
        %v801 = vpop.permute.xlu0 %800
        %v802 = vsel %vm485, %v799, %v801
        %v806 = vadd.f32 %v784, %v799
        %v807 = vadd.f32 %v785, %v802
        %v808 = vadd.f32 %v786, %v801
        %s809 = scalar_lea.vmem %s3, 136
        %v810 = vld [vmem:[%s809] sm:$0xff]
        %812 = vset.pattern.permute.xlu0 0
        %813 = vperm.xlu0 %812, %v810
        %v814 = vpop.permute.xlu0 %813
        %v816 = vmul.f32 %v494, %v814
        %v817 = vmul.f32 %v495, %v814
        %v818 = vmul.f32 %v496, %v814
        %822 = vrot.lane.b32.xlu0 %v816, 80
        %v823 = vpop.permute.xlu0 %822
        %824 = vrot.lane.b32.xlu0 %v817, 80
        %v825 = vpop.permute.xlu0 %824
        %826 = vrot.lane.b32.xlu0 %v818, 80
        %v827 = vpop.permute.xlu0 %826
        %v828 = vsel %vm516, %v823, %v825
        %v829 = vsel %vm516, %v825, %v827
        %v833 = vadd.f32 %v806, %v823
        %v834 = vadd.f32 %v807, %v828
        %v835 = vadd.f32 %v808, %v829
        %s836 = scalar_lea.vmem %s3, 176
        %v837 = vld [vmem:[%s836] sm:$0xff]
        %839 = vset.pattern.permute.xlu0 0
        %840 = vperm.xlu0 %839, %v837
        %v841 = vpop.permute.xlu0 %840
        %v843 = vmul.f32 %v494, %v841
        %v844 = vmul.f32 %v495, %v841
        %v845 = vmul.f32 %v496, %v841
        %849 = vrot.lane.b32.xlu0 %v843, 64
        %v850 = vpop.permute.xlu0 %849
        %851 = vrot.lane.b32.xlu0 %v844, 64
        %v852 = vpop.permute.xlu0 %851
        %853 = vrot.lane.b32.xlu0 %v845, 64
        %v854 = vpop.permute.xlu0 %853
        %v855 = vsel %vm544, %v850, %v852
        %v856 = vsel %vm544, %v852, %v854
        %v860 = vadd.f32 %v833, %v850
        %v861 = vadd.f32 %v834, %v855
        %v862 = vadd.f32 %v835, %v856
        %vm863 = vcmp.ge.s32.totalorder %v411, 0
        %vm864 = vcmp.ge.s32.totalorder %v412, 0
        %vm865 = vcmp.lt.s32.totalorder %v411, 16
        %vm866 = vcmp.lt.s32.totalorder %v412, 16
        %vm867 = vmand %vm863, %vm865
        %vm868 = vmand %vm864, %vm866
        %v869 = vsel %vm867, 1, 0
        %v870 = vsel %vm868, 1, 0
        %v871 = vcvt.s32.f32 %v869
        %v872 = vcvt.s32.f32 %v870
        %875 = vrot.lane.b32.xlu0 %v871, 96
        %v876 = vpop.permute.xlu0 %875
        %877 = vrot.lane.b32.xlu0 %v872, 96
        %v878 = vpop.permute.xlu0 %877
        %v879 = vsel %vm485, %v876, %v878
        %v883 = vmul.f32 %v860, %v876
        %v884 = vmul.f32 %v861, %v879
        %v885 = vmul.f32 %v862, %v878
        %889 = vrot.lane.b32.xlu0 %v883, 126
        %v890 = vpop.permute.xlu0 %889
        %891 = vrot.lane.b32.xlu0 %v884, 126
        %v892 = vpop.permute.xlu0 %891
        %893 = vrot.lane.b32.xlu0 %v885, 126
        %v894 = vpop.permute.xlu0 %893
        %vm895 = vcmask 1031168
        %v896 = vsel %vm895, %v890, %v892
        %v897 = vsel %vm895, %v892, %v894
        %v901 = vadd.f32 %v744, %v896
        %v902 = vadd.f32 %v745, %v897
        %v903 = vadd.f32 %v746, %v894
        %s904 = scalar_lea.vmem %s3, 24
        %v905 = vld [vmem:[%s904] sm:$0xff]
        %907 = vset.pattern.permute.xlu0 0
        %908 = vperm.xlu0 %907, %v905
        %v909 = vpop.permute.xlu0 %908
        %v911 = vmul.f32 %v423, %v909
        %v912 = vmul.f32 %v424, %v909
        %v913 = vmul.f32 %v425, %v909
        %v914 = vadd.f32 %v911, 0.0
        %v915 = vadd.f32 %v912, 0.0
        %v916 = vadd.f32 %v913, 0.0
        %s917 = scalar_lea.vmem %s3, 64
        %v918 = vld [vmem:[%s917] sm:$0xff]
        %920 = vset.pattern.permute.xlu0 0
        %921 = vperm.xlu0 %920, %v918
        %v922 = vpop.permute.xlu0 %921
        %v924 = vmul.f32 %v423, %v922
        %v925 = vmul.f32 %v424, %v922
        %v926 = vmul.f32 %v425, %v922
        %930 = vrot.lane.b32.xlu0 %v924, 112
        %v931 = vpop.permute.xlu0 %930
        %932 = vrot.lane.b32.xlu0 %v925, 112
        %v933 = vpop.permute.xlu0 %932
        %934 = vrot.lane.b32.xlu0 %v926, 112
        %v935 = vpop.permute.xlu0 %934
        %v936 = vsel %vm457, %v931, %v933
        %v937 = vsel %vm457, %v933, %v935
        %v941 = vadd.f32 %v914, %v936
        %v942 = vadd.f32 %v915, %v937
        %v943 = vadd.f32 %v916, %v935
        %s944 = scalar_lea.vmem %s3, 104
        %v945 = vld [vmem:[%s944] sm:$0xff]
        %947 = vset.pattern.permute.xlu0 0
        %948 = vperm.xlu0 %947, %v945
        %v949 = vpop.permute.xlu0 %948
        %v951 = vmul.f32 %v494, %v949
        %v952 = vmul.f32 %v495, %v949
        %v953 = vmul.f32 %v496, %v949
        %957 = vrot.lane.b32.xlu0 %v951, 96
        %v958 = vpop.permute.xlu0 %957
        %959 = vrot.lane.b32.xlu0 %v952, 96
        %v960 = vpop.permute.xlu0 %959
        %961 = vrot.lane.b32.xlu0 %v953, 96
        %v962 = vpop.permute.xlu0 %961
        %v963 = vsel %vm485, %v958, %v960
        %v964 = vsel %vm485, %v960, %v962
        %v968 = vadd.f32 %v941, %v958
        %v969 = vadd.f32 %v942, %v963
        %v970 = vadd.f32 %v943, %v964
        %s971 = scalar_lea.vmem %s3, 144
        %v972 = vld [vmem:[%s971] sm:$0xff]
        %974 = vset.pattern.permute.xlu0 0
        %975 = vperm.xlu0 %974, %v972
        %v976 = vpop.permute.xlu0 %975
        %v978 = vmul.f32 %v494, %v976
        %v979 = vmul.f32 %v495, %v976
        %v980 = vmul.f32 %v496, %v976
        %984 = vrot.lane.b32.xlu0 %v978, 80
        %v985 = vpop.permute.xlu0 %984
        %986 = vrot.lane.b32.xlu0 %v979, 80
        %v987 = vpop.permute.xlu0 %986
        %988 = vrot.lane.b32.xlu0 %v980, 80
        %v989 = vpop.permute.xlu0 %988
        %v990 = vsel %vm516, %v985, %v987
        %v991 = vsel %vm516, %v987, %v989
        %v995 = vadd.f32 %v968, %v985
        %v996 = vadd.f32 %v969, %v990
        %v997 = vadd.f32 %v970, %v991
        %s998 = scalar_lea.vmem %s3, 184
        %v999 = vld [vmem:[%s998] sm:$0xff]
        %1001 = vset.pattern.permute.xlu0 0
        %1002 = vperm.xlu0 %1001, %v999
        %v1003 = vpop.permute.xlu0 %1002
        %v1005 = vmul.f32 %v494, %v1003
        %v1006 = vmul.f32 %v495, %v1003
        %v1007 = vmul.f32 %v496, %v1003
        %1011 = vrot.lane.b32.xlu0 %v1005, 64
        %v1012 = vpop.permute.xlu0 %1011
        %1013 = vrot.lane.b32.xlu0 %v1006, 64
        %v1014 = vpop.permute.xlu0 %1013
        %1015 = vrot.lane.b32.xlu0 %v1007, 64
        %v1016 = vpop.permute.xlu0 %1015
        %v1017 = vsel %vm544, %v1012, %v1014
        %v1018 = vsel %vm544, %v1014, %v1016
        %v1022 = vadd.f32 %v995, %v1012
        %v1023 = vadd.f32 %v996, %v1017
        %v1024 = vadd.f32 %v997, %v1018
        %v1025 = vadd.s32 %v411, 1
        %v1026 = vadd.s32 %v412, 1
        %vm1027 = vcmp.ge.s32.totalorder %v1025, 0
        %vm1028 = vcmp.ge.s32.totalorder %v1026, 0
        %vm1029 = vcmp.lt.s32.totalorder %v1025, 16
        %vm1030 = vcmp.lt.s32.totalorder %v1026, 16
        %vm1031 = vmand %vm1027, %vm1029
        %vm1032 = vmand %vm1028, %vm1030
        %v1033 = vsel %vm1031, 1, 0
        %v1034 = vsel %vm1032, 1, 0
        %v1035 = vcvt.s32.f32 %v1033
        %v1036 = vcvt.s32.f32 %v1034
        %1039 = vrot.lane.b32.xlu0 %v1035, 97
        %v1040 = vpop.permute.xlu0 %1039
        %1041 = vrot.lane.b32.xlu0 %v1036, 97
        %v1042 = vpop.permute.xlu0 %1041
        %vm1043 = vcmask 793600
        %v1044 = vsel %vm1043, %v1040, %v1042
        %v1048 = vmul.f32 %v1022, %v1040
        %v1049 = vmul.f32 %v1023, %v1044
        %v1050 = vmul.f32 %v1024, %v1042
        %1054 = vrot.lane.b32.xlu0 %v1048, 125
        %v1055 = vpop.permute.xlu0 %1054
        %1056 = vrot.lane.b32.xlu0 %v1049, 125
        %v1057 = vpop.permute.xlu0 %1056
        %1058 = vrot.lane.b32.xlu0 %v1050, 125
        %v1059 = vpop.permute.xlu0 %1058
        %vm1060 = vcmask 1022976
        %v1061 = vsel %vm1060, %v1055, %v1057
        %v1062 = vsel %vm1060, %v1057, %v1059
        %v1066 = vadd.f32 %v901, %v1061
        %v1067 = vadd.f32 %v902, %v1062
        %v1068 = vadd.f32 %v903, %v1059
        %s1069 = scalar_lea.vmem %s3, 32
        %v1070 = vld [vmem:[%s1069] sm:$0xff]
        %1072 = vset.pattern.permute.xlu0 0
        %1073 = vperm.xlu0 %1072, %v1070
        %v1074 = vpop.permute.xlu0 %1073
        %v1076 = vmul.f32 %v423, %v1074
        %v1077 = vmul.f32 %v424, %v1074
        %v1078 = vmul.f32 %v425, %v1074
        %v1079 = vadd.f32 %v1076, 0.0
        %v1080 = vadd.f32 %v1077, 0.0
        %v1081 = vadd.f32 %v1078, 0.0
        %s1082 = scalar_lea.vmem %s3, 72
        %v1083 = vld [vmem:[%s1082] sm:$0xff]
        %1085 = vset.pattern.permute.xlu0 0
        %1086 = vperm.xlu0 %1085, %v1083
        %v1087 = vpop.permute.xlu0 %1086
        %v1089 = vmul.f32 %v423, %v1087
        %v1090 = vmul.f32 %v424, %v1087
        %v1091 = vmul.f32 %v425, %v1087
        %1095 = vrot.lane.b32.xlu0 %v1089, 112
        %v1096 = vpop.permute.xlu0 %1095
        %1097 = vrot.lane.b32.xlu0 %v1090, 112
        %v1098 = vpop.permute.xlu0 %1097
        %1099 = vrot.lane.b32.xlu0 %v1091, 112
        %v1100 = vpop.permute.xlu0 %1099
        %v1101 = vsel %vm457, %v1096, %v1098
        %v1102 = vsel %vm457, %v1098, %v1100
        %v1106 = vadd.f32 %v1079, %v1101
        %v1107 = vadd.f32 %v1080, %v1102
        %v1108 = vadd.f32 %v1081, %v1100
        %s1109 = scalar_lea.vmem %s3, 112
        %v1110 = vld [vmem:[%s1109] sm:$0xff]
        %1112 = vset.pattern.permute.xlu0 0
        %1113 = vperm.xlu0 %1112, %v1110
        %v1114 = vpop.permute.xlu0 %1113
        %v1116 = vmul.f32 %v494, %v1114
        %v1117 = vmul.f32 %v495, %v1114
        %v1118 = vmul.f32 %v496, %v1114
        %1122 = vrot.lane.b32.xlu0 %v1116, 96
        %v1123 = vpop.permute.xlu0 %1122
        %1124 = vrot.lane.b32.xlu0 %v1117, 96
        %v1125 = vpop.permute.xlu0 %1124
        %1126 = vrot.lane.b32.xlu0 %v1118, 96
        %v1127 = vpop.permute.xlu0 %1126
        %v1128 = vsel %vm485, %v1123, %v1125
        %v1129 = vsel %vm485, %v1125, %v1127
        %v1133 = vadd.f32 %v1106, %v1123
        %v1134 = vadd.f32 %v1107, %v1128
        %v1135 = vadd.f32 %v1108, %v1129
        %s1136 = scalar_lea.vmem %s3, 152
        %v1137 = vld [vmem:[%s1136] sm:$0xff]
        %1139 = vset.pattern.permute.xlu0 0
        %1140 = vperm.xlu0 %1139, %v1137
        %v1141 = vpop.permute.xlu0 %1140
        %v1143 = vmul.f32 %v494, %v1141
        %v1144 = vmul.f32 %v495, %v1141
        %v1145 = vmul.f32 %v496, %v1141
        %1149 = vrot.lane.b32.xlu0 %v1143, 80
        %v1150 = vpop.permute.xlu0 %1149
        %1151 = vrot.lane.b32.xlu0 %v1144, 80
        %v1152 = vpop.permute.xlu0 %1151
        %1153 = vrot.lane.b32.xlu0 %v1145, 80
        %v1154 = vpop.permute.xlu0 %1153
        %v1155 = vsel %vm516, %v1150, %v1152
        %v1156 = vsel %vm516, %v1152, %v1154
        %v1160 = vadd.f32 %v1133, %v1150
        %v1161 = vadd.f32 %v1134, %v1155
        %v1162 = vadd.f32 %v1135, %v1156
        %s1163 = scalar_lea.vmem %s3, 192
        %v1164 = vld [vmem:[%s1163] sm:$0xff]
        %1166 = vset.pattern.permute.xlu0 0
        %1167 = vperm.xlu0 %1166, %v1164
        %v1168 = vpop.permute.xlu0 %1167
        %v1170 = vmul.f32 %v494, %v1168
        %v1171 = vmul.f32 %v495, %v1168
        %v1172 = vmul.f32 %v496, %v1168
        %1176 = vrot.lane.b32.xlu0 %v1170, 64
        %v1177 = vpop.permute.xlu0 %1176
        %1178 = vrot.lane.b32.xlu0 %v1171, 64
        %v1179 = vpop.permute.xlu0 %1178
        %1180 = vrot.lane.b32.xlu0 %v1172, 64
        %v1181 = vpop.permute.xlu0 %1180
        %v1182 = vsel %vm544, %v1177, %v1179
        %v1183 = vsel %vm544, %v1179, %v1181
        %v1187 = vadd.f32 %v1160, %v1177
        %v1188 = vadd.f32 %v1161, %v1182
        %v1189 = vadd.f32 %v1162, %v1183
        %v1190 = vadd.s32 %v411, 2
        %v1191 = vadd.s32 %v412, 2
        %vm1192 = vcmp.ge.s32.totalorder %v1190, 0
        %vm1193 = vcmp.ge.s32.totalorder %v1191, 0
        %vm1194 = vcmp.lt.s32.totalorder %v1190, 16
        %vm1195 = vcmp.lt.s32.totalorder %v1191, 16
        %vm1196 = vmand %vm1192, %vm1194
        %vm1197 = vmand %vm1193, %vm1195
        %v1198 = vsel %vm1196, 1, 0
        %v1199 = vsel %vm1197, 1, 0
        %v1200 = vcvt.s32.f32 %v1198
        %v1201 = vcvt.s32.f32 %v1199
        %1204 = vrot.lane.b32.xlu0 %v1200, 98
        %v1205 = vpop.permute.xlu0 %1204
        %1206 = vrot.lane.b32.xlu0 %v1201, 98
        %v1207 = vpop.permute.xlu0 %1206
        %vm1208 = vcmask 801792
        %v1209 = vsel %vm1208, %v1205, %v1207
        %v1213 = vmul.f32 %v1187, %v1205
        %v1214 = vmul.f32 %v1188, %v1209
        %v1215 = vmul.f32 %v1189, %v1207
        %1219 = vrot.lane.b32.xlu0 %v1213, 124
        %v1220 = vpop.permute.xlu0 %1219
        %1221 = vrot.lane.b32.xlu0 %v1214, 124
        %v1222 = vpop.permute.xlu0 %1221
        %1223 = vrot.lane.b32.xlu0 %v1215, 124
        %v1224 = vpop.permute.xlu0 %1223
        %vm1225 = vcmask 1014784
        %v1226 = vsel %vm1225, %v1220, %v1222
        %v1227 = vsel %vm1225, %v1222, %v1224
        %v1231 = vadd.f32 %v1066, %v1226
        %v1232 = vadd.f32 %v1067, %v1227
        %v1233 = vadd.f32 %v1068, %v1224
        %v1234 = vld [vmem:[%s4] sm:$0xff]
        %1236 = vset.pattern.permute.xlu0 0
        %1237 = vperm.xlu0 %1236, %v1234
        %v1238 = vpop.permute.xlu0 %1237
        %v1240 = vadd.f32 %v1231, %v1238
        %v1241 = vadd.f32 %v1232, %v1238
        %v1242 = vadd.f32 %v1233, %v1238
        %1246 = vrot.lane.b32.xlu0 %v1240, 34
        %v1247 = vpop.permute.xlu0 %1246
        %1248 = vrot.lane.b32.xlu0 %v1241, 34
        %v1249 = vpop.permute.xlu0 %1248
        %1250 = vrot.lane.b32.xlu0 %v1242, 34
        %v1251 = vpop.permute.xlu0 %1250
        %vm1252 = vcmask 277504
        %v1253 = vsel %vm1252, %v1247, %v1249
        %v1254 = vsel %vm1252, %v1249, %v1251
        %1257 = vst [vmem:[#allocation3 + $0x10] sm:$0xff] %v1253
        %1258 = vst [vmem:[#allocation3 + $0x18] sm:$0xff] %v1254
        %v1259 = vld [vmem:[#allocation3] sm:$0xff]
        %v1260 = vld [vmem:[#allocation3 + $0x8] sm:$0xff]
        %v1261 = vld [vmem:[#allocation3 + $0x10] sm:$0xff]
        %v1262 = vld [vmem:[%s5] sm:$0xff]
        %1264 = vset.pattern.permute.xlu0 0
        %1265 = vperm.xlu0 %1264, %v1262
        %v1266 = vpop.permute.xlu0 %1265
        %v1268 = vmul.f32 %v1259, %v1266
        %v1269 = vmul.f32 %v1260, %v1266
        %v1270 = vmul.f32 %v1261, %v1266
        %v1271 = vadd.f32 %v1268, 0.0
        %v1272 = vadd.f32 %v1269, 0.0
        %v1273 = vadd.f32 %v1270, 0.0
        %v1274 = vld [vmem:[#allocation3 + $0x8] sm:$0xff]
        %v1275 = vld [vmem:[#allocation3 + $0x10] sm:$0xff]
        %v1276 = vld [vmem:[#allocation3 + $0x18] sm:$0xff]
        %s1277 = scalar_lea.vmem %s5, 56
        %v1278 = vld [vmem:[%s1277] sm:$0xff]
        %1280 = vset.pattern.permute.xlu0 0
        %1281 = vperm.xlu0 %1280, %v1278
        %v1282 = vpop.permute.xlu0 %1281
        %v1284 = vmul.f32 %v1274, %v1282
        %v1285 = vmul.f32 %v1275, %v1282
        %v1286 = vmul.f32 %v1276, %v1282
        %1290 = vrot.lane.b32.xlu0 %v1284, 80
        %v1291 = vpop.permute.xlu0 %1290
        %1292 = vrot.lane.b32.xlu0 %v1285, 80
        %v1293 = vpop.permute.xlu0 %1292
        %1294 = vrot.lane.b32.xlu0 %v1286, 80
        %v1295 = vpop.permute.xlu0 %1294
        %v1296 = vsel %vm516, %v1291, %v1293
        %v1297 = vsel %vm516, %v1293, %v1295
        %v1301 = vadd.f32 %v1271, %v1291
        %v1302 = vadd.f32 %v1272, %v1296
        %v1303 = vadd.f32 %v1273, %v1297
        %s1304 = scalar_lea.vmem %s5, 112
        %v1305 = vld [vmem:[%s1304] sm:$0xff]
        %1307 = vset.pattern.permute.xlu0 0
        %1308 = vperm.xlu0 %1307, %v1305
        %v1309 = vpop.permute.xlu0 %1308
        %v1311 = vmul.f32 %v1274, %v1309
        %v1312 = vmul.f32 %v1275, %v1309
        %v1313 = vmul.f32 %v1276, %v1309
        %1317 = vrot.lane.b32.xlu0 %v1311, 32
        %v1318 = vpop.permute.xlu0 %1317
        %1319 = vrot.lane.b32.xlu0 %v1312, 32
        %v1320 = vpop.permute.xlu0 %1319
        %1321 = vrot.lane.b32.xlu0 %v1313, 32
        %v1322 = vpop.permute.xlu0 %1321
        %vm1323 = vcmask 261120
        %v1324 = vsel %vm1323, %v1318, %v1320
        %v1325 = vsel %vm1323, %v1320, %v1322
        %v1329 = vadd.f32 %v1301, %v1318
        %v1330 = vadd.f32 %v1302, %v1324
        %v1331 = vadd.f32 %v1303, %v1325
        %s1332 = scalar_lea.vmem %s5, 168
        %v1333 = vld [vmem:[%s1332] sm:$0xff]
        %1335 = vset.pattern.permute.xlu0 0
        %1336 = vperm.xlu0 %1335, %v1333
        %v1337 = vpop.permute.xlu0 %1336
        %v1339 = vmul.f32 %v1274, %v1337
        %v1340 = vmul.f32 %v1275, %v1337
        %v1341 = vmul.f32 %v1276, %v1337
        %1345 = vrot.lane.b32.xlu0 %v1339, 112
        %v1346 = vpop.permute.xlu0 %1345
        %1347 = vrot.lane.b32.xlu0 %v1340, 112
        %v1348 = vpop.permute.xlu0 %1347
        %1349 = vrot.lane.b32.xlu0 %v1341, 112
        %v1350 = vpop.permute.xlu0 %1349
        %v1351 = vsel %vm457, %v1346, %v1348
        %v1352 = vsel %vm457, %v1348, %v1350
        %v1356 = vadd.f32 %v1329, %v1351
        %v1357 = vadd.f32 %v1330, %v1352
        %v1358 = vadd.f32 %v1331, %v1350
        %v1359 = vld [vmem:[#allocation3 + $0x10] sm:$0xff]
        %v1360 = vld [vmem:[#allocation3 + $0x18] sm:$0xff]
        %v1361 = vld [vmem:[#allocation3 + $0x20] sm:$0xff]
        %s1362 = scalar_lea.vmem %s5, 224
        %v1363 = vld [vmem:[%s1362] sm:$0xff]
        %1365 = vset.pattern.permute.xlu0 0
        %1366 = vperm.xlu0 %1365, %v1363
        %v1367 = vpop.permute.xlu0 %1366
        %v1369 = vmul.f32 %v1359, %v1367
        %v1370 = vmul.f32 %v1360, %v1367
        %v1371 = vmul.f32 %v1361, %v1367
        %1375 = vrot.lane.b32.xlu0 %v1369, 64
        %v1376 = vpop.permute.xlu0 %1375
        %1377 = vrot.lane.b32.xlu0 %v1370, 64
        %v1378 = vpop.permute.xlu0 %1377
        %1379 = vrot.lane.b32.xlu0 %v1371, 64
        %v1380 = vpop.permute.xlu0 %1379
        %v1381 = vsel %vm544, %v1376, %v1378
        %v1382 = vsel %vm544, %v1378, %v1380
        %v1386 = vadd.f32 %v1356, %v1376
        %v1387 = vadd.f32 %v1357, %v1381
        %v1388 = vadd.f32 %v1358, %v1382
        %s1389 = scalar_lea.vmem %s5, 280
        %v1390 = vld [vmem:[%s1389] sm:$0xff]
        %1392 = vset.pattern.permute.xlu0 0
        %1393 = vperm.xlu0 %1392, %v1390
        %v1394 = vpop.permute.xlu0 %1393
        %v1396 = vmul.f32 %v1359, %v1394
        %v1397 = vmul.f32 %v1360, %v1394
        %v1398 = vmul.f32 %v1361, %v1394
        %1402 = vrot.lane.b32.xlu0 %v1396, 16
        %v1403 = vpop.permute.xlu0 %1402
        %1404 = vrot.lane.b32.xlu0 %v1397, 16
        %v1405 = vpop.permute.xlu0 %1404
        %1406 = vrot.lane.b32.xlu0 %v1398, 16
        %v1407 = vpop.permute.xlu0 %1406
        %vm1408 = vcmask 130048
        %v1409 = vsel %vm1408, %v1403, %v1405
        %v1410 = vsel %vm1408, %v1405, %v1407
        %v1414 = vadd.f32 %v1386, %v1403
        %v1415 = vadd.f32 %v1387, %v1409
        %v1416 = vadd.f32 %v1388, %v1410
        %v1417 = vld [vmem:[#allocation3 + $0x18] sm:$0xff]
        %v1418 = vld [vmem:[#allocation3 + $0x20] sm:$0xff]
        %v1419 = vld [vmem:[#allocation3 + $0x28] sm:$0xff]
        %s1420 = scalar_lea.vmem %s5, 336
        %v1421 = vld [vmem:[%s1420] sm:$0xff]
        %1423 = vset.pattern.permute.xlu0 0
        %1424 = vperm.xlu0 %1423, %v1421
        %v1425 = vpop.permute.xlu0 %1424
        %v1427 = vmul.f32 %v1417, %v1425
        %v1428 = vmul.f32 %v1418, %v1425
        %v1429 = vmul.f32 %v1419, %v1425
        %1433 = vrot.lane.b32.xlu0 %v1427, 96
        %v1434 = vpop.permute.xlu0 %1433
        %1435 = vrot.lane.b32.xlu0 %v1428, 96
        %v1436 = vpop.permute.xlu0 %1435
        %1437 = vrot.lane.b32.xlu0 %v1429, 96
        %v1438 = vpop.permute.xlu0 %1437
        %v1439 = vsel %vm485, %v1434, %v1436
        %v1440 = vsel %vm485, %v1436, %v1438
        %v1444 = vadd.f32 %v1414, %v1434
        %v1445 = vadd.f32 %v1415, %v1439
        %v1446 = vadd.f32 %v1416, %v1440
        %v1447 = vadd.s32 %v411, 4294967287
        %v1448 = vadd.s32 %v412, 4294967287
        %vm1449 = vcmp.ge.s32.totalorder %v1447, 0
        %vm1450 = vcmp.ge.s32.totalorder %v1448, 0
        %vm1451 = vcmp.lt.s32.totalorder %v1447, 16
        %vm1452 = vcmp.lt.s32.totalorder %v1448, 16
        %vm1453 = vmand %vm1449, %vm1451
        %vm1454 = vmand %vm1450, %vm1452
        %v1455 = vsel %vm1453, 1, 0
        %v1456 = vsel %vm1454, 1, 0
        %v1457 = vcvt.s32.f32 %v1455
        %v1458 = vcvt.s32.f32 %v1456
        %1461 = vrot.lane.b32.xlu0 %v1457, 103
        %v1462 = vpop.permute.xlu0 %1461
        %1463 = vrot.lane.b32.xlu0 %v1458, 103
        %v1464 = vpop.permute.xlu0 %1463
        %vm1465 = vcmask 842752
        %v1466 = vsel %vm1465, %v1462, %v1464
        %v1470 = vmul.f32 %v1444, %v1462
        %v1471 = vmul.f32 %v1445, %v1466
        %v1472 = vmul.f32 %v1446, %v1464
        %v1473 = vadd.f32 %v1470, 0.0
        %v1474 = vadd.f32 %v1471, 0.0
        %v1475 = vadd.f32 %v1472, 0.0
        %s1476 = scalar_lea.vmem %s5, 8
        %v1477 = vld [vmem:[%s1476] sm:$0xff]
        %1479 = vset.pattern.permute.xlu0 0
        %1480 = vperm.xlu0 %1479, %v1477
        %v1481 = vpop.permute.xlu0 %1480
        %v1483 = vmul.f32 %v1259, %v1481
        %v1484 = vmul.f32 %v1260, %v1481
        %v1485 = vmul.f32 %v1261, %v1481
        %v1486 = vadd.f32 %v1483, 0.0
        %v1487 = vadd.f32 %v1484, 0.0
        %v1488 = vadd.f32 %v1485, 0.0
        %s1489 = scalar_lea.vmem %s5, 64
        %v1490 = vld [vmem:[%s1489] sm:$0xff]
        %1492 = vset.pattern.permute.xlu0 0
        %1493 = vperm.xlu0 %1492, %v1490
        %v1494 = vpop.permute.xlu0 %1493
        %v1496 = vmul.f32 %v1274, %v1494
        %v1497 = vmul.f32 %v1275, %v1494
        %v1498 = vmul.f32 %v1276, %v1494
        %1502 = vrot.lane.b32.xlu0 %v1496, 80
        %v1503 = vpop.permute.xlu0 %1502
        %1504 = vrot.lane.b32.xlu0 %v1497, 80
        %v1505 = vpop.permute.xlu0 %1504
        %1506 = vrot.lane.b32.xlu0 %v1498, 80
        %v1507 = vpop.permute.xlu0 %1506
        %v1508 = vsel %vm516, %v1503, %v1505
        %v1509 = vsel %vm516, %v1505, %v1507
        %v1513 = vadd.f32 %v1486, %v1503
        %v1514 = vadd.f32 %v1487, %v1508
        %v1515 = vadd.f32 %v1488, %v1509
        %s1516 = scalar_lea.vmem %s5, 120
        %v1517 = vld [vmem:[%s1516] sm:$0xff]
        %1519 = vset.pattern.permute.xlu0 0
        %1520 = vperm.xlu0 %1519, %v1517
        %v1521 = vpop.permute.xlu0 %1520
        %v1523 = vmul.f32 %v1274, %v1521
        %v1524 = vmul.f32 %v1275, %v1521
        %v1525 = vmul.f32 %v1276, %v1521
        %1529 = vrot.lane.b32.xlu0 %v1523, 32
        %v1530 = vpop.permute.xlu0 %1529
        %1531 = vrot.lane.b32.xlu0 %v1524, 32
        %v1532 = vpop.permute.xlu0 %1531
        %1533 = vrot.lane.b32.xlu0 %v1525, 32
        %v1534 = vpop.permute.xlu0 %1533
        %v1535 = vsel %vm1323, %v1530, %v1532
        %v1536 = vsel %vm1323, %v1532, %v1534
        %v1540 = vadd.f32 %v1513, %v1530
        %v1541 = vadd.f32 %v1514, %v1535
        %v1542 = vadd.f32 %v1515, %v1536
        %s1543 = scalar_lea.vmem %s5, 176
        %v1544 = vld [vmem:[%s1543] sm:$0xff]
        %1546 = vset.pattern.permute.xlu0 0
        %1547 = vperm.xlu0 %1546, %v1544
        %v1548 = vpop.permute.xlu0 %1547
        %v1550 = vmul.f32 %v1274, %v1548
        %v1551 = vmul.f32 %v1275, %v1548
        %v1552 = vmul.f32 %v1276, %v1548
        %1556 = vrot.lane.b32.xlu0 %v1550, 112
        %v1557 = vpop.permute.xlu0 %1556
        %1558 = vrot.lane.b32.xlu0 %v1551, 112
        %v1559 = vpop.permute.xlu0 %1558
        %1560 = vrot.lane.b32.xlu0 %v1552, 112
        %v1561 = vpop.permute.xlu0 %1560
        %v1562 = vsel %vm457, %v1557, %v1559
        %v1563 = vsel %vm457, %v1559, %v1561
        %v1567 = vadd.f32 %v1540, %v1562
        %v1568 = vadd.f32 %v1541, %v1563
        %v1569 = vadd.f32 %v1542, %v1561
        %s1570 = scalar_lea.vmem %s5, 232
        %v1571 = vld [vmem:[%s1570] sm:$0xff]
        %1573 = vset.pattern.permute.xlu0 0
        %1574 = vperm.xlu0 %1573, %v1571
        %v1575 = vpop.permute.xlu0 %1574
        %v1577 = vmul.f32 %v1359, %v1575
        %v1578 = vmul.f32 %v1360, %v1575
        %v1579 = vmul.f32 %v1361, %v1575
        %1583 = vrot.lane.b32.xlu0 %v1577, 64
        %v1584 = vpop.permute.xlu0 %1583
        %1585 = vrot.lane.b32.xlu0 %v1578, 64
        %v1586 = vpop.permute.xlu0 %1585
        %1587 = vrot.lane.b32.xlu0 %v1579, 64
        %v1588 = vpop.permute.xlu0 %1587
        %v1589 = vsel %vm544, %v1584, %v1586
        %v1590 = vsel %vm544, %v1586, %v1588
        %v1594 = vadd.f32 %v1567, %v1584
        %v1595 = vadd.f32 %v1568, %v1589
        %v1596 = vadd.f32 %v1569, %v1590
        %s1597 = scalar_lea.vmem %s5, 288
        %v1598 = vld [vmem:[%s1597] sm:$0xff]
        %1600 = vset.pattern.permute.xlu0 0
        %1601 = vperm.xlu0 %1600, %v1598
        %v1602 = vpop.permute.xlu0 %1601
        %v1604 = vmul.f32 %v1359, %v1602
        %v1605 = vmul.f32 %v1360, %v1602
        %v1606 = vmul.f32 %v1361, %v1602
        %1610 = vrot.lane.b32.xlu0 %v1604, 16
        %v1611 = vpop.permute.xlu0 %1610
        %1612 = vrot.lane.b32.xlu0 %v1605, 16
        %v1613 = vpop.permute.xlu0 %1612
        %1614 = vrot.lane.b32.xlu0 %v1606, 16
        %v1615 = vpop.permute.xlu0 %1614
        %v1616 = vsel %vm1408, %v1611, %v1613
        %v1617 = vsel %vm1408, %v1613, %v1615
        %v1621 = vadd.f32 %v1594, %v1611
        %v1622 = vadd.f32 %v1595, %v1616
        %v1623 = vadd.f32 %v1596, %v1617
        %s1624 = scalar_lea.vmem %s5, 344
        %v1625 = vld [vmem:[%s1624] sm:$0xff]
        %1627 = vset.pattern.permute.xlu0 0
        %1628 = vperm.xlu0 %1627, %v1625
        %v1629 = vpop.permute.xlu0 %1628
        %v1631 = vmul.f32 %v1417, %v1629
        %v1632 = vmul.f32 %v1418, %v1629
        %v1633 = vmul.f32 %v1419, %v1629
        %1637 = vrot.lane.b32.xlu0 %v1631, 96
        %v1638 = vpop.permute.xlu0 %1637
        %1639 = vrot.lane.b32.xlu0 %v1632, 96
        %v1640 = vpop.permute.xlu0 %1639
        %1641 = vrot.lane.b32.xlu0 %v1633, 96
        %v1642 = vpop.permute.xlu0 %1641
        %v1643 = vsel %vm485, %v1638, %v1640
        %v1644 = vsel %vm485, %v1640, %v1642
        %v1648 = vadd.f32 %v1621, %v1638
        %v1649 = vadd.f32 %v1622, %v1643
        %v1650 = vadd.f32 %v1623, %v1644
        %v1651 = vadd.s32 %v411, 4294967290
        %v1652 = vadd.s32 %v412, 4294967290
        %vm1653 = vcmp.ge.s32.totalorder %v1651, 0
        %vm1654 = vcmp.ge.s32.totalorder %v1652, 0
        %vm1655 = vcmp.lt.s32.totalorder %v1651, 16
        %vm1656 = vcmp.lt.s32.totalorder %v1652, 16
        %vm1657 = vmand %vm1653, %vm1655
        %vm1658 = vmand %vm1654, %vm1656
        %v1659 = vsel %vm1657, 1, 0
        %v1660 = vsel %vm1658, 1, 0
        %v1661 = vcvt.s32.f32 %v1659
        %v1662 = vcvt.s32.f32 %v1660
        %1665 = vrot.lane.b32.xlu0 %v1661, 106
        %v1666 = vpop.permute.xlu0 %1665
        %1667 = vrot.lane.b32.xlu0 %v1662, 106
        %v1668 = vpop.permute.xlu0 %1667
        %vm1669 = vcmask 867328
        %v1670 = vsel %vm1669, %v1666, %v1668
        %v1674 = vmul.f32 %v1648, %v1666
        %v1675 = vmul.f32 %v1649, %v1670
        %v1676 = vmul.f32 %v1650, %v1668
        %1680 = vrot.lane.b32.xlu0 %v1674, 125
        %v1681 = vpop.permute.xlu0 %1680
        %1682 = vrot.lane.b32.xlu0 %v1675, 125
        %v1683 = vpop.permute.xlu0 %1682
        %1684 = vrot.lane.b32.xlu0 %v1676, 125
        %v1685 = vpop.permute.xlu0 %1684
        %v1686 = vsel %vm1060, %v1681, %v1683
        %v1687 = vsel %vm1060, %v1683, %v1685
        %v1691 = vadd.f32 %v1473, %v1686
        %v1692 = vadd.f32 %v1474, %v1687
        %v1693 = vadd.f32 %v1475, %v1685
        %s1694 = scalar_lea.vmem %s5, 16
        %v1695 = vld [vmem:[%s1694] sm:$0xff]
        %1697 = vset.pattern.permute.xlu0 0
        %1698 = vperm.xlu0 %1697, %v1695
        %v1699 = vpop.permute.xlu0 %1698
        %v1701 = vmul.f32 %v1259, %v1699
        %v1702 = vmul.f32 %v1260, %v1699
        %v1703 = vmul.f32 %v1261, %v1699
        %v1704 = vadd.f32 %v1701, 0.0
        %v1705 = vadd.f32 %v1702, 0.0
        %v1706 = vadd.f32 %v1703, 0.0
        %s1707 = scalar_lea.vmem %s5, 72
        %v1708 = vld [vmem:[%s1707] sm:$0xff]
        %1710 = vset.pattern.permute.xlu0 0
        %1711 = vperm.xlu0 %1710, %v1708
        %v1712 = vpop.permute.xlu0 %1711
        %v1714 = vmul.f32 %v1274, %v1712
        %v1715 = vmul.f32 %v1275, %v1712
        %v1716 = vmul.f32 %v1276, %v1712
        %1720 = vrot.lane.b32.xlu0 %v1714, 80
        %v1721 = vpop.permute.xlu0 %1720
        %1722 = vrot.lane.b32.xlu0 %v1715, 80
        %v1723 = vpop.permute.xlu0 %1722
        %1724 = vrot.lane.b32.xlu0 %v1716, 80
        %v1725 = vpop.permute.xlu0 %1724
        %v1726 = vsel %vm516, %v1721, %v1723
        %v1727 = vsel %vm516, %v1723, %v1725
        %v1731 = vadd.f32 %v1704, %v1721
        %v1732 = vadd.f32 %v1705, %v1726
        %v1733 = vadd.f32 %v1706, %v1727
        %s1734 = scalar_lea.vmem %s5, 128
        %v1735 = vld [vmem:[%s1734] sm:$0xff]
        %1737 = vset.pattern.permute.xlu0 0
        %1738 = vperm.xlu0 %1737, %v1735
        %v1739 = vpop.permute.xlu0 %1738
        %v1741 = vmul.f32 %v1274, %v1739
        %v1742 = vmul.f32 %v1275, %v1739
        %v1743 = vmul.f32 %v1276, %v1739
        %1747 = vrot.lane.b32.xlu0 %v1741, 32
        %v1748 = vpop.permute.xlu0 %1747
        %1749 = vrot.lane.b32.xlu0 %v1742, 32
        %v1750 = vpop.permute.xlu0 %1749
        %1751 = vrot.lane.b32.xlu0 %v1743, 32
        %v1752 = vpop.permute.xlu0 %1751
        %v1753 = vsel %vm1323, %v1748, %v1750
        %v1754 = vsel %vm1323, %v1750, %v1752
        %v1758 = vadd.f32 %v1731, %v1748
        %v1759 = vadd.f32 %v1732, %v1753
        %v1760 = vadd.f32 %v1733, %v1754
        %s1761 = scalar_lea.vmem %s5, 184
        %v1762 = vld [vmem:[%s1761] sm:$0xff]
        %1764 = vset.pattern.permute.xlu0 0
        %1765 = vperm.xlu0 %1764, %v1762
        %v1766 = vpop.permute.xlu0 %1765
        %v1768 = vmul.f32 %v1274, %v1766
        %v1769 = vmul.f32 %v1275, %v1766
        %v1770 = vmul.f32 %v1276, %v1766
        %1774 = vrot.lane.b32.xlu0 %v1768, 112
        %v1775 = vpop.permute.xlu0 %1774
        %1776 = vrot.lane.b32.xlu0 %v1769, 112
        %v1777 = vpop.permute.xlu0 %1776
        %1778 = vrot.lane.b32.xlu0 %v1770, 112
        %v1779 = vpop.permute.xlu0 %1778
        %v1780 = vsel %vm457, %v1775, %v1777
        %v1781 = vsel %vm457, %v1777, %v1779
        %v1785 = vadd.f32 %v1758, %v1780
        %v1786 = vadd.f32 %v1759, %v1781
        %v1787 = vadd.f32 %v1760, %v1779
        %s1788 = scalar_lea.vmem %s5, 240
        %v1789 = vld [vmem:[%s1788] sm:$0xff]
        %1791 = vset.pattern.permute.xlu0 0
        %1792 = vperm.xlu0 %1791, %v1789
        %v1793 = vpop.permute.xlu0 %1792
        %v1795 = vmul.f32 %v1359, %v1793
        %v1796 = vmul.f32 %v1360, %v1793
        %v1797 = vmul.f32 %v1361, %v1793
        %1801 = vrot.lane.b32.xlu0 %v1795, 64
        %v1802 = vpop.permute.xlu0 %1801
        %1803 = vrot.lane.b32.xlu0 %v1796, 64
        %v1804 = vpop.permute.xlu0 %1803
        %1805 = vrot.lane.b32.xlu0 %v1797, 64
        %v1806 = vpop.permute.xlu0 %1805
        %v1807 = vsel %vm544, %v1802, %v1804
        %v1808 = vsel %vm544, %v1804, %v1806
        %v1812 = vadd.f32 %v1785, %v1802
        %v1813 = vadd.f32 %v1786, %v1807
        %v1814 = vadd.f32 %v1787, %v1808
        %s1815 = scalar_lea.vmem %s5, 296
        %v1816 = vld [vmem:[%s1815] sm:$0xff]
        %1818 = vset.pattern.permute.xlu0 0
        %1819 = vperm.xlu0 %1818, %v1816
        %v1820 = vpop.permute.xlu0 %1819
        %v1822 = vmul.f32 %v1359, %v1820
        %v1823 = vmul.f32 %v1360, %v1820
        %v1824 = vmul.f32 %v1361, %v1820
        %1828 = vrot.lane.b32.xlu0 %v1822, 16
        %v1829 = vpop.permute.xlu0 %1828
        %1830 = vrot.lane.b32.xlu0 %v1823, 16
        %v1831 = vpop.permute.xlu0 %1830
        %1832 = vrot.lane.b32.xlu0 %v1824, 16
        %v1833 = vpop.permute.xlu0 %1832
        %v1834 = vsel %vm1408, %v1829, %v1831
        %v1835 = vsel %vm1408, %v1831, %v1833
        %v1839 = vadd.f32 %v1812, %v1829
        %v1840 = vadd.f32 %v1813, %v1834
        %v1841 = vadd.f32 %v1814, %v1835
        %s1842 = scalar_lea.vmem %s5, 352
        %v1843 = vld [vmem:[%s1842] sm:$0xff]
        %1845 = vset.pattern.permute.xlu0 0
        %1846 = vperm.xlu0 %1845, %v1843
        %v1847 = vpop.permute.xlu0 %1846
        %v1849 = vmul.f32 %v1417, %v1847
        %v1850 = vmul.f32 %v1418, %v1847
        %v1851 = vmul.f32 %v1419, %v1847
        %1855 = vrot.lane.b32.xlu0 %v1849, 96
        %v1856 = vpop.permute.xlu0 %1855
        %1857 = vrot.lane.b32.xlu0 %v1850, 96
        %v1858 = vpop.permute.xlu0 %1857
        %1859 = vrot.lane.b32.xlu0 %v1851, 96
        %v1860 = vpop.permute.xlu0 %1859
        %v1861 = vsel %vm485, %v1856, %v1858
        %v1862 = vsel %vm485, %v1858, %v1860
        %v1866 = vadd.f32 %v1839, %v1856
        %v1867 = vadd.f32 %v1840, %v1861
        %v1868 = vadd.f32 %v1841, %v1862
        %v1869 = vadd.s32 %v411, 4294967293
        %v1870 = vadd.s32 %v412, 4294967293
        %vm1871 = vcmp.ge.s32.totalorder %v1869, 0
        %vm1872 = vcmp.ge.s32.totalorder %v1870, 0
        %vm1873 = vcmp.lt.s32.totalorder %v1869, 16
        %vm1874 = vcmp.lt.s32.totalorder %v1870, 16
        %vm1875 = vmand %vm1871, %vm1873
        %vm1876 = vmand %vm1872, %vm1874
        %v1877 = vsel %vm1875, 1, 0
        %v1878 = vsel %vm1876, 1, 0
        %v1879 = vcvt.s32.f32 %v1877
        %v1880 = vcvt.s32.f32 %v1878
        %1883 = vrot.lane.b32.xlu0 %v1879, 109
        %v1884 = vpop.permute.xlu0 %1883
        %1885 = vrot.lane.b32.xlu0 %v1880, 109
        %v1886 = vpop.permute.xlu0 %1885
        %vm1887 = vcmask 891904
        %v1888 = vsel %vm1887, %v1884, %v1886
        %v1892 = vmul.f32 %v1866, %v1884
        %v1893 = vmul.f32 %v1867, %v1888
        %v1894 = vmul.f32 %v1868, %v1886
        %1898 = vrot.lane.b32.xlu0 %v1892, 122
        %v1899 = vpop.permute.xlu0 %1898
        %1900 = vrot.lane.b32.xlu0 %v1893, 122
        %v1901 = vpop.permute.xlu0 %1900
        %1902 = vrot.lane.b32.xlu0 %v1894, 122
        %v1903 = vpop.permute.xlu0 %1902
        %vm1904 = vcmask 998400
        %v1905 = vsel %vm1904, %v1899, %v1901
        %v1906 = vsel %vm1904, %v1901, %v1903
        %v1910 = vadd.f32 %v1691, %v1905
        %v1911 = vadd.f32 %v1692, %v1906
        %v1912 = vadd.f32 %v1693, %v1903
        %s1913 = scalar_lea.vmem %s5, 24
        %v1914 = vld [vmem:[%s1913] sm:$0xff]
        %1916 = vset.pattern.permute.xlu0 0
        %1917 = vperm.xlu0 %1916, %v1914
        %v1918 = vpop.permute.xlu0 %1917
        %v1920 = vmul.f32 %v1259, %v1918
        %v1921 = vmul.f32 %v1260, %v1918
        %v1922 = vmul.f32 %v1261, %v1918
        %v1923 = vadd.f32 %v1920, 0.0
        %v1924 = vadd.f32 %v1921, 0.0
        %v1925 = vadd.f32 %v1922, 0.0
        %s1926 = scalar_lea.vmem %s5, 80
        %v1927 = vld [vmem:[%s1926] sm:$0xff]
        %1929 = vset.pattern.permute.xlu0 0
        %1930 = vperm.xlu0 %1929, %v1927
        %v1931 = vpop.permute.xlu0 %1930
        %v1933 = vmul.f32 %v1274, %v1931
        %v1934 = vmul.f32 %v1275, %v1931
        %v1935 = vmul.f32 %v1276, %v1931
        %1939 = vrot.lane.b32.xlu0 %v1933, 80
        %v1940 = vpop.permute.xlu0 %1939
        %1941 = vrot.lane.b32.xlu0 %v1934, 80
        %v1942 = vpop.permute.xlu0 %1941
        %1943 = vrot.lane.b32.xlu0 %v1935, 80
        %v1944 = vpop.permute.xlu0 %1943
        %v1945 = vsel %vm516, %v1940, %v1942
        %v1946 = vsel %vm516, %v1942, %v1944
        %v1950 = vadd.f32 %v1923, %v1940
        %v1951 = vadd.f32 %v1924, %v1945
        %v1952 = vadd.f32 %v1925, %v1946
        %s1953 = scalar_lea.vmem %s5, 136
        %v1954 = vld [vmem:[%s1953] sm:$0xff]
        %1956 = vset.pattern.permute.xlu0 0
        %1957 = vperm.xlu0 %1956, %v1954
        %v1958 = vpop.permute.xlu0 %1957
        %v1960 = vmul.f32 %v1274, %v1958
        %v1961 = vmul.f32 %v1275, %v1958
        %v1962 = vmul.f32 %v1276, %v1958
        %1966 = vrot.lane.b32.xlu0 %v1960, 32
        %v1967 = vpop.permute.xlu0 %1966
        %1968 = vrot.lane.b32.xlu0 %v1961, 32
        %v1969 = vpop.permute.xlu0 %1968
        %1970 = vrot.lane.b32.xlu0 %v1962, 32
        %v1971 = vpop.permute.xlu0 %1970
        %v1972 = vsel %vm1323, %v1967, %v1969
        %v1973 = vsel %vm1323, %v1969, %v1971
        %v1977 = vadd.f32 %v1950, %v1967
        %v1978 = vadd.f32 %v1951, %v1972
        %v1979 = vadd.f32 %v1952, %v1973
        %s1980 = scalar_lea.vmem %s5, 192
        %v1981 = vld [vmem:[%s1980] sm:$0xff]
        %1983 = vset.pattern.permute.xlu0 0
        %1984 = vperm.xlu0 %1983, %v1981
        %v1985 = vpop.permute.xlu0 %1984
        %v1987 = vmul.f32 %v1275, %v1985
        %v1988 = vmul.f32 %v1276, %v1985
        %1991 = vrot.lane.b32.xlu0 %v1987, 112
        %v1992 = vpop.permute.xlu0 %1991
        %1993 = vrot.lane.b32.xlu0 %v1988, 112
        %v1994 = vpop.permute.xlu0 %1993
        %v1995 = vsel %vm457, %v1992, %v1994
        %v1999 = vadd.f32 %v1977, %v1992
        %v2000 = vadd.f32 %v1978, %v1995
        %v2001 = vadd.f32 %v1979, %v1994
        %s2002 = scalar_lea.vmem %s5, 248
        %v2003 = vld [vmem:[%s2002] sm:$0xff]
        %2005 = vset.pattern.permute.xlu0 0
        %2006 = vperm.xlu0 %2005, %v2003
        %v2007 = vpop.permute.xlu0 %2006
        %v2009 = vmul.f32 %v1359, %v2007
        %v2010 = vmul.f32 %v1360, %v2007
        %v2011 = vmul.f32 %v1361, %v2007
        %2015 = vrot.lane.b32.xlu0 %v2009, 64
        %v2016 = vpop.permute.xlu0 %2015
        %2017 = vrot.lane.b32.xlu0 %v2010, 64
        %v2018 = vpop.permute.xlu0 %2017
        %2019 = vrot.lane.b32.xlu0 %v2011, 64
        %v2020 = vpop.permute.xlu0 %2019
        %v2021 = vsel %vm544, %v2016, %v2018
        %v2022 = vsel %vm544, %v2018, %v2020
        %v2026 = vadd.f32 %v1999, %v2016
        %v2027 = vadd.f32 %v2000, %v2021
        %v2028 = vadd.f32 %v2001, %v2022
        %s2029 = scalar_lea.vmem %s5, 304
        %v2030 = vld [vmem:[%s2029] sm:$0xff]
        %2032 = vset.pattern.permute.xlu0 0
        %2033 = vperm.xlu0 %2032, %v2030
        %v2034 = vpop.permute.xlu0 %2033
        %v2036 = vmul.f32 %v1359, %v2034
        %v2037 = vmul.f32 %v1360, %v2034
        %v2038 = vmul.f32 %v1361, %v2034
        %2042 = vrot.lane.b32.xlu0 %v2036, 16
        %v2043 = vpop.permute.xlu0 %2042
        %2044 = vrot.lane.b32.xlu0 %v2037, 16
        %v2045 = vpop.permute.xlu0 %2044
        %2046 = vrot.lane.b32.xlu0 %v2038, 16
        %v2047 = vpop.permute.xlu0 %2046
        %v2048 = vsel %vm1408, %v2043, %v2045
        %v2049 = vsel %vm1408, %v2045, %v2047
        %v2053 = vadd.f32 %v2026, %v2043
        %v2054 = vadd.f32 %v2027, %v2048
        %v2055 = vadd.f32 %v2028, %v2049
        %s2056 = scalar_lea.vmem %s5, 360
        %v2057 = vld [vmem:[%s2056] sm:$0xff]
        %2059 = vset.pattern.permute.xlu0 0
        %2060 = vperm.xlu0 %2059, %v2057
        %v2061 = vpop.permute.xlu0 %2060
        %v2063 = vmul.f32 %v1417, %v2061
        %v2064 = vmul.f32 %v1418, %v2061
        %v2065 = vmul.f32 %v1419, %v2061
        %2069 = vrot.lane.b32.xlu0 %v2063, 96
        %v2070 = vpop.permute.xlu0 %2069
        %2071 = vrot.lane.b32.xlu0 %v2064, 96
        %v2072 = vpop.permute.xlu0 %2071
        %2073 = vrot.lane.b32.xlu0 %v2065, 96
        %v2074 = vpop.permute.xlu0 %2073
        %v2075 = vsel %vm485, %v2070, %v2072
        %v2076 = vsel %vm485, %v2072, %v2074
        %v2080 = vadd.f32 %v2053, %v2070
        %v2081 = vadd.f32 %v2054, %v2075
        %v2082 = vadd.f32 %v2055, %v2076
        %2083 = vrot.lane.b32.xlu0 %v871, 112
        %v2084 = vpop.permute.xlu0 %2083
        %2085 = vrot.lane.b32.xlu0 %v872, 112
        %v2086 = vpop.permute.xlu0 %2085
        %v2087 = vsel %vm457, %v2084, %v2086
        %v2091 = vmul.f32 %v2080, %v2084
        %v2092 = vmul.f32 %v2081, %v2087
        %v2093 = vmul.f32 %v2082, %v2086
        %2097 = vrot.lane.b32.xlu0 %v2091, 119
        %v2098 = vpop.permute.xlu0 %2097
        %2099 = vrot.lane.b32.xlu0 %v2092, 119
        %v2100 = vpop.permute.xlu0 %2099
        %2101 = vrot.lane.b32.xlu0 %v2093, 119
        %v2102 = vpop.permute.xlu0 %2101
        %vm2103 = vcmask 973824
        %v2104 = vsel %vm2103, %v2098, %v2100
        %v2105 = vsel %vm2103, %v2100, %v2102
        %v2109 = vadd.f32 %v1910, %v2104
        %v2110 = vadd.f32 %v1911, %v2105
        %v2111 = vadd.f32 %v1912, %v2102
        %s2112 = scalar_lea.vmem %s5, 32
        %v2113 = vld [vmem:[%s2112] sm:$0xff]
        %2115 = vset.pattern.permute.xlu0 0
        %2116 = vperm.xlu0 %2115, %v2113
        %v2117 = vpop.permute.xlu0 %2116
        %v2119 = vmul.f32 %v1259, %v2117
        %v2120 = vmul.f32 %v1260, %v2117
        %v2121 = vmul.f32 %v1261, %v2117
        %v2122 = vadd.f32 %v2119, 0.0
        %v2123 = vadd.f32 %v2120, 0.0
        %v2124 = vadd.f32 %v2121, 0.0
        %s2125 = scalar_lea.vmem %s5, 88
        %v2126 = vld [vmem:[%s2125] sm:$0xff]
        %2128 = vset.pattern.permute.xlu0 0
        %2129 = vperm.xlu0 %2128, %v2126
        %v2130 = vpop.permute.xlu0 %2129
        %v2132 = vmul.f32 %v1274, %v2130
        %v2133 = vmul.f32 %v1275, %v2130
        %v2134 = vmul.f32 %v1276, %v2130
        %2138 = vrot.lane.b32.xlu0 %v2132, 80
        %v2139 = vpop.permute.xlu0 %2138
        %2140 = vrot.lane.b32.xlu0 %v2133, 80
        %v2141 = vpop.permute.xlu0 %2140
        %2142 = vrot.lane.b32.xlu0 %v2134, 80
        %v2143 = vpop.permute.xlu0 %2142
        %v2144 = vsel %vm516, %v2139, %v2141
        %v2145 = vsel %vm516, %v2141, %v2143
        %v2149 = vadd.f32 %v2122, %v2139
        %v2150 = vadd.f32 %v2123, %v2144
        %v2151 = vadd.f32 %v2124, %v2145
        %s2152 = scalar_lea.vmem %s5, 144
        %v2153 = vld [vmem:[%s2152] sm:$0xff]
        %2155 = vset.pattern.permute.xlu0 0
        %2156 = vperm.xlu0 %2155, %v2153
        %v2157 = vpop.permute.xlu0 %2156
        %v2159 = vmul.f32 %v1274, %v2157
        %v2160 = vmul.f32 %v1275, %v2157
        %v2161 = vmul.f32 %v1276, %v2157
        %2165 = vrot.lane.b32.xlu0 %v2159, 32
        %v2166 = vpop.permute.xlu0 %2165
        %2167 = vrot.lane.b32.xlu0 %v2160, 32
        %v2168 = vpop.permute.xlu0 %2167
        %2169 = vrot.lane.b32.xlu0 %v2161, 32
        %v2170 = vpop.permute.xlu0 %2169
        %v2171 = vsel %vm1323, %v2166, %v2168
        %v2172 = vsel %vm1323, %v2168, %v2170
        %v2176 = vadd.f32 %v2149, %v2166
        %v2177 = vadd.f32 %v2150, %v2171
        %v2178 = vadd.f32 %v2151, %v2172
        %s2179 = scalar_lea.vmem %s5, 200
        %v2180 = vld [vmem:[%s2179] sm:$0xff]
        %2182 = vset.pattern.permute.xlu0 0
        %2183 = vperm.xlu0 %2182, %v2180
        %v2184 = vpop.permute.xlu0 %2183
        %v2186 = vmul.f32 %v1359, %v2184
        %v2187 = vmul.f32 %v1360, %v2184
        %v2188 = vmul.f32 %v1361, %v2184
        %2192 = vrot.lane.b32.xlu0 %v2186, 112
        %v2193 = vpop.permute.xlu0 %2192
        %2194 = vrot.lane.b32.xlu0 %v2187, 112
        %v2195 = vpop.permute.xlu0 %2194
        %2196 = vrot.lane.b32.xlu0 %v2188, 112
        %v2197 = vpop.permute.xlu0 %2196
        %v2198 = vsel %vm457, %v2193, %v2195
        %v2199 = vsel %vm457, %v2195, %v2197
        %v2203 = vadd.f32 %v2176, %v2193
        %v2204 = vadd.f32 %v2177, %v2198
        %v2205 = vadd.f32 %v2178, %v2199
        %s2206 = scalar_lea.vmem %s5, 256
        %v2207 = vld [vmem:[%s2206] sm:$0xff]
        %2209 = vset.pattern.permute.xlu0 0
        %2210 = vperm.xlu0 %2209, %v2207
        %v2211 = vpop.permute.xlu0 %2210
        %v2213 = vmul.f32 %v1359, %v2211
        %v2214 = vmul.f32 %v1360, %v2211
        %v2215 = vmul.f32 %v1361, %v2211
        %2219 = vrot.lane.b32.xlu0 %v2213, 64
        %v2220 = vpop.permute.xlu0 %2219
        %2221 = vrot.lane.b32.xlu0 %v2214, 64
        %v2222 = vpop.permute.xlu0 %2221
        %2223 = vrot.lane.b32.xlu0 %v2215, 64
        %v2224 = vpop.permute.xlu0 %2223
        %v2225 = vsel %vm544, %v2220, %v2222
        %v2226 = vsel %vm544, %v2222, %v2224
        %v2230 = vadd.f32 %v2203, %v2220
        %v2231 = vadd.f32 %v2204, %v2225
        %v2232 = vadd.f32 %v2205, %v2226
        %s2233 = scalar_lea.vmem %s5, 312
        %v2234 = vld [vmem:[%s2233] sm:$0xff]
        %2236 = vset.pattern.permute.xlu0 0
        %2237 = vperm.xlu0 %2236, %v2234
        %v2238 = vpop.permute.xlu0 %2237
        %v2240 = vmul.f32 %v1359, %v2238
        %v2241 = vmul.f32 %v1360, %v2238
        %v2242 = vmul.f32 %v1361, %v2238
        %2246 = vrot.lane.b32.xlu0 %v2240, 16
        %v2247 = vpop.permute.xlu0 %2246
        %2248 = vrot.lane.b32.xlu0 %v2241, 16
        %v2249 = vpop.permute.xlu0 %2248
        %2250 = vrot.lane.b32.xlu0 %v2242, 16
        %v2251 = vpop.permute.xlu0 %2250
        %v2252 = vsel %vm1408, %v2247, %v2249
        %v2253 = vsel %vm1408, %v2249, %v2251
        %v2257 = vadd.f32 %v2230, %v2247
        %v2258 = vadd.f32 %v2231, %v2252
        %v2259 = vadd.f32 %v2232, %v2253
        %s2260 = scalar_lea.vmem %s5, 368
        %v2261 = vld [vmem:[%s2260] sm:$0xff]
        %2263 = vset.pattern.permute.xlu0 0
        %2264 = vperm.xlu0 %2263, %v2261
        %v2265 = vpop.permute.xlu0 %2264
        %v2267 = vmul.f32 %v1417, %v2265
        %v2268 = vmul.f32 %v1418, %v2265
        %v2269 = vmul.f32 %v1419, %v2265
        %2273 = vrot.lane.b32.xlu0 %v2267, 96
        %v2274 = vpop.permute.xlu0 %2273
        %2275 = vrot.lane.b32.xlu0 %v2268, 96
        %v2276 = vpop.permute.xlu0 %2275
        %2277 = vrot.lane.b32.xlu0 %v2269, 96
        %v2278 = vpop.permute.xlu0 %2277
        %v2279 = vsel %vm485, %v2274, %v2276
        %v2280 = vsel %vm485, %v2276, %v2278
        %v2284 = vadd.f32 %v2257, %v2274
        %v2285 = vadd.f32 %v2258, %v2279
        %v2286 = vadd.f32 %v2259, %v2280
        %v2287 = vadd.s32 %v411, 3
        %v2288 = vadd.s32 %v412, 3
        %vm2289 = vcmp.ge.s32.totalorder %v2287, 0
        %vm2290 = vcmp.ge.s32.totalorder %v2288, 0
        %vm2291 = vcmp.lt.s32.totalorder %v2287, 16
        %vm2292 = vcmp.lt.s32.totalorder %v2288, 16
        %vm2293 = vmand %vm2289, %vm2291
        %vm2294 = vmand %vm2290, %vm2292
        %v2295 = vsel %vm2293, 1, 0
        %v2296 = vsel %vm2294, 1, 0
        %v2297 = vcvt.s32.f32 %v2295
        %v2298 = vcvt.s32.f32 %v2296
        %2301 = vrot.lane.b32.xlu0 %v2297, 115
        %v2302 = vpop.permute.xlu0 %2301
        %2303 = vrot.lane.b32.xlu0 %v2298, 115
        %v2304 = vpop.permute.xlu0 %2303
        %vm2305 = vcmask 941056
        %v2306 = vsel %vm2305, %v2302, %v2304
        %v2310 = vmul.f32 %v2284, %v2302
        %v2311 = vmul.f32 %v2285, %v2306
        %v2312 = vmul.f32 %v2286, %v2304
        %2316 = vrot.lane.b32.xlu0 %v2310, 116
        %v2317 = vpop.permute.xlu0 %2316
        %2318 = vrot.lane.b32.xlu0 %v2311, 116
        %v2319 = vpop.permute.xlu0 %2318
        %2320 = vrot.lane.b32.xlu0 %v2312, 116
        %v2321 = vpop.permute.xlu0 %2320
        %vm2322 = vcmask 949248
        %v2323 = vsel %vm2322, %v2317, %v2319
        %v2324 = vsel %vm2322, %v2319, %v2321
        %v2328 = vadd.f32 %v2109, %v2323
        %v2329 = vadd.f32 %v2110, %v2324
        %v2330 = vadd.f32 %v2111, %v2321
        %s2331 = scalar_lea.vmem %s5, 40
        %v2332 = vld [vmem:[%s2331] sm:$0xff]
        %2334 = vset.pattern.permute.xlu0 0
        %2335 = vperm.xlu0 %2334, %v2332
        %v2336 = vpop.permute.xlu0 %2335
        %v2338 = vmul.f32 %v1259, %v2336
        %v2339 = vmul.f32 %v1260, %v2336
        %v2340 = vmul.f32 %v1261, %v2336
        %v2341 = vadd.f32 %v2338, 0.0
        %v2342 = vadd.f32 %v2339, 0.0
        %v2343 = vadd.f32 %v2340, 0.0
        %s2344 = scalar_lea.vmem %s5, 96
        %v2345 = vld [vmem:[%s2344] sm:$0xff]
        %2347 = vset.pattern.permute.xlu0 0
        %2348 = vperm.xlu0 %2347, %v2345
        %v2349 = vpop.permute.xlu0 %2348
        %v2351 = vmul.f32 %v1274, %v2349
        %v2352 = vmul.f32 %v1275, %v2349
        %v2353 = vmul.f32 %v1276, %v2349
        %2357 = vrot.lane.b32.xlu0 %v2351, 80
        %v2358 = vpop.permute.xlu0 %2357
        %2359 = vrot.lane.b32.xlu0 %v2352, 80
        %v2360 = vpop.permute.xlu0 %2359
        %2361 = vrot.lane.b32.xlu0 %v2353, 80
        %v2362 = vpop.permute.xlu0 %2361
        %v2363 = vsel %vm516, %v2358, %v2360
        %v2364 = vsel %vm516, %v2360, %v2362
        %v2368 = vadd.f32 %v2341, %v2358
        %v2369 = vadd.f32 %v2342, %v2363
        %v2370 = vadd.f32 %v2343, %v2364
        %s2371 = scalar_lea.vmem %s5, 152
        %v2372 = vld [vmem:[%s2371] sm:$0xff]
        %2374 = vset.pattern.permute.xlu0 0
        %2375 = vperm.xlu0 %2374, %v2372
        %v2376 = vpop.permute.xlu0 %2375
        %v2378 = vmul.f32 %v1274, %v2376
        %v2379 = vmul.f32 %v1275, %v2376
        %v2380 = vmul.f32 %v1276, %v2376
        %2384 = vrot.lane.b32.xlu0 %v2378, 32
        %v2385 = vpop.permute.xlu0 %2384
        %2386 = vrot.lane.b32.xlu0 %v2379, 32
        %v2387 = vpop.permute.xlu0 %2386
        %2388 = vrot.lane.b32.xlu0 %v2380, 32
        %v2389 = vpop.permute.xlu0 %2388
        %v2390 = vsel %vm1323, %v2385, %v2387
        %v2391 = vsel %vm1323, %v2387, %v2389
        %v2395 = vadd.f32 %v2368, %v2385
        %v2396 = vadd.f32 %v2369, %v2390
        %v2397 = vadd.f32 %v2370, %v2391
        %s2398 = scalar_lea.vmem %s5, 208
        %v2399 = vld [vmem:[%s2398] sm:$0xff]
        %2401 = vset.pattern.permute.xlu0 0
        %2402 = vperm.xlu0 %2401, %v2399
        %v2403 = vpop.permute.xlu0 %2402
        %v2405 = vmul.f32 %v1359, %v2403
        %v2406 = vmul.f32 %v1360, %v2403
        %v2407 = vmul.f32 %v1361, %v2403
        %2411 = vrot.lane.b32.xlu0 %v2405, 112
        %v2412 = vpop.permute.xlu0 %2411
        %2413 = vrot.lane.b32.xlu0 %v2406, 112
        %v2414 = vpop.permute.xlu0 %2413
        %2415 = vrot.lane.b32.xlu0 %v2407, 112
        %v2416 = vpop.permute.xlu0 %2415
        %v2417 = vsel %vm457, %v2412, %v2414
        %v2418 = vsel %vm457, %v2414, %v2416
        %v2422 = vadd.f32 %v2395, %v2412
        %v2423 = vadd.f32 %v2396, %v2417
        %v2424 = vadd.f32 %v2397, %v2418
        %s2425 = scalar_lea.vmem %s5, 264
        %v2426 = vld [vmem:[%s2425] sm:$0xff]
        %2428 = vset.pattern.permute.xlu0 0
        %2429 = vperm.xlu0 %2428, %v2426
        %v2430 = vpop.permute.xlu0 %2429
        %v2432 = vmul.f32 %v1359, %v2430
        %v2433 = vmul.f32 %v1360, %v2430
        %v2434 = vmul.f32 %v1361, %v2430
        %2438 = vrot.lane.b32.xlu0 %v2432, 64
        %v2439 = vpop.permute.xlu0 %2438
        %2440 = vrot.lane.b32.xlu0 %v2433, 64
        %v2441 = vpop.permute.xlu0 %2440
        %2442 = vrot.lane.b32.xlu0 %v2434, 64
        %v2443 = vpop.permute.xlu0 %2442
        %v2444 = vsel %vm544, %v2439, %v2441
        %v2445 = vsel %vm544, %v2441, %v2443
        %v2449 = vadd.f32 %v2422, %v2439
        %v2450 = vadd.f32 %v2423, %v2444
        %v2451 = vadd.f32 %v2424, %v2445
        %s2452 = scalar_lea.vmem %s5, 320
        %v2453 = vld [vmem:[%s2452] sm:$0xff]
        %2455 = vset.pattern.permute.xlu0 0
        %2456 = vperm.xlu0 %2455, %v2453
        %v2457 = vpop.permute.xlu0 %2456
        %v2459 = vmul.f32 %v1359, %v2457
        %v2460 = vmul.f32 %v1360, %v2457
        %v2461 = vmul.f32 %v1361, %v2457
        %2465 = vrot.lane.b32.xlu0 %v2459, 16
        %v2466 = vpop.permute.xlu0 %2465
        %2467 = vrot.lane.b32.xlu0 %v2460, 16
        %v2468 = vpop.permute.xlu0 %2467
        %2469 = vrot.lane.b32.xlu0 %v2461, 16
        %v2470 = vpop.permute.xlu0 %2469
        %v2471 = vsel %vm1408, %v2466, %v2468
        %v2472 = vsel %vm1408, %v2468, %v2470
        %v2476 = vadd.f32 %v2449, %v2466
        %v2477 = vadd.f32 %v2450, %v2471
        %v2478 = vadd.f32 %v2451, %v2472
        %s2479 = scalar_lea.vmem %s5, 376
        %v2480 = vld [vmem:[%s2479] sm:$0xff]
        %2482 = vset.pattern.permute.xlu0 0
        %2483 = vperm.xlu0 %2482, %v2480
        %v2484 = vpop.permute.xlu0 %2483
        %v2486 = vmul.f32 %v1417, %v2484
        %v2487 = vmul.f32 %v1418, %v2484
        %v2488 = vmul.f32 %v1419, %v2484
        %2492 = vrot.lane.b32.xlu0 %v2486, 96
        %v2493 = vpop.permute.xlu0 %2492
        %2494 = vrot.lane.b32.xlu0 %v2487, 96
        %v2495 = vpop.permute.xlu0 %2494
        %2496 = vrot.lane.b32.xlu0 %v2488, 96
        %v2497 = vpop.permute.xlu0 %2496
        %v2498 = vsel %vm485, %v2493, %v2495
        %v2499 = vsel %vm485, %v2495, %v2497
        %v2503 = vadd.f32 %v2476, %v2493
        %v2504 = vadd.f32 %v2477, %v2498
        %v2505 = vadd.f32 %v2478, %v2499
        %v2506 = vadd.s32 %v411, 6
        %v2507 = vadd.s32 %v412, 6
        %vm2508 = vcmp.ge.s32.totalorder %v2506, 0
        %vm2509 = vcmp.ge.s32.totalorder %v2507, 0
        %vm2510 = vcmp.lt.s32.totalorder %v2506, 16
        %vm2511 = vcmp.lt.s32.totalorder %v2507, 16
        %vm2512 = vmand %vm2508, %vm2510
        %vm2513 = vmand %vm2509, %vm2511
        %v2514 = vsel %vm2512, 1, 0
        %v2515 = vsel %vm2513, 1, 0
        %v2516 = vcvt.s32.f32 %v2514
        %v2517 = vcvt.s32.f32 %v2515
        %2520 = vrot.lane.b32.xlu0 %v2516, 118
        %v2521 = vpop.permute.xlu0 %2520
        %2522 = vrot.lane.b32.xlu0 %v2517, 118
        %v2523 = vpop.permute.xlu0 %2522
        %vm2524 = vcmask 965632
        %v2525 = vsel %vm2524, %v2521, %v2523
        %v2529 = vmul.f32 %v2503, %v2521
        %v2530 = vmul.f32 %v2504, %v2525
        %v2531 = vmul.f32 %v2505, %v2523
        %2535 = vrot.lane.b32.xlu0 %v2529, 113
        %v2536 = vpop.permute.xlu0 %2535
        %2537 = vrot.lane.b32.xlu0 %v2530, 113
        %v2538 = vpop.permute.xlu0 %2537
        %2539 = vrot.lane.b32.xlu0 %v2531, 113
        %v2540 = vpop.permute.xlu0 %2539
        %vm2541 = vcmask 924672
        %v2542 = vsel %vm2541, %v2536, %v2538
        %v2543 = vsel %vm2541, %v2538, %v2540
        %v2547 = vadd.f32 %v2328, %v2542
        %v2548 = vadd.f32 %v2329, %v2543
        %v2549 = vadd.f32 %v2330, %v2540
        %s2550 = scalar_lea.vmem %s5, 48
        %v2551 = vld [vmem:[%s2550] sm:$0xff]
        %2553 = vset.pattern.permute.xlu0 0
        %2554 = vperm.xlu0 %2553, %v2551
        %v2555 = vpop.permute.xlu0 %2554
        %v2557 = vmul.f32 %v1259, %v2555
        %v2558 = vmul.f32 %v1260, %v2555
        %v2559 = vmul.f32 %v1261, %v2555
        %v2560 = vadd.f32 %v2557, 0.0
        %v2561 = vadd.f32 %v2558, 0.0
        %v2562 = vadd.f32 %v2559, 0.0
        %s2563 = scalar_lea.vmem %s5, 104
        %v2564 = vld [vmem:[%s2563] sm:$0xff]
        %2566 = vset.pattern.permute.xlu0 0
        %2567 = vperm.xlu0 %2566, %v2564
        %v2568 = vpop.permute.xlu0 %2567
        %v2570 = vmul.f32 %v1274, %v2568
        %v2571 = vmul.f32 %v1275, %v2568
        %v2572 = vmul.f32 %v1276, %v2568
        %2576 = vrot.lane.b32.xlu0 %v2570, 80
        %v2577 = vpop.permute.xlu0 %2576
        %2578 = vrot.lane.b32.xlu0 %v2571, 80
        %v2579 = vpop.permute.xlu0 %2578
        %2580 = vrot.lane.b32.xlu0 %v2572, 80
        %v2581 = vpop.permute.xlu0 %2580
        %v2582 = vsel %vm516, %v2577, %v2579
        %v2583 = vsel %vm516, %v2579, %v2581
        %v2587 = vadd.f32 %v2560, %v2577
        %v2588 = vadd.f32 %v2561, %v2582
        %v2589 = vadd.f32 %v2562, %v2583
        %s2590 = scalar_lea.vmem %s5, 160
        %v2591 = vld [vmem:[%s2590] sm:$0xff]
        %2593 = vset.pattern.permute.xlu0 0
        %2594 = vperm.xlu0 %2593, %v2591
        %v2595 = vpop.permute.xlu0 %2594
        %v2597 = vmul.f32 %v1274, %v2595
        %v2598 = vmul.f32 %v1275, %v2595
        %v2599 = vmul.f32 %v1276, %v2595
        %2603 = vrot.lane.b32.xlu0 %v2597, 32
        %v2604 = vpop.permute.xlu0 %2603
        %2605 = vrot.lane.b32.xlu0 %v2598, 32
        %v2606 = vpop.permute.xlu0 %2605
        %2607 = vrot.lane.b32.xlu0 %v2599, 32
        %v2608 = vpop.permute.xlu0 %2607
        %v2609 = vsel %vm1323, %v2604, %v2606
        %v2610 = vsel %vm1323, %v2606, %v2608
        %v2614 = vadd.f32 %v2587, %v2604
        %v2615 = vadd.f32 %v2588, %v2609
        %v2616 = vadd.f32 %v2589, %v2610
        %s2617 = scalar_lea.vmem %s5, 216
        %v2618 = vld [vmem:[%s2617] sm:$0xff]
        %2620 = vset.pattern.permute.xlu0 0
        %2621 = vperm.xlu0 %2620, %v2618
        %v2622 = vpop.permute.xlu0 %2621
        %v2624 = vmul.f32 %v1359, %v2622
        %v2625 = vmul.f32 %v1360, %v2622
        %v2626 = vmul.f32 %v1361, %v2622
        %2630 = vrot.lane.b32.xlu0 %v2624, 112
        %v2631 = vpop.permute.xlu0 %2630
        %2632 = vrot.lane.b32.xlu0 %v2625, 112
        %v2633 = vpop.permute.xlu0 %2632
        %2634 = vrot.lane.b32.xlu0 %v2626, 112
        %v2635 = vpop.permute.xlu0 %2634
        %v2636 = vsel %vm457, %v2631, %v2633
        %v2637 = vsel %vm457, %v2633, %v2635
        %v2641 = vadd.f32 %v2614, %v2631
        %v2642 = vadd.f32 %v2615, %v2636
        %v2643 = vadd.f32 %v2616, %v2637
        %s2644 = scalar_lea.vmem %s5, 272
        %v2645 = vld [vmem:[%s2644] sm:$0xff]
        %2647 = vset.pattern.permute.xlu0 0
        %2648 = vperm.xlu0 %2647, %v2645
        %v2649 = vpop.permute.xlu0 %2648
        %v2651 = vmul.f32 %v1359, %v2649
        %v2652 = vmul.f32 %v1360, %v2649
        %v2653 = vmul.f32 %v1361, %v2649
        %2657 = vrot.lane.b32.xlu0 %v2651, 64
        %v2658 = vpop.permute.xlu0 %2657
        %2659 = vrot.lane.b32.xlu0 %v2652, 64
        %v2660 = vpop.permute.xlu0 %2659
        %2661 = vrot.lane.b32.xlu0 %v2653, 64
        %v2662 = vpop.permute.xlu0 %2661
        %v2663 = vsel %vm544, %v2658, %v2660
        %v2664 = vsel %vm544, %v2660, %v2662
        %v2668 = vadd.f32 %v2641, %v2658
        %v2669 = vadd.f32 %v2642, %v2663
        %v2670 = vadd.f32 %v2643, %v2664
        %s2671 = scalar_lea.vmem %s5, 328
        %v2672 = vld [vmem:[%s2671] sm:$0xff]
        %2674 = vset.pattern.permute.xlu0 0
        %2675 = vperm.xlu0 %2674, %v2672
        %v2676 = vpop.permute.xlu0 %2675
        %v2678 = vmul.f32 %v1359, %v2676
        %v2679 = vmul.f32 %v1360, %v2676
        %v2680 = vmul.f32 %v1361, %v2676
        %2684 = vrot.lane.b32.xlu0 %v2678, 16
        %v2685 = vpop.permute.xlu0 %2684
        %2686 = vrot.lane.b32.xlu0 %v2679, 16
        %v2687 = vpop.permute.xlu0 %2686
        %2688 = vrot.lane.b32.xlu0 %v2680, 16
        %v2689 = vpop.permute.xlu0 %2688
        %v2690 = vsel %vm1408, %v2685, %v2687
        %v2691 = vsel %vm1408, %v2687, %v2689
        %v2695 = vadd.f32 %v2668, %v2685
        %v2696 = vadd.f32 %v2669, %v2690
        %v2697 = vadd.f32 %v2670, %v2691
        %s2698 = scalar_lea.vmem %s5, 384
        %v2699 = vld [vmem:[%s2698] sm:$0xff]
        %2701 = vset.pattern.permute.xlu0 0
        %2702 = vperm.xlu0 %2701, %v2699
        %v2703 = vpop.permute.xlu0 %2702
        %v2705 = vmul.f32 %v1417, %v2703
        %v2706 = vmul.f32 %v1418, %v2703
        %v2707 = vmul.f32 %v1419, %v2703
        %2711 = vrot.lane.b32.xlu0 %v2705, 96
        %v2712 = vpop.permute.xlu0 %2711
        %2713 = vrot.lane.b32.xlu0 %v2706, 96
        %v2714 = vpop.permute.xlu0 %2713
        %2715 = vrot.lane.b32.xlu0 %v2707, 96
        %v2716 = vpop.permute.xlu0 %2715
        %v2717 = vsel %vm485, %v2712, %v2714
        %v2718 = vsel %vm485, %v2714, %v2716
        %v2722 = vadd.f32 %v2695, %v2712
        %v2723 = vadd.f32 %v2696, %v2717
        %v2724 = vadd.f32 %v2697, %v2718
        %v2725 = vadd.s32 %v411, 9
        %v2726 = vadd.s32 %v412, 9
        %vm2727 = vcmp.ge.s32.totalorder %v2725, 0
        %vm2728 = vcmp.ge.s32.totalorder %v2726, 0
        %vm2729 = vcmp.lt.s32.totalorder %v2725, 16
        %vm2730 = vcmp.lt.s32.totalorder %v2726, 16
        %vm2731 = vmand %vm2727, %vm2729
        %vm2732 = vmand %vm2728, %vm2730
        %v2733 = vsel %vm2731, 1, 0
        %v2734 = vsel %vm2732, 1, 0
        %v2735 = vcvt.s32.f32 %v2733
        %v2736 = vcvt.s32.f32 %v2734
        %2739 = vrot.lane.b32.xlu0 %v2735, 121
        %v2740 = vpop.permute.xlu0 %2739
        %2741 = vrot.lane.b32.xlu0 %v2736, 121
        %v2742 = vpop.permute.xlu0 %2741
        %vm2743 = vcmask 990208
        %v2744 = vsel %vm2743, %v2740, %v2742
        %v2748 = vmul.f32 %v2722, %v2740
        %v2749 = vmul.f32 %v2723, %v2744
        %v2750 = vmul.f32 %v2724, %v2742
        %2754 = vrot.lane.b32.xlu0 %v2748, 110
        %v2755 = vpop.permute.xlu0 %2754
        %2756 = vrot.lane.b32.xlu0 %v2749, 110
        %v2757 = vpop.permute.xlu0 %2756
        %2758 = vrot.lane.b32.xlu0 %v2750, 110
        %v2759 = vpop.permute.xlu0 %2758
        %vm2760 = vcmask 900096
        %v2761 = vsel %vm2760, %v2755, %v2757
        %v2762 = vsel %vm2760, %v2757, %v2759
        %v2766 = vadd.f32 %v2547, %v2761
        %v2767 = vadd.f32 %v2548, %v2762
        %v2768 = vadd.f32 %v2549, %v2759
        %v2769 = vld [vmem:[%s6] sm:$0xff]
        %2771 = vset.pattern.permute.xlu0 0
        %2772 = vperm.xlu0 %2771, %v2769
        %v2773 = vpop.permute.xlu0 %2772
        %v2775 = vadd.f32 %v2766, %v2773
        %v2776 = vadd.f32 %v2767, %v2773
        %v2777 = vadd.f32 %v2768, %v2773
        %2781 = vrot.lane.b32.xlu0 %v2775, 119
        %v2782 = vpop.permute.xlu0 %2781
        %2783 = vrot.lane.b32.xlu0 %v2776, 119
        %v2784 = vpop.permute.xlu0 %2783
        %2785 = vrot.lane.b32.xlu0 %v2777, 119
        %v2786 = vpop.permute.xlu0 %2785
        %v2787 = vsel %vm2103, %v2782, %v2784
        %v2788 = vsel %vm2103, %v2784, %v2786
        %v2789 = vld [vmem:[%s7] sm:$0xff]
        %v2790 = vld [vmem:[%s8] sm:$0xff]
        %2792 = vset.pattern.permute.xlu0 0
        %2793 = vperm.xlu0 %2792, %v2790
        %v2794 = vpop.permute.xlu0 %2793
        %2796 = vrot.lane.b32.xlu0 %v2787, 34
        %v2797 = vpop.permute.xlu0 %2796
        %2798 = vrot.lane.b32.xlu0 %v2788, 34
        %v2799 = vpop.permute.xlu0 %2798
        %2800 = vrot.lane.b32.xlu0 %v2786, 34
        %v2801 = vpop.permute.xlu0 %2800
        %v2802 = vsel %vm1252, %v2797, %v2799
        %v2803 = vsel %vm1252, %v2799, %v2801
        %v2807 = vsel %vm1408, %v2789, 0
        %2809 = vmatprep.subr.mxu0 %v1254
        %2810 = vmatpush1.msra.mxu0 %v1253
        %2811 = vmatprep.subr.mxu0 %v2803
        %2812 = vmatpush1.msra.mxu0 %v2802
        %2813 = vmatprep.subr.mxu0 0.0
        %2814 = vmatpush1.msra.mxu0 0.0
        %2815 = vmatprep.subr.mxu0 0.0
        %2816 = vmatpush1.msra.mxu0 0.0
        %2817 = vmatprep.subr.mxu0 0.0
        %2818 = vmatpush1.msra.mxu0 0.0
        %2819 = vmatprep.subr.mxu0 0.0
        %2820 = vmatpush1.msra.mxu0 0.0
        %2821 = vmatprep.subr.mxu0 0.0
        %2822 = vmatpush1.msra.mxu0 0.0
        %2823 = vmatprep.subr.mxu0 0.0
        %2824 = vmatpush1.msra.mxu0 0.0
        %2825 = vmatprep.subr.mxu0 0.0
        %2826 = vmatpush1.msra.mxu0 0.0
        %2827 = vmatprep.subr.mxu0 0.0
        %2828 = vmatpush1.msra.mxu0 0.0
        %2829 = vmatprep.subr.mxu0 0.0
        %2830 = vmatpush1.msra.mxu0 0.0
        %2831 = vmatprep.subr.mxu0 0.0
        %2832 = vmatpush1.msra.mxu0 0.0
        %2833 = vmatprep.subr.mxu0 0.0
        %2834 = vmatpush1.msra.mxu0 0.0
        %2835 = vmatprep.subr.mxu0 0.0
        %2836 = vmatpush1.msra.mxu0 0.0
        %2837 = vmatprep.subr.mxu0 0.0
        %2838 = vmatpush1.msra.mxu0 0.0
        %2839 = vmatprep.subr.mxu0 0.0
        %2840 = vmatpush1.msra.mxu0 0.0
        %2841 = vmatprep.subr.mxu0 0.0
        %2842 = vmatpush1.msra.mxu0 0.0
        %2843 = vmatprep.subr.mxu0 0.0
        %2844 = vmatpush1.msra.mxu0 0.0
        %2845 = vmatprep.subr.mxu0 0.0
        %2846 = vmatpush1.msra.mxu0 0.0
        %2847 = vmatprep.subr.mxu0 0.0
        %2848 = vmatpush1.msra.mxu0 0.0
        %2849 = vmatprep.subr.mxu0 0.0
        %2850 = vmatpush1.msra.mxu0 0.0
        %2851 = vmatprep.subr.mxu0 0.0
        %2852 = vmatpush1.msra.mxu0 0.0
        %2853 = vmatprep.subr.mxu0 0.0
        %2854 = vmatpush1.msra.mxu0 0.0
        %2855 = vmatprep.subr.mxu0 0.0
        %2856 = vmatpush1.msra.mxu0 0.0
        %2857 = vmatprep.subr.mxu0 0.0
        %2858 = vmatpush1.msra.mxu0 0.0
        %2859 = vmatprep.subr.mxu0 0.0
        %2860 = vmatpush1.msra.mxu0 0.0
        %2861 = vmatprep.subr.mxu0 0.0
        %2862 = vmatpush1.msra.mxu0 0.0
        %2863 = vmatprep.subr.mxu0 0.0
        %2864 = vmatpush1.msra.mxu0 0.0
        %2865 = vmatprep.subr.mxu0 0.0
        %2866 = vmatpush1.msra.mxu0 0.0
        %2867 = vmatprep.subr.mxu0 0.0
        %2868 = vmatpush1.msra.mxu0 0.0
        %2869 = vmatprep.subr.mxu0 0.0
        %2870 = vmatpush1.msra.mxu0 0.0
        %2871 = vmatprep.subr.mxu0 0.0
        %2872 = vmatpush1.msra.mxu0 0.0
        %2873 = vmatprep.mubr.f32.mxu0 0.0
        %2874 = vmatmul.mubr.f32.gmra.mrb[0].mxu0 %v2807
        %v2875 = vpop.f32.mrb[0].mxu0
        %v2876 = vadd.f32 %v2794, %v2875
        %v2877 = vpop.f32.mrb[0].mxu0
        %v2878 = vadd.f32 %v2794, %v2877
        %2879 = vdwg.mxu0
        %v2880 = vrot.slane %v2876, 4
        %v2881 = vadd.f32 %v2876, %v2880
        %v2882 = vrot.slane %v2881, 2
        %v2883 = vadd.f32 %v2881, %v2882
        %v2884 = vrot.slane %v2883, 1
        %v2885 = vadd.f32 %v2883, %v2884
        %v2886 = vrot.slane %v2878, 4
        %v2887 = vadd.f32 %v2878, %v2886
        %v2888 = vrot.slane %v2887, 2
        %v2889 = vadd.f32 %v2887, %v2888
        %v2890 = vrot.slane %v2889, 1
        %v2891 = vadd.f32 %v2889, %v2890
        %v2892 = vrcp.pop 8.0
        %v2893 = vmul.f32 %v2885, %v2892
        %v2894 = vmul.f32 %v2891, %v2892
        %v2895 = vrot.slane %v2876, 4
        %v2896 = vmax.f32 %v2876, %v2895
        %v2897 = vrot.slane %v2896, 2
        %v2898 = vmax.f32 %v2896, %v2897
        %v2899 = vrot.slane %v2898, 1
        %v2900 = vmax.f32 %v2898, %v2899
        %v2901 = vrot.slane %v2878, 4
        %v2902 = vmax.f32 %v2878, %v2901
        %v2903 = vrot.slane %v2902, 2
        %v2904 = vmax.f32 %v2902, %v2903
        %v2905 = vrot.slane %v2904, 1
        %v2906 = vmax.f32 %v2904, %v2905
        %vm2907 = vcmask 1040384
        %v2908 = vsel %vm2907, %v2893, %v2900
        %v2909 = vsel %vm2907, %v2894, %v2906
        %v2912 = vcombine.low %v2908, %v2909
        %v2914 = vunpack.c.l.s4 1983009808
        %v2915 = vunpack.c.0.s8 %v2914
        %v2916 = vlaneseq
        %v2917 = vshrl.u32 %v2916, 7
        %v2918 = vsub.s32 %v2915, %v2917
        %v2919 = vrot.slane %v2912, %v2918
        %2921 = vst [vmem:[#allocation4 + $0x2] sm:$0xf] %v2919
        %v2922 = vld [vmem:[#allocation4] sm:$0x3f]
        %s2923 = sld [smem:[#allocation5]]
        %v2924 = vstv %s2923
        %v2925 = vmul.f32 %v2922, %v2924
        %v2926 = vadd.f32 %v2925, 0.0
        %s2927 = sld [smem:[#allocation5 + $0x2]]
        %v2928 = vstv %s2927
        %v2929 = vmul.f32 %v2922, %v2928
        %v2931 = vrot.slane %v2929, 7
        %v2932 = vrot.slane %v2931, 2
        %v2934 = vadd.f32 %v2926, %v2932
        %s2935 = sld [smem:[#allocation5 + $0x1]]
        %v2936 = vstv %s2935
        %v2937 = vmul.f32 %v2922, %v2936
        %v2938 = vadd.f32 %v2937, 0.0
        %s2939 = sld [smem:[#allocation5 + $0x3]]
        %v2940 = vstv %s2939
        %v2941 = vmul.f32 %v2922, %v2940
        %v2943 = vrot.slane %v2941, 7
        %v2944 = vrot.slane %v2943, 2
        %v2946 = vadd.f32 %v2938, %v2944
        %s2947 = sld [smem:[#allocation5 + $0x1c]]
        %v2948 = vstv %s2947
        %v2949 = vmul.f32 %v2922, %v2948
        %2951 = vrot.lane.b32.xlu0 %v2949, 112
        %v2952 = vpop.permute.xlu0 %2951
        %v2953 = vrot.slane %v2952, 2
        %v2954 = vsel %vm457, %v2952, %v2953
        %v2956 = vadd.f32 %v2934, %v2954
        %s2957 = sld [smem:[#allocation5 + $0x1e]]
        %v2958 = vstv %s2957
        %v2959 = vmul.f32 %v2922, %v2958
        %v2961 = vrot.slane %v2959, 7
        %v2962 = vrot.slane %v2961, 2
        %2963 = vrot.lane.b32.xlu0 %v2962, 112
        %v2964 = vpop.permute.xlu0 %2963
        %v2965 = vrot.slane %v2964, 2
        %v2966 = vsel %vm457, %v2964, %v2965
        %v2968 = vadd.f32 %v2956, %v2966
        %s2969 = sld [smem:[#allocation5 + $0x1d]]
        %v2970 = vstv %s2969
        %v2971 = vmul.f32 %v2922, %v2970
        %2973 = vrot.lane.b32.xlu0 %v2971, 112
        %v2974 = vpop.permute.xlu0 %2973
        %v2975 = vrot.slane %v2974, 2
        %v2976 = vsel %vm457, %v2974, %v2975
        %v2978 = vadd.f32 %v2946, %v2976
        %s2979 = sld [smem:[#allocation5 + $0x1f]]
        %v2980 = vstv %s2979
        %v2981 = vmul.f32 %v2922, %v2980
        %v2983 = vrot.slane %v2981, 7
        %v2984 = vrot.slane %v2983, 2
        %2985 = vrot.lane.b32.xlu0 %v2984, 112
        %v2986 = vpop.permute.xlu0 %2985
        %v2987 = vrot.slane %v2986, 2
        %v2988 = vsel %vm457, %v2986, %v2987
        %v2990 = vadd.f32 %v2978, %v2988
        %s2991 = sld [smem:[#allocation5 + $0x38]]
        %v2992 = vstv %s2991
        %v2993 = vmul.f32 %v2922, %v2992
        %2995 = vrot.lane.b32.xlu0 %v2993, 96
        %v2996 = vpop.permute.xlu0 %2995
        %v2997 = vrot.slane %v2996, 2
        %v2998 = vsel %vm485, %v2996, %v2997
        %v3000 = vadd.f32 %v2968, %v2998
        %s3001 = sld [smem:[#allocation5 + $0x3a]]
        %v3002 = vstv %s3001
        %v3003 = vmul.f32 %v2922, %v3002
        %v3005 = vrot.slane %v3003, 7
        %v3006 = vrot.slane %v3005, 2
        %3007 = vrot.lane.b32.xlu0 %v3006, 96
        %v3008 = vpop.permute.xlu0 %3007
        %v3009 = vrot.slane %v3008, 2
        %v3010 = vsel %vm485, %v3008, %v3009
        %v3012 = vadd.f32 %v3000, %v3010
        %s3013 = sld [smem:[#allocation5 + $0x39]]
        %v3014 = vstv %s3013
        %v3015 = vmul.f32 %v2922, %v3014
        %3017 = vrot.lane.b32.xlu0 %v3015, 96
        %v3018 = vpop.permute.xlu0 %3017
        %v3019 = vrot.slane %v3018, 2
        %v3020 = vsel %vm485, %v3018, %v3019
        %v3022 = vadd.f32 %v2990, %v3020
        %s3023 = sld [smem:[#allocation5 + $0x3b]]
        %v3024 = vstv %s3023
        %v3025 = vmul.f32 %v2922, %v3024
        %v3027 = vrot.slane %v3025, 7
        %v3028 = vrot.slane %v3027, 2
        %3029 = vrot.lane.b32.xlu0 %v3028, 96
        %v3030 = vpop.permute.xlu0 %3029
        %v3031 = vrot.slane %v3030, 2
        %v3032 = vsel %vm485, %v3030, %v3031
        %v3034 = vadd.f32 %v3022, %v3032
        %s3035 = sld [smem:[#allocation5 + $0x54]]
        %v3036 = vstv %s3035
        %v3037 = vmul.f32 %v2922, %v3036
        %3039 = vrot.lane.b32.xlu0 %v3037, 80
        %v3040 = vpop.permute.xlu0 %3039
        %v3041 = vrot.slane %v3040, 2
        %v3042 = vsel %vm516, %v3040, %v3041
        %v3044 = vadd.f32 %v3012, %v3042
        %s3045 = sld [smem:[#allocation5 + $0x56]]
        %v3046 = vstv %s3045
        %v3047 = vmul.f32 %v2922, %v3046
        %v3049 = vrot.slane %v3047, 7
        %v3050 = vrot.slane %v3049, 2
        %3051 = vrot.lane.b32.xlu0 %v3050, 80
        %v3052 = vpop.permute.xlu0 %3051
        %v3053 = vrot.slane %v3052, 2
        %v3054 = vsel %vm516, %v3052, %v3053
        %v3056 = vadd.f32 %v3044, %v3054
        %s3057 = sld [smem:[#allocation5 + $0x55]]
        %v3058 = vstv %s3057
        %v3059 = vmul.f32 %v2922, %v3058
        %3061 = vrot.lane.b32.xlu0 %v3059, 80
        %v3062 = vpop.permute.xlu0 %3061
        %v3063 = vrot.slane %v3062, 2
        %v3064 = vsel %vm516, %v3062, %v3063
        %v3066 = vadd.f32 %v3034, %v3064
        %s3067 = sld [smem:[#allocation5 + $0x57]]
        %v3068 = vstv %s3067
        %v3069 = vmul.f32 %v2922, %v3068
        %v3071 = vrot.slane %v3069, 7
        %v3072 = vrot.slane %v3071, 2
        %3073 = vrot.lane.b32.xlu0 %v3072, 80
        %v3074 = vpop.permute.xlu0 %3073
        %v3075 = vrot.slane %v3074, 2
        %v3076 = vsel %vm516, %v3074, %v3075
        %v3078 = vadd.f32 %v3066, %v3076
        %v3079 = vld [vmem:[#allocation4 + $0x2] sm:$0x3f]
        %s3080 = sld [smem:[#allocation5 + $0x70]]
        %v3081 = vstv %s3080
        %v3082 = vmul.f32 %v3079, %v3081
        %3084 = vrot.lane.b32.xlu0 %v3082, 64
        %v3085 = vpop.permute.xlu0 %3084
        %v3086 = vrot.slane %v3085, 6
        %v3087 = vsel %vm544, %v3086, %v3085
        %v3089 = vadd.f32 %v3056, %v3087
        %s3090 = sld [smem:[#allocation5 + $0x72]]
        %v3091 = vstv %s3090
        %v3092 = vmul.f32 %v3079, %v3091
        %v3094 = vrot.slane %v3092, 7
        %v3095 = vrot.slane %v3094, 2
        %3096 = vrot.lane.b32.xlu0 %v3095, 64
        %v3097 = vpop.permute.xlu0 %3096
        %v3098 = vrot.slane %v3097, 6
        %v3099 = vsel %vm544, %v3098, %v3097
        %v3101 = vadd.f32 %v3089, %v3099
        %s3102 = sld [smem:[#allocation5 + $0x71]]
        %v3103 = vstv %s3102
        %v3104 = vmul.f32 %v3079, %v3103
        %3106 = vrot.lane.b32.xlu0 %v3104, 64
        %v3107 = vpop.permute.xlu0 %3106
        %v3108 = vrot.slane %v3107, 6
        %v3109 = vsel %vm544, %v3108, %v3107
        %v3111 = vadd.f32 %v3078, %v3109
        %s3112 = sld [smem:[#allocation5 + $0x73]]
        %v3113 = vstv %s3112
        %v3114 = vmul.f32 %v3079, %v3113
        %v3116 = vrot.slane %v3114, 7
        %v3117 = vrot.slane %v3116, 2
        %3118 = vrot.lane.b32.xlu0 %v3117, 64
        %v3119 = vpop.permute.xlu0 %3118
        %v3120 = vrot.slane %v3119, 6
        %v3121 = vsel %vm544, %v3120, %v3119
        %v3123 = vadd.f32 %v3111, %v3121
        %s3124 = sld [smem:[#allocation5 + $0x8c]]
        %v3125 = vstv %s3124
        %v3126 = vmul.f32 %v3079, %v3125
        %3128 = vrot.lane.b32.xlu0 %v3126, 48
        %v3129 = vpop.permute.xlu0 %3128
        %v3130 = vrot.slane %v3129, 6
        %vm3131 = vcmask 392192
        %v3132 = vsel %vm3131, %v3130, %v3129
        %v3134 = vadd.f32 %v3101, %v3132
        %s3135 = sld [smem:[#allocation5 + $0x8e]]
        %v3136 = vstv %s3135
        %v3137 = vmul.f32 %v3079, %v3136
        %v3139 = vrot.slane %v3137, 7
        %v3140 = vrot.slane %v3139, 2
        %3141 = vrot.lane.b32.xlu0 %v3140, 48
        %v3142 = vpop.permute.xlu0 %3141
        %v3143 = vrot.slane %v3142, 6
        %v3144 = vsel %vm3131, %v3143, %v3142
        %v3146 = vadd.f32 %v3134, %v3144
        %s3147 = sld [smem:[#allocation5 + $0x8d]]
        %v3148 = vstv %s3147
        %v3149 = vmul.f32 %v3079, %v3148
        %3151 = vrot.lane.b32.xlu0 %v3149, 48
        %v3152 = vpop.permute.xlu0 %3151
        %v3153 = vrot.slane %v3152, 6
        %v3154 = vsel %vm3131, %v3153, %v3152
        %v3156 = vadd.f32 %v3123, %v3154
        %s3157 = sld [smem:[#allocation5 + $0x8f]]
        %v3158 = vstv %s3157
        %v3159 = vmul.f32 %v3079, %v3158
        %v3161 = vrot.slane %v3159, 7
        %v3162 = vrot.slane %v3161, 2
        %3163 = vrot.lane.b32.xlu0 %v3162, 48
        %v3164 = vpop.permute.xlu0 %3163
        %v3165 = vrot.slane %v3164, 6
        %v3166 = vsel %vm3131, %v3165, %v3164
        %v3168 = vadd.f32 %v3156, %v3166
        %s3169 = sld [smem:[#allocation5 + $0xa8]]
        %v3170 = vstv %s3169
        %v3171 = vmul.f32 %v3079, %v3170
        %3173 = vrot.lane.b32.xlu0 %v3171, 32
        %v3174 = vpop.permute.xlu0 %3173
        %v3175 = vrot.slane %v3174, 6
        %v3176 = vsel %vm1323, %v3175, %v3174
        %v3178 = vadd.f32 %v3146, %v3176
        %s3179 = sld [smem:[#allocation5 + $0xaa]]
        %v3180 = vstv %s3179
        %v3181 = vmul.f32 %v3079, %v3180
        %v3183 = vrot.slane %v3181, 7
        %v3184 = vrot.slane %v3183, 2
        %3185 = vrot.lane.b32.xlu0 %v3184, 32
        %v3186 = vpop.permute.xlu0 %3185
        %v3187 = vrot.slane %v3186, 6
        %v3188 = vsel %vm1323, %v3187, %v3186
        %v3190 = vadd.f32 %v3178, %v3188
        %s3191 = sld [smem:[#allocation5 + $0xa9]]
        %v3192 = vstv %s3191
        %v3193 = vmul.f32 %v3079, %v3192
        %3195 = vrot.lane.b32.xlu0 %v3193, 32
        %v3196 = vpop.permute.xlu0 %3195
        %v3197 = vrot.slane %v3196, 6
        %v3198 = vsel %vm1323, %v3197, %v3196
        %v3200 = vadd.f32 %v3168, %v3198
        %s3201 = sld [smem:[#allocation5 + $0xab]]
        %v3202 = vstv %s3201
        %v3203 = vmul.f32 %v3079, %v3202
        %v3205 = vrot.slane %v3203, 7
        %v3206 = vrot.slane %v3205, 2
        %3207 = vrot.lane.b32.xlu0 %v3206, 32
        %v3208 = vpop.permute.xlu0 %3207
        %v3209 = vrot.slane %v3208, 6
        %v3210 = vsel %vm1323, %v3209, %v3208
        %v3212 = vadd.f32 %v3200, %v3210
        %v3213 = vcombine.low %v1879, %v1880
        %v3215 = vunpack.c.l.s4 1983009808
        %v3216 = vunpack.c.0.s8 %v3215
        %v3217 = vlaneseq
        %v3218 = vshrl.u32 %v3217, 7
        %v3219 = vsub.s32 %v3216, %v3218
        %v3220 = vrot.slane %v3213, %v3219
        %3221 = vrot.lane.b32.xlu0 %v3220, 77
        %v3222 = vpop.permute.xlu0 %3221
        %v3223 = vrot.slane %v3222, 6
        %vm3224 = vcmask 629760
        %v3225 = vsel %vm3224, %v3223, %v3222
        %v3227 = vmul.f32 %v3190, %v3225
        %v3228 = vadd.f32 %v3227, 0.0
        %v3229 = vmul.f32 %v3212, %v3225
        %v3230 = vadd.f32 %v3229, 0.0
        %v3231 = vld [vmem:[#allocation4] sm:$0x3f]
        %s3232 = sld [smem:[#allocation5 + $0x4]]
        %v3233 = vstv %s3232
        %v3234 = vmul.f32 %v3231, %v3233
        %v3235 = vadd.f32 %v3234, 0.0
        %s3236 = sld [smem:[#allocation5 + $0x6]]
        %v3237 = vstv %s3236
        %v3238 = vmul.f32 %v3231, %v3237
        %v3240 = vrot.slane %v3238, 7
        %v3241 = vrot.slane %v3240, 2
        %v3243 = vadd.f32 %v3235, %v3241
        %s3244 = sld [smem:[#allocation5 + $0x5]]
        %v3245 = vstv %s3244
        %v3246 = vmul.f32 %v3231, %v3245
        %v3247 = vadd.f32 %v3246, 0.0
        %s3248 = sld [smem:[#allocation5 + $0x7]]
        %v3249 = vstv %s3248
        %v3250 = vmul.f32 %v3231, %v3249
        %v3252 = vrot.slane %v3250, 7
        %v3253 = vrot.slane %v3252, 2
        %v3255 = vadd.f32 %v3247, %v3253
        %s3256 = sld [smem:[#allocation5 + $0x20]]
        %v3257 = vstv %s3256
        %v3258 = vmul.f32 %v3231, %v3257
        %3260 = vrot.lane.b32.xlu0 %v3258, 112
        %v3261 = vpop.permute.xlu0 %3260
        %v3262 = vrot.slane %v3261, 2
        %v3263 = vsel %vm457, %v3261, %v3262
        %v3265 = vadd.f32 %v3243, %v3263
        %s3266 = sld [smem:[#allocation5 + $0x22]]
        %v3267 = vstv %s3266
        %v3268 = vmul.f32 %v3231, %v3267
        %v3270 = vrot.slane %v3268, 7
        %v3271 = vrot.slane %v3270, 2
        %3272 = vrot.lane.b32.xlu0 %v3271, 112
        %v3273 = vpop.permute.xlu0 %3272
        %v3274 = vrot.slane %v3273, 2
        %v3275 = vsel %vm457, %v3273, %v3274
        %v3277 = vadd.f32 %v3265, %v3275
        %s3278 = sld [smem:[#allocation5 + $0x21]]
        %v3279 = vstv %s3278
        %v3280 = vmul.f32 %v3231, %v3279
        %3282 = vrot.lane.b32.xlu0 %v3280, 112
        %v3283 = vpop.permute.xlu0 %3282
        %v3284 = vrot.slane %v3283, 2
        %v3285 = vsel %vm457, %v3283, %v3284
        %v3287 = vadd.f32 %v3255, %v3285
        %s3288 = sld [smem:[#allocation5 + $0x23]]
        %v3289 = vstv %s3288
        %v3290 = vmul.f32 %v3231, %v3289
        %v3292 = vrot.slane %v3290, 7
        %v3293 = vrot.slane %v3292, 2
        %3294 = vrot.lane.b32.xlu0 %v3293, 112
        %v3295 = vpop.permute.xlu0 %3294
        %v3296 = vrot.slane %v3295, 2
        %v3297 = vsel %vm457, %v3295, %v3296
        %v3299 = vadd.f32 %v3287, %v3297
        %s3300 = sld [smem:[#allocation5 + $0x3c]]
        %v3301 = vstv %s3300
        %v3302 = vmul.f32 %v3231, %v3301
        %3304 = vrot.lane.b32.xlu0 %v3302, 96
        %v3305 = vpop.permute.xlu0 %3304
        %v3306 = vrot.slane %v3305, 2
        %v3307 = vsel %vm485, %v3305, %v3306
        %v3309 = vadd.f32 %v3277, %v3307
        %s3310 = sld [smem:[#allocation5 + $0x3e]]
        %v3311 = vstv %s3310
        %v3312 = vmul.f32 %v3231, %v3311
        %v3314 = vrot.slane %v3312, 7
        %v3315 = vrot.slane %v3314, 2
        %3316 = vrot.lane.b32.xlu0 %v3315, 96
        %v3317 = vpop.permute.xlu0 %3316
        %v3318 = vrot.slane %v3317, 2
        %v3319 = vsel %vm485, %v3317, %v3318
        %v3321 = vadd.f32 %v3309, %v3319
        %s3322 = sld [smem:[#allocation5 + $0x3d]]
        %v3323 = vstv %s3322
        %v3324 = vmul.f32 %v3231, %v3323
        %3326 = vrot.lane.b32.xlu0 %v3324, 96
        %v3327 = vpop.permute.xlu0 %3326
        %v3328 = vrot.slane %v3327, 2
        %v3329 = vsel %vm485, %v3327, %v3328
        %v3331 = vadd.f32 %v3299, %v3329
        %s3332 = sld [smem:[#allocation5 + $0x3f]]
        %v3333 = vstv %s3332
        %v3334 = vmul.f32 %v3231, %v3333
        %v3336 = vrot.slane %v3334, 7
        %v3337 = vrot.slane %v3336, 2
        %3338 = vrot.lane.b32.xlu0 %v3337, 96
        %v3339 = vpop.permute.xlu0 %3338
        %v3340 = vrot.slane %v3339, 2
        %v3341 = vsel %vm485, %v3339, %v3340
        %v3343 = vadd.f32 %v3331, %v3341
        %s3344 = sld [smem:[#allocation5 + $0x58]]
        %v3345 = vstv %s3344
        %v3346 = vmul.f32 %v3231, %v3345
        %3348 = vrot.lane.b32.xlu0 %v3346, 80
        %v3349 = vpop.permute.xlu0 %3348
        %v3350 = vrot.slane %v3349, 2
        %v3351 = vsel %vm516, %v3349, %v3350
        %v3353 = vadd.f32 %v3321, %v3351
        %s3354 = sld [smem:[#allocation5 + $0x5a]]
        %v3355 = vstv %s3354
        %v3356 = vmul.f32 %v3231, %v3355
        %v3358 = vrot.slane %v3356, 7
        %v3359 = vrot.slane %v3358, 2
        %3360 = vrot.lane.b32.xlu0 %v3359, 80
        %v3361 = vpop.permute.xlu0 %3360
        %v3362 = vrot.slane %v3361, 2
        %v3363 = vsel %vm516, %v3361, %v3362
        %v3365 = vadd.f32 %v3353, %v3363
        %s3366 = sld [smem:[#allocation5 + $0x59]]
        %v3367 = vstv %s3366
        %v3368 = vmul.f32 %v3231, %v3367
        %3370 = vrot.lane.b32.xlu0 %v3368, 80
        %v3371 = vpop.permute.xlu0 %3370
        %v3372 = vrot.slane %v3371, 2
        %v3373 = vsel %vm516, %v3371, %v3372
        %v3375 = vadd.f32 %v3343, %v3373
        %s3376 = sld [smem:[#allocation5 + $0x5b]]
        %v3377 = vstv %s3376
        %v3378 = vmul.f32 %v3231, %v3377
        %v3380 = vrot.slane %v3378, 7
        %v3381 = vrot.slane %v3380, 2
        %3382 = vrot.lane.b32.xlu0 %v3381, 80
        %v3383 = vpop.permute.xlu0 %3382
        %v3384 = vrot.slane %v3383, 2
        %v3385 = vsel %vm516, %v3383, %v3384
        %v3387 = vadd.f32 %v3375, %v3385
        %v3388 = vld [vmem:[#allocation4 + $0x2] sm:$0x3f]
        %s3389 = sld [smem:[#allocation5 + $0x74]]
        %v3390 = vstv %s3389
        %v3391 = vmul.f32 %v3388, %v3390
        %3393 = vrot.lane.b32.xlu0 %v3391, 64
        %v3394 = vpop.permute.xlu0 %3393
        %v3395 = vrot.slane %v3394, 6
        %v3396 = vsel %vm544, %v3395, %v3394
        %v3398 = vadd.f32 %v3365, %v3396
        %s3399 = sld [smem:[#allocation5 + $0x76]]
        %v3400 = vstv %s3399
        %v3401 = vmul.f32 %v3388, %v3400
        %v3403 = vrot.slane %v3401, 7
        %v3404 = vrot.slane %v3403, 2
        %3405 = vrot.lane.b32.xlu0 %v3404, 64
        %v3406 = vpop.permute.xlu0 %3405
        %v3407 = vrot.slane %v3406, 6
        %v3408 = vsel %vm544, %v3407, %v3406
        %v3410 = vadd.f32 %v3398, %v3408
        %s3411 = sld [smem:[#allocation5 + $0x75]]
        %v3412 = vstv %s3411
        %v3413 = vmul.f32 %v3388, %v3412
        %3415 = vrot.lane.b32.xlu0 %v3413, 64
        %v3416 = vpop.permute.xlu0 %3415
        %v3417 = vrot.slane %v3416, 6
        %v3418 = vsel %vm544, %v3417, %v3416
        %v3420 = vadd.f32 %v3387, %v3418
        %s3421 = sld [smem:[#allocation5 + $0x77]]
        %v3422 = vstv %s3421
        %v3423 = vmul.f32 %v3388, %v3422
        %v3425 = vrot.slane %v3423, 7
        %v3426 = vrot.slane %v3425, 2
        %3427 = vrot.lane.b32.xlu0 %v3426, 64
        %v3428 = vpop.permute.xlu0 %3427
        %v3429 = vrot.slane %v3428, 6
        %v3430 = vsel %vm544, %v3429, %v3428
        %v3432 = vadd.f32 %v3420, %v3430
        %s3433 = sld [smem:[#allocation5 + $0x90]]
        %v3434 = vstv %s3433
        %v3435 = vmul.f32 %v3388, %v3434
        %3437 = vrot.lane.b32.xlu0 %v3435, 48
        %v3438 = vpop.permute.xlu0 %3437
        %v3439 = vrot.slane %v3438, 6
        %v3440 = vsel %vm3131, %v3439, %v3438
        %v3442 = vadd.f32 %v3410, %v3440
        %s3443 = sld [smem:[#allocation5 + $0x92]]
        %v3444 = vstv %s3443
        %v3445 = vmul.f32 %v3388, %v3444
        %v3447 = vrot.slane %v3445, 7
        %v3448 = vrot.slane %v3447, 2
        %3449 = vrot.lane.b32.xlu0 %v3448, 48
        %v3450 = vpop.permute.xlu0 %3449
        %v3451 = vrot.slane %v3450, 6
        %v3452 = vsel %vm3131, %v3451, %v3450
        %v3454 = vadd.f32 %v3442, %v3452
        %s3455 = sld [smem:[#allocation5 + $0x91]]
        %v3456 = vstv %s3455
        %v3457 = vmul.f32 %v3388, %v3456
        %3459 = vrot.lane.b32.xlu0 %v3457, 48
        %v3460 = vpop.permute.xlu0 %3459
        %v3461 = vrot.slane %v3460, 6
        %v3462 = vsel %vm3131, %v3461, %v3460
        %v3464 = vadd.f32 %v3432, %v3462
        %s3465 = sld [smem:[#allocation5 + $0x93]]
        %v3466 = vstv %s3465
        %v3467 = vmul.f32 %v3388, %v3466
        %v3469 = vrot.slane %v3467, 7
        %v3470 = vrot.slane %v3469, 2
        %3471 = vrot.lane.b32.xlu0 %v3470, 48
        %v3472 = vpop.permute.xlu0 %3471
        %v3473 = vrot.slane %v3472, 6
        %v3474 = vsel %vm3131, %v3473, %v3472
        %v3476 = vadd.f32 %v3464, %v3474
        %s3477 = sld [smem:[#allocation5 + $0xac]]
        %v3478 = vstv %s3477
        %v3479 = vmul.f32 %v3388, %v3478
        %3481 = vrot.lane.b32.xlu0 %v3479, 32
        %v3482 = vpop.permute.xlu0 %3481
        %v3483 = vrot.slane %v3482, 6
        %v3484 = vsel %vm1323, %v3483, %v3482
        %v3486 = vadd.f32 %v3454, %v3484
        %s3487 = sld [smem:[#allocation5 + $0xae]]
        %v3488 = vstv %s3487
        %v3489 = vmul.f32 %v3388, %v3488
        %v3491 = vrot.slane %v3489, 7
        %v3492 = vrot.slane %v3491, 2
        %3493 = vrot.lane.b32.xlu0 %v3492, 32
        %v3494 = vpop.permute.xlu0 %3493
        %v3495 = vrot.slane %v3494, 6
        %v3496 = vsel %vm1323, %v3495, %v3494
        %v3498 = vadd.f32 %v3486, %v3496
        %s3499 = sld [smem:[#allocation5 + $0xad]]
        %v3500 = vstv %s3499
        %v3501 = vmul.f32 %v3388, %v3500
        %3503 = vrot.lane.b32.xlu0 %v3501, 32
        %v3504 = vpop.permute.xlu0 %3503
        %v3505 = vrot.slane %v3504, 6
        %v3506 = vsel %vm1323, %v3505, %v3504
        %v3508 = vadd.f32 %v3476, %v3506
        %s3509 = sld [smem:[#allocation5 + $0xaf]]
        %v3510 = vstv %s3509
        %v3511 = vmul.f32 %v3388, %v3510
        %v3513 = vrot.slane %v3511, 7
        %v3514 = vrot.slane %v3513, 2
        %3515 = vrot.lane.b32.xlu0 %v3514, 32
        %v3516 = vpop.permute.xlu0 %3515
        %v3517 = vrot.slane %v3516, 6
        %v3518 = vsel %vm1323, %v3517, %v3516
        %v3520 = vadd.f32 %v3508, %v3518
        %v3521 = vcombine.low %v563, %v564
        %v3523 = vunpack.c.l.s4 1983009808
        %v3524 = vunpack.c.0.s8 %v3523
        %v3525 = vlaneseq
        %v3526 = vshrl.u32 %v3525, 7
        %v3527 = vsub.s32 %v3524, %v3526
        %v3528 = vrot.slane %v3521, %v3527
        %3529 = vrot.lane.b32.xlu0 %v3528, 78
        %v3530 = vpop.permute.xlu0 %3529
        %v3531 = vrot.slane %v3530, 6
        %vm3532 = vcmask 637952
        %v3533 = vsel %vm3532, %v3531, %v3530
        %v3535 = vmul.f32 %v3498, %v3533
        %3537 = vrot.lane.b32.xlu0 %v3535, 127
        %v3538 = vpop.permute.xlu0 %3537
        %v3539 = vrot.slane %v3538, 2
        %v3540 = vsel %vm738, %v3538, %v3539
        %v3542 = vadd.f32 %v3228, %v3540
        %v3543 = vmul.f32 %v3520, %v3533
        %3545 = vrot.lane.b32.xlu0 %v3543, 127
        %v3546 = vpop.permute.xlu0 %3545
        %v3547 = vrot.slane %v3546, 2
        %v3548 = vsel %vm738, %v3546, %v3547
        %v3550 = vadd.f32 %v3230, %v3548
        %v3551 = vld [vmem:[#allocation4] sm:$0x3f]
        %s3552 = sld [smem:[#allocation5 + $0x8]]
        %v3553 = vstv %s3552
        %v3554 = vmul.f32 %v3551, %v3553
        %v3555 = vadd.f32 %v3554, 0.0
        %s3556 = sld [smem:[#allocation5 + $0xa]]
        %v3557 = vstv %s3556
        %v3558 = vmul.f32 %v3551, %v3557
        %v3560 = vrot.slane %v3558, 7
        %v3561 = vrot.slane %v3560, 2
        %v3563 = vadd.f32 %v3555, %v3561
        %s3564 = sld [smem:[#allocation5 + $0x9]]
        %v3565 = vstv %s3564
        %v3566 = vmul.f32 %v3551, %v3565
        %v3567 = vadd.f32 %v3566, 0.0
        %s3568 = sld [smem:[#allocation5 + $0xb]]
        %v3569 = vstv %s3568
        %v3570 = vmul.f32 %v3551, %v3569
        %v3572 = vrot.slane %v3570, 7
        %v3573 = vrot.slane %v3572, 2
        %v3575 = vadd.f32 %v3567, %v3573
        %s3576 = sld [smem:[#allocation5 + $0x24]]
        %v3577 = vstv %s3576
        %v3578 = vmul.f32 %v3551, %v3577
        %3580 = vrot.lane.b32.xlu0 %v3578, 112
        %v3581 = vpop.permute.xlu0 %3580
        %v3582 = vrot.slane %v3581, 2
        %v3583 = vsel %vm457, %v3581, %v3582
        %v3585 = vadd.f32 %v3563, %v3583
        %s3586 = sld [smem:[#allocation5 + $0x26]]
        %v3587 = vstv %s3586
        %v3588 = vmul.f32 %v3551, %v3587
        %v3590 = vrot.slane %v3588, 7
        %v3591 = vrot.slane %v3590, 2
        %3592 = vrot.lane.b32.xlu0 %v3591, 112
        %v3593 = vpop.permute.xlu0 %3592
        %v3594 = vrot.slane %v3593, 2
        %v3595 = vsel %vm457, %v3593, %v3594
        %v3597 = vadd.f32 %v3585, %v3595
        %s3598 = sld [smem:[#allocation5 + $0x25]]
        %v3599 = vstv %s3598
        %v3600 = vmul.f32 %v3551, %v3599
        %3602 = vrot.lane.b32.xlu0 %v3600, 112
        %v3603 = vpop.permute.xlu0 %3602
        %v3604 = vrot.slane %v3603, 2
        %v3605 = vsel %vm457, %v3603, %v3604
        %v3607 = vadd.f32 %v3575, %v3605
        %s3608 = sld [smem:[#allocation5 + $0x27]]
        %v3609 = vstv %s3608
        %v3610 = vmul.f32 %v3551, %v3609
        %v3612 = vrot.slane %v3610, 7
        %v3613 = vrot.slane %v3612, 2
        %3614 = vrot.lane.b32.xlu0 %v3613, 112
        %v3615 = vpop.permute.xlu0 %3614
        %v3616 = vrot.slane %v3615, 2
        %v3617 = vsel %vm457, %v3615, %v3616
        %v3619 = vadd.f32 %v3607, %v3617
        %s3620 = sld [smem:[#allocation5 + $0x40]]
        %v3621 = vstv %s3620
        %v3622 = vmul.f32 %v3551, %v3621
        %3624 = vrot.lane.b32.xlu0 %v3622, 96
        %v3625 = vpop.permute.xlu0 %3624
        %v3626 = vrot.slane %v3625, 2
        %v3627 = vsel %vm485, %v3625, %v3626
        %v3629 = vadd.f32 %v3597, %v3627
        %s3630 = sld [smem:[#allocation5 + $0x42]]
        %v3631 = vstv %s3630
        %v3632 = vmul.f32 %v3551, %v3631
        %v3634 = vrot.slane %v3632, 7
        %v3635 = vrot.slane %v3634, 2
        %3636 = vrot.lane.b32.xlu0 %v3635, 96
        %v3637 = vpop.permute.xlu0 %3636
        %v3638 = vrot.slane %v3637, 2
        %v3639 = vsel %vm485, %v3637, %v3638
        %v3641 = vadd.f32 %v3629, %v3639
        %s3642 = sld [smem:[#allocation5 + $0x41]]
        %v3643 = vstv %s3642
        %v3644 = vmul.f32 %v3551, %v3643
        %3646 = vrot.lane.b32.xlu0 %v3644, 96
        %v3647 = vpop.permute.xlu0 %3646
        %v3648 = vrot.slane %v3647, 2
        %v3649 = vsel %vm485, %v3647, %v3648
        %v3651 = vadd.f32 %v3619, %v3649
        %s3652 = sld [smem:[#allocation5 + $0x43]]
        %v3653 = vstv %s3652
        %v3654 = vmul.f32 %v3551, %v3653
        %v3656 = vrot.slane %v3654, 7
        %v3657 = vrot.slane %v3656, 2
        %3658 = vrot.lane.b32.xlu0 %v3657, 96
        %v3659 = vpop.permute.xlu0 %3658
        %v3660 = vrot.slane %v3659, 2
        %v3661 = vsel %vm485, %v3659, %v3660
        %v3663 = vadd.f32 %v3651, %v3661
        %s3664 = sld [smem:[#allocation5 + $0x5c]]
        %v3665 = vstv %s3664
        %v3666 = vmul.f32 %v3551, %v3665
        %3668 = vrot.lane.b32.xlu0 %v3666, 80
        %v3669 = vpop.permute.xlu0 %3668
        %v3670 = vrot.slane %v3669, 2
        %v3671 = vsel %vm516, %v3669, %v3670
        %v3673 = vadd.f32 %v3641, %v3671
        %s3674 = sld [smem:[#allocation5 + $0x5e]]
        %v3675 = vstv %s3674
        %v3676 = vmul.f32 %v3551, %v3675
        %v3678 = vrot.slane %v3676, 7
        %v3679 = vrot.slane %v3678, 2
        %3680 = vrot.lane.b32.xlu0 %v3679, 80
        %v3681 = vpop.permute.xlu0 %3680
        %v3682 = vrot.slane %v3681, 2
        %v3683 = vsel %vm516, %v3681, %v3682
        %v3685 = vadd.f32 %v3673, %v3683
        %s3686 = sld [smem:[#allocation5 + $0x5d]]
        %v3687 = vstv %s3686
        %v3688 = vmul.f32 %v3551, %v3687
        %3690 = vrot.lane.b32.xlu0 %v3688, 80
        %v3691 = vpop.permute.xlu0 %3690
        %v3692 = vrot.slane %v3691, 2
        %v3693 = vsel %vm516, %v3691, %v3692
        %v3695 = vadd.f32 %v3663, %v3693
        %s3696 = sld [smem:[#allocation5 + $0x5f]]
        %v3697 = vstv %s3696
        %v3698 = vmul.f32 %v3551, %v3697
        %v3700 = vrot.slane %v3698, 7
        %v3701 = vrot.slane %v3700, 2
        %3702 = vrot.lane.b32.xlu0 %v3701, 80
        %v3703 = vpop.permute.xlu0 %3702
        %v3704 = vrot.slane %v3703, 2
        %v3705 = vsel %vm516, %v3703, %v3704
        %v3707 = vadd.f32 %v3695, %v3705
        %v3708 = vld [vmem:[#allocation4 + $0x2] sm:$0x3f]
        %s3709 = sld [smem:[#allocation5 + $0x78]]
        %v3710 = vstv %s3709
        %v3711 = vmul.f32 %v3708, %v3710
        %3713 = vrot.lane.b32.xlu0 %v3711, 64
        %v3714 = vpop.permute.xlu0 %3713
        %v3715 = vrot.slane %v3714, 6
        %v3716 = vsel %vm544, %v3715, %v3714
        %v3718 = vadd.f32 %v3685, %v3716
        %s3719 = sld [smem:[#allocation5 + $0x7a]]
        %v3720 = vstv %s3719
        %v3721 = vmul.f32 %v3708, %v3720
        %v3723 = vrot.slane %v3721, 7
        %v3724 = vrot.slane %v3723, 2
        %3725 = vrot.lane.b32.xlu0 %v3724, 64
        %v3726 = vpop.permute.xlu0 %3725
        %v3727 = vrot.slane %v3726, 6
        %v3728 = vsel %vm544, %v3727, %v3726
        %v3730 = vadd.f32 %v3718, %v3728
        %s3731 = sld [smem:[#allocation5 + $0x79]]
        %v3732 = vstv %s3731
        %v3733 = vmul.f32 %v3708, %v3732
        %3735 = vrot.lane.b32.xlu0 %v3733, 64
        %v3736 = vpop.permute.xlu0 %3735
        %v3737 = vrot.slane %v3736, 6
        %v3738 = vsel %vm544, %v3737, %v3736
        %v3740 = vadd.f32 %v3707, %v3738
        %s3741 = sld [smem:[#allocation5 + $0x7b]]
        %v3742 = vstv %s3741
        %v3743 = vmul.f32 %v3708, %v3742
        %v3745 = vrot.slane %v3743, 7
        %v3746 = vrot.slane %v3745, 2
        %3747 = vrot.lane.b32.xlu0 %v3746, 64
        %v3748 = vpop.permute.xlu0 %3747
        %v3749 = vrot.slane %v3748, 6
        %v3750 = vsel %vm544, %v3749, %v3748
        %v3752 = vadd.f32 %v3740, %v3750
        %s3753 = sld [smem:[#allocation5 + $0x94]]
        %v3754 = vstv %s3753
        %v3755 = vmul.f32 %v3708, %v3754
        %3757 = vrot.lane.b32.xlu0 %v3755, 48
        %v3758 = vpop.permute.xlu0 %3757
        %v3759 = vrot.slane %v3758, 6
        %v3760 = vsel %vm3131, %v3759, %v3758
        %v3762 = vadd.f32 %v3730, %v3760
        %s3763 = sld [smem:[#allocation5 + $0x96]]
        %v3764 = vstv %s3763
        %v3765 = vmul.f32 %v3708, %v3764
        %v3767 = vrot.slane %v3765, 7
        %v3768 = vrot.slane %v3767, 2
        %3769 = vrot.lane.b32.xlu0 %v3768, 48
        %v3770 = vpop.permute.xlu0 %3769
        %v3771 = vrot.slane %v3770, 6
        %v3772 = vsel %vm3131, %v3771, %v3770
        %v3774 = vadd.f32 %v3762, %v3772
        %s3775 = sld [smem:[#allocation5 + $0x95]]
        %v3776 = vstv %s3775
        %v3777 = vmul.f32 %v3708, %v3776
        %3779 = vrot.lane.b32.xlu0 %v3777, 48
        %v3780 = vpop.permute.xlu0 %3779
        %v3781 = vrot.slane %v3780, 6
        %v3782 = vsel %vm3131, %v3781, %v3780
        %v3784 = vadd.f32 %v3752, %v3782
        %s3785 = sld [smem:[#allocation5 + $0x97]]
        %v3786 = vstv %s3785
        %v3787 = vmul.f32 %v3708, %v3786
        %v3789 = vrot.slane %v3787, 7
        %v3790 = vrot.slane %v3789, 2
        %3791 = vrot.lane.b32.xlu0 %v3790, 48
        %v3792 = vpop.permute.xlu0 %3791
        %v3793 = vrot.slane %v3792, 6
        %v3794 = vsel %vm3131, %v3793, %v3792
        %v3796 = vadd.f32 %v3784, %v3794
        %s3797 = sld [smem:[#allocation5 + $0xb0]]
        %v3798 = vstv %s3797
        %v3799 = vmul.f32 %v3708, %v3798
        %3801 = vrot.lane.b32.xlu0 %v3799, 32
        %v3802 = vpop.permute.xlu0 %3801
        %v3803 = vrot.slane %v3802, 6
        %v3804 = vsel %vm1323, %v3803, %v3802
        %v3806 = vadd.f32 %v3774, %v3804
        %s3807 = sld [smem:[#allocation5 + $0xb2]]
        %v3808 = vstv %s3807
        %v3809 = vmul.f32 %v3708, %v3808
        %v3811 = vrot.slane %v3809, 7
        %v3812 = vrot.slane %v3811, 2
        %3813 = vrot.lane.b32.xlu0 %v3812, 32
        %v3814 = vpop.permute.xlu0 %3813
        %v3815 = vrot.slane %v3814, 6
        %v3816 = vsel %vm1323, %v3815, %v3814
        %v3818 = vadd.f32 %v3806, %v3816
        %s3819 = sld [smem:[#allocation5 + $0xb1]]
        %v3820 = vstv %s3819
        %v3821 = vmul.f32 %v3708, %v3820
        %3823 = vrot.lane.b32.xlu0 %v3821, 32
        %v3824 = vpop.permute.xlu0 %3823
        %v3825 = vrot.slane %v3824, 6
        %v3826 = vsel %vm1323, %v3825, %v3824
        %v3828 = vadd.f32 %v3796, %v3826
        %s3829 = sld [smem:[#allocation5 + $0xb3]]
        %v3830 = vstv %s3829
        %v3831 = vmul.f32 %v3708, %v3830
        %v3833 = vrot.slane %v3831, 7
        %v3834 = vrot.slane %v3833, 2
        %3835 = vrot.lane.b32.xlu0 %v3834, 32
        %v3836 = vpop.permute.xlu0 %3835
        %v3837 = vrot.slane %v3836, 6
        %v3838 = vsel %vm1323, %v3837, %v3836
        %v3840 = vadd.f32 %v3828, %v3838
        %v3841 = vcombine.low %v713, %v714
        %v3843 = vunpack.c.l.s4 1983009808
        %v3844 = vunpack.c.0.s8 %v3843
        %v3845 = vlaneseq
        %v3846 = vshrl.u32 %v3845, 7
        %v3847 = vsub.s32 %v3844, %v3846
        %v3848 = vrot.slane %v3841, %v3847
        %3849 = vrot.lane.b32.xlu0 %v3848, 79
        %v3850 = vpop.permute.xlu0 %3849
        %v3851 = vrot.slane %v3850, 6
        %vm3852 = vcmask 646144
        %v3853 = vsel %vm3852, %v3851, %v3850
        %v3855 = vmul.f32 %v3818, %v3853
        %3857 = vrot.lane.b32.xlu0 %v3855, 126
        %v3858 = vpop.permute.xlu0 %3857
        %v3859 = vrot.slane %v3858, 2
        %v3860 = vsel %vm895, %v3858, %v3859
        %v3862 = vadd.f32 %v3542, %v3860
        %v3863 = vmul.f32 %v3840, %v3853
        %3865 = vrot.lane.b32.xlu0 %v3863, 126
        %v3866 = vpop.permute.xlu0 %3865
        %v3867 = vrot.slane %v3866, 2
        %v3868 = vsel %vm895, %v3866, %v3867
        %v3870 = vadd.f32 %v3550, %v3868
        %v3871 = vld [vmem:[#allocation4] sm:$0x3f]
        %s3872 = sld [smem:[#allocation5 + $0xc]]
        %v3873 = vstv %s3872
        %v3874 = vmul.f32 %v3871, %v3873
        %v3875 = vadd.f32 %v3874, 0.0
        %s3876 = sld [smem:[#allocation5 + $0xe]]
        %v3877 = vstv %s3876
        %v3878 = vmul.f32 %v3871, %v3877
        %v3880 = vrot.slane %v3878, 7
        %v3881 = vrot.slane %v3880, 2
        %v3883 = vadd.f32 %v3875, %v3881
        %s3884 = sld [smem:[#allocation5 + $0xd]]
        %v3885 = vstv %s3884
        %v3886 = vmul.f32 %v3871, %v3885
        %v3887 = vadd.f32 %v3886, 0.0
        %s3888 = sld [smem:[#allocation5 + $0xf]]
        %v3889 = vstv %s3888
        %v3890 = vmul.f32 %v3871, %v3889
        %v3892 = vrot.slane %v3890, 7
        %v3893 = vrot.slane %v3892, 2
        %v3895 = vadd.f32 %v3887, %v3893
        %s3896 = sld [smem:[#allocation5 + $0x28]]
        %v3897 = vstv %s3896
        %v3898 = vmul.f32 %v3871, %v3897
        %3900 = vrot.lane.b32.xlu0 %v3898, 112
        %v3901 = vpop.permute.xlu0 %3900
        %v3902 = vrot.slane %v3901, 2
        %v3903 = vsel %vm457, %v3901, %v3902
        %v3905 = vadd.f32 %v3883, %v3903
        %s3906 = sld [smem:[#allocation5 + $0x2a]]
        %v3907 = vstv %s3906
        %v3908 = vmul.f32 %v3871, %v3907
        %v3910 = vrot.slane %v3908, 7
        %v3911 = vrot.slane %v3910, 2
        %3912 = vrot.lane.b32.xlu0 %v3911, 112
        %v3913 = vpop.permute.xlu0 %3912
        %v3914 = vrot.slane %v3913, 2
        %v3915 = vsel %vm457, %v3913, %v3914
        %v3917 = vadd.f32 %v3905, %v3915
        %s3918 = sld [smem:[#allocation5 + $0x29]]
        %v3919 = vstv %s3918
        %v3920 = vmul.f32 %v3871, %v3919
        %3922 = vrot.lane.b32.xlu0 %v3920, 112
        %v3923 = vpop.permute.xlu0 %3922
        %v3924 = vrot.slane %v3923, 2
        %v3925 = vsel %vm457, %v3923, %v3924
        %v3927 = vadd.f32 %v3895, %v3925
        %s3928 = sld [smem:[#allocation5 + $0x2b]]
        %v3929 = vstv %s3928
        %v3930 = vmul.f32 %v3871, %v3929
        %v3932 = vrot.slane %v3930, 7
        %v3933 = vrot.slane %v3932, 2
        %3934 = vrot.lane.b32.xlu0 %v3933, 112
        %v3935 = vpop.permute.xlu0 %3934
        %v3936 = vrot.slane %v3935, 2
        %v3937 = vsel %vm457, %v3935, %v3936
        %v3939 = vadd.f32 %v3927, %v3937
        %s3940 = sld [smem:[#allocation5 + $0x44]]
        %v3941 = vstv %s3940
        %v3942 = vmul.f32 %v3871, %v3941
        %3944 = vrot.lane.b32.xlu0 %v3942, 96
        %v3945 = vpop.permute.xlu0 %3944
        %v3946 = vrot.slane %v3945, 2
        %v3947 = vsel %vm485, %v3945, %v3946
        %v3949 = vadd.f32 %v3917, %v3947
        %s3950 = sld [smem:[#allocation5 + $0x46]]
        %v3951 = vstv %s3950
        %v3952 = vmul.f32 %v3871, %v3951
        %v3954 = vrot.slane %v3952, 7
        %v3955 = vrot.slane %v3954, 2
        %3956 = vrot.lane.b32.xlu0 %v3955, 96
        %v3957 = vpop.permute.xlu0 %3956
        %v3958 = vrot.slane %v3957, 2
        %v3959 = vsel %vm485, %v3957, %v3958
        %v3961 = vadd.f32 %v3949, %v3959
        %s3962 = sld [smem:[#allocation5 + $0x45]]
        %v3963 = vstv %s3962
        %v3964 = vmul.f32 %v3871, %v3963
        %3966 = vrot.lane.b32.xlu0 %v3964, 96
        %v3967 = vpop.permute.xlu0 %3966
        %v3968 = vrot.slane %v3967, 2
        %v3969 = vsel %vm485, %v3967, %v3968
        %v3971 = vadd.f32 %v3939, %v3969
        %s3972 = sld [smem:[#allocation5 + $0x47]]
        %v3973 = vstv %s3972
        %v3974 = vmul.f32 %v3871, %v3973
        %v3976 = vrot.slane %v3974, 7
        %v3977 = vrot.slane %v3976, 2
        %3978 = vrot.lane.b32.xlu0 %v3977, 96
        %v3979 = vpop.permute.xlu0 %3978
        %v3980 = vrot.slane %v3979, 2
        %v3981 = vsel %vm485, %v3979, %v3980
        %v3983 = vadd.f32 %v3971, %v3981
        %v3984 = vld [vmem:[#allocation4 + $0x2] sm:$0xf]
        %s3985 = sld [smem:[#allocation5 + $0x60]]
        %v3986 = vstv %s3985
        %v3987 = vmul.f32 %v3984, %v3986
        %3989 = vrot.lane.b32.xlu0 %v3987, 80
        %v3990 = vpop.permute.xlu0 %3989
        %v3991 = vrot.slane %v3990, 6
        %v3992 = vsel %vm516, %v3991, %v3990
        %v3994 = vadd.f32 %v3961, %v3992
        %s3995 = sld [smem:[#allocation5 + $0x62]]
        %v3996 = vstv %s3995
        %v3997 = vmul.f32 %v3984, %v3996
        %v3999 = vrot.slane %v3997, 7
        %v4000 = vrot.slane %v3999, 2
        %4001 = vrot.lane.b32.xlu0 %v4000, 80
        %v4002 = vpop.permute.xlu0 %4001
        %v4003 = vrot.slane %v4002, 6
        %v4004 = vsel %vm516, %v4003, %v4002
        %v4006 = vadd.f32 %v3994, %v4004
        %s4007 = sld [smem:[#allocation5 + $0x61]]
        %v4008 = vstv %s4007
        %v4009 = vmul.f32 %v3984, %v4008
        %4011 = vrot.lane.b32.xlu0 %v4009, 80
        %v4012 = vpop.permute.xlu0 %4011
        %v4013 = vrot.slane %v4012, 6
        %v4014 = vsel %vm516, %v4013, %v4012
        %v4016 = vadd.f32 %v3983, %v4014
        %s4017 = sld [smem:[#allocation5 + $0x63]]
        %v4018 = vstv %s4017
        %v4019 = vmul.f32 %v3984, %v4018
        %v4021 = vrot.slane %v4019, 7
        %v4022 = vrot.slane %v4021, 2
        %4023 = vrot.lane.b32.xlu0 %v4022, 80
        %v4024 = vpop.permute.xlu0 %4023
        %v4025 = vrot.slane %v4024, 6
        %v4026 = vsel %vm516, %v4025, %v4024
        %v4028 = vadd.f32 %v4016, %v4026
        %v4029 = vld [vmem:[#allocation4 + $0x2] sm:$0x3f]
        %s4030 = sld [smem:[#allocation5 + $0x7c]]
        %v4031 = vstv %s4030
        %v4032 = vmul.f32 %v4029, %v4031
        %4034 = vrot.lane.b32.xlu0 %v4032, 64
        %v4035 = vpop.permute.xlu0 %4034
        %v4036 = vrot.slane %v4035, 6
        %v4037 = vsel %vm544, %v4036, %v4035
        %v4039 = vadd.f32 %v4006, %v4037
        %s4040 = sld [smem:[#allocation5 + $0x7e]]
        %v4041 = vstv %s4040
        %v4042 = vmul.f32 %v4029, %v4041
        %v4044 = vrot.slane %v4042, 7
        %v4045 = vrot.slane %v4044, 2
        %4046 = vrot.lane.b32.xlu0 %v4045, 64
        %v4047 = vpop.permute.xlu0 %4046
        %v4048 = vrot.slane %v4047, 6
        %v4049 = vsel %vm544, %v4048, %v4047
        %v4051 = vadd.f32 %v4039, %v4049
        %s4052 = sld [smem:[#allocation5 + $0x7d]]
        %v4053 = vstv %s4052
        %v4054 = vmul.f32 %v4029, %v4053
        %4056 = vrot.lane.b32.xlu0 %v4054, 64
        %v4057 = vpop.permute.xlu0 %4056
        %v4058 = vrot.slane %v4057, 6
        %v4059 = vsel %vm544, %v4058, %v4057
        %v4061 = vadd.f32 %v4028, %v4059
        %s4062 = sld [smem:[#allocation5 + $0x7f]]
        %v4063 = vstv %s4062
        %v4064 = vmul.f32 %v4029, %v4063
        %v4066 = vrot.slane %v4064, 7
        %v4067 = vrot.slane %v4066, 2
        %4068 = vrot.lane.b32.xlu0 %v4067, 64
        %v4069 = vpop.permute.xlu0 %4068
        %v4070 = vrot.slane %v4069, 6
        %v4071 = vsel %vm544, %v4070, %v4069
        %v4073 = vadd.f32 %v4061, %v4071
        %s4074 = sld [smem:[#allocation5 + $0x98]]
        %v4075 = vstv %s4074
        %v4076 = vmul.f32 %v4029, %v4075
        %4078 = vrot.lane.b32.xlu0 %v4076, 48
        %v4079 = vpop.permute.xlu0 %4078
        %v4080 = vrot.slane %v4079, 6
        %v4081 = vsel %vm3131, %v4080, %v4079
        %v4083 = vadd.f32 %v4051, %v4081
        %s4084 = sld [smem:[#allocation5 + $0x9a]]
        %v4085 = vstv %s4084
        %v4086 = vmul.f32 %v4029, %v4085
        %v4088 = vrot.slane %v4086, 7
        %v4089 = vrot.slane %v4088, 2
        %4090 = vrot.lane.b32.xlu0 %v4089, 48
        %v4091 = vpop.permute.xlu0 %4090
        %v4092 = vrot.slane %v4091, 6
        %v4093 = vsel %vm3131, %v4092, %v4091
        %v4095 = vadd.f32 %v4083, %v4093
        %s4096 = sld [smem:[#allocation5 + $0x99]]
        %v4097 = vstv %s4096
        %v4098 = vmul.f32 %v4029, %v4097
        %4100 = vrot.lane.b32.xlu0 %v4098, 48
        %v4101 = vpop.permute.xlu0 %4100
        %v4102 = vrot.slane %v4101, 6
        %v4103 = vsel %vm3131, %v4102, %v4101
        %v4105 = vadd.f32 %v4073, %v4103
        %s4106 = sld [smem:[#allocation5 + $0x9b]]
        %v4107 = vstv %s4106
        %v4108 = vmul.f32 %v4029, %v4107
        %v4110 = vrot.slane %v4108, 7
        %v4111 = vrot.slane %v4110, 2
        %4112 = vrot.lane.b32.xlu0 %v4111, 48
        %v4113 = vpop.permute.xlu0 %4112
        %v4114 = vrot.slane %v4113, 6
        %v4115 = vsel %vm3131, %v4114, %v4113
        %v4117 = vadd.f32 %v4105, %v4115
        %s4118 = sld [smem:[#allocation5 + $0xb4]]
        %v4119 = vstv %s4118
        %v4120 = vmul.f32 %v4029, %v4119
        %4122 = vrot.lane.b32.xlu0 %v4120, 32
        %v4123 = vpop.permute.xlu0 %4122
        %v4124 = vrot.slane %v4123, 6
        %v4125 = vsel %vm1323, %v4124, %v4123
        %v4127 = vadd.f32 %v4095, %v4125
        %s4128 = sld [smem:[#allocation5 + $0xb6]]
        %v4129 = vstv %s4128
        %v4130 = vmul.f32 %v4029, %v4129
        %v4132 = vrot.slane %v4130, 7
        %v4133 = vrot.slane %v4132, 2
        %4134 = vrot.lane.b32.xlu0 %v4133, 32
        %v4135 = vpop.permute.xlu0 %4134
        %v4136 = vrot.slane %v4135, 6
        %v4137 = vsel %vm1323, %v4136, %v4135
        %v4139 = vadd.f32 %v4127, %v4137
        %s4140 = sld [smem:[#allocation5 + $0xb5]]
        %v4141 = vstv %s4140
        %v4142 = vmul.f32 %v4029, %v4141
        %4144 = vrot.lane.b32.xlu0 %v4142, 32
        %v4145 = vpop.permute.xlu0 %4144
        %v4146 = vrot.slane %v4145, 6
        %v4147 = vsel %vm1323, %v4146, %v4145
        %v4149 = vadd.f32 %v4117, %v4147
        %s4150 = sld [smem:[#allocation5 + $0xb7]]
        %v4151 = vstv %s4150
        %v4152 = vmul.f32 %v4029, %v4151
        %v4154 = vrot.slane %v4152, 7
        %v4155 = vrot.slane %v4154, 2
        %4156 = vrot.lane.b32.xlu0 %v4155, 32
        %v4157 = vpop.permute.xlu0 %4156
        %v4158 = vrot.slane %v4157, 6
        %v4159 = vsel %vm1323, %v4158, %v4157
        %v4161 = vadd.f32 %v4149, %v4159
        %v4162 = vcombine.low %v871, %v872
        %v4164 = vunpack.c.l.s4 1983009808
        %v4165 = vunpack.c.0.s8 %v4164
        %v4166 = vlaneseq
        %v4167 = vshrl.u32 %v4166, 7
        %v4168 = vsub.s32 %v4165, %v4167
        %v4169 = vrot.slane %v4162, %v4168
        %4170 = vrot.lane.b32.xlu0 %v4169, 80
        %v4171 = vpop.permute.xlu0 %4170
        %v4172 = vrot.slane %v4171, 6
        %v4173 = vsel %vm516, %v4172, %v4171
        %v4175 = vmul.f32 %v4139, %v4173
        %4177 = vrot.lane.b32.xlu0 %v4175, 125
        %v4178 = vpop.permute.xlu0 %4177
        %v4179 = vrot.slane %v4178, 2
        %v4180 = vsel %vm1060, %v4178, %v4179
        %v4182 = vadd.f32 %v3862, %v4180
        %v4183 = vmul.f32 %v4161, %v4173
        %4185 = vrot.lane.b32.xlu0 %v4183, 125
        %v4186 = vpop.permute.xlu0 %4185
        %v4187 = vrot.slane %v4186, 2
        %v4188 = vsel %vm1060, %v4186, %v4187
        %v4190 = vadd.f32 %v3870, %v4188
        %v4191 = vld [vmem:[#allocation4] sm:$0x3f]
        %s4192 = sld [smem:[#allocation5 + $0x10]]
        %v4193 = vstv %s4192
        %v4194 = vmul.f32 %v4191, %v4193
        %v4195 = vadd.f32 %v4194, 0.0
        %s4196 = sld [smem:[#allocation5 + $0x12]]
        %v4197 = vstv %s4196
        %v4198 = vmul.f32 %v4191, %v4197
        %v4200 = vrot.slane %v4198, 7
        %v4201 = vrot.slane %v4200, 2
        %v4203 = vadd.f32 %v4195, %v4201
        %s4204 = sld [smem:[#allocation5 + $0x11]]
        %v4205 = vstv %s4204
        %v4206 = vmul.f32 %v4191, %v4205
        %v4207 = vadd.f32 %v4206, 0.0
        %s4208 = sld [smem:[#allocation5 + $0x13]]
        %v4209 = vstv %s4208
        %v4210 = vmul.f32 %v4191, %v4209
        %v4212 = vrot.slane %v4210, 7
        %v4213 = vrot.slane %v4212, 2
        %v4215 = vadd.f32 %v4207, %v4213
        %s4216 = sld [smem:[#allocation5 + $0x2c]]
        %v4217 = vstv %s4216
        %v4218 = vmul.f32 %v4191, %v4217
        %4220 = vrot.lane.b32.xlu0 %v4218, 112
        %v4221 = vpop.permute.xlu0 %4220
        %v4222 = vrot.slane %v4221, 2
        %v4223 = vsel %vm457, %v4221, %v4222
        %v4225 = vadd.f32 %v4203, %v4223
        %s4226 = sld [smem:[#allocation5 + $0x2e]]
        %v4227 = vstv %s4226
        %v4228 = vmul.f32 %v4191, %v4227
        %v4230 = vrot.slane %v4228, 7
        %v4231 = vrot.slane %v4230, 2
        %4232 = vrot.lane.b32.xlu0 %v4231, 112
        %v4233 = vpop.permute.xlu0 %4232
        %v4234 = vrot.slane %v4233, 2
        %v4235 = vsel %vm457, %v4233, %v4234
        %v4237 = vadd.f32 %v4225, %v4235
        %s4238 = sld [smem:[#allocation5 + $0x2d]]
        %v4239 = vstv %s4238
        %v4240 = vmul.f32 %v4191, %v4239
        %4242 = vrot.lane.b32.xlu0 %v4240, 112
        %v4243 = vpop.permute.xlu0 %4242
        %v4244 = vrot.slane %v4243, 2
        %v4245 = vsel %vm457, %v4243, %v4244
        %v4247 = vadd.f32 %v4215, %v4245
        %s4248 = sld [smem:[#allocation5 + $0x2f]]
        %v4249 = vstv %s4248
        %v4250 = vmul.f32 %v4191, %v4249
        %v4252 = vrot.slane %v4250, 7
        %v4253 = vrot.slane %v4252, 2
        %4254 = vrot.lane.b32.xlu0 %v4253, 112
        %v4255 = vpop.permute.xlu0 %4254
        %v4256 = vrot.slane %v4255, 2
        %v4257 = vsel %vm457, %v4255, %v4256
        %v4259 = vadd.f32 %v4247, %v4257
        %s4260 = sld [smem:[#allocation5 + $0x48]]
        %v4261 = vstv %s4260
        %v4262 = vmul.f32 %v4191, %v4261
        %4264 = vrot.lane.b32.xlu0 %v4262, 96
        %v4265 = vpop.permute.xlu0 %4264
        %v4266 = vrot.slane %v4265, 2
        %v4267 = vsel %vm485, %v4265, %v4266
        %v4269 = vadd.f32 %v4237, %v4267
        %s4270 = sld [smem:[#allocation5 + $0x4a]]
        %v4271 = vstv %s4270
        %v4272 = vmul.f32 %v4191, %v4271
        %v4274 = vrot.slane %v4272, 7
        %v4275 = vrot.slane %v4274, 2
        %4276 = vrot.lane.b32.xlu0 %v4275, 96
        %v4277 = vpop.permute.xlu0 %4276
        %v4278 = vrot.slane %v4277, 2
        %v4279 = vsel %vm485, %v4277, %v4278
        %v4281 = vadd.f32 %v4269, %v4279
        %s4282 = sld [smem:[#allocation5 + $0x49]]
        %v4283 = vstv %s4282
        %v4284 = vmul.f32 %v4191, %v4283
        %4286 = vrot.lane.b32.xlu0 %v4284, 96
        %v4287 = vpop.permute.xlu0 %4286
        %v4288 = vrot.slane %v4287, 2
        %v4289 = vsel %vm485, %v4287, %v4288
        %v4291 = vadd.f32 %v4259, %v4289
        %s4292 = sld [smem:[#allocation5 + $0x4b]]
        %v4293 = vstv %s4292
        %v4294 = vmul.f32 %v4191, %v4293
        %v4296 = vrot.slane %v4294, 7
        %v4297 = vrot.slane %v4296, 2
        %4298 = vrot.lane.b32.xlu0 %v4297, 96
        %v4299 = vpop.permute.xlu0 %4298
        %v4300 = vrot.slane %v4299, 2
        %v4301 = vsel %vm485, %v4299, %v4300
        %v4303 = vadd.f32 %v4291, %v4301
        %v4304 = vld [vmem:[#allocation4 + $0x2] sm:$0x3f]
        %s4305 = sld [smem:[#allocation5 + $0x64]]
        %v4306 = vstv %s4305
        %v4307 = vmul.f32 %v4304, %v4306
        %4309 = vrot.lane.b32.xlu0 %v4307, 80
        %v4310 = vpop.permute.xlu0 %4309
        %v4311 = vrot.slane %v4310, 6
        %v4312 = vsel %vm516, %v4311, %v4310
        %v4314 = vadd.f32 %v4281, %v4312
        %s4315 = sld [smem:[#allocation5 + $0x66]]
        %v4316 = vstv %s4315
        %v4317 = vmul.f32 %v4304, %v4316
        %v4319 = vrot.slane %v4317, 7
        %v4320 = vrot.slane %v4319, 2
        %4321 = vrot.lane.b32.xlu0 %v4320, 80
        %v4322 = vpop.permute.xlu0 %4321
        %v4323 = vrot.slane %v4322, 6
        %v4324 = vsel %vm516, %v4323, %v4322
        %v4326 = vadd.f32 %v4314, %v4324
        %s4327 = sld [smem:[#allocation5 + $0x65]]
        %v4328 = vstv %s4327
        %v4329 = vmul.f32 %v4304, %v4328
        %4331 = vrot.lane.b32.xlu0 %v4329, 80
        %v4332 = vpop.permute.xlu0 %4331
        %v4333 = vrot.slane %v4332, 6
        %v4334 = vsel %vm516, %v4333, %v4332
        %v4336 = vadd.f32 %v4303, %v4334
        %s4337 = sld [smem:[#allocation5 + $0x67]]
        %v4338 = vstv %s4337
        %v4339 = vmul.f32 %v4304, %v4338
        %v4341 = vrot.slane %v4339, 7
        %v4342 = vrot.slane %v4341, 2
        %4343 = vrot.lane.b32.xlu0 %v4342, 80
        %v4344 = vpop.permute.xlu0 %4343
        %v4345 = vrot.slane %v4344, 6
        %v4346 = vsel %vm516, %v4345, %v4344
        %v4348 = vadd.f32 %v4336, %v4346
        %s4349 = sld [smem:[#allocation5 + $0x80]]
        %v4350 = vstv %s4349
        %v4351 = vmul.f32 %v4304, %v4350
        %4353 = vrot.lane.b32.xlu0 %v4351, 64
        %v4354 = vpop.permute.xlu0 %4353
        %v4355 = vrot.slane %v4354, 6
        %v4356 = vsel %vm544, %v4355, %v4354
        %v4358 = vadd.f32 %v4326, %v4356
        %s4359 = sld [smem:[#allocation5 + $0x82]]
        %v4360 = vstv %s4359
        %v4361 = vmul.f32 %v4304, %v4360
        %v4363 = vrot.slane %v4361, 7
        %v4364 = vrot.slane %v4363, 2
        %4365 = vrot.lane.b32.xlu0 %v4364, 64
        %v4366 = vpop.permute.xlu0 %4365
        %v4367 = vrot.slane %v4366, 6
        %v4368 = vsel %vm544, %v4367, %v4366
        %v4370 = vadd.f32 %v4358, %v4368
        %s4371 = sld [smem:[#allocation5 + $0x81]]
        %v4372 = vstv %s4371
        %v4373 = vmul.f32 %v4304, %v4372
        %4375 = vrot.lane.b32.xlu0 %v4373, 64
        %v4376 = vpop.permute.xlu0 %4375
        %v4377 = vrot.slane %v4376, 6
        %v4378 = vsel %vm544, %v4377, %v4376
        %v4380 = vadd.f32 %v4348, %v4378
        %s4381 = sld [smem:[#allocation5 + $0x83]]
        %v4382 = vstv %s4381
        %v4383 = vmul.f32 %v4304, %v4382
        %v4385 = vrot.slane %v4383, 7
        %v4386 = vrot.slane %v4385, 2
        %4387 = vrot.lane.b32.xlu0 %v4386, 64
        %v4388 = vpop.permute.xlu0 %4387
        %v4389 = vrot.slane %v4388, 6
        %v4390 = vsel %vm544, %v4389, %v4388
        %v4392 = vadd.f32 %v4380, %v4390
        %s4393 = sld [smem:[#allocation5 + $0x9c]]
        %v4394 = vstv %s4393
        %v4395 = vmul.f32 %v4304, %v4394
        %4397 = vrot.lane.b32.xlu0 %v4395, 48
        %v4398 = vpop.permute.xlu0 %4397
        %v4399 = vrot.slane %v4398, 6
        %v4400 = vsel %vm3131, %v4399, %v4398
        %v4402 = vadd.f32 %v4370, %v4400
        %s4403 = sld [smem:[#allocation5 + $0x9e]]
        %v4404 = vstv %s4403
        %v4405 = vmul.f32 %v4304, %v4404
        %v4407 = vrot.slane %v4405, 7
        %v4408 = vrot.slane %v4407, 2
        %4409 = vrot.lane.b32.xlu0 %v4408, 48
        %v4410 = vpop.permute.xlu0 %4409
        %v4411 = vrot.slane %v4410, 6
        %v4412 = vsel %vm3131, %v4411, %v4410
        %v4414 = vadd.f32 %v4402, %v4412
        %s4415 = sld [smem:[#allocation5 + $0x9d]]
        %v4416 = vstv %s4415
        %v4417 = vmul.f32 %v4304, %v4416
        %4419 = vrot.lane.b32.xlu0 %v4417, 48
        %v4420 = vpop.permute.xlu0 %4419
        %v4421 = vrot.slane %v4420, 6
        %v4422 = vsel %vm3131, %v4421, %v4420
        %v4424 = vadd.f32 %v4392, %v4422
        %s4425 = sld [smem:[#allocation5 + $0x9f]]
        %v4426 = vstv %s4425
        %v4427 = vmul.f32 %v4304, %v4426
        %v4429 = vrot.slane %v4427, 7
        %v4430 = vrot.slane %v4429, 2
        %4431 = vrot.lane.b32.xlu0 %v4430, 48
        %v4432 = vpop.permute.xlu0 %4431
        %v4433 = vrot.slane %v4432, 6
        %v4434 = vsel %vm3131, %v4433, %v4432
        %v4436 = vadd.f32 %v4424, %v4434
        %s4437 = sld [smem:[#allocation5 + $0xb8]]
        %v4438 = vstv %s4437
        %v4439 = vmul.f32 %v4304, %v4438
        %4441 = vrot.lane.b32.xlu0 %v4439, 32
        %v4442 = vpop.permute.xlu0 %4441
        %v4443 = vrot.slane %v4442, 6
        %v4444 = vsel %vm1323, %v4443, %v4442
        %v4446 = vadd.f32 %v4414, %v4444
        %s4447 = sld [smem:[#allocation5 + $0xba]]
        %v4448 = vstv %s4447
        %v4449 = vmul.f32 %v4304, %v4448
        %v4451 = vrot.slane %v4449, 7
        %v4452 = vrot.slane %v4451, 2
        %4453 = vrot.lane.b32.xlu0 %v4452, 32
        %v4454 = vpop.permute.xlu0 %4453
        %v4455 = vrot.slane %v4454, 6
        %v4456 = vsel %vm1323, %v4455, %v4454
        %v4458 = vadd.f32 %v4446, %v4456
        %s4459 = sld [smem:[#allocation5 + $0xb9]]
        %v4460 = vstv %s4459
        %v4461 = vmul.f32 %v4304, %v4460
        %4463 = vrot.lane.b32.xlu0 %v4461, 32
        %v4464 = vpop.permute.xlu0 %4463
        %v4465 = vrot.slane %v4464, 6
        %v4466 = vsel %vm1323, %v4465, %v4464
        %v4468 = vadd.f32 %v4436, %v4466
        %s4469 = sld [smem:[#allocation5 + $0xbb]]
        %v4470 = vstv %s4469
        %v4471 = vmul.f32 %v4304, %v4470
        %v4473 = vrot.slane %v4471, 7
        %v4474 = vrot.slane %v4473, 2
        %4475 = vrot.lane.b32.xlu0 %v4474, 32
        %v4476 = vpop.permute.xlu0 %4475
        %v4477 = vrot.slane %v4476, 6
        %v4478 = vsel %vm1323, %v4477, %v4476
        %v4480 = vadd.f32 %v4468, %v4478
        %v4481 = vcombine.low %v1035, %v1036
        %v4483 = vunpack.c.l.s4 1983009808
        %v4484 = vunpack.c.0.s8 %v4483
        %v4485 = vlaneseq
        %v4486 = vshrl.u32 %v4485, 7
        %v4487 = vsub.s32 %v4484, %v4486
        %v4488 = vrot.slane %v4481, %v4487
        %4489 = vrot.lane.b32.xlu0 %v4488, 81
        %v4490 = vpop.permute.xlu0 %4489
        %v4491 = vrot.slane %v4490, 6
        %vm4492 = vcmask 662528
        %v4493 = vsel %vm4492, %v4491, %v4490
        %v4495 = vmul.f32 %v4458, %v4493
        %4497 = vrot.lane.b32.xlu0 %v4495, 124
        %v4498 = vpop.permute.xlu0 %4497
        %v4499 = vrot.slane %v4498, 2
        %v4500 = vsel %vm1225, %v4498, %v4499
        %v4502 = vadd.f32 %v4182, %v4500
        %v4503 = vmul.f32 %v4480, %v4493
        %4505 = vrot.lane.b32.xlu0 %v4503, 124
        %v4506 = vpop.permute.xlu0 %4505
        %v4507 = vrot.slane %v4506, 2
        %v4508 = vsel %vm1225, %v4506, %v4507
        %v4510 = vadd.f32 %v4190, %v4508
        %v4511 = vld [vmem:[#allocation4] sm:$0x3f]
        %s4512 = sld [smem:[#allocation5 + $0x14]]
        %v4513 = vstv %s4512
        %v4514 = vmul.f32 %v4511, %v4513
        %v4515 = vadd.f32 %v4514, 0.0
        %s4516 = sld [smem:[#allocation5 + $0x16]]
        %v4517 = vstv %s4516
        %v4518 = vmul.f32 %v4511, %v4517
        %v4520 = vrot.slane %v4518, 7
        %v4521 = vrot.slane %v4520, 2
        %v4523 = vadd.f32 %v4515, %v4521
        %s4524 = sld [smem:[#allocation5 + $0x15]]
        %v4525 = vstv %s4524
        %v4526 = vmul.f32 %v4511, %v4525
        %v4527 = vadd.f32 %v4526, 0.0
        %s4528 = sld [smem:[#allocation5 + $0x17]]
        %v4529 = vstv %s4528
        %v4530 = vmul.f32 %v4511, %v4529
        %v4532 = vrot.slane %v4530, 7
        %v4533 = vrot.slane %v4532, 2
        %v4535 = vadd.f32 %v4527, %v4533
        %s4536 = sld [smem:[#allocation5 + $0x30]]
        %v4537 = vstv %s4536
        %v4538 = vmul.f32 %v4511, %v4537
        %4540 = vrot.lane.b32.xlu0 %v4538, 112
        %v4541 = vpop.permute.xlu0 %4540
        %v4542 = vrot.slane %v4541, 2
        %v4543 = vsel %vm457, %v4541, %v4542
        %v4545 = vadd.f32 %v4523, %v4543
        %s4546 = sld [smem:[#allocation5 + $0x32]]
        %v4547 = vstv %s4546
        %v4548 = vmul.f32 %v4511, %v4547
        %v4550 = vrot.slane %v4548, 7
        %v4551 = vrot.slane %v4550, 2
        %4552 = vrot.lane.b32.xlu0 %v4551, 112
        %v4553 = vpop.permute.xlu0 %4552
        %v4554 = vrot.slane %v4553, 2
        %v4555 = vsel %vm457, %v4553, %v4554
        %v4557 = vadd.f32 %v4545, %v4555
        %s4558 = sld [smem:[#allocation5 + $0x31]]
        %v4559 = vstv %s4558
        %v4560 = vmul.f32 %v4511, %v4559
        %4562 = vrot.lane.b32.xlu0 %v4560, 112
        %v4563 = vpop.permute.xlu0 %4562
        %v4564 = vrot.slane %v4563, 2
        %v4565 = vsel %vm457, %v4563, %v4564
        %v4567 = vadd.f32 %v4535, %v4565
        %s4568 = sld [smem:[#allocation5 + $0x33]]
        %v4569 = vstv %s4568
        %v4570 = vmul.f32 %v4511, %v4569
        %v4572 = vrot.slane %v4570, 7
        %v4573 = vrot.slane %v4572, 2
        %4574 = vrot.lane.b32.xlu0 %v4573, 112
        %v4575 = vpop.permute.xlu0 %4574
        %v4576 = vrot.slane %v4575, 2
        %v4577 = vsel %vm457, %v4575, %v4576
        %v4579 = vadd.f32 %v4567, %v4577
        %s4580 = sld [smem:[#allocation5 + $0x4c]]
        %v4581 = vstv %s4580
        %v4582 = vmul.f32 %v4511, %v4581
        %4584 = vrot.lane.b32.xlu0 %v4582, 96
        %v4585 = vpop.permute.xlu0 %4584
        %v4586 = vrot.slane %v4585, 2
        %v4587 = vsel %vm485, %v4585, %v4586
        %v4589 = vadd.f32 %v4557, %v4587
        %s4590 = sld [smem:[#allocation5 + $0x4e]]
        %v4591 = vstv %s4590
        %v4592 = vmul.f32 %v4511, %v4591
        %v4594 = vrot.slane %v4592, 7
        %v4595 = vrot.slane %v4594, 2
        %4596 = vrot.lane.b32.xlu0 %v4595, 96
        %v4597 = vpop.permute.xlu0 %4596
        %v4598 = vrot.slane %v4597, 2
        %v4599 = vsel %vm485, %v4597, %v4598
        %v4601 = vadd.f32 %v4589, %v4599
        %s4602 = sld [smem:[#allocation5 + $0x4d]]
        %v4603 = vstv %s4602
        %v4604 = vmul.f32 %v4511, %v4603
        %4606 = vrot.lane.b32.xlu0 %v4604, 96
        %v4607 = vpop.permute.xlu0 %4606
        %v4608 = vrot.slane %v4607, 2
        %v4609 = vsel %vm485, %v4607, %v4608
        %v4611 = vadd.f32 %v4579, %v4609
        %s4612 = sld [smem:[#allocation5 + $0x4f]]
        %v4613 = vstv %s4612
        %v4614 = vmul.f32 %v4511, %v4613
        %v4616 = vrot.slane %v4614, 7
        %v4617 = vrot.slane %v4616, 2
        %4618 = vrot.lane.b32.xlu0 %v4617, 96
        %v4619 = vpop.permute.xlu0 %4618
        %v4620 = vrot.slane %v4619, 2
        %v4621 = vsel %vm485, %v4619, %v4620
        %v4623 = vadd.f32 %v4611, %v4621
        %v4624 = vld [vmem:[#allocation4 + $0x2] sm:$0x3f]
        %s4625 = sld [smem:[#allocation5 + $0x68]]
        %v4626 = vstv %s4625
        %v4627 = vmul.f32 %v4624, %v4626
        %4629 = vrot.lane.b32.xlu0 %v4627, 80
        %v4630 = vpop.permute.xlu0 %4629
        %v4631 = vrot.slane %v4630, 6
        %v4632 = vsel %vm516, %v4631, %v4630
        %v4634 = vadd.f32 %v4601, %v4632
        %s4635 = sld [smem:[#allocation5 + $0x6a]]
        %v4636 = vstv %s4635
        %v4637 = vmul.f32 %v4624, %v4636
        %v4639 = vrot.slane %v4637, 7
        %v4640 = vrot.slane %v4639, 2
        %4641 = vrot.lane.b32.xlu0 %v4640, 80
        %v4642 = vpop.permute.xlu0 %4641
        %v4643 = vrot.slane %v4642, 6
        %v4644 = vsel %vm516, %v4643, %v4642
        %v4646 = vadd.f32 %v4634, %v4644
        %s4647 = sld [smem:[#allocation5 + $0x69]]
        %v4648 = vstv %s4647
        %v4649 = vmul.f32 %v4624, %v4648
        %4651 = vrot.lane.b32.xlu0 %v4649, 80
        %v4652 = vpop.permute.xlu0 %4651
        %v4653 = vrot.slane %v4652, 6
        %v4654 = vsel %vm516, %v4653, %v4652
        %v4656 = vadd.f32 %v4623, %v4654
        %s4657 = sld [smem:[#allocation5 + $0x6b]]
        %v4658 = vstv %s4657
        %v4659 = vmul.f32 %v4624, %v4658
        %v4661 = vrot.slane %v4659, 7
        %v4662 = vrot.slane %v4661, 2
        %4663 = vrot.lane.b32.xlu0 %v4662, 80
        %v4664 = vpop.permute.xlu0 %4663
        %v4665 = vrot.slane %v4664, 6
        %v4666 = vsel %vm516, %v4665, %v4664
        %v4668 = vadd.f32 %v4656, %v4666
        %s4669 = sld [smem:[#allocation5 + $0x84]]
        %v4670 = vstv %s4669
        %v4671 = vmul.f32 %v4624, %v4670
        %4673 = vrot.lane.b32.xlu0 %v4671, 64
        %v4674 = vpop.permute.xlu0 %4673
        %v4675 = vrot.slane %v4674, 6
        %v4676 = vsel %vm544, %v4675, %v4674
        %v4678 = vadd.f32 %v4646, %v4676
        %s4679 = sld [smem:[#allocation5 + $0x86]]
        %v4680 = vstv %s4679
        %v4681 = vmul.f32 %v4624, %v4680
        %v4683 = vrot.slane %v4681, 7
        %v4684 = vrot.slane %v4683, 2
        %4685 = vrot.lane.b32.xlu0 %v4684, 64
        %v4686 = vpop.permute.xlu0 %4685
        %v4687 = vrot.slane %v4686, 6
        %v4688 = vsel %vm544, %v4687, %v4686
        %v4690 = vadd.f32 %v4678, %v4688
        %s4691 = sld [smem:[#allocation5 + $0x85]]
        %v4692 = vstv %s4691
        %v4693 = vmul.f32 %v4624, %v4692
        %4695 = vrot.lane.b32.xlu0 %v4693, 64
        %v4696 = vpop.permute.xlu0 %4695
        %v4697 = vrot.slane %v4696, 6
        %v4698 = vsel %vm544, %v4697, %v4696
        %v4700 = vadd.f32 %v4668, %v4698
        %s4701 = sld [smem:[#allocation5 + $0x87]]
        %v4702 = vstv %s4701
        %v4703 = vmul.f32 %v4624, %v4702
        %v4705 = vrot.slane %v4703, 7
        %v4706 = vrot.slane %v4705, 2
        %4707 = vrot.lane.b32.xlu0 %v4706, 64
        %v4708 = vpop.permute.xlu0 %4707
        %v4709 = vrot.slane %v4708, 6
        %v4710 = vsel %vm544, %v4709, %v4708
        %v4712 = vadd.f32 %v4700, %v4710
        %s4713 = sld [smem:[#allocation5 + $0xa0]]
        %v4714 = vstv %s4713
        %v4715 = vmul.f32 %v4624, %v4714
        %4717 = vrot.lane.b32.xlu0 %v4715, 48
        %v4718 = vpop.permute.xlu0 %4717
        %v4719 = vrot.slane %v4718, 6
        %v4720 = vsel %vm3131, %v4719, %v4718
        %v4722 = vadd.f32 %v4690, %v4720
        %s4723 = sld [smem:[#allocation5 + $0xa2]]
        %v4724 = vstv %s4723
        %v4725 = vmul.f32 %v4624, %v4724
        %v4727 = vrot.slane %v4725, 7
        %v4728 = vrot.slane %v4727, 2
        %4729 = vrot.lane.b32.xlu0 %v4728, 48
        %v4730 = vpop.permute.xlu0 %4729
        %v4731 = vrot.slane %v4730, 6
        %v4732 = vsel %vm3131, %v4731, %v4730
        %v4734 = vadd.f32 %v4722, %v4732
        %s4735 = sld [smem:[#allocation5 + $0xa1]]
        %v4736 = vstv %s4735
        %v4737 = vmul.f32 %v4624, %v4736
        %4739 = vrot.lane.b32.xlu0 %v4737, 48
        %v4740 = vpop.permute.xlu0 %4739
        %v4741 = vrot.slane %v4740, 6
        %v4742 = vsel %vm3131, %v4741, %v4740
        %v4744 = vadd.f32 %v4712, %v4742
        %s4745 = sld [smem:[#allocation5 + $0xa3]]
        %v4746 = vstv %s4745
        %v4747 = vmul.f32 %v4624, %v4746
        %v4749 = vrot.slane %v4747, 7
        %v4750 = vrot.slane %v4749, 2
        %4751 = vrot.lane.b32.xlu0 %v4750, 48
        %v4752 = vpop.permute.xlu0 %4751
        %v4753 = vrot.slane %v4752, 6
        %v4754 = vsel %vm3131, %v4753, %v4752
        %v4756 = vadd.f32 %v4744, %v4754
        %s4757 = sld [smem:[#allocation5 + $0xbc]]
        %v4758 = vstv %s4757
        %v4759 = vmul.f32 %v4624, %v4758
        %4761 = vrot.lane.b32.xlu0 %v4759, 32
        %v4762 = vpop.permute.xlu0 %4761
        %v4763 = vrot.slane %v4762, 6
        %v4764 = vsel %vm1323, %v4763, %v4762
        %v4766 = vadd.f32 %v4734, %v4764
        %s4767 = sld [smem:[#allocation5 + $0xbe]]
        %v4768 = vstv %s4767
        %v4769 = vmul.f32 %v4624, %v4768
        %v4771 = vrot.slane %v4769, 7
        %v4772 = vrot.slane %v4771, 2
        %4773 = vrot.lane.b32.xlu0 %v4772, 32
        %v4774 = vpop.permute.xlu0 %4773
        %v4775 = vrot.slane %v4774, 6
        %v4776 = vsel %vm1323, %v4775, %v4774
        %v4778 = vadd.f32 %v4766, %v4776
        %s4779 = sld [smem:[#allocation5 + $0xbd]]
        %v4780 = vstv %s4779
        %v4781 = vmul.f32 %v4624, %v4780
        %4783 = vrot.lane.b32.xlu0 %v4781, 32
        %v4784 = vpop.permute.xlu0 %4783
        %v4785 = vrot.slane %v4784, 6
        %v4786 = vsel %vm1323, %v4785, %v4784
        %v4788 = vadd.f32 %v4756, %v4786
        %s4789 = sld [smem:[#allocation5 + $0xbf]]
        %v4790 = vstv %s4789
        %v4791 = vmul.f32 %v4624, %v4790
        %v4793 = vrot.slane %v4791, 7
        %v4794 = vrot.slane %v4793, 2
        %4795 = vrot.lane.b32.xlu0 %v4794, 32
        %v4796 = vpop.permute.xlu0 %4795
        %v4797 = vrot.slane %v4796, 6
        %v4798 = vsel %vm1323, %v4797, %v4796
        %v4800 = vadd.f32 %v4788, %v4798
        %v4801 = vcombine.low %v1200, %v1201
        %v4803 = vunpack.c.l.s4 1983009808
        %v4804 = vunpack.c.0.s8 %v4803
        %v4805 = vlaneseq
        %v4806 = vshrl.u32 %v4805, 7
        %v4807 = vsub.s32 %v4804, %v4806
        %v4808 = vrot.slane %v4801, %v4807
        %4809 = vrot.lane.b32.xlu0 %v4808, 82
        %v4810 = vpop.permute.xlu0 %4809
        %v4811 = vrot.slane %v4810, 6
        %vm4812 = vcmask 670720
        %v4813 = vsel %vm4812, %v4811, %v4810
        %v4815 = vmul.f32 %v4778, %v4813
        %4817 = vrot.lane.b32.xlu0 %v4815, 123
        %v4818 = vpop.permute.xlu0 %4817
        %v4819 = vrot.slane %v4818, 2
        %vm4820 = vcmask 1006592
        %v4821 = vsel %vm4820, %v4818, %v4819
        %v4823 = vadd.f32 %v4502, %v4821
        %v4824 = vmul.f32 %v4800, %v4813
        %4826 = vrot.lane.b32.xlu0 %v4824, 123
        %v4827 = vpop.permute.xlu0 %4826
        %v4828 = vrot.slane %v4827, 2
        %v4829 = vsel %vm4820, %v4827, %v4828
        %v4831 = vadd.f32 %v4510, %v4829
        %v4832 = vld [vmem:[#allocation4] sm:$0x3f]
        %s4833 = sld [smem:[#allocation5 + $0x18]]
        %v4834 = vstv %s4833
        %v4835 = vmul.f32 %v4832, %v4834
        %v4836 = vadd.f32 %v4835, 0.0
        %s4837 = sld [smem:[#allocation5 + $0x1a]]
        %v4838 = vstv %s4837
        %v4839 = vmul.f32 %v4832, %v4838
        %v4841 = vrot.slane %v4839, 7
        %v4842 = vrot.slane %v4841, 2
        %v4844 = vadd.f32 %v4836, %v4842
        %s4845 = sld [smem:[#allocation5 + $0x19]]
        %v4846 = vstv %s4845
        %v4847 = vmul.f32 %v4832, %v4846
        %v4848 = vadd.f32 %v4847, 0.0
        %s4849 = sld [smem:[#allocation5 + $0x1b]]
        %v4850 = vstv %s4849
        %v4851 = vmul.f32 %v4832, %v4850
        %v4853 = vrot.slane %v4851, 7
        %v4854 = vrot.slane %v4853, 2
        %v4856 = vadd.f32 %v4848, %v4854
        %s4857 = sld [smem:[#allocation5 + $0x34]]
        %v4858 = vstv %s4857
        %v4859 = vmul.f32 %v4832, %v4858
        %4861 = vrot.lane.b32.xlu0 %v4859, 112
        %v4862 = vpop.permute.xlu0 %4861
        %v4863 = vrot.slane %v4862, 2
        %v4864 = vsel %vm457, %v4862, %v4863
        %v4866 = vadd.f32 %v4844, %v4864
        %s4867 = sld [smem:[#allocation5 + $0x36]]
        %v4868 = vstv %s4867
        %v4869 = vmul.f32 %v4832, %v4868
        %v4871 = vrot.slane %v4869, 7
        %v4872 = vrot.slane %v4871, 2
        %4873 = vrot.lane.b32.xlu0 %v4872, 112
        %v4874 = vpop.permute.xlu0 %4873
        %v4875 = vrot.slane %v4874, 2
        %v4876 = vsel %vm457, %v4874, %v4875
        %v4878 = vadd.f32 %v4866, %v4876
        %s4879 = sld [smem:[#allocation5 + $0x35]]
        %v4880 = vstv %s4879
        %v4881 = vmul.f32 %v4832, %v4880
        %4883 = vrot.lane.b32.xlu0 %v4881, 112
        %v4884 = vpop.permute.xlu0 %4883
        %v4885 = vrot.slane %v4884, 2
        %v4886 = vsel %vm457, %v4884, %v4885
        %v4888 = vadd.f32 %v4856, %v4886
        %s4889 = sld [smem:[#allocation5 + $0x37]]
        %v4890 = vstv %s4889
        %v4891 = vmul.f32 %v4832, %v4890
        %v4893 = vrot.slane %v4891, 7
        %v4894 = vrot.slane %v4893, 2
        %4895 = vrot.lane.b32.xlu0 %v4894, 112
        %v4896 = vpop.permute.xlu0 %4895
        %v4897 = vrot.slane %v4896, 2
        %v4898 = vsel %vm457, %v4896, %v4897
        %v4900 = vadd.f32 %v4888, %v4898
        %s4901 = sld [smem:[#allocation5 + $0x50]]
        %v4902 = vstv %s4901
        %v4903 = vmul.f32 %v4832, %v4902
        %4905 = vrot.lane.b32.xlu0 %v4903, 96
        %v4906 = vpop.permute.xlu0 %4905
        %v4907 = vrot.slane %v4906, 2
        %v4908 = vsel %vm485, %v4906, %v4907
        %v4910 = vadd.f32 %v4878, %v4908
        %s4911 = sld [smem:[#allocation5 + $0x52]]
        %v4912 = vstv %s4911
        %v4913 = vmul.f32 %v4832, %v4912
        %v4915 = vrot.slane %v4913, 7
        %v4916 = vrot.slane %v4915, 2
        %4917 = vrot.lane.b32.xlu0 %v4916, 96
        %v4918 = vpop.permute.xlu0 %4917
        %v4919 = vrot.slane %v4918, 2
        %v4920 = vsel %vm485, %v4918, %v4919
        %v4922 = vadd.f32 %v4910, %v4920
        %s4923 = sld [smem:[#allocation5 + $0x51]]
        %v4924 = vstv %s4923
        %v4925 = vmul.f32 %v4832, %v4924
        %4927 = vrot.lane.b32.xlu0 %v4925, 96
        %v4928 = vpop.permute.xlu0 %4927
        %v4929 = vrot.slane %v4928, 2
        %v4930 = vsel %vm485, %v4928, %v4929
        %v4932 = vadd.f32 %v4900, %v4930
        %s4933 = sld [smem:[#allocation5 + $0x53]]
        %v4934 = vstv %s4933
        %v4935 = vmul.f32 %v4832, %v4934
        %v4937 = vrot.slane %v4935, 7
        %v4938 = vrot.slane %v4937, 2
        %4939 = vrot.lane.b32.xlu0 %v4938, 96
        %v4940 = vpop.permute.xlu0 %4939
        %v4941 = vrot.slane %v4940, 2
        %v4942 = vsel %vm485, %v4940, %v4941
        %v4944 = vadd.f32 %v4932, %v4942
        %v4945 = vld [vmem:[#allocation4 + $0x2] sm:$0x3f]
        %s4946 = sld [smem:[#allocation5 + $0x6c]]
        %v4947 = vstv %s4946
        %v4948 = vmul.f32 %v4945, %v4947
        %4950 = vrot.lane.b32.xlu0 %v4948, 80
        %v4951 = vpop.permute.xlu0 %4950
        %v4952 = vrot.slane %v4951, 6
        %v4953 = vsel %vm516, %v4952, %v4951
        %v4955 = vadd.f32 %v4922, %v4953
        %s4956 = sld [smem:[#allocation5 + $0x6e]]
        %v4957 = vstv %s4956
        %v4958 = vmul.f32 %v4945, %v4957
        %v4960 = vrot.slane %v4958, 7
        %v4961 = vrot.slane %v4960, 2
        %4962 = vrot.lane.b32.xlu0 %v4961, 80
        %v4963 = vpop.permute.xlu0 %4962
        %v4964 = vrot.slane %v4963, 6
        %v4965 = vsel %vm516, %v4964, %v4963
        %v4967 = vadd.f32 %v4955, %v4965
        %s4968 = sld [smem:[#allocation5 + $0x6d]]
        %v4969 = vstv %s4968
        %v4970 = vmul.f32 %v4945, %v4969
        %4972 = vrot.lane.b32.xlu0 %v4970, 80
        %v4973 = vpop.permute.xlu0 %4972
        %v4974 = vrot.slane %v4973, 6
        %v4975 = vsel %vm516, %v4974, %v4973
        %v4977 = vadd.f32 %v4944, %v4975
        %s4978 = sld [smem:[#allocation5 + $0x6f]]
        %v4979 = vstv %s4978
        %v4980 = vmul.f32 %v4945, %v4979
        %v4982 = vrot.slane %v4980, 7
        %v4983 = vrot.slane %v4982, 2
        %4984 = vrot.lane.b32.xlu0 %v4983, 80
        %v4985 = vpop.permute.xlu0 %4984
        %v4986 = vrot.slane %v4985, 6
        %v4987 = vsel %vm516, %v4986, %v4985
        %v4989 = vadd.f32 %v4977, %v4987
        %s4990 = sld [smem:[#allocation5 + $0x88]]
        %v4991 = vstv %s4990
        %v4992 = vmul.f32 %v4945, %v4991
        %4994 = vrot.lane.b32.xlu0 %v4992, 64
        %v4995 = vpop.permute.xlu0 %4994
        %v4996 = vrot.slane %v4995, 6
        %v4997 = vsel %vm544, %v4996, %v4995
        %v4999 = vadd.f32 %v4967, %v4997
        %s5000 = sld [smem:[#allocation5 + $0x8a]]
        %v5001 = vstv %s5000
        %v5002 = vmul.f32 %v4945, %v5001
        %v5004 = vrot.slane %v5002, 7
        %v5005 = vrot.slane %v5004, 2
        %5006 = vrot.lane.b32.xlu0 %v5005, 64
        %v5007 = vpop.permute.xlu0 %5006
        %v5008 = vrot.slane %v5007, 6
        %v5009 = vsel %vm544, %v5008, %v5007
        %v5011 = vadd.f32 %v4999, %v5009
        %s5012 = sld [smem:[#allocation5 + $0x89]]
        %v5013 = vstv %s5012
        %v5014 = vmul.f32 %v4945, %v5013
        %5016 = vrot.lane.b32.xlu0 %v5014, 64
        %v5017 = vpop.permute.xlu0 %5016
        %v5018 = vrot.slane %v5017, 6
        %v5019 = vsel %vm544, %v5018, %v5017
        %v5021 = vadd.f32 %v4989, %v5019
        %s5022 = sld [smem:[#allocation5 + $0x8b]]
        %v5023 = vstv %s5022
        %v5024 = vmul.f32 %v4945, %v5023
        %v5026 = vrot.slane %v5024, 7
        %v5027 = vrot.slane %v5026, 2
        %5028 = vrot.lane.b32.xlu0 %v5027, 64
        %v5029 = vpop.permute.xlu0 %5028
        %v5030 = vrot.slane %v5029, 6
        %v5031 = vsel %vm544, %v5030, %v5029
        %v5033 = vadd.f32 %v5021, %v5031
        %s5034 = sld [smem:[#allocation5 + $0xa4]]
        %v5035 = vstv %s5034
        %v5036 = vmul.f32 %v4945, %v5035
        %5038 = vrot.lane.b32.xlu0 %v5036, 48
        %v5039 = vpop.permute.xlu0 %5038
        %v5040 = vrot.slane %v5039, 6
        %v5041 = vsel %vm3131, %v5040, %v5039
        %v5043 = vadd.f32 %v5011, %v5041
        %s5044 = sld [smem:[#allocation5 + $0xa6]]
        %v5045 = vstv %s5044
        %v5046 = vmul.f32 %v4945, %v5045
        %v5048 = vrot.slane %v5046, 7
        %v5049 = vrot.slane %v5048, 2
        %5050 = vrot.lane.b32.xlu0 %v5049, 48
        %v5051 = vpop.permute.xlu0 %5050
        %v5052 = vrot.slane %v5051, 6
        %v5053 = vsel %vm3131, %v5052, %v5051
        %v5055 = vadd.f32 %v5043, %v5053
        %s5056 = sld [smem:[#allocation5 + $0xa5]]
        %v5057 = vstv %s5056
        %v5058 = vmul.f32 %v4945, %v5057
        %5060 = vrot.lane.b32.xlu0 %v5058, 48
        %v5061 = vpop.permute.xlu0 %5060
        %v5062 = vrot.slane %v5061, 6
        %v5063 = vsel %vm3131, %v5062, %v5061
        %v5065 = vadd.f32 %v5033, %v5063
        %s5066 = sld [smem:[#allocation5 + $0xa7]]
        %v5067 = vstv %s5066
        %v5068 = vmul.f32 %v4945, %v5067
        %v5070 = vrot.slane %v5068, 7
        %v5071 = vrot.slane %v5070, 2
        %5072 = vrot.lane.b32.xlu0 %v5071, 48
        %v5073 = vpop.permute.xlu0 %5072
        %v5074 = vrot.slane %v5073, 6
        %v5075 = vsel %vm3131, %v5074, %v5073
        %v5077 = vadd.f32 %v5065, %v5075
        %s5078 = sld [smem:[#allocation5 + $0xc0]]
        %v5079 = vstv %s5078
        %v5080 = vmul.f32 %v4945, %v5079
        %5082 = vrot.lane.b32.xlu0 %v5080, 32
        %v5083 = vpop.permute.xlu0 %5082
        %v5084 = vrot.slane %v5083, 6
        %v5085 = vsel %vm1323, %v5084, %v5083
        %v5087 = vadd.f32 %v5055, %v5085
        %s5088 = sld [smem:[#allocation5 + $0xc2]]
        %v5089 = vstv %s5088
        %v5090 = vmul.f32 %v4945, %v5089
        %v5092 = vrot.slane %v5090, 7
        %v5093 = vrot.slane %v5092, 2
        %5094 = vrot.lane.b32.xlu0 %v5093, 32
        %v5095 = vpop.permute.xlu0 %5094
        %v5096 = vrot.slane %v5095, 6
        %v5097 = vsel %vm1323, %v5096, %v5095
        %v5099 = vadd.f32 %v5087, %v5097
        %s5100 = sld [smem:[#allocation5 + $0xc1]]
        %v5101 = vstv %s5100
        %v5102 = vmul.f32 %v4945, %v5101
        %5104 = vrot.lane.b32.xlu0 %v5102, 32
        %v5105 = vpop.permute.xlu0 %5104
        %v5106 = vrot.slane %v5105, 6
        %v5107 = vsel %vm1323, %v5106, %v5105
        %v5109 = vadd.f32 %v5077, %v5107
        %s5110 = sld [smem:[#allocation5 + $0xc3]]
        %v5111 = vstv %s5110
        %v5112 = vmul.f32 %v4945, %v5111
        %v5114 = vrot.slane %v5112, 7
        %v5115 = vrot.slane %v5114, 2
        %5116 = vrot.lane.b32.xlu0 %v5115, 32
        %v5117 = vpop.permute.xlu0 %5116
        %v5118 = vrot.slane %v5117, 6
        %v5119 = vsel %vm1323, %v5118, %v5117
        %v5121 = vadd.f32 %v5109, %v5119
        %v5122 = vcombine.low %v2297, %v2298
        %v5124 = vunpack.c.l.s4 1983009808
        %v5125 = vunpack.c.0.s8 %v5124
        %v5126 = vlaneseq
        %v5127 = vshrl.u32 %v5126, 7
        %v5128 = vsub.s32 %v5125, %v5127
        %v5129 = vrot.slane %v5122, %v5128
        %5130 = vrot.lane.b32.xlu0 %v5129, 83
        %v5131 = vpop.permute.xlu0 %5130
        %v5132 = vrot.slane %v5131, 6
        %vm5133 = vcmask 678912
        %v5134 = vsel %vm5133, %v5132, %v5131
        %v5136 = vmul.f32 %v5099, %v5134
        %5138 = vrot.lane.b32.xlu0 %v5136, 122
        %v5139 = vpop.permute.xlu0 %5138
        %v5140 = vrot.slane %v5139, 2
        %v5141 = vsel %vm1904, %v5139, %v5140
        %v5143 = vadd.f32 %v4823, %v5141
        %v5144 = vmul.f32 %v5121, %v5134
        %5146 = vrot.lane.b32.xlu0 %v5144, 122
        %v5147 = vpop.permute.xlu0 %5146
        %v5148 = vrot.slane %v5147, 2
        %v5149 = vsel %vm1904, %v5147, %v5148
        %v5151 = vadd.f32 %v4831, %v5149
        %s5152 = sld [smem:[#allocation8]]
        %v5153 = vstv %s5152
        %v5154 = vadd.f32 %v5143, %v5153
        %v5155 = vxor.u32 %v5154, 2147483648
        %v5156 = vmul.f32 %v5155, 1.442695
        %v5157 = vpow.pop %v5156
        %v5158 = vadd.f32 %v5157, 1.0
        %v5159 = vrcp.pop %v5158
        %v5160 = vmul.f32 1.0, %v5159
        %s5161 = sld [smem:[#allocation8 + $0x1]]
        %v5162 = vstv %s5161
        %v5163 = vadd.f32 %v5151, %v5162
        %v5164 = vxor.u32 %v5163, 2147483648
        %v5165 = vmul.f32 %v5164, 1.442695
        %v5166 = vpow.pop %v5165
        %v5167 = vadd.f32 %v5166, 1.0
        %v5168 = vrcp.pop %v5167
        %v5169 = vmul.f32 1.0, %v5168
        %v5171 = vlaneseq
        %v5172 = vshrl.u32 %v5171, 7
        %v5173 = vsub.s32 0, %v5172
        %v5174 = vrot.slane %v5160, %v5173
        %v5175 = vlaneseq
        %v5176 = vshrl.u32 %v5175, 7
        %v5177 = vsub.s32 2, %v5176
        %v5178 = vrot.slane %v5160, %v5177
        %v5179 = vlaneseq
        %v5180 = vshrl.u32 %v5179, 7
        %v5181 = vsub.s32 4, %v5180
        %v5182 = vrot.slane %v5160, %v5181
        %v5186 = vlaneseq
        %v5187 = vshrl.u32 %v5186, 7
        %v5188 = vsub.s32 0, %v5187
        %v5189 = vrot.slane %v5174, %v5188
        %v5190 = vlaneseq
        %v5191 = vshrl.u32 %v5190, 7
        %v5192 = vsub.s32 0, %v5191
        %v5193 = vrot.slane %v5178, %v5192
        %v5194 = vlaneseq
        %v5195 = vshrl.u32 %v5194, 7
        %v5196 = vsub.s32 0, %v5195
        %v5197 = vrot.slane %v5182, %v5196
        %5201 = vrot.lane.b32.xlu0 %v5189, 51
        %v5202 = vpop.permute.xlu0 %5201
        %5203 = vrot.lane.b32.xlu0 %v5193, 51
        %v5204 = vpop.permute.xlu0 %5203
        %5205 = vrot.lane.b32.xlu0 %v5197, 51
        %v5206 = vpop.permute.xlu0 %5205
        %vm5207 = vcmask 416768
        %v5208 = vsel %vm5207, %v5202, %v5204
        %v5209 = vsel %vm5207, %v5204, %v5206
        %v5212 = vmul.f32 %v2876, %v5208
        %v5213 = vmul.f32 %v2878, %v5209
        %v5215 = vlaneseq
        %v5216 = vshrl.u32 %v5215, 7
        %v5217 = vsub.s32 0, %v5216
        %v5218 = vrot.slane %v5169, %v5217
        %v5219 = vlaneseq
        %v5220 = vshrl.u32 %v5219, 7
        %v5221 = vsub.s32 2, %v5220
        %v5222 = vrot.slane %v5169, %v5221
        %v5223 = vlaneseq
        %v5224 = vshrl.u32 %v5223, 7
        %v5225 = vsub.s32 4, %v5224
        %v5226 = vrot.slane %v5169, %v5225
        %v5230 = vlaneseq
        %v5231 = vshrl.u32 %v5230, 7
        %v5232 = vsub.s32 0, %v5231
        %v5233 = vrot.slane %v5218, %v5232
        %v5234 = vlaneseq
        %v5235 = vshrl.u32 %v5234, 7
        %v5236 = vsub.s32 0, %v5235
        %v5237 = vrot.slane %v5222, %v5236
        %v5238 = vlaneseq
        %v5239 = vshrl.u32 %v5238, 7
        %v5240 = vsub.s32 0, %v5239
        %v5241 = vrot.slane %v5226, %v5240
        %5245 = vrot.lane.b32.xlu0 %v5233, 51
        %v5246 = vpop.permute.xlu0 %5245
        %5247 = vrot.lane.b32.xlu0 %v5237, 51
        %v5248 = vpop.permute.xlu0 %5247
        %5249 = vrot.lane.b32.xlu0 %v5241, 51
        %v5250 = vpop.permute.xlu0 %5249
        %v5251 = vsel %vm5207, %v5246, %v5248
        %v5252 = vsel %vm5207, %v5248, %v5250
        %v5255 = vmul.f32 %v2876, %v5251
        %v5256 = vmul.f32 %v2878, %v5252
        %v5259 = vrot.slane %v5255, 4
        %v5260 = vrot.slane %v5256, 4
        %v5263 = vadd.f32 %v5212, %v5259
        %v5264 = vadd.f32 %v5213, %v5260
        %vm5265 = vcmask 1043456
        %v5266 = vsel %vm5265, %v5263, 1.0
        %v5267 = vsel %vm5265, %v5264, 1.0
        %vm5268 = vcmask 1044480
        %v5269 = vsel %vm5268, %v5266, 0.0
        %v5270 = vsel %vm5268, %v5267, 0.0
        %5271 = vmatprep.subr.mxu0 %v385
        %5272 = vmatpush1.xpose.msra.mxu0 %v384
        %5273 = vmatprep.subr.mxu0 0.0
        %5274 = vmatpush1.xpose.msra.mxu0 0.0
        %5275 = vmatprep.subr.mxu0 0.0
        %5276 = vmatpush1.xpose.msra.mxu0 0.0
        %5277 = vmatprep.subr.mxu0 0.0
        %5278 = vmatpush1.xpose.msra.mxu0 0.0
        %5279 = vmatprep.subr.mxu0 0.0
        %5280 = vmatpush1.xpose.msra.mxu0 0.0
        %5281 = vmatprep.subr.mxu0 0.0
        %5282 = vmatpush1.xpose.msra.mxu0 0.0
        %5283 = vmatprep.subr.mxu0 0.0
        %5284 = vmatpush1.xpose.msra.mxu0 0.0
        %5285 = vmatprep.subr.mxu0 0.0
        %5286 = vmatpush1.xpose.msra.mxu0 0.0
        %5287 = vmatprep.subr.mxu0 0.0
        %5288 = vmatpush1.xpose.msra.mxu0 0.0
        %5289 = vmatprep.subr.mxu0 0.0
        %5290 = vmatpush1.xpose.msra.mxu0 0.0
        %5291 = vmatprep.subr.mxu0 0.0
        %5292 = vmatpush1.xpose.msra.mxu0 0.0
        %5293 = vmatprep.subr.mxu0 0.0
        %5294 = vmatpush1.xpose.msra.mxu0 0.0
        %5295 = vmatprep.subr.mxu0 0.0
        %5296 = vmatpush1.xpose.msra.mxu0 0.0
        %5297 = vmatprep.subr.mxu0 0.0
        %5298 = vmatpush1.xpose.msra.mxu0 0.0
        %5299 = vmatprep.subr.mxu0 0.0
        %5300 = vmatpush1.xpose.msra.mxu0 0.0
        %5301 = vmatprep.subr.mxu0 0.0
        %5302 = vmatpush1.xpose.msra.mxu0 0.0
        %5303 = vmatprep.subr.mxu0 0.0
        %5304 = vmatpush1.xpose.msra.mxu0 0.0
        %5305 = vmatprep.subr.mxu0 0.0
        %5306 = vmatpush1.xpose.msra.mxu0 0.0
        %5307 = vmatprep.subr.mxu0 0.0
        %5308 = vmatpush1.xpose.msra.mxu0 0.0
        %5309 = vmatprep.subr.mxu0 0.0
        %5310 = vmatpush1.xpose.msra.mxu0 0.0
        %5311 = vmatprep.subr.mxu0 0.0
        %5312 = vmatpush1.xpose.msra.mxu0 0.0
        %5313 = vmatprep.subr.mxu0 0.0
        %5314 = vmatpush1.xpose.msra.mxu0 0.0
        %5315 = vmatprep.subr.mxu0 0.0
        %5316 = vmatpush1.xpose.msra.mxu0 0.0
        %5317 = vmatprep.subr.mxu0 0.0
        %5318 = vmatpush1.xpose.msra.mxu0 0.0
        %5319 = vmatprep.subr.mxu0 0.0
        %5320 = vmatpush1.xpose.msra.mxu0 0.0
        %5321 = vmatprep.subr.mxu0 0.0
        %5322 = vmatpush1.xpose.msra.mxu0 0.0
        %5323 = vmatprep.subr.mxu0 0.0
        %5324 = vmatpush1.xpose.msra.mxu0 0.0
        %5325 = vmatprep.subr.mxu0 0.0
        %5326 = vmatpush1.xpose.msra.mxu0 0.0
        %5327 = vmatprep.subr.mxu0 0.0
        %5328 = vmatpush1.xpose.msra.mxu0 0.0
        %5329 = vmatprep.subr.mxu0 0.0
        %5330 = vmatpush1.xpose.msra.mxu0 0.0
        %5331 = vmatprep.subr.mxu0 0.0
        %5332 = vmatpush1.xpose.msra.mxu0 0.0
        %5333 = vmatprep.subr.mxu0 0.0
        %5334 = vmatpush1.xpose.msra.mxu0 0.0
        %5335 = vmatprep.mubr.f32.mxu0 %v5270
        %5336 = vmatmul.mubr.f32.gmra.mrb[0].mxu0 %v5269
        %v5337 = vpop.f32.mrb[0].mxu0
        %v5338 = vadd.f32 0.0, %v5337
        %v5339 = vpop.f32.mrb[0].mxu0
        %5340 = vdwg.mxu0
        %v5341 = vld [vmem:[%s9] sm:$0xff]
        %v5342 = vmul.f32 %v5338, %v5341
        %vm5343 = vcmask 64512
        %v5344 = vsel %vm5343, %v5342, 0.0
        %v5345 = vrot.slane %v5344, 4
        %v5346 = vadd.f32 %v5344, %v5345
        %v5347 = vrot.slane %v5346, 2
        %v5348 = vadd.f32 %v5346, %v5347
        %v5349 = vrot.slane %v5348, 1
        %v5350 = vadd.f32 %v5348, %v5349
        %v5351 = vmul.f32 %v5350, 0.00390625
        %vm5352 = vcmask 57344
        %5353 = vst.msk [vmem:[%s378] sm:$0x1] %vm5352, %v5351
        %s5354 = sand.u32 %s249, 1
        %s5355 = scalar_lea.sflag [#allocation6], %s5354
        %s5356 = sand.u32 %s249, 1
        %s5357 = scalar_lea.vmem [#allocation10], %s5356
        // Predicated region
        $region69: #{tpu_custom_call.1} parent=59 // pred_check
          %p5358 = pneg %p259
        $region70: #{tpu_custom_call.1} parent=59 // pred_check_branch
          %5360 = sbr.rel (%p5358) target = $region72
        $region71: #{tpu_custom_call.1} parent=59 // pred_region
          %s5362 = ssub.s32 16, 16
          %5363 = vsyncadd %s5355, %s5362
          %s5364 = smul.addr %s26, 16
          %s5365 = scalar_lea.hbm %s10, %s5364
          %s5367 = sshll.u32 %s5357, 4
          %s5368 = int_to_ptr.vmem [resolvable:$true] %s5367
          %5370 = dma.vmem_to_hbm [thread:$0]  %s5368, 16, %s5365, %s5355
        $region72: #{tpu_custom_call.1} parent=59 // pred_fallthru
          _
      $region60: #{tpu_custom_call.1} parent=5 // pred_fallthru
        _
      %p5371 = scmp.le.s32.totalorder 2, %s21
      // Predicated region
      $region73: #{tpu_custom_call.1} parent=5 // pred_check
        %p5372 = pneg %p5371
      $region74: #{tpu_custom_call.1} parent=5 // pred_check_branch
        %5374 = sbr.rel (%p5372) target = $region76
      $region75: #{tpu_custom_call.1} parent=5 // pred_region
        %s5375 = ssub.s32 %s21, 2
        // Predicated region
        $region77: #{tpu_custom_call.1} parent=75 // pred_check
          %p5376 = pneg %p265
        $region78: #{tpu_custom_call.1} parent=75 // pred_check_branch
          %5378 = sbr.rel (%p5376) target = $region80
        $region79: #{tpu_custom_call.1} parent=75 // pred_region
          %s5379 = sand.u32 %s250, 1
          %s5380 = scalar_lea.sflag [#allocation6], %s5379
          %s5381 = sand.u32 %s250, 1
          %s5382 = scalar_lea.vmem [#allocation10], %s5381
          %5383 = dma.done %s5380, 16
        $region80: #{tpu_custom_call.1} parent=75 // pred_fallthru
          _
      $region76: #{tpu_custom_call.1} parent=5 // pred_fallthru
        _
    $region6: #{tpu_custom_call.1} parent=1 // loop_footer
      %s25 = sadd.s32 1, %s21
    $region7: #{tpu_custom_call.1} parent=1 // loop_footer_branch
      %20 = sbr.rel target = $region3
    $region8: #{tpu_custom_call.1} parent=1 // loop_exit
      _
    %5384 = vsyncpa [#allocation6], 1
    %s5385 = scalar_lea.sflag [#allocation6], 1
    %5386 = vsyncpa %s5385, 1
    %5387 = vsyncpa [#allocation7], 1
    %s5388 = scalar_lea.sflag [#allocation7], 1
    %5389 = vsyncpa %s5388, 1
    %5390 = vsyncpa [#allocation9], 1

</llo_original>
